<compile_context>
chip_gen: v7x
topology: tpu7x:2x2x1
jax: 0.10.0
libtpu: 0.0.40
codegen_flags: <defaults>
</compile_context>

<pallas_src>
import jax
import jax.numpy as jnp
from jax.experimental import pallas as pl
from jax.experimental.pallas import tpu as pltpu


def _round_up(x, m):
    return ((x + m - 1) // m) * m


def _largest_divisor_tile(n, cap, align=128):
    """Largest multiple of `align` that divides n and is <= cap.

    `n` must itself be a multiple of `align` (we pad the vocab to guarantee
    this), so `align` is always a valid fallback.
    """
    if n <= cap:
        return n
    best = align
    t = align
    while t <= cap:
        if n % t == 0:
            best = t
        t += align
    return best


def _device_kind():
    try:
        return jax.devices()[0].device_kind.lower()
    except Exception:  # pragma: no cover - defensive only
        return ""


def word_predictor_kernel(idx_ref, emb_ref, w1_ref, b1_ref, w2_ref, b2_ref,
                          out_ref, h_ref):
    """One (batch_tile, vocab_tile) grid step.

    idx_ref : VMEM (Bt, C)      int32  token ids for this batch tile
    emb_ref : VMEM (Vp, D)      bf16   full (padded) embedding table, resident
    w1_ref  : VMEM (C*D, H)     bf16   fc1 weight, resident
    b1_ref  : VMEM (1, H)       f32    resident
    w2_ref  : VMEM (H, Vt)      bf16   fc2 weight tile for this vocab tile
    b2_ref  : VMEM (1, Vt)      f32
    out_ref : VMEM (Bt, Vt)            logits tile
    h_ref   : VMEM (Bt, H)      bf16   scratch: hidden acts, reused across vocab tiles
    """
    Bt, C = idx_ref.shape
    Vp, D = emb_ref.shape

    # fc1 (embedding gather + linear + ReLU) depends only on the batch tile:
    # compute it once at the first vocab tile and cache it in VMEM scratch.
    # NOTE: this is only correct because the vocab axis is the innermost grid
    # axis and marked "arbitrary" (runs in order per batch tile). Do NOT flip
    # it to parallel / core-parallel without removing the h_ref reuse.
    @pl.when(pl.program_id(1) == 0)
    def _():
        ids = idx_ref[...]                                           # (Bt, C) i32
        iota_v = jax.lax.broadcasted_iota(jnp.int32, (Bt, Vp), 1)    # (Bt, Vp)
        # Stack the C one-hot gathers into a single (C*Bt, Vp) @ (Vp, D)
        # MXU matmul: one K=Vp pass / one result drain instead of C.
        onehot = jnp.concatenate(
            [(iota_v == ids[:, c:c + 1]).astype(jnp.bfloat16) for c in range(C)],
            axis=0)                                                  # (C*Bt, Vp)
        e_stack = jnp.dot(onehot, emb_ref[...],
                          preferred_element_type=jnp.float32)        # (C*Bt, D)
        # Rearrange the strips to (Bt, C*D) and run fc1 as ONE K=C*D matmul
        # (instead of C small K=D matmuls that pad out on the MXU).
        e_flat = jnp.concatenate(
            [e_stack[c * Bt:(c + 1) * Bt, :] for c in range(C)],
            axis=-1).astype(jnp.bfloat16)                            # (Bt, C*D)
        acc = jnp.dot(e_flat, w1_ref[...],
                      preferred_element_type=jnp.float32)            # (Bt, H)
        h = jnp.maximum(acc + b1_ref[...], 0.0)      # bias + ReLU epilogue in f32
        h_ref[...] = h.astype(jnp.bfloat16)

    # fc2 for this (batch tile, vocab tile).
    out_ref[...] = (
        jnp.dot(h_ref[...], w2_ref[...], preferred_element_type=jnp.float32)
        + b2_ref[...]
    ).astype(out_ref.dtype)


def word_predictor_forward(idx, emb, w1, b1, w2, b2, *,
                           batch_tile=None, vocab_tile=None,
                           out_dtype=jnp.float32):
    """Forward pass.

    idx:(B,C) ids, emb:(V,D), w1:(C*D,H), b1:(H,), w2:(H,V), b2:(V,).
    Returns logits (B, V) in `out_dtype` (f32 by default; bf16 halves the
    HBM writeback of the largest output).
    """
    B, C = idx.shape
    V, D = emb.shape
    H = w1.shape[1]
    assert w1.shape == (C * D, H) and w2.shape == (H, V)
    assert b1.shape == (H,) and b2.shape == (V,)

    kind = _device_kind()
    is_v7 = "v7" in kind
    if batch_tile is None:
        # v7x has 2 TensorCores: keep Bt=128 so the batch axis has >=2 tiles
        # for both cores; single-TC v5e/v6e collapse to one big 256-row tile
        # (no pipeline overhead, MXU gets M=256 rows).
        batch_tile = 128 if is_v7 else 256
    if vocab_tile is None:
        # Generation-aware cap on the fc2/logits vocab tile (v7x: 64 MiB VMEM).
        vocab_tile = 2048 if is_v7 else 4096

    # Pad the vocab dim up to a multiple of 128 so every vocab tile is
    # lane-dense; padded logits columns are sliced off at the end.
    V_pad = _round_up(V, 128)

    # bf16 weights for the MXU; f32 biases added post-matmul.
    emb_bf = emb.astype(jnp.bfloat16)
    w2_bf = w2.astype(jnp.bfloat16)
    b2_f = b2.reshape(1, V).astype(jnp.float32)
    if V_pad != V:
        emb_bf = jnp.pad(emb_bf, ((0, V_pad - V), (0, 0)))
        w2_bf = jnp.pad(w2_bf, ((0, 0), (0, V_pad - V)))
        b2_f = jnp.pad(b2_f, ((0, 0), (0, V_pad - V)))
    w1_bf = w1.astype(jnp.bfloat16)                       # (C*D, H), kept flat
    b1_f = b1.reshape(1, H).astype(jnp.float32)

    # Clamp ids so an out-of-range token cannot corrupt the gather.
    idx_i32 = jnp.clip(idx.astype(jnp.int32), 0, V - 1)

    # Batch tiling (keep the MXU fed with >=128 rows when possible).
    Bt = min(batch_tile, _round_up(B, 8))
    B_pad = _round_up(B, Bt)
    if B_pad != B:
        idx_i32 = jnp.pad(idx_i32, ((0, B_pad - B), (0, 0)))
    # Vocab tiling for fc2 / logits (lane-dense multiples of 128).
    Vt = _largest_divisor_tile(V_pad, vocab_tile)
    num_b, num_v = B_pad // Bt, V_pad // Vt

    # TODO(synk): for realistic vocab sizes (tens of thousands) the one-hot
    # gather is O(B*V) and the whole emb table should stay in HBM and be
    # gathered with scalar-prefetched ids (PrefetchScalarGridSpec + manual
    # make_async_copy); this whole-table-in-VMEM layout is sized for the toy
    # config only.

    out_itemsize = jnp.dtype(out_dtype).itemsize
    # Explicit VMEM budget: resident operands + scratch are single-buffered,
    # W2/b2/out streams are double-buffered. Cap per generation.
    resident_bytes = (emb_bf.size * 2 + w1_bf.size * 2 + b1_f.size * 4
                      + Bt * C * 4 * 2 + Bt * H * 2)
    streamed_bytes = 2 * (H * Vt * 2 + Vt * 4 + Bt * Vt * out_itemsize)
    vmem_cap = (48 << 20) if is_v7 else (100 << 20)
    vmem_limit = int(min(max(2 * (resident_bytes + streamed_bytes), 16 << 20),
                         vmem_cap))

    # NOTE: flops includes the artificial 2*B*C*V*D one-hot-gather term; drop
    # it if the gather is replaced by a DMA gather.
    flops = 2 * B_pad * (C * V_pad * D + C * D * H + H * V_pad)
    bytes_accessed = (idx_i32.size * 4 + emb_bf.size * 2 + w1_bf.size * 2
                      + w2_bf.size * 2 + b1_f.size * 4 + b2_f.size * 4
                      + B_pad * V_pad * out_itemsize)

    # Grid-resident operands: constant index_map -> a second pipeline buffer
    # is pure VMEM waste, so request a single buffer. If the fc2 stream also
    # has a single vocab tile, single-buffer it too.
    resident = pl.Buffered(1)
    stream = pl.Buffered(1) if num_v == 1 else pl.Buffered(2)

    out = pl.pallas_call(
        word_predictor_kernel,
        out_shape=jax.ShapeDtypeStruct((B_pad, V_pad), out_dtype),
        grid=(num_b, num_v),
        in_specs=[
            pl.BlockSpec((Bt, C), lambda b, v: (b, 0)),               # token ids
            pl.BlockSpec((V_pad, D), lambda b, v: (0, 0),
                         pipeline_mode=resident),                     # emb table
            pl.BlockSpec((C * D, H), lambda b, v: (0, 0),
                         pipeline_mode=resident),                     # W1
            pl.BlockSpec((1, H), lambda b, v: (0, 0),
                         pipeline_mode=resident),                     # b1
            pl.BlockSpec((H, Vt), lambda b, v: (0, v),
                         pipeline_mode=stream),                       # W2 tile
            pl.BlockSpec((1, Vt), lambda b, v: (0, v),
                         pipeline_mode=stream),                       # b2 tile
        ],
        out_specs=pl.BlockSpec((Bt, Vt), lambda b, v: (b, v)),
        scratch_shapes=[pltpu.VMEM((Bt, H), jnp.bfloat16)],
        compiler_params=pltpu.CompilerParams(
            # batch tiles are independent ("parallel"); vocab tiles must run
            # in order per batch tile because hidden activations are computed
            # at v==0 and reused from scratch ("arbitrary").
            dimension_semantics=("parallel", "arbitrary"),
            vmem_limit_bytes=vmem_limit,
        ),
        cost_estimate=pl.CostEstimate(
            flops=flops, transcendentals=0, bytes_accessed=bytes_accessed),
    )(idx_i32, emb_bf, w1_bf, b1_f, w2_bf, b2_f)

    return out[:B, :V]


def reference_forward(idx, emb, w1, b1, w2, b2):
    """Pure-JAX reference mirroring the kernel's bf16/f32 mixed precision."""
    B, C = idx.shape
    V, D = emb.shape
    emb_bf = emb.astype(jnp.bfloat16)
    w1_bf = w1.astype(jnp.bfloat16)
    w2_bf = w2.astype(jnp.bfloat16)
    x = emb_bf[jnp.clip(idx, 0, V - 1)].reshape(B, C * D)
    h = jnp.dot(x, w1_bf, preferred_element_type=jnp.float32) + b1.reshape(1, -1)
    h = jnp.maximum(h, 0.0).astype(jnp.bfloat16)
    return jnp.dot(h, w2_bf, preferred_element_type=jnp.float32) + b2.reshape(1, -1)


if __name__ == "__main__":
    # Deterministic synthetic setup (no checkpoint loading).
    vocab_size = 512          # stand-in for len(vocab) from the checkpoint
    embedding_dim = 64
    hidden_dim = 1024
    context_size = 3
    batch = 256               # single 256-row tile on single-TC chips

    key = jax.random.PRNGKey(0)
    k_emb, k_w1, k_b1, k_w2, k_b2, k_idx = jax.random.split(key, 6)

    in_dim = context_size * embedding_dim
    emb = jax.random.normal(k_emb, (vocab_size, embedding_dim), jnp.float32)
    # Linear weights stored (in, out) so the kernel computes x @ W + b.
    w1 = jax.random.normal(k_w1, (in_dim, hidden_dim), jnp.float32) / jnp.sqrt(in_dim)
    b1 = jax.random.normal(k_b1, (hidden_dim,), jnp.float32) * 0.01
    w2 = jax.random.normal(k_w2, (hidden_dim, vocab_size), jnp.float32) / jnp.sqrt(hidden_dim)
    b2 = jax.random.normal(k_b2, (vocab_size,), jnp.float32) * 0.01
    idx = jax.random.randint(k_idx, (batch, context_size), 0, vocab_size, jnp.int32)

    out = word_predictor_forward(idx, emb, w1, b1, w2, b2)
    out = jax.block_until_ready(out)

    ref = reference_forward(idx, emb, w1, b1, w2, b2)
    assert out.shape == (batch, vocab_size)
    assert out.dtype == jnp.float32
    max_err = float(jnp.max(jnp.abs(out - ref)))
    assert jnp.allclose(out, ref, atol=2e-2, rtol=2e-2), \
        f"mismatch vs JAX reference (max abs err {max_err})"

    print("KERNEL_OK")
</pallas_src>

<mosaic_0001>
module attributes {stable_mosaic.version = 11 : i64} {
  func.func @word_predictor_kernel(%arg0: i32, %arg1: i32, %arg2: memref<256x3xi32, #tpu.memory_space<vmem>>, %arg3: memref<512x64xbf16, #tpu.memory_space<vmem>>, %arg4: memref<192x1024xbf16, #tpu.memory_space<vmem>>, %arg5: memref<1x1024xf32, #tpu.memory_space<vmem>>, %arg6: memref<1024x512xbf16, #tpu.memory_space<vmem>>, %arg7: memref<1x512xf32, #tpu.memory_space<vmem>>, %arg8: memref<256x512xf32, #tpu.memory_space<vmem>>, %arg9: memref<256x1024xbf16, #tpu.memory_space<vmem>>) attributes {dimension_semantics = [#tpu.dimension_semantics<parallel>, #tpu.dimension_semantics<arbitrary>], iteration_bounds = array<i64: 1, 1>, scalar_prefetch = 0 : i64, scratch_operands = 1 : i64, tpu.core_type = #tpu.core_type<tc>, window_params = [{transform_indices = @transform_0, window_bounds = array<i64: 256, 3>}, {pipeline_mode = #tpu.pipeline_mode<synchronous>, transform_indices = @transform_1, window_bounds = array<i64: 512, 64>}, {pipeline_mode = #tpu.pipeline_mode<synchronous>, transform_indices = @transform_2, window_bounds = array<i64: 192, 1024>}, {pipeline_mode = #tpu.pipeline_mode<synchronous>, transform_indices = @transform_3, window_bounds = array<i64: 1, 1024>}, {pipeline_mode = #tpu.pipeline_mode<synchronous>, transform_indices = @transform_4, window_bounds = array<i64: 1024, 512>}, {pipeline_mode = #tpu.pipeline_mode<synchronous>, transform_indices = @transform_5, window_bounds = array<i64: 1, 512>}, {transform_indices = @transform_6, window_bounds = array<i64: 256, 512>}]} {
    %c0_i32 = arith.constant 0 : i32
    %0 = arith.cmpi eq, %arg1, %c0_i32 : i32
    %1 = arith.extui %0 : i1 to i32
    %c0_i32_0 = arith.constant 0 : i32
    %2 = arith.cmpi ne, %1, %c0_i32_0 : i32
    scf.if %2 {
      %c0_8 = arith.constant 0 : index
      %c0_9 = arith.constant 0 : index
      %10 = vector.load %arg2[%c0_8, %c0_9] : memref<256x3xi32, #tpu.memory_space<vmem>>, vector<256x3xi32>
      %11 = tpu.iota {dimensions = array<i32: 1>} : vector<256x512xi32>
      %12 = vector.extract_strided_slice %10 {offsets = [0, 0], sizes = [256, 1], strides = [1, 1]} : vector<256x3xi32> to vector<256x1xi32>
      %13 = vector.broadcast %12 : vector<256x1xi32> to vector<256x512xi32>
      %14 = arith.cmpi eq, %11, %13 : vector<256x512xi32>
      %15 = arith.extui %14 : vector<256x512xi1> to vector<256x512xi32>
      %16 = arith.sitofp %15 : vector<256x512xi32> to vector<256x512xf32>
      %17 = arith.truncf %16 : vector<256x512xf32> to vector<256x512xbf16>
      %18 = vector.extract_strided_slice %10 {offsets = [0, 1], sizes = [256, 1], strides = [1, 1]} : vector<256x3xi32> to vector<256x1xi32>
      %19 = vector.broadcast %18 : vector<256x1xi32> to vector<256x512xi32>
      %20 = arith.cmpi eq, %11, %19 : vector<256x512xi32>
      %21 = arith.extui %20 : vector<256x512xi1> to vector<256x512xi32>
      %22 = arith.sitofp %21 : vector<256x512xi32> to vector<256x512xf32>
      %23 = arith.truncf %22 : vector<256x512xf32> to vector<256x512xbf16>
      %24 = vector.extract_strided_slice %10 {offsets = [0, 2], sizes = [256, 1], strides = [1, 1]} : vector<256x3xi32> to vector<256x1xi32>
      %25 = vector.broadcast %24 : vector<256x1xi32> to vector<256x512xi32>
      %26 = arith.cmpi eq, %11, %25 : vector<256x512xi32>
      %27 = arith.extui %26 : vector<256x512xi1> to vector<256x512xi32>
      %28 = arith.sitofp %27 : vector<256x512xi32> to vector<256x512xf32>
      %29 = arith.truncf %28 : vector<256x512xf32> to vector<256x512xbf16>
      %30 = tpu.concatenate %17, %23, %29 in 0 : vector<256x512xbf16>, vector<256x512xbf16>, vector<256x512xbf16> -> vector<768x512xbf16>
      %c0_10 = arith.constant 0 : index
      %c0_11 = arith.constant 0 : index
      %31 = vector.load %arg3[%c0_10, %c0_11] : memref<512x64xbf16, #tpu.memory_space<vmem>>, vector<512x64xbf16>
      %cst_12 = arith.constant dense<0.000000e+00> : vector<768x64xf32>
      %32 = tpu.matmul %30, %31, %cst_12 {dimension_numbers = #tpu.dot_dimension_numbers<[1], [0], [0], [1], [0, 0, 1, 1], [], []>} : vector<768x512xbf16>, vector<512x64xbf16>, vector<768x64xf32> -> vector<768x64xf32>
      %33 = vector.extract_strided_slice %32 {offsets = [0, 0], sizes = [256, 64], strides = [1, 1]} : vector<768x64xf32> to vector<256x64xf32>
      %34 = vector.extract_strided_slice %32 {offsets = [256, 0], sizes = [256, 64], strides = [1, 1]} : vector<768x64xf32> to vector<256x64xf32>
      %35 = vector.extract_strided_slice %32 {offsets = [512, 0], sizes = [256, 64], strides = [1, 1]} : vector<768x64xf32> to vector<256x64xf32>
      %36 = tpu.concatenate %33, %34, %35 in 1 : vector<256x64xf32>, vector<256x64xf32>, vector<256x64xf32> -> vector<256x192xf32>
      %37 = arith.truncf %36 : vector<256x192xf32> to vector<256x192xbf16>
      %c0_13 = arith.constant 0 : index
      %c0_14 = arith.constant 0 : index
      %38 = vector.load %arg4[%c0_13, %c0_14] : memref<192x1024xbf16, #tpu.memory_space<vmem>>, vector<192x1024xbf16>
      %cst_15 = arith.constant dense<0.000000e+00> : vector<256x1024xf32>
      %39 = tpu.matmul %37, %38, %cst_15 {dimension_numbers = #tpu.dot_dimension_numbers<[1], [0], [0], [1], [0, 0, 1, 1], [], []>} : vector<256x192xbf16>, vector<192x1024xbf16>, vector<256x1024xf32> -> vector<256x1024xf32>
      %c0_16 = arith.constant 0 : index
      %c0_17 = arith.constant 0 : index
      %40 = vector.load %arg5[%c0_16, %c0_17] : memref<1x1024xf32, #tpu.memory_space<vmem>>, vector<1x1024xf32>
      %41 = vector.broadcast %40 : vector<1x1024xf32> to vector<256x1024xf32>
      %42 = arith.addf %39, %41 : vector<256x1024xf32>
      %cst_18 = arith.constant 0.000000e+00 : f32
      %43 = vector.broadcast %cst_18 : f32 to vector<256x1024xf32>
      %44 = arith.maximumf %42, %43 : vector<256x1024xf32>
      %45 = arith.truncf %44 : vector<256x1024xf32> to vector<256x1024xbf16>
      %c0_19 = arith.constant 0 : index
      %c0_20 = arith.constant 0 : index
      %46 = vector.load %arg9[%c0_19, %c0_20] : memref<256x1024xbf16, #tpu.memory_space<vmem>>, vector<256x1024xbf16>
      tpu.vector_store %arg9[%c0_19, %c0_20], %45 {strides = array<i32>} : memref<256x1024xbf16, #tpu.memory_space<vmem>>, vector<256x1024xbf16>,
    } else {
    }
    %c0 = arith.constant 0 : index
    %c0_1 = arith.constant 0 : index
    %3 = vector.load %arg9[%c0, %c0_1] : memref<256x1024xbf16, #tpu.memory_space<vmem>>, vector<256x1024xbf16>
    %c0_2 = arith.constant 0 : index
    %c0_3 = arith.constant 0 : index
    %4 = vector.load %arg6[%c0_2, %c0_3] : memref<1024x512xbf16, #tpu.memory_space<vmem>>, vector<1024x512xbf16>
    %cst = arith.constant dense<0.000000e+00> : vector<256x512xf32>
    %5 = tpu.matmul %3, %4, %cst {dimension_numbers = #tpu.dot_dimension_numbers<[1], [0], [0], [1], [0, 0, 1, 1], [], []>} : vector<256x1024xbf16>, vector<1024x512xbf16>, vector<256x512xf32> -> vector<256x512xf32>
    %c0_4 = arith.constant 0 : index
    %c0_5 = arith.constant 0 : index
    %6 = vector.load %arg7[%c0_4, %c0_5] : memref<1x512xf32, #tpu.memory_space<vmem>>, vector<1x512xf32>
    %7 = vector.broadcast %6 : vector<1x512xf32> to vector<256x512xf32>
    %8 = arith.addf %5, %7 : vector<256x512xf32>
    %c0_6 = arith.constant 0 : index
    %c0_7 = arith.constant 0 : index
    %9 = vector.load %arg8[%c0_6, %c0_7] : memref<256x512xf32, #tpu.memory_space<vmem>>, vector<256x512xf32>
    tpu.vector_store %arg8[%c0_6, %c0_7], %8 {strides = array<i32>} : memref<256x512xf32, #tpu.memory_space<vmem>>, vector<256x512xf32>,
    return
  }
  func.func @transform_0(%arg0: i32, %arg1: i32) -> (i32, i32) {
    %c0_i32 = arith.constant 0 : i32
    %c0_i32_0 = arith.constant 0 : i32
    return %arg0, %c0_i32 : i32, i32
  }
  func.func @transform_1(%arg0: i32, %arg1: i32) -> (i32, i32) {
    %c0_i32 = arith.constant 0 : i32
    %c0_i32_0 = arith.constant 0 : i32
    %c0_i32_1 = arith.constant 0 : i32
    return %c0_i32, %c0_i32_0 : i32, i32
  }
  func.func @transform_2(%arg0: i32, %arg1: i32) -> (i32, i32) {
    %c0_i32 = arith.constant 0 : i32
    %c0_i32_0 = arith.constant 0 : i32
    %c0_i32_1 = arith.constant 0 : i32
    return %c0_i32, %c0_i32_0 : i32, i32
  }
  func.func @transform_3(%arg0: i32, %arg1: i32) -> (i32, i32) {
    %c0_i32 = arith.constant 0 : i32
    %c0_i32_0 = arith.constant 0 : i32
    %c0_i32_1 = arith.constant 0 : i32
    return %c0_i32, %c0_i32_0 : i32, i32
  }
  func.func @transform_4(%arg0: i32, %arg1: i32) -> (i32, i32) {
    %c0_i32 = arith.constant 0 : i32
    %c0_i32_0 = arith.constant 0 : i32
    return %c0_i32, %arg1 : i32, i32
  }
  func.func @transform_5(%arg0: i32, %arg1: i32) -> (i32, i32) {
    %c0_i32 = arith.constant 0 : i32
    %c0_i32_0 = arith.constant 0 : i32
    return %c0_i32, %arg1 : i32, i32
  }
  func.func @transform_6(%arg0: i32, %arg1: i32) -> (i32, i32) {
    %c0_i32 = arith.constant 0 : i32
    return %arg0, %arg1 : i32, i32
  }
}

</mosaic_0001>

<llo_original>
// kernel: tpu_custom_call.1
$region0: #{tpu_custom_call.1}
  #allocation0 [shape = 'u32[]', space=smem, size = 0x4, offset = 0x4, fixed_abs, tag = 'smem constant byte address 0x4 - core index']
  #allocation1 [shape = 'u32[144,128]{1,0:T(1,128)}', space=vmem, size = 0x12000, scoped, tag = 'internal scratch']
  #allocation2 [shape = 'bf16[256,1024]{1,0:T(16,128)(2,1)}', space=vmem, size = 0x80000, scoped, tag = 'scratch operand']
  %s0 = inlined_call_operand.vmem [shape: s32[256,3], index: 0, kind: input, shape index: {}]
  %s1 = inlined_call_operand.vmem [shape: bf16[512,64], index: 1, kind: input, shape index: {}]
  %s2 = inlined_call_operand.hbm [shape: bf16[192,1024], index: 2, kind: input, shape index: {}]
  %s3 = inlined_call_operand.vmem [shape: f32[1,1024], index: 3, kind: input, shape index: {}]
  %s4 = inlined_call_operand.hbm [shape: bf16[1024,512], index: 4, kind: input, shape index: {}]
  %s5 = inlined_call_operand.vmem [shape: f32[1,512], index: 5, kind: input, shape index: {}]
  %s6 = inlined_call_operand.hbm [shape: f32[256,512], index: 6, kind: output, shape index: {}]
  %s7 = sld [smem:[#allocation0]]
  $region46: #{tpu_custom_call.1} parent=0
    _
  %s9 = ssub.s32 1, %s7
  %s10 = scalar_select 0, %s9, %s7
  $region1: #{tpu_custom_call.1} parent=0
    #allocation3 [shape = 'u8[393216]{0}', space=vmem, size = 0x60000, scoped, tag = 'input window, operand 2, single buffered']
    #allocation4 [shape = 's32[1]{0}', space=sflag, size = 0x4, scoped, tag = 'scoped memory for tpu_custom_call.1']
    #allocation5 [shape = 's32[1]{0}', space=sflag, size = 0x4, scoped, tag = 'scoped memory for tpu_custom_call.1']
    #allocation6 [shape = 'u8[1048576]{0}', space=vmem, size = 0x100000, scoped, tag = 'input window, operand 4, single buffered']
    #allocation7 [shape = 's32[1]{0}', space=sflag, size = 0x4, scoped, tag = 'scoped memory for tpu_custom_call.1']
    #allocation8 [shape = 'u8[524288]{0}', space=vmem, size = 0x80000, scoped, tag = 'output window, operand 0, single buffered']
    %11 = vsyncpa [#allocation4], 0
    %12 = vsyncpa [#allocation7], 0
    %13 = vsyncpa [#allocation5], 0
    // Predicated region
    $region2: #{tpu_custom_call.1} parent=1 // pred_check
      _
    $region3: #{tpu_custom_call.1} parent=1 // pred_check_branch
      %15 = sbr.rel (0) target = $region5
    $region4: #{tpu_custom_call.1} parent=1 // pred_region
      _
    $region5: #{tpu_custom_call.1} parent=1 // pred_fallthru
      _
    // Predicated region
    $region6: #{tpu_custom_call.1} parent=1 // pred_check
      _
    $region7: #{tpu_custom_call.1} parent=1 // pred_check_branch
      %17 = sbr.rel (0) target = $region9
    $region8: #{tpu_custom_call.1} parent=1 // pred_region
      _
    $region9: #{tpu_custom_call.1} parent=1 // pred_fallthru
      _
    // Predicated region
    $region10: #{tpu_custom_call.1} parent=1 // pred_check
      _
    $region11: #{tpu_custom_call.1} parent=1 // pred_check_branch
      %19 = sbr.rel (0) target = $region13
    $region12: #{tpu_custom_call.1} parent=1 // pred_region
      %s21 = ssub.s32 12288, 12288
      %22 = vsyncadd [#allocation4], %s21
      %s23 = sshll.u32 [#allocation3], 4
      %s24 = int_to_ptr.vmem [resolvable:$true] %s23
      %29 = dma.hbm_to_vmem [thread:$0]  %s2, 12288, %s24, [#allocation4], 512, 512, 32
    $region13: #{tpu_custom_call.1} parent=1 // pred_fallthru
      _
    // Predicated region
    $region14: #{tpu_custom_call.1} parent=1 // pred_check
      _
    $region15: #{tpu_custom_call.1} parent=1 // pred_check_branch
      %31 = sbr.rel (0) target = $region17
    $region16: #{tpu_custom_call.1} parent=1 // pred_region
      _
    $region17: #{tpu_custom_call.1} parent=1 // pred_fallthru
      _
    // Predicated region
    $region18: #{tpu_custom_call.1} parent=1 // pred_check
      _
    $region19: #{tpu_custom_call.1} parent=1 // pred_check_branch
      %33 = sbr.rel (0) target = $region21
    $region20: #{tpu_custom_call.1} parent=1 // pred_region
      %s35 = ssub.s32 32768, 32768
      %36 = vsyncadd [#allocation7], %s35
      %s37 = sshll.u32 [#allocation6], 4
      %s38 = int_to_ptr.vmem [resolvable:$true] %s37
      %43 = dma.hbm_to_vmem [thread:$0]  %s4, 32768, %s38, [#allocation7], 256, 256, 16
    $region21: #{tpu_custom_call.1} parent=1 // pred_fallthru
      _
    // Predicated region
    $region22: #{tpu_custom_call.1} parent=1 // pred_check
      _
    $region23: #{tpu_custom_call.1} parent=1 // pred_check_branch
      %45 = sbr.rel (0) target = $region25
    $region24: #{tpu_custom_call.1} parent=1 // pred_region
      _
    $region25: #{tpu_custom_call.1} parent=1 // pred_fallthru
      _
    // Predicated region
    $region26: #{tpu_custom_call.1} parent=1 // pred_check
      _
    $region27: #{tpu_custom_call.1} parent=1 // pred_check_branch
      %47 = sbr.rel (0) target = $region29
    $region28: #{tpu_custom_call.1} parent=1 // pred_region
      %48 = dma.done [#allocation4], 12288
    $region29: #{tpu_custom_call.1} parent=1 // pred_fallthru
      _
    // Predicated region
    $region30: #{tpu_custom_call.1} parent=1 // pred_check
      _
    $region31: #{tpu_custom_call.1} parent=1 // pred_check_branch
      %50 = sbr.rel (0) target = $region33
    $region32: #{tpu_custom_call.1} parent=1 // pred_region
      %51 = dma.done [#allocation7], 32768
    $region33: #{tpu_custom_call.1} parent=1 // pred_fallthru
      _
    %p53 = scmp.eq.s32.totalorder 0, 0
    // Predicated region
    $region34: #{tpu_custom_call.1} parent=1 // pred_check
      %p54 = pneg %p53
    $region35: #{tpu_custom_call.1} parent=1 // pred_check_branch
      %56 = sbr.rel (%p54) target = $region37
    $region36: #{tpu_custom_call.1} parent=1 // pred_region
      %v57 = vld [vmem:[%s0] sm:$0xff]
      %v58 = vld [vmem:[%s0 + $0x8] sm:$0xff]
      %v59 = vld [vmem:[%s0 + $0x10] sm:$0xff]
      %v60 = vld [vmem:[%s0 + $0x18] sm:$0xff]
      %v61 = vld [vmem:[%s0 + $0x20] sm:$0xff]
      %v62 = vld [vmem:[%s0 + $0x28] sm:$0xff]
      %v63 = vld [vmem:[%s0 + $0x30] sm:$0xff]
      %v64 = vld [vmem:[%s0 + $0x38] sm:$0xff]
      %v65 = vld [vmem:[%s0 + $0x40] sm:$0xff]
      %v66 = vld [vmem:[%s0 + $0x48] sm:$0xff]
      %v67 = vld [vmem:[%s0 + $0x50] sm:$0xff]
      %v68 = vld [vmem:[%s0 + $0x58] sm:$0xff]
      %v69 = vld [vmem:[%s0 + $0x60] sm:$0xff]
      %v70 = vld [vmem:[%s0 + $0x68] sm:$0xff]
      %v71 = vld [vmem:[%s0 + $0x70] sm:$0xff]
      %v72 = vld [vmem:[%s0 + $0x78] sm:$0xff]
      %v73 = vld [vmem:[%s0 + $0x80] sm:$0xff]
      %v74 = vld [vmem:[%s0 + $0x88] sm:$0xff]
      %v75 = vld [vmem:[%s0 + $0x90] sm:$0xff]
      %v76 = vld [vmem:[%s0 + $0x98] sm:$0xff]
      %v77 = vld [vmem:[%s0 + $0xa0] sm:$0xff]
      %v78 = vld [vmem:[%s0 + $0xa8] sm:$0xff]
      %v79 = vld [vmem:[%s0 + $0xb0] sm:$0xff]
      %v80 = vld [vmem:[%s0 + $0xb8] sm:$0xff]
      %v81 = vld [vmem:[%s0 + $0xc0] sm:$0xff]
      %v82 = vld [vmem:[%s0 + $0xc8] sm:$0xff]
      %v83 = vld [vmem:[%s0 + $0xd0] sm:$0xff]
      %v84 = vld [vmem:[%s0 + $0xd8] sm:$0xff]
      %v85 = vld [vmem:[%s0 + $0xe0] sm:$0xff]
      %v86 = vld [vmem:[%s0 + $0xe8] sm:$0xff]
      %v87 = vld [vmem:[%s0 + $0xf0] sm:$0xff]
      %v88 = vld [vmem:[%s0 + $0xf8] sm:$0xff]
      %v89 = vlaneseq
      %v90 = vand.u32 %v89, 127
      %v91 = vadd.s32 %v90, 128
      %v92 = vadd.s32 %v90, 256
      %v93 = vadd.s32 %v90, 384
      %94 = vset.pattern.permute.xlu0 0
      %95 = vperm.xlu0 %94, %v57
      %v96 = vpop.permute.xlu0 %95
      %97 = vset.pattern.permute.xlu0 0
      %98 = vperm.xlu0 %97, %v58
      %v99 = vpop.permute.xlu0 %98
      %100 = vset.pattern.permute.xlu0 0
      %101 = vperm.xlu0 %100, %v59
      %v102 = vpop.permute.xlu0 %101
      %103 = vset.pattern.permute.xlu0 0
      %104 = vperm.xlu0 %103, %v60
      %v105 = vpop.permute.xlu0 %104
      %106 = vset.pattern.permute.xlu0 0
      %107 = vperm.xlu0 %106, %v61
      %v108 = vpop.permute.xlu0 %107
      %109 = vset.pattern.permute.xlu0 0
      %110 = vperm.xlu0 %109, %v62
      %v111 = vpop.permute.xlu0 %110
      %112 = vset.pattern.permute.xlu0 0
      %113 = vperm.xlu0 %112, %v63
      %v114 = vpop.permute.xlu0 %113
      %115 = vset.pattern.permute.xlu0 0
      %116 = vperm.xlu0 %115, %v64
      %v117 = vpop.permute.xlu0 %116
      %118 = vset.pattern.permute.xlu0 0
      %119 = vperm.xlu0 %118, %v65
      %v120 = vpop.permute.xlu0 %119
      %121 = vset.pattern.permute.xlu0 0
      %122 = vperm.xlu0 %121, %v66
      %v123 = vpop.permute.xlu0 %122
      %124 = vset.pattern.permute.xlu0 0
      %125 = vperm.xlu0 %124, %v67
      %v126 = vpop.permute.xlu0 %125
      %127 = vset.pattern.permute.xlu0 0
      %128 = vperm.xlu0 %127, %v68
      %v129 = vpop.permute.xlu0 %128
      %130 = vset.pattern.permute.xlu0 0
      %131 = vperm.xlu0 %130, %v69
      %v132 = vpop.permute.xlu0 %131
      %133 = vset.pattern.permute.xlu0 0
      %134 = vperm.xlu0 %133, %v70
      %v135 = vpop.permute.xlu0 %134
      %136 = vset.pattern.permute.xlu0 0
      %137 = vperm.xlu0 %136, %v71
      %v138 = vpop.permute.xlu0 %137
      %139 = vset.pattern.permute.xlu0 0
      %140 = vperm.xlu0 %139, %v72
      %v141 = vpop.permute.xlu0 %140
      %142 = vset.pattern.permute.xlu0 0
      %143 = vperm.xlu0 %142, %v73
      %v144 = vpop.permute.xlu0 %143
      %145 = vset.pattern.permute.xlu0 0
      %146 = vperm.xlu0 %145, %v74
      %v147 = vpop.permute.xlu0 %146
      %148 = vset.pattern.permute.xlu0 0
      %149 = vperm.xlu0 %148, %v75
      %v150 = vpop.permute.xlu0 %149
      %151 = vset.pattern.permute.xlu0 0
      %152 = vperm.xlu0 %151, %v76
      %v153 = vpop.permute.xlu0 %152
      %154 = vset.pattern.permute.xlu0 0
      %155 = vperm.xlu0 %154, %v77
      %v156 = vpop.permute.xlu0 %155
      %157 = vset.pattern.permute.xlu0 0
      %158 = vperm.xlu0 %157, %v78
      %v159 = vpop.permute.xlu0 %158
      %160 = vset.pattern.permute.xlu0 0
      %161 = vperm.xlu0 %160, %v79
      %v162 = vpop.permute.xlu0 %161
      %163 = vset.pattern.permute.xlu0 0
      %164 = vperm.xlu0 %163, %v80
      %v165 = vpop.permute.xlu0 %164
      %166 = vset.pattern.permute.xlu0 0
      %167 = vperm.xlu0 %166, %v81
      %v168 = vpop.permute.xlu0 %167
      %169 = vset.pattern.permute.xlu0 0
      %170 = vperm.xlu0 %169, %v82
      %v171 = vpop.permute.xlu0 %170
      %172 = vset.pattern.permute.xlu0 0
      %173 = vperm.xlu0 %172, %v83
      %v174 = vpop.permute.xlu0 %173
      %175 = vset.pattern.permute.xlu0 0
      %176 = vperm.xlu0 %175, %v84
      %v177 = vpop.permute.xlu0 %176
      %178 = vset.pattern.permute.xlu0 0
      %179 = vperm.xlu0 %178, %v85
      %v180 = vpop.permute.xlu0 %179
      %181 = vset.pattern.permute.xlu0 0
      %182 = vperm.xlu0 %181, %v86
      %v183 = vpop.permute.xlu0 %182
      %184 = vset.pattern.permute.xlu0 0
      %185 = vperm.xlu0 %184, %v87
      %v186 = vpop.permute.xlu0 %185
      %187 = vset.pattern.permute.xlu0 0
      %188 = vperm.xlu0 %187, %v88
      %v189 = vpop.permute.xlu0 %188
      %vm190 = vcmp.eq.s32.totalorder %v90, %v96
      %vm191 = vcmp.eq.s32.totalorder %v91, %v96
      %vm192 = vcmp.eq.s32.totalorder %v92, %v96
      %vm193 = vcmp.eq.s32.totalorder %v93, %v96
      %vm194 = vcmp.eq.s32.totalorder %v90, %v99
      %vm195 = vcmp.eq.s32.totalorder %v91, %v99
      %vm196 = vcmp.eq.s32.totalorder %v92, %v99
      %vm197 = vcmp.eq.s32.totalorder %v93, %v99
      %vm198 = vcmp.eq.s32.totalorder %v90, %v102
      %vm199 = vcmp.eq.s32.totalorder %v91, %v102
      %vm200 = vcmp.eq.s32.totalorder %v92, %v102
      %vm201 = vcmp.eq.s32.totalorder %v93, %v102
      %vm202 = vcmp.eq.s32.totalorder %v90, %v105
      %vm203 = vcmp.eq.s32.totalorder %v91, %v105
      %vm204 = vcmp.eq.s32.totalorder %v92, %v105
      %vm205 = vcmp.eq.s32.totalorder %v93, %v105
      %vm206 = vcmp.eq.s32.totalorder %v90, %v108
      %vm207 = vcmp.eq.s32.totalorder %v91, %v108
      %vm208 = vcmp.eq.s32.totalorder %v92, %v108
      %vm209 = vcmp.eq.s32.totalorder %v93, %v108
      %vm210 = vcmp.eq.s32.totalorder %v90, %v111
      %vm211 = vcmp.eq.s32.totalorder %v91, %v111
      %vm212 = vcmp.eq.s32.totalorder %v92, %v111
      %vm213 = vcmp.eq.s32.totalorder %v93, %v111
      %vm214 = vcmp.eq.s32.totalorder %v90, %v114
      %vm215 = vcmp.eq.s32.totalorder %v91, %v114
      %vm216 = vcmp.eq.s32.totalorder %v92, %v114
      %vm217 = vcmp.eq.s32.totalorder %v93, %v114
      %vm218 = vcmp.eq.s32.totalorder %v90, %v117
      %vm219 = vcmp.eq.s32.totalorder %v91, %v117
      %vm220 = vcmp.eq.s32.totalorder %v92, %v117
      %vm221 = vcmp.eq.s32.totalorder %v93, %v117
      %vm222 = vcmp.eq.s32.totalorder %v90, %v120
      %vm223 = vcmp.eq.s32.totalorder %v91, %v120
      %vm224 = vcmp.eq.s32.totalorder %v92, %v120
      %vm225 = vcmp.eq.s32.totalorder %v93, %v120
      %vm226 = vcmp.eq.s32.totalorder %v90, %v123
      %vm227 = vcmp.eq.s32.totalorder %v91, %v123
      %vm228 = vcmp.eq.s32.totalorder %v92, %v123
      %vm229 = vcmp.eq.s32.totalorder %v93, %v123
      %vm230 = vcmp.eq.s32.totalorder %v90, %v126
      %vm231 = vcmp.eq.s32.totalorder %v91, %v126
      %vm232 = vcmp.eq.s32.totalorder %v92, %v126
      %vm233 = vcmp.eq.s32.totalorder %v93, %v126
      %vm234 = vcmp.eq.s32.totalorder %v90, %v129
      %vm235 = vcmp.eq.s32.totalorder %v91, %v129
      %vm236 = vcmp.eq.s32.totalorder %v92, %v129
      %vm237 = vcmp.eq.s32.totalorder %v93, %v129
      %vm238 = vcmp.eq.s32.totalorder %v90, %v132
      %vm239 = vcmp.eq.s32.totalorder %v91, %v132
      %vm240 = vcmp.eq.s32.totalorder %v92, %v132
      %vm241 = vcmp.eq.s32.totalorder %v93, %v132
      %vm242 = vcmp.eq.s32.totalorder %v90, %v135
      %vm243 = vcmp.eq.s32.totalorder %v91, %v135
      %vm244 = vcmp.eq.s32.totalorder %v92, %v135
      %vm245 = vcmp.eq.s32.totalorder %v93, %v135
      %vm246 = vcmp.eq.s32.totalorder %v90, %v138
      %vm247 = vcmp.eq.s32.totalorder %v91, %v138
      %vm248 = vcmp.eq.s32.totalorder %v92, %v138
      %vm249 = vcmp.eq.s32.totalorder %v93, %v138
      %vm250 = vcmp.eq.s32.totalorder %v90, %v141
      %vm251 = vcmp.eq.s32.totalorder %v91, %v141
      %vm252 = vcmp.eq.s32.totalorder %v92, %v141
      %vm253 = vcmp.eq.s32.totalorder %v93, %v141
      %vm254 = vcmp.eq.s32.totalorder %v90, %v144
      %vm255 = vcmp.eq.s32.totalorder %v91, %v144
      %vm256 = vcmp.eq.s32.totalorder %v92, %v144
      %vm257 = vcmp.eq.s32.totalorder %v93, %v144
      %vm258 = vcmp.eq.s32.totalorder %v90, %v147
      %vm259 = vcmp.eq.s32.totalorder %v91, %v147
      %vm260 = vcmp.eq.s32.totalorder %v92, %v147
      %vm261 = vcmp.eq.s32.totalorder %v93, %v147
      %vm262 = vcmp.eq.s32.totalorder %v90, %v150
      %vm263 = vcmp.eq.s32.totalorder %v91, %v150
      %vm264 = vcmp.eq.s32.totalorder %v92, %v150
      %vm265 = vcmp.eq.s32.totalorder %v93, %v150
      %vm266 = vcmp.eq.s32.totalorder %v90, %v153
      %vm267 = vcmp.eq.s32.totalorder %v91, %v153
      %vm268 = vcmp.eq.s32.totalorder %v92, %v153
      %vm269 = vcmp.eq.s32.totalorder %v93, %v153
      %vm270 = vcmp.eq.s32.totalorder %v90, %v156
      %vm271 = vcmp.eq.s32.totalorder %v91, %v156
      %vm272 = vcmp.eq.s32.totalorder %v92, %v156
      %vm273 = vcmp.eq.s32.totalorder %v93, %v156
      %vm274 = vcmp.eq.s32.totalorder %v90, %v159
      %vm275 = vcmp.eq.s32.totalorder %v91, %v159
      %vm276 = vcmp.eq.s32.totalorder %v92, %v159
      %vm277 = vcmp.eq.s32.totalorder %v93, %v159
      %vm278 = vcmp.eq.s32.totalorder %v90, %v162
      %vm279 = vcmp.eq.s32.totalorder %v91, %v162
      %vm280 = vcmp.eq.s32.totalorder %v92, %v162
      %vm281 = vcmp.eq.s32.totalorder %v93, %v162
      %vm282 = vcmp.eq.s32.totalorder %v90, %v165
      %vm283 = vcmp.eq.s32.totalorder %v91, %v165
      %vm284 = vcmp.eq.s32.totalorder %v92, %v165
      %vm285 = vcmp.eq.s32.totalorder %v93, %v165
      %vm286 = vcmp.eq.s32.totalorder %v90, %v168
      %vm287 = vcmp.eq.s32.totalorder %v91, %v168
      %vm288 = vcmp.eq.s32.totalorder %v92, %v168
      %vm289 = vcmp.eq.s32.totalorder %v93, %v168
      %vm290 = vcmp.eq.s32.totalorder %v90, %v171
      %vm291 = vcmp.eq.s32.totalorder %v91, %v171
      %vm292 = vcmp.eq.s32.totalorder %v92, %v171
      %vm293 = vcmp.eq.s32.totalorder %v93, %v171
      %vm294 = vcmp.eq.s32.totalorder %v90, %v174
      %vm295 = vcmp.eq.s32.totalorder %v91, %v174
      %vm296 = vcmp.eq.s32.totalorder %v92, %v174
      %vm297 = vcmp.eq.s32.totalorder %v93, %v174
      %vm298 = vcmp.eq.s32.totalorder %v90, %v177
      %vm299 = vcmp.eq.s32.totalorder %v91, %v177
      %vm300 = vcmp.eq.s32.totalorder %v92, %v177
      %vm301 = vcmp.eq.s32.totalorder %v93, %v177
      %vm302 = vcmp.eq.s32.totalorder %v90, %v180
      %vm303 = vcmp.eq.s32.totalorder %v91, %v180
      %vm304 = vcmp.eq.s32.totalorder %v92, %v180
      %vm305 = vcmp.eq.s32.totalorder %v93, %v180
      %vm306 = vcmp.eq.s32.totalorder %v90, %v183
      %vm307 = vcmp.eq.s32.totalorder %v91, %v183
      %vm308 = vcmp.eq.s32.totalorder %v92, %v183
      %vm309 = vcmp.eq.s32.totalorder %v93, %v183
      %vm310 = vcmp.eq.s32.totalorder %v90, %v186
      %vm311 = vcmp.eq.s32.totalorder %v91, %v186
      %vm312 = vcmp.eq.s32.totalorder %v92, %v186
      %vm313 = vcmp.eq.s32.totalorder %v93, %v186
      %vm314 = vcmp.eq.s32.totalorder %v90, %v189
      %vm315 = vcmp.eq.s32.totalorder %v91, %v189
      %vm316 = vcmp.eq.s32.totalorder %v92, %v189
      %vm317 = vcmp.eq.s32.totalorder %v93, %v189
      %v318 = vsel %vm190, 1, 0
      %v319 = vsel %vm191, 1, 0
      %v320 = vsel %vm192, 1, 0
      %v321 = vsel %vm193, 1, 0
      %v322 = vsel %vm194, 1, 0
      %v323 = vsel %vm195, 1, 0
      %v324 = vsel %vm196, 1, 0
      %v325 = vsel %vm197, 1, 0
      %v326 = vsel %vm198, 1, 0
      %v327 = vsel %vm199, 1, 0
      %v328 = vsel %vm200, 1, 0
      %v329 = vsel %vm201, 1, 0
      %v330 = vsel %vm202, 1, 0
      %v331 = vsel %vm203, 1, 0
      %v332 = vsel %vm204, 1, 0
      %v333 = vsel %vm205, 1, 0
      %v334 = vsel %vm206, 1, 0
      %v335 = vsel %vm207, 1, 0
      %v336 = vsel %vm208, 1, 0
      %v337 = vsel %vm209, 1, 0
      %v338 = vsel %vm210, 1, 0
      %v339 = vsel %vm211, 1, 0
      %v340 = vsel %vm212, 1, 0
      %v341 = vsel %vm213, 1, 0
      %v342 = vsel %vm214, 1, 0
      %v343 = vsel %vm215, 1, 0
      %v344 = vsel %vm216, 1, 0
      %v345 = vsel %vm217, 1, 0
      %v346 = vsel %vm218, 1, 0
      %v347 = vsel %vm219, 1, 0
      %v348 = vsel %vm220, 1, 0
      %v349 = vsel %vm221, 1, 0
      %v350 = vsel %vm222, 1, 0
      %v351 = vsel %vm223, 1, 0
      %v352 = vsel %vm224, 1, 0
      %v353 = vsel %vm225, 1, 0
      %v354 = vsel %vm226, 1, 0
      %v355 = vsel %vm227, 1, 0
      %v356 = vsel %vm228, 1, 0
      %v357 = vsel %vm229, 1, 0
      %v358 = vsel %vm230, 1, 0
      %v359 = vsel %vm231, 1, 0
      %v360 = vsel %vm232, 1, 0
      %v361 = vsel %vm233, 1, 0
      %v362 = vsel %vm234, 1, 0
      %v363 = vsel %vm235, 1, 0
      %v364 = vsel %vm236, 1, 0
      %v365 = vsel %vm237, 1, 0
      %v366 = vsel %vm238, 1, 0
      %v367 = vsel %vm239, 1, 0
      %v368 = vsel %vm240, 1, 0
      %v369 = vsel %vm241, 1, 0
      %v370 = vsel %vm242, 1, 0
      %v371 = vsel %vm243, 1, 0
      %v372 = vsel %vm244, 1, 0
      %v373 = vsel %vm245, 1, 0
      %v374 = vsel %vm246, 1, 0
      %v375 = vsel %vm247, 1, 0
      %v376 = vsel %vm248, 1, 0
      %v377 = vsel %vm249, 1, 0
      %v378 = vsel %vm250, 1, 0
      %v379 = vsel %vm251, 1, 0
      %v380 = vsel %vm252, 1, 0
      %v381 = vsel %vm253, 1, 0
      %v382 = vsel %vm254, 1, 0
      %v383 = vsel %vm255, 1, 0
      %v384 = vsel %vm256, 1, 0
      %v385 = vsel %vm257, 1, 0
      %v386 = vsel %vm258, 1, 0
      %v387 = vsel %vm259, 1, 0
      %v388 = vsel %vm260, 1, 0
      %v389 = vsel %vm261, 1, 0
      %v390 = vsel %vm262, 1, 0
      %v391 = vsel %vm263, 1, 0
      %v392 = vsel %vm264, 1, 0
      %v393 = vsel %vm265, 1, 0
      %v394 = vsel %vm266, 1, 0
      %v395 = vsel %vm267, 1, 0
      %v396 = vsel %vm268, 1, 0
      %v397 = vsel %vm269, 1, 0
      %v398 = vsel %vm270, 1, 0
      %v399 = vsel %vm271, 1, 0
      %v400 = vsel %vm272, 1, 0
      %v401 = vsel %vm273, 1, 0
      %v402 = vsel %vm274, 1, 0
      %v403 = vsel %vm275, 1, 0
      %v404 = vsel %vm276, 1, 0
      %v405 = vsel %vm277, 1, 0
      %v406 = vsel %vm278, 1, 0
      %v407 = vsel %vm279, 1, 0
      %v408 = vsel %vm280, 1, 0
      %v409 = vsel %vm281, 1, 0
      %v410 = vsel %vm282, 1, 0
      %v411 = vsel %vm283, 1, 0
      %v412 = vsel %vm284, 1, 0
      %v413 = vsel %vm285, 1, 0
      %v414 = vsel %vm286, 1, 0
      %v415 = vsel %vm287, 1, 0
      %v416 = vsel %vm288, 1, 0
      %v417 = vsel %vm289, 1, 0
      %v418 = vsel %vm290, 1, 0
      %v419 = vsel %vm291, 1, 0
      %v420 = vsel %vm292, 1, 0
      %v421 = vsel %vm293, 1, 0
      %v422 = vsel %vm294, 1, 0
      %v423 = vsel %vm295, 1, 0
      %v424 = vsel %vm296, 1, 0
      %v425 = vsel %vm297, 1, 0
      %v426 = vsel %vm298, 1, 0
      %v427 = vsel %vm299, 1, 0
      %v428 = vsel %vm300, 1, 0
      %v429 = vsel %vm301, 1, 0
      %v430 = vsel %vm302, 1, 0
      %v431 = vsel %vm303, 1, 0
      %v432 = vsel %vm304, 1, 0
      %v433 = vsel %vm305, 1, 0
      %v434 = vsel %vm306, 1, 0
      %v435 = vsel %vm307, 1, 0
      %v436 = vsel %vm308, 1, 0
      %v437 = vsel %vm309, 1, 0
      %v438 = vsel %vm310, 1, 0
      %v439 = vsel %vm311, 1, 0
      %v440 = vsel %vm312, 1, 0
      %v441 = vsel %vm313, 1, 0
      %v442 = vsel %vm314, 1, 0
      %v443 = vsel %vm315, 1, 0
      %v444 = vsel %vm316, 1, 0
      %v445 = vsel %vm317, 1, 0
      %v446 = vcvt.s32.f32 %v318
      %v447 = vcvt.s32.f32 %v319
      %v448 = vcvt.s32.f32 %v320
      %v449 = vcvt.s32.f32 %v321
      %v450 = vcvt.s32.f32 %v322
      %v451 = vcvt.s32.f32 %v323
      %v452 = vcvt.s32.f32 %v324
      %v453 = vcvt.s32.f32 %v325
      %v454 = vcvt.s32.f32 %v326
      %v455 = vcvt.s32.f32 %v327
      %v456 = vcvt.s32.f32 %v328
      %v457 = vcvt.s32.f32 %v329
      %v458 = vcvt.s32.f32 %v330
      %v459 = vcvt.s32.f32 %v331
      %v460 = vcvt.s32.f32 %v332
      %v461 = vcvt.s32.f32 %v333
      %v462 = vcvt.s32.f32 %v334
      %v463 = vcvt.s32.f32 %v335
      %v464 = vcvt.s32.f32 %v336
      %v465 = vcvt.s32.f32 %v337
      %v466 = vcvt.s32.f32 %v338
      %v467 = vcvt.s32.f32 %v339
      %v468 = vcvt.s32.f32 %v340
      %v469 = vcvt.s32.f32 %v341
      %v470 = vcvt.s32.f32 %v342
      %v471 = vcvt.s32.f32 %v343
      %v472 = vcvt.s32.f32 %v344
      %v473 = vcvt.s32.f32 %v345
      %v474 = vcvt.s32.f32 %v346
      %v475 = vcvt.s32.f32 %v347
      %v476 = vcvt.s32.f32 %v348
      %v477 = vcvt.s32.f32 %v349
      %v478 = vcvt.s32.f32 %v350
      %v479 = vcvt.s32.f32 %v351
      %v480 = vcvt.s32.f32 %v352
      %v481 = vcvt.s32.f32 %v353
      %v482 = vcvt.s32.f32 %v354
      %v483 = vcvt.s32.f32 %v355
      %v484 = vcvt.s32.f32 %v356
      %v485 = vcvt.s32.f32 %v357
      %v486 = vcvt.s32.f32 %v358
      %v487 = vcvt.s32.f32 %v359
      %v488 = vcvt.s32.f32 %v360
      %v489 = vcvt.s32.f32 %v361
      %v490 = vcvt.s32.f32 %v362
      %v491 = vcvt.s32.f32 %v363
      %v492 = vcvt.s32.f32 %v364
      %v493 = vcvt.s32.f32 %v365
      %v494 = vcvt.s32.f32 %v366
      %v495 = vcvt.s32.f32 %v367
      %v496 = vcvt.s32.f32 %v368
      %v497 = vcvt.s32.f32 %v369
      %v498 = vcvt.s32.f32 %v370
      %v499 = vcvt.s32.f32 %v371
      %v500 = vcvt.s32.f32 %v372
      %v501 = vcvt.s32.f32 %v373
      %v502 = vcvt.s32.f32 %v374
      %v503 = vcvt.s32.f32 %v375
      %v504 = vcvt.s32.f32 %v376
      %v505 = vcvt.s32.f32 %v377
      %v506 = vcvt.s32.f32 %v378
      %v507 = vcvt.s32.f32 %v379
      %v508 = vcvt.s32.f32 %v380
      %v509 = vcvt.s32.f32 %v381
      %v510 = vcvt.s32.f32 %v382
      %v511 = vcvt.s32.f32 %v383
      %v512 = vcvt.s32.f32 %v384
      %v513 = vcvt.s32.f32 %v385
      %v514 = vcvt.s32.f32 %v386
      %v515 = vcvt.s32.f32 %v387
      %v516 = vcvt.s32.f32 %v388
      %v517 = vcvt.s32.f32 %v389
      %v518 = vcvt.s32.f32 %v390
      %v519 = vcvt.s32.f32 %v391
      %v520 = vcvt.s32.f32 %v392
      %v521 = vcvt.s32.f32 %v393
      %v522 = vcvt.s32.f32 %v394
      %v523 = vcvt.s32.f32 %v395
      %v524 = vcvt.s32.f32 %v396
      %v525 = vcvt.s32.f32 %v397
      %v526 = vcvt.s32.f32 %v398
      %v527 = vcvt.s32.f32 %v399
      %v528 = vcvt.s32.f32 %v400
      %v529 = vcvt.s32.f32 %v401
      %v530 = vcvt.s32.f32 %v402
      %v531 = vcvt.s32.f32 %v403
      %v532 = vcvt.s32.f32 %v404
      %v533 = vcvt.s32.f32 %v405
      %v534 = vcvt.s32.f32 %v406
      %v535 = vcvt.s32.f32 %v407
      %v536 = vcvt.s32.f32 %v408
      %v537 = vcvt.s32.f32 %v409
      %v538 = vcvt.s32.f32 %v410
      %v539 = vcvt.s32.f32 %v411
      %v540 = vcvt.s32.f32 %v412
      %v541 = vcvt.s32.f32 %v413
      %v542 = vcvt.s32.f32 %v414
      %v543 = vcvt.s32.f32 %v415
      %v544 = vcvt.s32.f32 %v416
      %v545 = vcvt.s32.f32 %v417
      %v546 = vcvt.s32.f32 %v418
      %v547 = vcvt.s32.f32 %v419
      %v548 = vcvt.s32.f32 %v420
      %v549 = vcvt.s32.f32 %v421
      %v550 = vcvt.s32.f32 %v422
      %v551 = vcvt.s32.f32 %v423
      %v552 = vcvt.s32.f32 %v424
      %v553 = vcvt.s32.f32 %v425
      %v554 = vcvt.s32.f32 %v426
      %v555 = vcvt.s32.f32 %v427
      %v556 = vcvt.s32.f32 %v428
      %v557 = vcvt.s32.f32 %v429
      %v558 = vcvt.s32.f32 %v430
      %v559 = vcvt.s32.f32 %v431
      %v560 = vcvt.s32.f32 %v432
      %v561 = vcvt.s32.f32 %v433
      %v562 = vcvt.s32.f32 %v434
      %v563 = vcvt.s32.f32 %v435
      %v564 = vcvt.s32.f32 %v436
      %v565 = vcvt.s32.f32 %v437
      %v566 = vcvt.s32.f32 %v438
      %v567 = vcvt.s32.f32 %v439
      %v568 = vcvt.s32.f32 %v440
      %v569 = vcvt.s32.f32 %v441
      %v570 = vcvt.s32.f32 %v442
      %v571 = vcvt.s32.f32 %v443
      %v572 = vcvt.s32.f32 %v444
      %v573 = vcvt.s32.f32 %v445
      %v574 = vpack.c.bf16 %v450, %v446
      %v575 = vpack.c.bf16 %v451, %v447
      %v576 = vpack.c.bf16 %v452, %v448
      %v577 = vpack.c.bf16 %v453, %v449
      %v578 = vpack.c.bf16 %v458, %v454
      %v579 = vpack.c.bf16 %v459, %v455
      %v580 = vpack.c.bf16 %v460, %v456
      %v581 = vpack.c.bf16 %v461, %v457
      %v582 = vpack.c.bf16 %v466, %v462
      %v583 = vpack.c.bf16 %v467, %v463
      %v584 = vpack.c.bf16 %v468, %v464
      %v585 = vpack.c.bf16 %v469, %v465
      %v586 = vpack.c.bf16 %v474, %v470
      %v587 = vpack.c.bf16 %v475, %v471
      %v588 = vpack.c.bf16 %v476, %v472
      %v589 = vpack.c.bf16 %v477, %v473
      %v590 = vpack.c.bf16 %v482, %v478
      %v591 = vpack.c.bf16 %v483, %v479
      %v592 = vpack.c.bf16 %v484, %v480
      %v593 = vpack.c.bf16 %v485, %v481
      %v594 = vpack.c.bf16 %v490, %v486
      %v595 = vpack.c.bf16 %v491, %v487
      %v596 = vpack.c.bf16 %v492, %v488
      %v597 = vpack.c.bf16 %v493, %v489
      %v598 = vpack.c.bf16 %v498, %v494
      %v599 = vpack.c.bf16 %v499, %v495
      %v600 = vpack.c.bf16 %v500, %v496
      %v601 = vpack.c.bf16 %v501, %v497
      %v602 = vpack.c.bf16 %v506, %v502
      %v603 = vpack.c.bf16 %v507, %v503
      %v604 = vpack.c.bf16 %v508, %v504
      %v605 = vpack.c.bf16 %v509, %v505
      %v606 = vpack.c.bf16 %v514, %v510
      %v607 = vpack.c.bf16 %v515, %v511
      %v608 = vpack.c.bf16 %v516, %v512
      %v609 = vpack.c.bf16 %v517, %v513
      %v610 = vpack.c.bf16 %v522, %v518
      %v611 = vpack.c.bf16 %v523, %v519
      %v612 = vpack.c.bf16 %v524, %v520
      %v613 = vpack.c.bf16 %v525, %v521
      %v614 = vpack.c.bf16 %v530, %v526
      %v615 = vpack.c.bf16 %v531, %v527
      %v616 = vpack.c.bf16 %v532, %v528
      %v617 = vpack.c.bf16 %v533, %v529
      %v618 = vpack.c.bf16 %v538, %v534
      %v619 = vpack.c.bf16 %v539, %v535
      %v620 = vpack.c.bf16 %v540, %v536
      %v621 = vpack.c.bf16 %v541, %v537
      %v622 = vpack.c.bf16 %v546, %v542
      %v623 = vpack.c.bf16 %v547, %v543
      %v624 = vpack.c.bf16 %v548, %v544
      %v625 = vpack.c.bf16 %v549, %v545
      %v626 = vpack.c.bf16 %v554, %v550
      %v627 = vpack.c.bf16 %v555, %v551
      %v628 = vpack.c.bf16 %v556, %v552
      %v629 = vpack.c.bf16 %v557, %v553
      %v630 = vpack.c.bf16 %v562, %v558
      %v631 = vpack.c.bf16 %v563, %v559
      %v632 = vpack.c.bf16 %v564, %v560
      %v633 = vpack.c.bf16 %v565, %v561
      %v634 = vpack.c.bf16 %v570, %v566
      %v635 = vpack.c.bf16 %v571, %v567
      %v636 = vpack.c.bf16 %v572, %v568
      %v637 = vpack.c.bf16 %v573, %v569
      %638 = vset.pattern.permute.xlu0 1
      %639 = vperm.xlu0 %638, %v57
      %v640 = vpop.permute.xlu0 %639
      %641 = vset.pattern.permute.xlu0 1
      %642 = vperm.xlu0 %641, %v58
      %v643 = vpop.permute.xlu0 %642
      %644 = vset.pattern.permute.xlu0 1
      %645 = vperm.xlu0 %644, %v59
      %v646 = vpop.permute.xlu0 %645
      %647 = vset.pattern.permute.xlu0 1
      %648 = vperm.xlu0 %647, %v60
      %v649 = vpop.permute.xlu0 %648
      %650 = vset.pattern.permute.xlu0 1
      %651 = vperm.xlu0 %650, %v61
      %v652 = vpop.permute.xlu0 %651
      %653 = vset.pattern.permute.xlu0 1
      %654 = vperm.xlu0 %653, %v62
      %v655 = vpop.permute.xlu0 %654
      %656 = vset.pattern.permute.xlu0 1
      %657 = vperm.xlu0 %656, %v63
      %v658 = vpop.permute.xlu0 %657
      %659 = vset.pattern.permute.xlu0 1
      %660 = vperm.xlu0 %659, %v64
      %v661 = vpop.permute.xlu0 %660
      %662 = vset.pattern.permute.xlu0 1
      %663 = vperm.xlu0 %662, %v65
      %v664 = vpop.permute.xlu0 %663
      %665 = vset.pattern.permute.xlu0 1
      %666 = vperm.xlu0 %665, %v66
      %v667 = vpop.permute.xlu0 %666
      %668 = vset.pattern.permute.xlu0 1
      %669 = vperm.xlu0 %668, %v67
      %v670 = vpop.permute.xlu0 %669
      %671 = vset.pattern.permute.xlu0 1
      %672 = vperm.xlu0 %671, %v68
      %v673 = vpop.permute.xlu0 %672
      %674 = vset.pattern.permute.xlu0 1
      %675 = vperm.xlu0 %674, %v69
      %v676 = vpop.permute.xlu0 %675
      %677 = vset.pattern.permute.xlu0 1
      %678 = vperm.xlu0 %677, %v70
      %v679 = vpop.permute.xlu0 %678
      %680 = vset.pattern.permute.xlu0 1
      %681 = vperm.xlu0 %680, %v71
      %v682 = vpop.permute.xlu0 %681
      %683 = vset.pattern.permute.xlu0 1
      %684 = vperm.xlu0 %683, %v72
      %v685 = vpop.permute.xlu0 %684
      %686 = vset.pattern.permute.xlu0 1
      %687 = vperm.xlu0 %686, %v73
      %v688 = vpop.permute.xlu0 %687
      %689 = vset.pattern.permute.xlu0 1
      %690 = vperm.xlu0 %689, %v74
      %v691 = vpop.permute.xlu0 %690
      %692 = vset.pattern.permute.xlu0 1
      %693 = vperm.xlu0 %692, %v75
      %v694 = vpop.permute.xlu0 %693
      %695 = vset.pattern.permute.xlu0 1
      %696 = vperm.xlu0 %695, %v76
      %v697 = vpop.permute.xlu0 %696
      %698 = vset.pattern.permute.xlu0 1
      %699 = vperm.xlu0 %698, %v77
      %v700 = vpop.permute.xlu0 %699
      %701 = vset.pattern.permute.xlu0 1
      %702 = vperm.xlu0 %701, %v78
      %v703 = vpop.permute.xlu0 %702
      %704 = vset.pattern.permute.xlu0 1
      %705 = vperm.xlu0 %704, %v79
      %v706 = vpop.permute.xlu0 %705
      %707 = vset.pattern.permute.xlu0 1
      %708 = vperm.xlu0 %707, %v80
      %v709 = vpop.permute.xlu0 %708
      %710 = vset.pattern.permute.xlu0 1
      %711 = vperm.xlu0 %710, %v81
      %v712 = vpop.permute.xlu0 %711
      %713 = vset.pattern.permute.xlu0 1
      %714 = vperm.xlu0 %713, %v82
      %v715 = vpop.permute.xlu0 %714
      %716 = vset.pattern.permute.xlu0 1
      %717 = vperm.xlu0 %716, %v83
      %v718 = vpop.permute.xlu0 %717
      %719 = vset.pattern.permute.xlu0 1
      %720 = vperm.xlu0 %719, %v84
      %v721 = vpop.permute.xlu0 %720
      %722 = vset.pattern.permute.xlu0 1
      %723 = vperm.xlu0 %722, %v85
      %v724 = vpop.permute.xlu0 %723
      %725 = vset.pattern.permute.xlu0 1
      %726 = vperm.xlu0 %725, %v86
      %v727 = vpop.permute.xlu0 %726
      %728 = vset.pattern.permute.xlu0 1
      %729 = vperm.xlu0 %728, %v87
      %v730 = vpop.permute.xlu0 %729
      %731 = vset.pattern.permute.xlu0 1
      %732 = vperm.xlu0 %731, %v88
      %v733 = vpop.permute.xlu0 %732
      %vm734 = vcmp.eq.s32.totalorder %v90, %v640
      %vm735 = vcmp.eq.s32.totalorder %v91, %v640
      %vm736 = vcmp.eq.s32.totalorder %v92, %v640
      %vm737 = vcmp.eq.s32.totalorder %v93, %v640
      %vm738 = vcmp.eq.s32.totalorder %v90, %v643
      %vm739 = vcmp.eq.s32.totalorder %v91, %v643
      %vm740 = vcmp.eq.s32.totalorder %v92, %v643
      %vm741 = vcmp.eq.s32.totalorder %v93, %v643
      %vm742 = vcmp.eq.s32.totalorder %v90, %v646
      %vm743 = vcmp.eq.s32.totalorder %v91, %v646
      %vm744 = vcmp.eq.s32.totalorder %v92, %v646
      %vm745 = vcmp.eq.s32.totalorder %v93, %v646
      %vm746 = vcmp.eq.s32.totalorder %v90, %v649
      %vm747 = vcmp.eq.s32.totalorder %v91, %v649
      %vm748 = vcmp.eq.s32.totalorder %v92, %v649
      %vm749 = vcmp.eq.s32.totalorder %v93, %v649
      %vm750 = vcmp.eq.s32.totalorder %v90, %v652
      %vm751 = vcmp.eq.s32.totalorder %v91, %v652
      %vm752 = vcmp.eq.s32.totalorder %v92, %v652
      %vm753 = vcmp.eq.s32.totalorder %v93, %v652
      %vm754 = vcmp.eq.s32.totalorder %v90, %v655
      %vm755 = vcmp.eq.s32.totalorder %v91, %v655
      %vm756 = vcmp.eq.s32.totalorder %v92, %v655
      %vm757 = vcmp.eq.s32.totalorder %v93, %v655
      %vm758 = vcmp.eq.s32.totalorder %v90, %v658
      %vm759 = vcmp.eq.s32.totalorder %v91, %v658
      %vm760 = vcmp.eq.s32.totalorder %v92, %v658
      %vm761 = vcmp.eq.s32.totalorder %v93, %v658
      %vm762 = vcmp.eq.s32.totalorder %v90, %v661
      %vm763 = vcmp.eq.s32.totalorder %v91, %v661
      %vm764 = vcmp.eq.s32.totalorder %v92, %v661
      %vm765 = vcmp.eq.s32.totalorder %v93, %v661
      %vm766 = vcmp.eq.s32.totalorder %v90, %v664
      %vm767 = vcmp.eq.s32.totalorder %v91, %v664
      %vm768 = vcmp.eq.s32.totalorder %v92, %v664
      %vm769 = vcmp.eq.s32.totalorder %v93, %v664
      %vm770 = vcmp.eq.s32.totalorder %v90, %v667
      %vm771 = vcmp.eq.s32.totalorder %v91, %v667
      %vm772 = vcmp.eq.s32.totalorder %v92, %v667
      %vm773 = vcmp.eq.s32.totalorder %v93, %v667
      %vm774 = vcmp.eq.s32.totalorder %v90, %v670
      %vm775 = vcmp.eq.s32.totalorder %v91, %v670
      %vm776 = vcmp.eq.s32.totalorder %v92, %v670
      %vm777 = vcmp.eq.s32.totalorder %v93, %v670
      %vm778 = vcmp.eq.s32.totalorder %v90, %v673
      %vm779 = vcmp.eq.s32.totalorder %v91, %v673
      %vm780 = vcmp.eq.s32.totalorder %v92, %v673
      %vm781 = vcmp.eq.s32.totalorder %v93, %v673
      %vm782 = vcmp.eq.s32.totalorder %v90, %v676
      %vm783 = vcmp.eq.s32.totalorder %v91, %v676
      %vm784 = vcmp.eq.s32.totalorder %v92, %v676
      %vm785 = vcmp.eq.s32.totalorder %v93, %v676
      %vm786 = vcmp.eq.s32.totalorder %v90, %v679
      %vm787 = vcmp.eq.s32.totalorder %v91, %v679
      %vm788 = vcmp.eq.s32.totalorder %v92, %v679
      %vm789 = vcmp.eq.s32.totalorder %v93, %v679
      %vm790 = vcmp.eq.s32.totalorder %v90, %v682
      %vm791 = vcmp.eq.s32.totalorder %v91, %v682
      %vm792 = vcmp.eq.s32.totalorder %v92, %v682
      %vm793 = vcmp.eq.s32.totalorder %v93, %v682
      %vm794 = vcmp.eq.s32.totalorder %v90, %v685
      %vm795 = vcmp.eq.s32.totalorder %v91, %v685
      %vm796 = vcmp.eq.s32.totalorder %v92, %v685
      %vm797 = vcmp.eq.s32.totalorder %v93, %v685
      %vm798 = vcmp.eq.s32.totalorder %v90, %v688
      %vm799 = vcmp.eq.s32.totalorder %v91, %v688
      %vm800 = vcmp.eq.s32.totalorder %v92, %v688
      %vm801 = vcmp.eq.s32.totalorder %v93, %v688
      %vm802 = vcmp.eq.s32.totalorder %v90, %v691
      %vm803 = vcmp.eq.s32.totalorder %v91, %v691
      %vm804 = vcmp.eq.s32.totalorder %v92, %v691
      %vm805 = vcmp.eq.s32.totalorder %v93, %v691
      %vm806 = vcmp.eq.s32.totalorder %v90, %v694
      %vm807 = vcmp.eq.s32.totalorder %v91, %v694
      %vm808 = vcmp.eq.s32.totalorder %v92, %v694
      %vm809 = vcmp.eq.s32.totalorder %v93, %v694
      %vm810 = vcmp.eq.s32.totalorder %v90, %v697
      %vm811 = vcmp.eq.s32.totalorder %v91, %v697
      %vm812 = vcmp.eq.s32.totalorder %v92, %v697
      %vm813 = vcmp.eq.s32.totalorder %v93, %v697
      %vm814 = vcmp.eq.s32.totalorder %v90, %v700
      %vm815 = vcmp.eq.s32.totalorder %v91, %v700
      %vm816 = vcmp.eq.s32.totalorder %v92, %v700
      %vm817 = vcmp.eq.s32.totalorder %v93, %v700
      %vm818 = vcmp.eq.s32.totalorder %v90, %v703
      %vm819 = vcmp.eq.s32.totalorder %v91, %v703
      %vm820 = vcmp.eq.s32.totalorder %v92, %v703
      %vm821 = vcmp.eq.s32.totalorder %v93, %v703
      %vm822 = vcmp.eq.s32.totalorder %v90, %v706
      %vm823 = vcmp.eq.s32.totalorder %v91, %v706
      %vm824 = vcmp.eq.s32.totalorder %v92, %v706
      %vm825 = vcmp.eq.s32.totalorder %v93, %v706
      %vm826 = vcmp.eq.s32.totalorder %v90, %v709
      %vm827 = vcmp.eq.s32.totalorder %v91, %v709
      %vm828 = vcmp.eq.s32.totalorder %v92, %v709
      %vm829 = vcmp.eq.s32.totalorder %v93, %v709
      %vm830 = vcmp.eq.s32.totalorder %v90, %v712
      %vm831 = vcmp.eq.s32.totalorder %v91, %v712
      %vm832 = vcmp.eq.s32.totalorder %v92, %v712
      %vm833 = vcmp.eq.s32.totalorder %v93, %v712
      %vm834 = vcmp.eq.s32.totalorder %v90, %v715
      %vm835 = vcmp.eq.s32.totalorder %v91, %v715
      %vm836 = vcmp.eq.s32.totalorder %v92, %v715
      %vm837 = vcmp.eq.s32.totalorder %v93, %v715
      %vm838 = vcmp.eq.s32.totalorder %v90, %v718
      %vm839 = vcmp.eq.s32.totalorder %v91, %v718
      %vm840 = vcmp.eq.s32.totalorder %v92, %v718
      %vm841 = vcmp.eq.s32.totalorder %v93, %v718
      %vm842 = vcmp.eq.s32.totalorder %v90, %v721
      %vm843 = vcmp.eq.s32.totalorder %v91, %v721
      %vm844 = vcmp.eq.s32.totalorder %v92, %v721
      %vm845 = vcmp.eq.s32.totalorder %v93, %v721
      %vm846 = vcmp.eq.s32.totalorder %v90, %v724
      %vm847 = vcmp.eq.s32.totalorder %v91, %v724
      %vm848 = vcmp.eq.s32.totalorder %v92, %v724
      %vm849 = vcmp.eq.s32.totalorder %v93, %v724
      %vm850 = vcmp.eq.s32.totalorder %v90, %v727
      %vm851 = vcmp.eq.s32.totalorder %v91, %v727
      %vm852 = vcmp.eq.s32.totalorder %v92, %v727
      %vm853 = vcmp.eq.s32.totalorder %v93, %v727
      %vm854 = vcmp.eq.s32.totalorder %v90, %v730
      %vm855 = vcmp.eq.s32.totalorder %v91, %v730
      %vm856 = vcmp.eq.s32.totalorder %v92, %v730
      %vm857 = vcmp.eq.s32.totalorder %v93, %v730
      %vm858 = vcmp.eq.s32.totalorder %v90, %v733
      %vm859 = vcmp.eq.s32.totalorder %v91, %v733
      %vm860 = vcmp.eq.s32.totalorder %v92, %v733
      %vm861 = vcmp.eq.s32.totalorder %v93, %v733
      %v862 = vsel %vm734, 1, 0
      %v863 = vsel %vm735, 1, 0
      %v864 = vsel %vm736, 1, 0
      %v865 = vsel %vm737, 1, 0
      %v866 = vsel %vm738, 1, 0
      %v867 = vsel %vm739, 1, 0
      %v868 = vsel %vm740, 1, 0
      %v869 = vsel %vm741, 1, 0
      %v870 = vsel %vm742, 1, 0
      %v871 = vsel %vm743, 1, 0
      %v872 = vsel %vm744, 1, 0
      %v873 = vsel %vm745, 1, 0
      %v874 = vsel %vm746, 1, 0
      %v875 = vsel %vm747, 1, 0
      %v876 = vsel %vm748, 1, 0
      %v877 = vsel %vm749, 1, 0
      %v878 = vsel %vm750, 1, 0
      %v879 = vsel %vm751, 1, 0
      %v880 = vsel %vm752, 1, 0
      %v881 = vsel %vm753, 1, 0
      %v882 = vsel %vm754, 1, 0
      %v883 = vsel %vm755, 1, 0
      %v884 = vsel %vm756, 1, 0
      %v885 = vsel %vm757, 1, 0
      %v886 = vsel %vm758, 1, 0
      %v887 = vsel %vm759, 1, 0
      %v888 = vsel %vm760, 1, 0
      %v889 = vsel %vm761, 1, 0
      %v890 = vsel %vm762, 1, 0
      %v891 = vsel %vm763, 1, 0
      %v892 = vsel %vm764, 1, 0
      %v893 = vsel %vm765, 1, 0
      %v894 = vsel %vm766, 1, 0
      %v895 = vsel %vm767, 1, 0
      %v896 = vsel %vm768, 1, 0
      %v897 = vsel %vm769, 1, 0
      %v898 = vsel %vm770, 1, 0
      %v899 = vsel %vm771, 1, 0
      %v900 = vsel %vm772, 1, 0
      %v901 = vsel %vm773, 1, 0
      %v902 = vsel %vm774, 1, 0
      %v903 = vsel %vm775, 1, 0
      %v904 = vsel %vm776, 1, 0
      %v905 = vsel %vm777, 1, 0
      %v906 = vsel %vm778, 1, 0
      %v907 = vsel %vm779, 1, 0
      %v908 = vsel %vm780, 1, 0
      %v909 = vsel %vm781, 1, 0
      %v910 = vsel %vm782, 1, 0
      %v911 = vsel %vm783, 1, 0
      %v912 = vsel %vm784, 1, 0
      %v913 = vsel %vm785, 1, 0
      %v914 = vsel %vm786, 1, 0
      %v915 = vsel %vm787, 1, 0
      %v916 = vsel %vm788, 1, 0
      %v917 = vsel %vm789, 1, 0
      %v918 = vsel %vm790, 1, 0
      %v919 = vsel %vm791, 1, 0
      %v920 = vsel %vm792, 1, 0
      %v921 = vsel %vm793, 1, 0
      %v922 = vsel %vm794, 1, 0
      %v923 = vsel %vm795, 1, 0
      %v924 = vsel %vm796, 1, 0
      %v925 = vsel %vm797, 1, 0
      %v926 = vsel %vm798, 1, 0
      %v927 = vsel %vm799, 1, 0
      %v928 = vsel %vm800, 1, 0
      %v929 = vsel %vm801, 1, 0
      %v930 = vsel %vm802, 1, 0
      %v931 = vsel %vm803, 1, 0
      %v932 = vsel %vm804, 1, 0
      %v933 = vsel %vm805, 1, 0
      %v934 = vsel %vm806, 1, 0
      %v935 = vsel %vm807, 1, 0
      %v936 = vsel %vm808, 1, 0
      %v937 = vsel %vm809, 1, 0
      %v938 = vsel %vm810, 1, 0
      %v939 = vsel %vm811, 1, 0
      %v940 = vsel %vm812, 1, 0
      %v941 = vsel %vm813, 1, 0
      %v942 = vsel %vm814, 1, 0
      %v943 = vsel %vm815, 1, 0
      %v944 = vsel %vm816, 1, 0
      %v945 = vsel %vm817, 1, 0
      %v946 = vsel %vm818, 1, 0
      %v947 = vsel %vm819, 1, 0
      %v948 = vsel %vm820, 1, 0
      %v949 = vsel %vm821, 1, 0
      %v950 = vsel %vm822, 1, 0
      %v951 = vsel %vm823, 1, 0
      %v952 = vsel %vm824, 1, 0
      %v953 = vsel %vm825, 1, 0
      %v954 = vsel %vm826, 1, 0
      %v955 = vsel %vm827, 1, 0
      %v956 = vsel %vm828, 1, 0
      %v957 = vsel %vm829, 1, 0
      %v958 = vsel %vm830, 1, 0
      %v959 = vsel %vm831, 1, 0
      %v960 = vsel %vm832, 1, 0
      %v961 = vsel %vm833, 1, 0
      %v962 = vsel %vm834, 1, 0
      %v963 = vsel %vm835, 1, 0
      %v964 = vsel %vm836, 1, 0
      %v965 = vsel %vm837, 1, 0
      %v966 = vsel %vm838, 1, 0
      %v967 = vsel %vm839, 1, 0
      %v968 = vsel %vm840, 1, 0
      %v969 = vsel %vm841, 1, 0
      %v970 = vsel %vm842, 1, 0
      %v971 = vsel %vm843, 1, 0
      %v972 = vsel %vm844, 1, 0
      %v973 = vsel %vm845, 1, 0
      %v974 = vsel %vm846, 1, 0
      %v975 = vsel %vm847, 1, 0
      %v976 = vsel %vm848, 1, 0
      %v977 = vsel %vm849, 1, 0
      %v978 = vsel %vm850, 1, 0
      %v979 = vsel %vm851, 1, 0
      %v980 = vsel %vm852, 1, 0
      %v981 = vsel %vm853, 1, 0
      %v982 = vsel %vm854, 1, 0
      %v983 = vsel %vm855, 1, 0
      %v984 = vsel %vm856, 1, 0
      %v985 = vsel %vm857, 1, 0
      %v986 = vsel %vm858, 1, 0
      %v987 = vsel %vm859, 1, 0
      %v988 = vsel %vm860, 1, 0
      %v989 = vsel %vm861, 1, 0
      %v990 = vcvt.s32.f32 %v862
      %v991 = vcvt.s32.f32 %v863
      %v992 = vcvt.s32.f32 %v864
      %v993 = vcvt.s32.f32 %v865
      %v994 = vcvt.s32.f32 %v866
      %v995 = vcvt.s32.f32 %v867
      %v996 = vcvt.s32.f32 %v868
      %v997 = vcvt.s32.f32 %v869
      %v998 = vcvt.s32.f32 %v870
      %v999 = vcvt.s32.f32 %v871
      %v1000 = vcvt.s32.f32 %v872
      %v1001 = vcvt.s32.f32 %v873
      %v1002 = vcvt.s32.f32 %v874
      %v1003 = vcvt.s32.f32 %v875
      %v1004 = vcvt.s32.f32 %v876
      %v1005 = vcvt.s32.f32 %v877
      %v1006 = vcvt.s32.f32 %v878
      %v1007 = vcvt.s32.f32 %v879
      %v1008 = vcvt.s32.f32 %v880
      %v1009 = vcvt.s32.f32 %v881
      %v1010 = vcvt.s32.f32 %v882
      %v1011 = vcvt.s32.f32 %v883
      %v1012 = vcvt.s32.f32 %v884
      %v1013 = vcvt.s32.f32 %v885
      %v1014 = vcvt.s32.f32 %v886
      %v1015 = vcvt.s32.f32 %v887
      %v1016 = vcvt.s32.f32 %v888
      %v1017 = vcvt.s32.f32 %v889
      %v1018 = vcvt.s32.f32 %v890
      %v1019 = vcvt.s32.f32 %v891
      %v1020 = vcvt.s32.f32 %v892
      %v1021 = vcvt.s32.f32 %v893
      %v1022 = vcvt.s32.f32 %v894
      %v1023 = vcvt.s32.f32 %v895
      %v1024 = vcvt.s32.f32 %v896
      %v1025 = vcvt.s32.f32 %v897
      %v1026 = vcvt.s32.f32 %v898
      %v1027 = vcvt.s32.f32 %v899
      %v1028 = vcvt.s32.f32 %v900
      %v1029 = vcvt.s32.f32 %v901
      %v1030 = vcvt.s32.f32 %v902
      %v1031 = vcvt.s32.f32 %v903
      %v1032 = vcvt.s32.f32 %v904
      %v1033 = vcvt.s32.f32 %v905
      %v1034 = vcvt.s32.f32 %v906
      %v1035 = vcvt.s32.f32 %v907
      %v1036 = vcvt.s32.f32 %v908
      %v1037 = vcvt.s32.f32 %v909
      %v1038 = vcvt.s32.f32 %v910
      %v1039 = vcvt.s32.f32 %v911
      %v1040 = vcvt.s32.f32 %v912
      %v1041 = vcvt.s32.f32 %v913
      %v1042 = vcvt.s32.f32 %v914
      %v1043 = vcvt.s32.f32 %v915
      %v1044 = vcvt.s32.f32 %v916
      %v1045 = vcvt.s32.f32 %v917
      %v1046 = vcvt.s32.f32 %v918
      %v1047 = vcvt.s32.f32 %v919
      %v1048 = vcvt.s32.f32 %v920
      %v1049 = vcvt.s32.f32 %v921
      %v1050 = vcvt.s32.f32 %v922
      %v1051 = vcvt.s32.f32 %v923
      %v1052 = vcvt.s32.f32 %v924
      %v1053 = vcvt.s32.f32 %v925
      %v1054 = vcvt.s32.f32 %v926
      %v1055 = vcvt.s32.f32 %v927
      %v1056 = vcvt.s32.f32 %v928
      %v1057 = vcvt.s32.f32 %v929
      %v1058 = vcvt.s32.f32 %v930
      %v1059 = vcvt.s32.f32 %v931
      %v1060 = vcvt.s32.f32 %v932
      %v1061 = vcvt.s32.f32 %v933
      %v1062 = vcvt.s32.f32 %v934
      %v1063 = vcvt.s32.f32 %v935
      %v1064 = vcvt.s32.f32 %v936
      %v1065 = vcvt.s32.f32 %v937
      %v1066 = vcvt.s32.f32 %v938
      %v1067 = vcvt.s32.f32 %v939
      %v1068 = vcvt.s32.f32 %v940
      %v1069 = vcvt.s32.f32 %v941
      %v1070 = vcvt.s32.f32 %v942
      %v1071 = vcvt.s32.f32 %v943
      %v1072 = vcvt.s32.f32 %v944
      %v1073 = vcvt.s32.f32 %v945
      %v1074 = vcvt.s32.f32 %v946
      %v1075 = vcvt.s32.f32 %v947
      %v1076 = vcvt.s32.f32 %v948
      %v1077 = vcvt.s32.f32 %v949
      %v1078 = vcvt.s32.f32 %v950
      %v1079 = vcvt.s32.f32 %v951
      %v1080 = vcvt.s32.f32 %v952
      %v1081 = vcvt.s32.f32 %v953
      %v1082 = vcvt.s32.f32 %v954
      %v1083 = vcvt.s32.f32 %v955
      %v1084 = vcvt.s32.f32 %v956
      %v1085 = vcvt.s32.f32 %v957
      %v1086 = vcvt.s32.f32 %v958
      %v1087 = vcvt.s32.f32 %v959
      %v1088 = vcvt.s32.f32 %v960
      %v1089 = vcvt.s32.f32 %v961
      %v1090 = vcvt.s32.f32 %v962
      %v1091 = vcvt.s32.f32 %v963
      %v1092 = vcvt.s32.f32 %v964
      %v1093 = vcvt.s32.f32 %v965
      %v1094 = vcvt.s32.f32 %v966
      %v1095 = vcvt.s32.f32 %v967
      %v1096 = vcvt.s32.f32 %v968
      %v1097 = vcvt.s32.f32 %v969
      %v1098 = vcvt.s32.f32 %v970
      %v1099 = vcvt.s32.f32 %v971
      %v1100 = vcvt.s32.f32 %v972
      %v1101 = vcvt.s32.f32 %v973
      %v1102 = vcvt.s32.f32 %v974
      %v1103 = vcvt.s32.f32 %v975
      %v1104 = vcvt.s32.f32 %v976
      %v1105 = vcvt.s32.f32 %v977
      %v1106 = vcvt.s32.f32 %v978
      %v1107 = vcvt.s32.f32 %v979
      %v1108 = vcvt.s32.f32 %v980
      %v1109 = vcvt.s32.f32 %v981
      %v1110 = vcvt.s32.f32 %v982
      %v1111 = vcvt.s32.f32 %v983
      %v1112 = vcvt.s32.f32 %v984
      %v1113 = vcvt.s32.f32 %v985
      %v1114 = vcvt.s32.f32 %v986
      %v1115 = vcvt.s32.f32 %v987
      %v1116 = vcvt.s32.f32 %v988
      %v1117 = vcvt.s32.f32 %v989
      %v1118 = vpack.c.bf16 %v994, %v990
      %v1119 = vpack.c.bf16 %v995, %v991
      %v1120 = vpack.c.bf16 %v996, %v992
      %v1121 = vpack.c.bf16 %v997, %v993
      %v1122 = vpack.c.bf16 %v1002, %v998
      %v1123 = vpack.c.bf16 %v1003, %v999
      %v1124 = vpack.c.bf16 %v1004, %v1000
      %v1125 = vpack.c.bf16 %v1005, %v1001
      %v1126 = vpack.c.bf16 %v1010, %v1006
      %v1127 = vpack.c.bf16 %v1011, %v1007
      %v1128 = vpack.c.bf16 %v1012, %v1008
      %v1129 = vpack.c.bf16 %v1013, %v1009
      %v1130 = vpack.c.bf16 %v1018, %v1014
      %v1131 = vpack.c.bf16 %v1019, %v1015
      %v1132 = vpack.c.bf16 %v1020, %v1016
      %v1133 = vpack.c.bf16 %v1021, %v1017
      %v1134 = vpack.c.bf16 %v1026, %v1022
      %v1135 = vpack.c.bf16 %v1027, %v1023
      %v1136 = vpack.c.bf16 %v1028, %v1024
      %v1137 = vpack.c.bf16 %v1029, %v1025
      %v1138 = vpack.c.bf16 %v1034, %v1030
      %v1139 = vpack.c.bf16 %v1035, %v1031
      %v1140 = vpack.c.bf16 %v1036, %v1032
      %v1141 = vpack.c.bf16 %v1037, %v1033
      %v1142 = vpack.c.bf16 %v1042, %v1038
      %v1143 = vpack.c.bf16 %v1043, %v1039
      %v1144 = vpack.c.bf16 %v1044, %v1040
      %v1145 = vpack.c.bf16 %v1045, %v1041
      %v1146 = vpack.c.bf16 %v1050, %v1046
      %v1147 = vpack.c.bf16 %v1051, %v1047
      %v1148 = vpack.c.bf16 %v1052, %v1048
      %v1149 = vpack.c.bf16 %v1053, %v1049
      %v1150 = vpack.c.bf16 %v1058, %v1054
      %v1151 = vpack.c.bf16 %v1059, %v1055
      %v1152 = vpack.c.bf16 %v1060, %v1056
      %v1153 = vpack.c.bf16 %v1061, %v1057
      %v1154 = vpack.c.bf16 %v1066, %v1062
      %v1155 = vpack.c.bf16 %v1067, %v1063
      %v1156 = vpack.c.bf16 %v1068, %v1064
      %v1157 = vpack.c.bf16 %v1069, %v1065
      %v1158 = vpack.c.bf16 %v1074, %v1070
      %v1159 = vpack.c.bf16 %v1075, %v1071
      %v1160 = vpack.c.bf16 %v1076, %v1072
      %v1161 = vpack.c.bf16 %v1077, %v1073
      %v1162 = vpack.c.bf16 %v1082, %v1078
      %v1163 = vpack.c.bf16 %v1083, %v1079
      %v1164 = vpack.c.bf16 %v1084, %v1080
      %v1165 = vpack.c.bf16 %v1085, %v1081
      %v1166 = vpack.c.bf16 %v1090, %v1086
      %v1167 = vpack.c.bf16 %v1091, %v1087
      %v1168 = vpack.c.bf16 %v1092, %v1088
      %v1169 = vpack.c.bf16 %v1093, %v1089
      %v1170 = vpack.c.bf16 %v1098, %v1094
      %v1171 = vpack.c.bf16 %v1099, %v1095
      %v1172 = vpack.c.bf16 %v1100, %v1096
      %v1173 = vpack.c.bf16 %v1101, %v1097
      %v1174 = vpack.c.bf16 %v1106, %v1102
      %v1175 = vpack.c.bf16 %v1107, %v1103
      %v1176 = vpack.c.bf16 %v1108, %v1104
      %v1177 = vpack.c.bf16 %v1109, %v1105
      %v1178 = vpack.c.bf16 %v1114, %v1110
      %v1179 = vpack.c.bf16 %v1115, %v1111
      %v1180 = vpack.c.bf16 %v1116, %v1112
      %v1181 = vpack.c.bf16 %v1117, %v1113
      %1182 = vset.pattern.permute.xlu0 2
      %1183 = vperm.xlu0 %1182, %v57
      %v1184 = vpop.permute.xlu0 %1183
      %1185 = vset.pattern.permute.xlu0 2
      %1186 = vperm.xlu0 %1185, %v58
      %v1187 = vpop.permute.xlu0 %1186
      %1188 = vset.pattern.permute.xlu0 2
      %1189 = vperm.xlu0 %1188, %v59
      %v1190 = vpop.permute.xlu0 %1189
      %1191 = vset.pattern.permute.xlu0 2
      %1192 = vperm.xlu0 %1191, %v60
      %v1193 = vpop.permute.xlu0 %1192
      %1194 = vset.pattern.permute.xlu0 2
      %1195 = vperm.xlu0 %1194, %v61
      %v1196 = vpop.permute.xlu0 %1195
      %1197 = vset.pattern.permute.xlu0 2
      %1198 = vperm.xlu0 %1197, %v62
      %v1199 = vpop.permute.xlu0 %1198
      %1200 = vset.pattern.permute.xlu0 2
      %1201 = vperm.xlu0 %1200, %v63
      %v1202 = vpop.permute.xlu0 %1201
      %1203 = vset.pattern.permute.xlu0 2
      %1204 = vperm.xlu0 %1203, %v64
      %v1205 = vpop.permute.xlu0 %1204
      %1206 = vset.pattern.permute.xlu0 2
      %1207 = vperm.xlu0 %1206, %v65
      %v1208 = vpop.permute.xlu0 %1207
      %1209 = vset.pattern.permute.xlu0 2
      %1210 = vperm.xlu0 %1209, %v66
      %v1211 = vpop.permute.xlu0 %1210
      %1212 = vset.pattern.permute.xlu0 2
      %1213 = vperm.xlu0 %1212, %v67
      %v1214 = vpop.permute.xlu0 %1213
      %1215 = vset.pattern.permute.xlu0 2
      %1216 = vperm.xlu0 %1215, %v68
      %v1217 = vpop.permute.xlu0 %1216
      %1218 = vset.pattern.permute.xlu0 2
      %1219 = vperm.xlu0 %1218, %v69
      %v1220 = vpop.permute.xlu0 %1219
      %1221 = vset.pattern.permute.xlu0 2
      %1222 = vperm.xlu0 %1221, %v70
      %v1223 = vpop.permute.xlu0 %1222
      %1224 = vset.pattern.permute.xlu0 2
      %1225 = vperm.xlu0 %1224, %v71
      %v1226 = vpop.permute.xlu0 %1225
      %1227 = vset.pattern.permute.xlu0 2
      %1228 = vperm.xlu0 %1227, %v72
      %v1229 = vpop.permute.xlu0 %1228
      %1230 = vset.pattern.permute.xlu0 2
      %1231 = vperm.xlu0 %1230, %v73
      %v1232 = vpop.permute.xlu0 %1231
      %1233 = vset.pattern.permute.xlu0 2
      %1234 = vperm.xlu0 %1233, %v74
      %v1235 = vpop.permute.xlu0 %1234
      %1236 = vset.pattern.permute.xlu0 2
      %1237 = vperm.xlu0 %1236, %v75
      %v1238 = vpop.permute.xlu0 %1237
      %1239 = vset.pattern.permute.xlu0 2
      %1240 = vperm.xlu0 %1239, %v76
      %v1241 = vpop.permute.xlu0 %1240
      %1242 = vset.pattern.permute.xlu0 2
      %1243 = vperm.xlu0 %1242, %v77
      %v1244 = vpop.permute.xlu0 %1243
      %1245 = vset.pattern.permute.xlu0 2
      %1246 = vperm.xlu0 %1245, %v78
      %v1247 = vpop.permute.xlu0 %1246
      %1248 = vset.pattern.permute.xlu0 2
      %1249 = vperm.xlu0 %1248, %v79
      %v1250 = vpop.permute.xlu0 %1249
      %1251 = vset.pattern.permute.xlu0 2
      %1252 = vperm.xlu0 %1251, %v80
      %v1253 = vpop.permute.xlu0 %1252
      %1254 = vset.pattern.permute.xlu0 2
      %1255 = vperm.xlu0 %1254, %v81
      %v1256 = vpop.permute.xlu0 %1255
      %1257 = vset.pattern.permute.xlu0 2
      %1258 = vperm.xlu0 %1257, %v82
      %v1259 = vpop.permute.xlu0 %1258
      %1260 = vset.pattern.permute.xlu0 2
      %1261 = vperm.xlu0 %1260, %v83
      %v1262 = vpop.permute.xlu0 %1261
      %1263 = vset.pattern.permute.xlu0 2
      %1264 = vperm.xlu0 %1263, %v84
      %v1265 = vpop.permute.xlu0 %1264
      %1266 = vset.pattern.permute.xlu0 2
      %1267 = vperm.xlu0 %1266, %v85
      %v1268 = vpop.permute.xlu0 %1267
      %1269 = vset.pattern.permute.xlu0 2
      %1270 = vperm.xlu0 %1269, %v86
      %v1271 = vpop.permute.xlu0 %1270
      %1272 = vset.pattern.permute.xlu0 2
      %1273 = vperm.xlu0 %1272, %v87
      %v1274 = vpop.permute.xlu0 %1273
      %1275 = vset.pattern.permute.xlu0 2
      %1276 = vperm.xlu0 %1275, %v88
      %v1277 = vpop.permute.xlu0 %1276
      %vm1278 = vcmp.eq.s32.totalorder %v90, %v1184
      %vm1279 = vcmp.eq.s32.totalorder %v91, %v1184
      %vm1280 = vcmp.eq.s32.totalorder %v92, %v1184
      %vm1281 = vcmp.eq.s32.totalorder %v93, %v1184
      %vm1282 = vcmp.eq.s32.totalorder %v90, %v1187
      %vm1283 = vcmp.eq.s32.totalorder %v91, %v1187
      %vm1284 = vcmp.eq.s32.totalorder %v92, %v1187
      %vm1285 = vcmp.eq.s32.totalorder %v93, %v1187
      %vm1286 = vcmp.eq.s32.totalorder %v90, %v1190
      %vm1287 = vcmp.eq.s32.totalorder %v91, %v1190
      %vm1288 = vcmp.eq.s32.totalorder %v92, %v1190
      %vm1289 = vcmp.eq.s32.totalorder %v93, %v1190
      %vm1290 = vcmp.eq.s32.totalorder %v90, %v1193
      %vm1291 = vcmp.eq.s32.totalorder %v91, %v1193
      %vm1292 = vcmp.eq.s32.totalorder %v92, %v1193
      %vm1293 = vcmp.eq.s32.totalorder %v93, %v1193
      %vm1294 = vcmp.eq.s32.totalorder %v90, %v1196
      %vm1295 = vcmp.eq.s32.totalorder %v91, %v1196
      %vm1296 = vcmp.eq.s32.totalorder %v92, %v1196
      %vm1297 = vcmp.eq.s32.totalorder %v93, %v1196
      %vm1298 = vcmp.eq.s32.totalorder %v90, %v1199
      %vm1299 = vcmp.eq.s32.totalorder %v91, %v1199
      %vm1300 = vcmp.eq.s32.totalorder %v92, %v1199
      %vm1301 = vcmp.eq.s32.totalorder %v93, %v1199
      %vm1302 = vcmp.eq.s32.totalorder %v90, %v1202
      %vm1303 = vcmp.eq.s32.totalorder %v91, %v1202
      %vm1304 = vcmp.eq.s32.totalorder %v92, %v1202
      %vm1305 = vcmp.eq.s32.totalorder %v93, %v1202
      %vm1306 = vcmp.eq.s32.totalorder %v90, %v1205
      %vm1307 = vcmp.eq.s32.totalorder %v91, %v1205
      %vm1308 = vcmp.eq.s32.totalorder %v92, %v1205
      %vm1309 = vcmp.eq.s32.totalorder %v93, %v1205
      %vm1310 = vcmp.eq.s32.totalorder %v90, %v1208
      %vm1311 = vcmp.eq.s32.totalorder %v91, %v1208
      %vm1312 = vcmp.eq.s32.totalorder %v92, %v1208
      %vm1313 = vcmp.eq.s32.totalorder %v93, %v1208
      %vm1314 = vcmp.eq.s32.totalorder %v90, %v1211
      %vm1315 = vcmp.eq.s32.totalorder %v91, %v1211
      %vm1316 = vcmp.eq.s32.totalorder %v92, %v1211
      %vm1317 = vcmp.eq.s32.totalorder %v93, %v1211
      %vm1318 = vcmp.eq.s32.totalorder %v90, %v1214
      %vm1319 = vcmp.eq.s32.totalorder %v91, %v1214
      %vm1320 = vcmp.eq.s32.totalorder %v92, %v1214
      %vm1321 = vcmp.eq.s32.totalorder %v93, %v1214
      %vm1322 = vcmp.eq.s32.totalorder %v90, %v1217
      %vm1323 = vcmp.eq.s32.totalorder %v91, %v1217
      %vm1324 = vcmp.eq.s32.totalorder %v92, %v1217
      %vm1325 = vcmp.eq.s32.totalorder %v93, %v1217
      %vm1326 = vcmp.eq.s32.totalorder %v90, %v1220
      %vm1327 = vcmp.eq.s32.totalorder %v91, %v1220
      %vm1328 = vcmp.eq.s32.totalorder %v92, %v1220
      %vm1329 = vcmp.eq.s32.totalorder %v93, %v1220
      %vm1330 = vcmp.eq.s32.totalorder %v90, %v1223
      %vm1331 = vcmp.eq.s32.totalorder %v91, %v1223
      %vm1332 = vcmp.eq.s32.totalorder %v92, %v1223
      %vm1333 = vcmp.eq.s32.totalorder %v93, %v1223
      %vm1334 = vcmp.eq.s32.totalorder %v90, %v1226
      %vm1335 = vcmp.eq.s32.totalorder %v91, %v1226
      %vm1336 = vcmp.eq.s32.totalorder %v92, %v1226
      %vm1337 = vcmp.eq.s32.totalorder %v93, %v1226
      %vm1338 = vcmp.eq.s32.totalorder %v90, %v1229
      %vm1339 = vcmp.eq.s32.totalorder %v91, %v1229
      %vm1340 = vcmp.eq.s32.totalorder %v92, %v1229
      %vm1341 = vcmp.eq.s32.totalorder %v93, %v1229
      %vm1342 = vcmp.eq.s32.totalorder %v90, %v1232
      %vm1343 = vcmp.eq.s32.totalorder %v91, %v1232
      %vm1344 = vcmp.eq.s32.totalorder %v92, %v1232
      %vm1345 = vcmp.eq.s32.totalorder %v93, %v1232
      %vm1346 = vcmp.eq.s32.totalorder %v90, %v1235
      %vm1347 = vcmp.eq.s32.totalorder %v91, %v1235
      %vm1348 = vcmp.eq.s32.totalorder %v92, %v1235
      %vm1349 = vcmp.eq.s32.totalorder %v93, %v1235
      %vm1350 = vcmp.eq.s32.totalorder %v90, %v1238
      %vm1351 = vcmp.eq.s32.totalorder %v91, %v1238
      %vm1352 = vcmp.eq.s32.totalorder %v92, %v1238
      %vm1353 = vcmp.eq.s32.totalorder %v93, %v1238
      %vm1354 = vcmp.eq.s32.totalorder %v90, %v1241
      %vm1355 = vcmp.eq.s32.totalorder %v91, %v1241
      %vm1356 = vcmp.eq.s32.totalorder %v92, %v1241
      %vm1357 = vcmp.eq.s32.totalorder %v93, %v1241
      %vm1358 = vcmp.eq.s32.totalorder %v90, %v1244
      %vm1359 = vcmp.eq.s32.totalorder %v91, %v1244
      %vm1360 = vcmp.eq.s32.totalorder %v92, %v1244
      %vm1361 = vcmp.eq.s32.totalorder %v93, %v1244
      %vm1362 = vcmp.eq.s32.totalorder %v90, %v1247
      %vm1363 = vcmp.eq.s32.totalorder %v91, %v1247
      %vm1364 = vcmp.eq.s32.totalorder %v92, %v1247
      %vm1365 = vcmp.eq.s32.totalorder %v93, %v1247
      %vm1366 = vcmp.eq.s32.totalorder %v90, %v1250
      %vm1367 = vcmp.eq.s32.totalorder %v91, %v1250
      %vm1368 = vcmp.eq.s32.totalorder %v92, %v1250
      %vm1369 = vcmp.eq.s32.totalorder %v93, %v1250
      %vm1370 = vcmp.eq.s32.totalorder %v90, %v1253
      %vm1371 = vcmp.eq.s32.totalorder %v91, %v1253
      %vm1372 = vcmp.eq.s32.totalorder %v92, %v1253
      %vm1373 = vcmp.eq.s32.totalorder %v93, %v1253
      %vm1374 = vcmp.eq.s32.totalorder %v90, %v1256
      %vm1375 = vcmp.eq.s32.totalorder %v91, %v1256
      %vm1376 = vcmp.eq.s32.totalorder %v92, %v1256
      %vm1377 = vcmp.eq.s32.totalorder %v93, %v1256
      %vm1378 = vcmp.eq.s32.totalorder %v90, %v1259
      %vm1379 = vcmp.eq.s32.totalorder %v91, %v1259
      %vm1380 = vcmp.eq.s32.totalorder %v92, %v1259
      %vm1381 = vcmp.eq.s32.totalorder %v93, %v1259
      %vm1382 = vcmp.eq.s32.totalorder %v90, %v1262
      %vm1383 = vcmp.eq.s32.totalorder %v91, %v1262
      %vm1384 = vcmp.eq.s32.totalorder %v92, %v1262
      %vm1385 = vcmp.eq.s32.totalorder %v93, %v1262
      %vm1386 = vcmp.eq.s32.totalorder %v90, %v1265
      %vm1387 = vcmp.eq.s32.totalorder %v91, %v1265
      %vm1388 = vcmp.eq.s32.totalorder %v92, %v1265
      %vm1389 = vcmp.eq.s32.totalorder %v93, %v1265
      %vm1390 = vcmp.eq.s32.totalorder %v90, %v1268
      %vm1391 = vcmp.eq.s32.totalorder %v91, %v1268
      %vm1392 = vcmp.eq.s32.totalorder %v92, %v1268
      %vm1393 = vcmp.eq.s32.totalorder %v93, %v1268
      %vm1394 = vcmp.eq.s32.totalorder %v90, %v1271
      %vm1395 = vcmp.eq.s32.totalorder %v91, %v1271
      %vm1396 = vcmp.eq.s32.totalorder %v92, %v1271
      %vm1397 = vcmp.eq.s32.totalorder %v93, %v1271
      %vm1398 = vcmp.eq.s32.totalorder %v90, %v1274
      %vm1399 = vcmp.eq.s32.totalorder %v91, %v1274
      %vm1400 = vcmp.eq.s32.totalorder %v92, %v1274
      %vm1401 = vcmp.eq.s32.totalorder %v93, %v1274
      %vm1402 = vcmp.eq.s32.totalorder %v90, %v1277
      %vm1403 = vcmp.eq.s32.totalorder %v91, %v1277
      %vm1404 = vcmp.eq.s32.totalorder %v92, %v1277
      %vm1405 = vcmp.eq.s32.totalorder %v93, %v1277
      %v1406 = vsel %vm1278, 1, 0
      %v1407 = vsel %vm1279, 1, 0
      %v1408 = vsel %vm1280, 1, 0
      %v1409 = vsel %vm1281, 1, 0
      %v1410 = vsel %vm1282, 1, 0
      %v1411 = vsel %vm1283, 1, 0
      %v1412 = vsel %vm1284, 1, 0
      %v1413 = vsel %vm1285, 1, 0
      %v1414 = vsel %vm1286, 1, 0
      %v1415 = vsel %vm1287, 1, 0
      %v1416 = vsel %vm1288, 1, 0
      %v1417 = vsel %vm1289, 1, 0
      %v1418 = vsel %vm1290, 1, 0
      %v1419 = vsel %vm1291, 1, 0
      %v1420 = vsel %vm1292, 1, 0
      %v1421 = vsel %vm1293, 1, 0
      %v1422 = vsel %vm1294, 1, 0
      %v1423 = vsel %vm1295, 1, 0
      %v1424 = vsel %vm1296, 1, 0
      %v1425 = vsel %vm1297, 1, 0
      %v1426 = vsel %vm1298, 1, 0
      %v1427 = vsel %vm1299, 1, 0
      %v1428 = vsel %vm1300, 1, 0
      %v1429 = vsel %vm1301, 1, 0
      %v1430 = vsel %vm1302, 1, 0
      %v1431 = vsel %vm1303, 1, 0
      %v1432 = vsel %vm1304, 1, 0
      %v1433 = vsel %vm1305, 1, 0
      %v1434 = vsel %vm1306, 1, 0
      %v1435 = vsel %vm1307, 1, 0
      %v1436 = vsel %vm1308, 1, 0
      %v1437 = vsel %vm1309, 1, 0
      %v1438 = vsel %vm1310, 1, 0
      %v1439 = vsel %vm1311, 1, 0
      %v1440 = vsel %vm1312, 1, 0
      %v1441 = vsel %vm1313, 1, 0
      %v1442 = vsel %vm1314, 1, 0
      %v1443 = vsel %vm1315, 1, 0
      %v1444 = vsel %vm1316, 1, 0
      %v1445 = vsel %vm1317, 1, 0
      %v1446 = vsel %vm1318, 1, 0
      %v1447 = vsel %vm1319, 1, 0
      %v1448 = vsel %vm1320, 1, 0
      %v1449 = vsel %vm1321, 1, 0
      %v1450 = vsel %vm1322, 1, 0
      %v1451 = vsel %vm1323, 1, 0
      %v1452 = vsel %vm1324, 1, 0
      %v1453 = vsel %vm1325, 1, 0
      %v1454 = vsel %vm1326, 1, 0
      %v1455 = vsel %vm1327, 1, 0
      %v1456 = vsel %vm1328, 1, 0
      %v1457 = vsel %vm1329, 1, 0
      %v1458 = vsel %vm1330, 1, 0
      %v1459 = vsel %vm1331, 1, 0
      %v1460 = vsel %vm1332, 1, 0
      %v1461 = vsel %vm1333, 1, 0
      %v1462 = vsel %vm1334, 1, 0
      %v1463 = vsel %vm1335, 1, 0
      %v1464 = vsel %vm1336, 1, 0
      %v1465 = vsel %vm1337, 1, 0
      %v1466 = vsel %vm1338, 1, 0
      %v1467 = vsel %vm1339, 1, 0
      %v1468 = vsel %vm1340, 1, 0
      %v1469 = vsel %vm1341, 1, 0
      %v1470 = vsel %vm1342, 1, 0
      %v1471 = vsel %vm1343, 1, 0
      %v1472 = vsel %vm1344, 1, 0
      %v1473 = vsel %vm1345, 1, 0
      %v1474 = vsel %vm1346, 1, 0
      %v1475 = vsel %vm1347, 1, 0
      %v1476 = vsel %vm1348, 1, 0
      %v1477 = vsel %vm1349, 1, 0
      %v1478 = vsel %vm1350, 1, 0
      %v1479 = vsel %vm1351, 1, 0
      %v1480 = vsel %vm1352, 1, 0
      %v1481 = vsel %vm1353, 1, 0
      %v1482 = vsel %vm1354, 1, 0
      %v1483 = vsel %vm1355, 1, 0
      %v1484 = vsel %vm1356, 1, 0
      %v1485 = vsel %vm1357, 1, 0
      %v1486 = vsel %vm1358, 1, 0
      %v1487 = vsel %vm1359, 1, 0
      %v1488 = vsel %vm1360, 1, 0
      %v1489 = vsel %vm1361, 1, 0
      %v1490 = vsel %vm1362, 1, 0
      %v1491 = vsel %vm1363, 1, 0
      %v1492 = vsel %vm1364, 1, 0
      %v1493 = vsel %vm1365, 1, 0
      %v1494 = vsel %vm1366, 1, 0
      %v1495 = vsel %vm1367, 1, 0
      %v1496 = vsel %vm1368, 1, 0
      %v1497 = vsel %vm1369, 1, 0
      %v1498 = vsel %vm1370, 1, 0
      %v1499 = vsel %vm1371, 1, 0
      %v1500 = vsel %vm1372, 1, 0
      %v1501 = vsel %vm1373, 1, 0
      %v1502 = vsel %vm1374, 1, 0
      %v1503 = vsel %vm1375, 1, 0
      %v1504 = vsel %vm1376, 1, 0
      %v1505 = vsel %vm1377, 1, 0
      %v1506 = vsel %vm1378, 1, 0
      %v1507 = vsel %vm1379, 1, 0
      %v1508 = vsel %vm1380, 1, 0
      %v1509 = vsel %vm1381, 1, 0
      %v1510 = vsel %vm1382, 1, 0
      %v1511 = vsel %vm1383, 1, 0
      %v1512 = vsel %vm1384, 1, 0
      %v1513 = vsel %vm1385, 1, 0
      %v1514 = vsel %vm1386, 1, 0
      %v1515 = vsel %vm1387, 1, 0
      %v1516 = vsel %vm1388, 1, 0
      %v1517 = vsel %vm1389, 1, 0
      %v1518 = vsel %vm1390, 1, 0
      %v1519 = vsel %vm1391, 1, 0
      %v1520 = vsel %vm1392, 1, 0
      %v1521 = vsel %vm1393, 1, 0
      %v1522 = vsel %vm1394, 1, 0
      %v1523 = vsel %vm1395, 1, 0
      %v1524 = vsel %vm1396, 1, 0
      %v1525 = vsel %vm1397, 1, 0
      %v1526 = vsel %vm1398, 1, 0
      %v1527 = vsel %vm1399, 1, 0
      %v1528 = vsel %vm1400, 1, 0
      %v1529 = vsel %vm1401, 1, 0
      %v1530 = vsel %vm1402, 1, 0
      %v1531 = vsel %vm1403, 1, 0
      %v1532 = vsel %vm1404, 1, 0
      %v1533 = vsel %vm1405, 1, 0
      %v1534 = vcvt.s32.f32 %v1406
      %v1535 = vcvt.s32.f32 %v1407
      %v1536 = vcvt.s32.f32 %v1408
      %v1537 = vcvt.s32.f32 %v1409
      %v1538 = vcvt.s32.f32 %v1410
      %v1539 = vcvt.s32.f32 %v1411
      %v1540 = vcvt.s32.f32 %v1412
      %v1541 = vcvt.s32.f32 %v1413
      %v1542 = vcvt.s32.f32 %v1414
      %v1543 = vcvt.s32.f32 %v1415
      %v1544 = vcvt.s32.f32 %v1416
      %v1545 = vcvt.s32.f32 %v1417
      %v1546 = vcvt.s32.f32 %v1418
      %v1547 = vcvt.s32.f32 %v1419
      %v1548 = vcvt.s32.f32 %v1420
      %v1549 = vcvt.s32.f32 %v1421
      %v1550 = vcvt.s32.f32 %v1422
      %v1551 = vcvt.s32.f32 %v1423
      %v1552 = vcvt.s32.f32 %v1424
      %v1553 = vcvt.s32.f32 %v1425
      %v1554 = vcvt.s32.f32 %v1426
      %v1555 = vcvt.s32.f32 %v1427
      %v1556 = vcvt.s32.f32 %v1428
      %v1557 = vcvt.s32.f32 %v1429
      %v1558 = vcvt.s32.f32 %v1430
      %v1559 = vcvt.s32.f32 %v1431
      %v1560 = vcvt.s32.f32 %v1432
      %v1561 = vcvt.s32.f32 %v1433
      %v1562 = vcvt.s32.f32 %v1434
      %v1563 = vcvt.s32.f32 %v1435
      %v1564 = vcvt.s32.f32 %v1436
      %v1565 = vcvt.s32.f32 %v1437
      %v1566 = vcvt.s32.f32 %v1438
      %v1567 = vcvt.s32.f32 %v1439
      %v1568 = vcvt.s32.f32 %v1440
      %v1569 = vcvt.s32.f32 %v1441
      %v1570 = vcvt.s32.f32 %v1442
      %v1571 = vcvt.s32.f32 %v1443
      %v1572 = vcvt.s32.f32 %v1444
      %v1573 = vcvt.s32.f32 %v1445
      %v1574 = vcvt.s32.f32 %v1446
      %v1575 = vcvt.s32.f32 %v1447
      %v1576 = vcvt.s32.f32 %v1448
      %v1577 = vcvt.s32.f32 %v1449
      %v1578 = vcvt.s32.f32 %v1450
      %v1579 = vcvt.s32.f32 %v1451
      %v1580 = vcvt.s32.f32 %v1452
      %v1581 = vcvt.s32.f32 %v1453
      %v1582 = vcvt.s32.f32 %v1454
      %v1583 = vcvt.s32.f32 %v1455
      %v1584 = vcvt.s32.f32 %v1456
      %v1585 = vcvt.s32.f32 %v1457
      %v1586 = vcvt.s32.f32 %v1458
      %v1587 = vcvt.s32.f32 %v1459
      %v1588 = vcvt.s32.f32 %v1460
      %v1589 = vcvt.s32.f32 %v1461
      %v1590 = vcvt.s32.f32 %v1462
      %v1591 = vcvt.s32.f32 %v1463
      %v1592 = vcvt.s32.f32 %v1464
      %v1593 = vcvt.s32.f32 %v1465
      %v1594 = vcvt.s32.f32 %v1466
      %v1595 = vcvt.s32.f32 %v1467
      %v1596 = vcvt.s32.f32 %v1468
      %v1597 = vcvt.s32.f32 %v1469
      %v1598 = vcvt.s32.f32 %v1470
      %v1599 = vcvt.s32.f32 %v1471
      %v1600 = vcvt.s32.f32 %v1472
      %v1601 = vcvt.s32.f32 %v1473
      %v1602 = vcvt.s32.f32 %v1474
      %v1603 = vcvt.s32.f32 %v1475
      %v1604 = vcvt.s32.f32 %v1476
      %v1605 = vcvt.s32.f32 %v1477
      %v1606 = vcvt.s32.f32 %v1478
      %v1607 = vcvt.s32.f32 %v1479
      %v1608 = vcvt.s32.f32 %v1480
      %v1609 = vcvt.s32.f32 %v1481
      %v1610 = vcvt.s32.f32 %v1482
      %v1611 = vcvt.s32.f32 %v1483
      %v1612 = vcvt.s32.f32 %v1484
      %v1613 = vcvt.s32.f32 %v1485
      %v1614 = vcvt.s32.f32 %v1486
      %v1615 = vcvt.s32.f32 %v1487
      %v1616 = vcvt.s32.f32 %v1488
      %v1617 = vcvt.s32.f32 %v1489
      %v1618 = vcvt.s32.f32 %v1490
      %v1619 = vcvt.s32.f32 %v1491
      %v1620 = vcvt.s32.f32 %v1492
      %v1621 = vcvt.s32.f32 %v1493
      %v1622 = vcvt.s32.f32 %v1494
      %v1623 = vcvt.s32.f32 %v1495
      %v1624 = vcvt.s32.f32 %v1496
      %v1625 = vcvt.s32.f32 %v1497
      %v1626 = vcvt.s32.f32 %v1498
      %v1627 = vcvt.s32.f32 %v1499
      %v1628 = vcvt.s32.f32 %v1500
      %v1629 = vcvt.s32.f32 %v1501
      %v1630 = vcvt.s32.f32 %v1502
      %v1631 = vcvt.s32.f32 %v1503
      %v1632 = vcvt.s32.f32 %v1504
      %v1633 = vcvt.s32.f32 %v1505
      %v1634 = vcvt.s32.f32 %v1506
      %v1635 = vcvt.s32.f32 %v1507
      %v1636 = vcvt.s32.f32 %v1508
      %v1637 = vcvt.s32.f32 %v1509
      %v1638 = vcvt.s32.f32 %v1510
      %v1639 = vcvt.s32.f32 %v1511
      %v1640 = vcvt.s32.f32 %v1512
      %v1641 = vcvt.s32.f32 %v1513
      %v1642 = vcvt.s32.f32 %v1514
      %v1643 = vcvt.s32.f32 %v1515
      %v1644 = vcvt.s32.f32 %v1516
      %v1645 = vcvt.s32.f32 %v1517
      %v1646 = vcvt.s32.f32 %v1518
      %v1647 = vcvt.s32.f32 %v1519
      %v1648 = vcvt.s32.f32 %v1520
      %v1649 = vcvt.s32.f32 %v1521
      %v1650 = vcvt.s32.f32 %v1522
      %v1651 = vcvt.s32.f32 %v1523
      %v1652 = vcvt.s32.f32 %v1524
      %v1653 = vcvt.s32.f32 %v1525
      %v1654 = vcvt.s32.f32 %v1526
      %v1655 = vcvt.s32.f32 %v1527
      %v1656 = vcvt.s32.f32 %v1528
      %v1657 = vcvt.s32.f32 %v1529
      %v1658 = vcvt.s32.f32 %v1530
      %v1659 = vcvt.s32.f32 %v1531
      %v1660 = vcvt.s32.f32 %v1532
      %v1661 = vcvt.s32.f32 %v1533
      %v1662 = vpack.c.bf16 %v1538, %v1534
      %v1663 = vpack.c.bf16 %v1539, %v1535
      %v1664 = vpack.c.bf16 %v1540, %v1536
      %v1665 = vpack.c.bf16 %v1541, %v1537
      %v1666 = vpack.c.bf16 %v1546, %v1542
      %v1667 = vpack.c.bf16 %v1547, %v1543
      %v1668 = vpack.c.bf16 %v1548, %v1544
      %v1669 = vpack.c.bf16 %v1549, %v1545
      %v1670 = vpack.c.bf16 %v1554, %v1550
      %v1671 = vpack.c.bf16 %v1555, %v1551
      %v1672 = vpack.c.bf16 %v1556, %v1552
      %v1673 = vpack.c.bf16 %v1557, %v1553
      %v1674 = vpack.c.bf16 %v1562, %v1558
      %v1675 = vpack.c.bf16 %v1563, %v1559
      %v1676 = vpack.c.bf16 %v1564, %v1560
      %v1677 = vpack.c.bf16 %v1565, %v1561
      %v1678 = vpack.c.bf16 %v1570, %v1566
      %v1679 = vpack.c.bf16 %v1571, %v1567
      %v1680 = vpack.c.bf16 %v1572, %v1568
      %v1681 = vpack.c.bf16 %v1573, %v1569
      %v1682 = vpack.c.bf16 %v1578, %v1574
      %v1683 = vpack.c.bf16 %v1579, %v1575
      %v1684 = vpack.c.bf16 %v1580, %v1576
      %v1685 = vpack.c.bf16 %v1581, %v1577
      %v1686 = vpack.c.bf16 %v1586, %v1582
      %v1687 = vpack.c.bf16 %v1587, %v1583
      %v1688 = vpack.c.bf16 %v1588, %v1584
      %v1689 = vpack.c.bf16 %v1589, %v1585
      %v1690 = vpack.c.bf16 %v1594, %v1590
      %v1691 = vpack.c.bf16 %v1595, %v1591
      %v1692 = vpack.c.bf16 %v1596, %v1592
      %v1693 = vpack.c.bf16 %v1597, %v1593
      %v1694 = vpack.c.bf16 %v1602, %v1598
      %v1695 = vpack.c.bf16 %v1603, %v1599
      %v1696 = vpack.c.bf16 %v1604, %v1600
      %v1697 = vpack.c.bf16 %v1605, %v1601
      %v1698 = vpack.c.bf16 %v1610, %v1606
      %v1699 = vpack.c.bf16 %v1611, %v1607
      %v1700 = vpack.c.bf16 %v1612, %v1608
      %v1701 = vpack.c.bf16 %v1613, %v1609
      %v1702 = vpack.c.bf16 %v1618, %v1614
      %v1703 = vpack.c.bf16 %v1619, %v1615
      %v1704 = vpack.c.bf16 %v1620, %v1616
      %v1705 = vpack.c.bf16 %v1621, %v1617
      %v1706 = vpack.c.bf16 %v1626, %v1622
      %v1707 = vpack.c.bf16 %v1627, %v1623
      %v1708 = vpack.c.bf16 %v1628, %v1624
      %v1709 = vpack.c.bf16 %v1629, %v1625
      %v1710 = vpack.c.bf16 %v1634, %v1630
      %v1711 = vpack.c.bf16 %v1635, %v1631
      %v1712 = vpack.c.bf16 %v1636, %v1632
      %v1713 = vpack.c.bf16 %v1637, %v1633
      %v1714 = vpack.c.bf16 %v1642, %v1638
      %v1715 = vpack.c.bf16 %v1643, %v1639
      %v1716 = vpack.c.bf16 %v1644, %v1640
      %v1717 = vpack.c.bf16 %v1645, %v1641
      %v1718 = vpack.c.bf16 %v1650, %v1646
      %v1719 = vpack.c.bf16 %v1651, %v1647
      %v1720 = vpack.c.bf16 %v1652, %v1648
      %v1721 = vpack.c.bf16 %v1653, %v1649
      %v1722 = vpack.c.bf16 %v1658, %v1654
      %v1723 = vpack.c.bf16 %v1659, %v1655
      %v1724 = vpack.c.bf16 %v1660, %v1656
      %v1725 = vpack.c.bf16 %v1661, %v1657
      %v1726 = vld [vmem:[%s1] sm:$0xf]
      %v1727 = vld [vmem:[%s1 + $0x4] sm:$0xf]
      %v1728 = vld [vmem:[%s1 + $0x8] sm:$0xf]
      %v1729 = vld [vmem:[%s1 + $0xc] sm:$0xf]
      %v1730 = vld [vmem:[%s1 + $0x10] sm:$0xf]
      %v1731 = vld [vmem:[%s1 + $0x14] sm:$0xf]
      %v1732 = vld [vmem:[%s1 + $0x18] sm:$0xf]
      %v1733 = vld [vmem:[%s1 + $0x1c] sm:$0xf]
      %v1734 = vld [vmem:[%s1 + $0x20] sm:$0xf]
      %v1735 = vld [vmem:[%s1 + $0x24] sm:$0xf]
      %v1736 = vld [vmem:[%s1 + $0x28] sm:$0xf]
      %v1737 = vld [vmem:[%s1 + $0x2c] sm:$0xf]
      %v1738 = vld [vmem:[%s1 + $0x30] sm:$0xf]
      %v1739 = vld [vmem:[%s1 + $0x34] sm:$0xf]
      %v1740 = vld [vmem:[%s1 + $0x38] sm:$0xf]
      %v1741 = vld [vmem:[%s1 + $0x3c] sm:$0xf]
      %v1742 = vld [vmem:[%s1 + $0x40] sm:$0xf]
      %v1743 = vld [vmem:[%s1 + $0x44] sm:$0xf]
      %v1744 = vld [vmem:[%s1 + $0x48] sm:$0xf]
      %v1745 = vld [vmem:[%s1 + $0x4c] sm:$0xf]
      %v1746 = vld [vmem:[%s1 + $0x50] sm:$0xf]
      %v1747 = vld [vmem:[%s1 + $0x54] sm:$0xf]
      %v1748 = vld [vmem:[%s1 + $0x58] sm:$0xf]
      %v1749 = vld [vmem:[%s1 + $0x5c] sm:$0xf]
      %v1750 = vld [vmem:[%s1 + $0x60] sm:$0xf]
      %v1751 = vld [vmem:[%s1 + $0x64] sm:$0xf]
      %v1752 = vld [vmem:[%s1 + $0x68] sm:$0xf]
      %v1753 = vld [vmem:[%s1 + $0x6c] sm:$0xf]
      %v1754 = vld [vmem:[%s1 + $0x70] sm:$0xf]
      %v1755 = vld [vmem:[%s1 + $0x74] sm:$0xf]
      %v1756 = vld [vmem:[%s1 + $0x78] sm:$0xf]
      %v1757 = vld [vmem:[%s1 + $0x7c] sm:$0xf]
      %v1758 = vld [vmem:[%s1 + $0x80] sm:$0xf]
      %v1759 = vld [vmem:[%s1 + $0x84] sm:$0xf]
      %v1760 = vld [vmem:[%s1 + $0x88] sm:$0xf]
      %v1761 = vld [vmem:[%s1 + $0x8c] sm:$0xf]
      %v1762 = vld [vmem:[%s1 + $0x90] sm:$0xf]
      %v1763 = vld [vmem:[%s1 + $0x94] sm:$0xf]
      %v1764 = vld [vmem:[%s1 + $0x98] sm:$0xf]
      %v1765 = vld [vmem:[%s1 + $0x9c] sm:$0xf]
      %v1766 = vld [vmem:[%s1 + $0xa0] sm:$0xf]
      %v1767 = vld [vmem:[%s1 + $0xa4] sm:$0xf]
      %v1768 = vld [vmem:[%s1 + $0xa8] sm:$0xf]
      %v1769 = vld [vmem:[%s1 + $0xac] sm:$0xf]
      %v1770 = vld [vmem:[%s1 + $0xb0] sm:$0xf]
      %v1771 = vld [vmem:[%s1 + $0xb4] sm:$0xf]
      %v1772 = vld [vmem:[%s1 + $0xb8] sm:$0xf]
      %v1773 = vld [vmem:[%s1 + $0xbc] sm:$0xf]
      %v1774 = vld [vmem:[%s1 + $0xc0] sm:$0xf]
      %v1775 = vld [vmem:[%s1 + $0xc4] sm:$0xf]
      %v1776 = vld [vmem:[%s1 + $0xc8] sm:$0xf]
      %v1777 = vld [vmem:[%s1 + $0xcc] sm:$0xf]
      %v1778 = vld [vmem:[%s1 + $0xd0] sm:$0xf]
      %v1779 = vld [vmem:[%s1 + $0xd4] sm:$0xf]
      %v1780 = vld [vmem:[%s1 + $0xd8] sm:$0xf]
      %v1781 = vld [vmem:[%s1 + $0xdc] sm:$0xf]
      %v1782 = vld [vmem:[%s1 + $0xe0] sm:$0xf]
      %v1783 = vld [vmem:[%s1 + $0xe4] sm:$0xf]
      %v1784 = vld [vmem:[%s1 + $0xe8] sm:$0xf]
      %v1785 = vld [vmem:[%s1 + $0xec] sm:$0xf]
      %v1786 = vld [vmem:[%s1 + $0xf0] sm:$0xf]
      %v1787 = vld [vmem:[%s1 + $0xf4] sm:$0xf]
      %v1788 = vld [vmem:[%s1 + $0xf8] sm:$0xf]
      %v1789 = vld [vmem:[%s1 + $0xfc] sm:$0xf]
      %v1854 = vunpack.c.l.b16 %v1726
      %v1855 = vunpack.c.l.b16 %v1727
      %v1856 = vunpack.c.l.b16 %v1728
      %v1857 = vunpack.c.l.b16 %v1729
      %v1858 = vunpack.c.l.b16 %v1730
      %v1859 = vunpack.c.l.b16 %v1731
      %v1860 = vunpack.c.l.b16 %v1732
      %v1861 = vunpack.c.l.b16 %v1733
      %v1862 = vunpack.c.l.b16 %v1734
      %v1863 = vunpack.c.l.b16 %v1735
      %v1864 = vunpack.c.l.b16 %v1736
      %v1865 = vunpack.c.l.b16 %v1737
      %v1866 = vunpack.c.l.b16 %v1738
      %v1867 = vunpack.c.l.b16 %v1739
      %v1868 = vunpack.c.l.b16 %v1740
      %v1869 = vunpack.c.l.b16 %v1741
      %v1870 = vunpack.c.l.b16 %v1742
      %v1871 = vunpack.c.l.b16 %v1743
      %v1872 = vunpack.c.l.b16 %v1744
      %v1873 = vunpack.c.l.b16 %v1745
      %v1874 = vunpack.c.l.b16 %v1746
      %v1875 = vunpack.c.l.b16 %v1747
      %v1876 = vunpack.c.l.b16 %v1748
      %v1877 = vunpack.c.l.b16 %v1749
      %v1878 = vunpack.c.l.b16 %v1750
      %v1879 = vunpack.c.l.b16 %v1751
      %v1880 = vunpack.c.l.b16 %v1752
      %v1881 = vunpack.c.l.b16 %v1753
      %v1882 = vunpack.c.l.b16 %v1754
      %v1883 = vunpack.c.l.b16 %v1755
      %v1884 = vunpack.c.l.b16 %v1756
      %v1885 = vunpack.c.l.b16 %v1757
      %v1886 = vunpack.c.l.b16 %v1758
      %v1887 = vunpack.c.l.b16 %v1759
      %v1888 = vunpack.c.l.b16 %v1760
      %v1889 = vunpack.c.l.b16 %v1761
      %v1890 = vunpack.c.l.b16 %v1762
      %v1891 = vunpack.c.l.b16 %v1763
      %v1892 = vunpack.c.l.b16 %v1764
      %v1893 = vunpack.c.l.b16 %v1765
      %v1894 = vunpack.c.l.b16 %v1766
      %v1895 = vunpack.c.l.b16 %v1767
      %v1896 = vunpack.c.l.b16 %v1768
      %v1897 = vunpack.c.l.b16 %v1769
      %v1898 = vunpack.c.l.b16 %v1770
      %v1899 = vunpack.c.l.b16 %v1771
      %v1900 = vunpack.c.l.b16 %v1772
      %v1901 = vunpack.c.l.b16 %v1773
      %v1902 = vunpack.c.l.b16 %v1774
      %v1903 = vunpack.c.l.b16 %v1775
      %v1904 = vunpack.c.l.b16 %v1776
      %v1905 = vunpack.c.l.b16 %v1777
      %v1906 = vunpack.c.l.b16 %v1778
      %v1907 = vunpack.c.l.b16 %v1779
      %v1908 = vunpack.c.l.b16 %v1780
      %v1909 = vunpack.c.l.b16 %v1781
      %v1910 = vunpack.c.l.b16 %v1782
      %v1911 = vunpack.c.l.b16 %v1783
      %v1912 = vunpack.c.l.b16 %v1784
      %v1913 = vunpack.c.l.b16 %v1785
      %v1914 = vunpack.c.l.b16 %v1786
      %v1915 = vunpack.c.l.b16 %v1787
      %v1916 = vunpack.c.l.b16 %v1788
      %v1917 = vunpack.c.l.b16 %v1789
      %v1918 = vpack.c.b16 %v1855, %v1854
      %v1919 = vpack.c.b16 %v1857, %v1856
      %v1920 = vpack.c.b16 %v1859, %v1858
      %v1921 = vpack.c.b16 %v1861, %v1860
      %v1922 = vpack.c.b16 %v1863, %v1862
      %v1923 = vpack.c.b16 %v1865, %v1864
      %v1924 = vpack.c.b16 %v1867, %v1866
      %v1925 = vpack.c.b16 %v1869, %v1868
      %v1926 = vpack.c.b16 %v1871, %v1870
      %v1927 = vpack.c.b16 %v1873, %v1872
      %v1928 = vpack.c.b16 %v1875, %v1874
      %v1929 = vpack.c.b16 %v1877, %v1876
      %v1930 = vpack.c.b16 %v1879, %v1878
      %v1931 = vpack.c.b16 %v1881, %v1880
      %v1932 = vpack.c.b16 %v1883, %v1882
      %v1933 = vpack.c.b16 %v1885, %v1884
      %v1934 = vpack.c.b16 %v1887, %v1886
      %v1935 = vpack.c.b16 %v1889, %v1888
      %v1936 = vpack.c.b16 %v1891, %v1890
      %v1937 = vpack.c.b16 %v1893, %v1892
      %v1938 = vpack.c.b16 %v1895, %v1894
      %v1939 = vpack.c.b16 %v1897, %v1896
      %v1940 = vpack.c.b16 %v1899, %v1898
      %v1941 = vpack.c.b16 %v1901, %v1900
      %v1942 = vpack.c.b16 %v1903, %v1902
      %v1943 = vpack.c.b16 %v1905, %v1904
      %v1944 = vpack.c.b16 %v1907, %v1906
      %v1945 = vpack.c.b16 %v1909, %v1908
      %v1946 = vpack.c.b16 %v1911, %v1910
      %v1947 = vpack.c.b16 %v1913, %v1912
      %v1948 = vpack.c.b16 %v1915, %v1914
      %v1949 = vpack.c.b16 %v1917, %v1916
      %1982 = vmatprep.subr.bf16.mxu0 0
      %1983 = vmatpush1.bf16.msra.mxu0 %v1918
      %1984 = vmatprep.subr.bf16.mxu0 0
      %1985 = vmatpush1.bf16.msra.mxu0 %v1919
      %1986 = vmatprep.subr.bf16.mxu0 0
      %1987 = vmatpush1.bf16.msra.mxu0 %v1920
      %1988 = vmatprep.subr.bf16.mxu0 0
      %1989 = vmatpush1.bf16.msra.mxu0 %v1921
      %1990 = vmatprep.subr.bf16.mxu0 0
      %1991 = vmatpush1.bf16.msra.mxu0 %v1922
      %1992 = vmatprep.subr.bf16.mxu0 0
      %1993 = vmatpush1.bf16.msra.mxu0 %v1923
      %1994 = vmatprep.subr.bf16.mxu0 0
      %1995 = vmatpush1.bf16.msra.mxu0 %v1924
      %1996 = vmatprep.subr.bf16.mxu0 0
      %1997 = vmatpush1.bf16.msra.mxu0 %v1925
      %1998 = vmatprep.subr.bf16.mxu0 0
      %1999 = vmatpush1.bf16.msra.mxu0 %v1926
      %2000 = vmatprep.subr.bf16.mxu0 0
      %2001 = vmatpush1.bf16.msra.mxu0 %v1927
      %2002 = vmatprep.subr.bf16.mxu0 0
      %2003 = vmatpush1.bf16.msra.mxu0 %v1928
      %2004 = vmatprep.subr.bf16.mxu0 0
      %2005 = vmatpush1.bf16.msra.mxu0 %v1929
      %2006 = vmatprep.subr.bf16.mxu0 0
      %2007 = vmatpush1.bf16.msra.mxu0 %v1930
      %2008 = vmatprep.subr.bf16.mxu0 0
      %2009 = vmatpush1.bf16.msra.mxu0 %v1931
      %2010 = vmatprep.subr.bf16.mxu0 0
      %2011 = vmatpush1.bf16.msra.mxu0 %v1932
      %2012 = vmatprep.subr.bf16.mxu0 0
      %2013 = vmatpush1.bf16.msra.mxu0 %v1933
      %2014 = vmatprep.mubr.bf16.mxu0 %v575
      %2015 = vmatmul.mubr.bf16.gmra.mrb[0].mxu0 %v574
      %v2016 = vpop.f32.mrb[0].mxu0
      %v2017 = vadd.f32 0.0, %v2016
      %v2018 = vpop.f32.mrb[0].mxu0
      %v2019 = vpop.f32.mrb[0].mxu0
      %v2020 = vadd.f32 0.0, %v2019
      %v2021 = vpop.f32.mrb[0].mxu0
      %2022 = vmatprep.mubr.bf16.mxu0 %v579
      %2023 = vmatmul.mubr.bf16.gmra.mrb[0].mxu0 %v578
      %v2024 = vpop.f32.mrb[0].mxu0
      %v2025 = vadd.f32 0.0, %v2024
      %v2026 = vpop.f32.mrb[0].mxu0
      %v2027 = vpop.f32.mrb[0].mxu0
      %v2028 = vadd.f32 0.0, %v2027
      %v2029 = vpop.f32.mrb[0].mxu0
      %2030 = vmatprep.mubr.bf16.mxu0 %v583
      %2031 = vmatmul.mubr.bf16.gmra.mrb[0].mxu0 %v582
      %v2032 = vpop.f32.mrb[0].mxu0
      %v2033 = vadd.f32 0.0, %v2032
      %v2034 = vpop.f32.mrb[0].mxu0
      %v2035 = vpop.f32.mrb[0].mxu0
      %v2036 = vadd.f32 0.0, %v2035
      %v2037 = vpop.f32.mrb[0].mxu0
      %2038 = vmatprep.mubr.bf16.mxu0 %v587
      %2039 = vmatmul.mubr.bf16.gmra.mrb[0].mxu0 %v586
      %v2040 = vpop.f32.mrb[0].mxu0
      %v2041 = vadd.f32 0.0, %v2040
      %v2042 = vpop.f32.mrb[0].mxu0
      %v2043 = vpop.f32.mrb[0].mxu0
      %v2044 = vadd.f32 0.0, %v2043
      %v2045 = vpop.f32.mrb[0].mxu0
      %2046 = vmatprep.mubr.bf16.mxu0 %v591
      %2047 = vmatmul.mubr.bf16.gmra.mrb[0].mxu0 %v590
      %v2048 = vpop.f32.mrb[0].mxu0
      %v2049 = vadd.f32 0.0, %v2048
      %v2050 = vpop.f32.mrb[0].mxu0
      %v2051 = vpop.f32.mrb[0].mxu0
      %v2052 = vadd.f32 0.0, %v2051
      %v2053 = vpop.f32.mrb[0].mxu0
      %2054 = vmatprep.mubr.bf16.mxu0 %v595
      %2055 = vmatmul.mubr.bf16.gmra.mrb[0].mxu0 %v594
      %v2056 = vpop.f32.mrb[0].mxu0
      %v2057 = vadd.f32 0.0, %v2056
      %v2058 = vpop.f32.mrb[0].mxu0
      %v2059 = vpop.f32.mrb[0].mxu0
      %v2060 = vadd.f32 0.0, %v2059
      %v2061 = vpop.f32.mrb[0].mxu0
      %2062 = vmatprep.mubr.bf16.mxu0 %v599
      %2063 = vmatmul.mubr.bf16.gmra.mrb[0].mxu0 %v598
      %v2064 = vpop.f32.mrb[0].mxu0
      %v2065 = vadd.f32 0.0, %v2064
      %v2066 = vpop.f32.mrb[0].mxu0
      %v2067 = vpop.f32.mrb[0].mxu0
      %v2068 = vadd.f32 0.0, %v2067
      %v2069 = vpop.f32.mrb[0].mxu0
      %2070 = vmatprep.mubr.bf16.mxu0 %v603
      %2071 = vmatmul.mubr.bf16.gmra.mrb[0].mxu0 %v602
      %v2072 = vpop.f32.mrb[0].mxu0
      %v2073 = vadd.f32 0.0, %v2072
      %v2074 = vpop.f32.mrb[0].mxu0
      %v2075 = vpop.f32.mrb[0].mxu0
      %v2076 = vadd.f32 0.0, %v2075
      %v2077 = vpop.f32.mrb[0].mxu0
      %2078 = vmatprep.mubr.bf16.mxu0 %v607
      %2079 = vmatmul.mubr.bf16.gmra.mrb[0].mxu0 %v606
      %v2080 = vpop.f32.mrb[0].mxu0
      %v2081 = vadd.f32 0.0, %v2080
      %v2082 = vpop.f32.mrb[0].mxu0
      %v2083 = vpop.f32.mrb[0].mxu0
      %v2084 = vadd.f32 0.0, %v2083
      %v2085 = vpop.f32.mrb[0].mxu0
      %2086 = vmatprep.mubr.bf16.mxu0 %v611
      %2087 = vmatmul.mubr.bf16.gmra.mrb[0].mxu0 %v610
      %v2088 = vpop.f32.mrb[0].mxu0
      %v2089 = vadd.f32 0.0, %v2088
      %v2090 = vpop.f32.mrb[0].mxu0
      %v2091 = vpop.f32.mrb[0].mxu0
      %v2092 = vadd.f32 0.0, %v2091
      %v2093 = vpop.f32.mrb[0].mxu0
      %2094 = vmatprep.mubr.bf16.mxu0 %v615
      %2095 = vmatmul.mubr.bf16.gmra.mrb[0].mxu0 %v614
      %v2096 = vpop.f32.mrb[0].mxu0
      %v2097 = vadd.f32 0.0, %v2096
      %v2098 = vpop.f32.mrb[0].mxu0
      %v2099 = vpop.f32.mrb[0].mxu0
      %v2100 = vadd.f32 0.0, %v2099
      %v2101 = vpop.f32.mrb[0].mxu0
      %2102 = vmatprep.mubr.bf16.mxu0 %v619
      %2103 = vmatmul.mubr.bf16.gmra.mrb[0].mxu0 %v618
      %v2104 = vpop.f32.mrb[0].mxu0
      %v2105 = vadd.f32 0.0, %v2104
      %v2106 = vpop.f32.mrb[0].mxu0
      %v2107 = vpop.f32.mrb[0].mxu0
      %v2108 = vadd.f32 0.0, %v2107
      %v2109 = vpop.f32.mrb[0].mxu0
      %2110 = vmatprep.mubr.bf16.mxu0 %v623
      %2111 = vmatmul.mubr.bf16.gmra.mrb[0].mxu0 %v622
      %v2112 = vpop.f32.mrb[0].mxu0
      %v2113 = vadd.f32 0.0, %v2112
      %v2114 = vpop.f32.mrb[0].mxu0
      %v2115 = vpop.f32.mrb[0].mxu0
      %v2116 = vadd.f32 0.0, %v2115
      %v2117 = vpop.f32.mrb[0].mxu0
      %2118 = vmatprep.mubr.bf16.mxu0 %v627
      %2119 = vmatmul.mubr.bf16.gmra.mrb[0].mxu0 %v626
      %v2120 = vpop.f32.mrb[0].mxu0
      %v2121 = vadd.f32 0.0, %v2120
      %v2122 = vpop.f32.mrb[0].mxu0
      %v2123 = vpop.f32.mrb[0].mxu0
      %v2124 = vadd.f32 0.0, %v2123
      %v2125 = vpop.f32.mrb[0].mxu0
      %2126 = vmatprep.mubr.bf16.mxu0 %v631
      %2127 = vmatmul.mubr.bf16.gmra.mrb[0].mxu0 %v630
      %v2128 = vpop.f32.mrb[0].mxu0
      %v2129 = vadd.f32 0.0, %v2128
      %v2130 = vpop.f32.mrb[0].mxu0
      %v2131 = vpop.f32.mrb[0].mxu0
      %v2132 = vadd.f32 0.0, %v2131
      %v2133 = vpop.f32.mrb[0].mxu0
      %2134 = vmatprep.mubr.bf16.mxu0 %v635
      %2135 = vmatmul.mubr.bf16.gmra.mrb[0].mxu0 %v634
      %v2136 = vpop.f32.mrb[0].mxu0
      %v2137 = vadd.f32 0.0, %v2136
      %v2138 = vpop.f32.mrb[0].mxu0
      %v2139 = vpop.f32.mrb[0].mxu0
      %v2140 = vadd.f32 0.0, %v2139
      %v2141 = vpop.f32.mrb[0].mxu0
      %2142 = vmatprep.mubr.bf16.mxu0 %v1119
      %2143 = vmatmul.mubr.bf16.gmra.mrb[0].mxu0 %v1118
      %v2144 = vpop.f32.mrb[0].mxu0
      %v2145 = vadd.f32 0.0, %v2144
      %v2146 = vpop.f32.mrb[0].mxu0
      %v2147 = vpop.f32.mrb[0].mxu0
      %v2148 = vadd.f32 0.0, %v2147
      %v2149 = vpop.f32.mrb[0].mxu0
      %2150 = vmatprep.mubr.bf16.mxu0 %v1123
      %2151 = vmatmul.mubr.bf16.gmra.mrb[0].mxu0 %v1122
      %v2152 = vpop.f32.mrb[0].mxu0
      %v2153 = vadd.f32 0.0, %v2152
      %v2154 = vpop.f32.mrb[0].mxu0
      %v2155 = vpop.f32.mrb[0].mxu0
      %v2156 = vadd.f32 0.0, %v2155
      %v2157 = vpop.f32.mrb[0].mxu0
      %2158 = vmatprep.mubr.bf16.mxu0 %v1127
      %2159 = vmatmul.mubr.bf16.gmra.mrb[0].mxu0 %v1126
      %v2160 = vpop.f32.mrb[0].mxu0
      %v2161 = vadd.f32 0.0, %v2160
      %v2162 = vpop.f32.mrb[0].mxu0
      %v2163 = vpop.f32.mrb[0].mxu0
      %v2164 = vadd.f32 0.0, %v2163
      %v2165 = vpop.f32.mrb[0].mxu0
      %2166 = vmatprep.mubr.bf16.mxu0 %v1131
      %2167 = vmatmul.mubr.bf16.gmra.mrb[0].mxu0 %v1130
      %v2168 = vpop.f32.mrb[0].mxu0
      %v2169 = vadd.f32 0.0, %v2168
      %v2170 = vpop.f32.mrb[0].mxu0
      %v2171 = vpop.f32.mrb[0].mxu0
      %v2172 = vadd.f32 0.0, %v2171
      %v2173 = vpop.f32.mrb[0].mxu0
      %2174 = vmatprep.mubr.bf16.mxu0 %v1135
      %2175 = vmatmul.mubr.bf16.gmra.mrb[0].mxu0 %v1134
      %v2176 = vpop.f32.mrb[0].mxu0
      %v2177 = vadd.f32 0.0, %v2176
      %v2178 = vpop.f32.mrb[0].mxu0
      %v2179 = vpop.f32.mrb[0].mxu0
      %v2180 = vadd.f32 0.0, %v2179
      %v2181 = vpop.f32.mrb[0].mxu0
      %2182 = vmatprep.mubr.bf16.mxu0 %v1139
      %2183 = vmatmul.mubr.bf16.gmra.mrb[0].mxu0 %v1138
      %v2184 = vpop.f32.mrb[0].mxu0
      %v2185 = vadd.f32 0.0, %v2184
      %v2186 = vpop.f32.mrb[0].mxu0
      %v2187 = vpop.f32.mrb[0].mxu0
      %v2188 = vadd.f32 0.0, %v2187
      %v2189 = vpop.f32.mrb[0].mxu0
      %2190 = vmatprep.mubr.bf16.mxu0 %v1143
      %2191 = vmatmul.mubr.bf16.gmra.mrb[0].mxu0 %v1142
      %v2192 = vpop.f32.mrb[0].mxu0
      %v2193 = vadd.f32 0.0, %v2192
      %v2194 = vpop.f32.mrb[0].mxu0
      %v2195 = vpop.f32.mrb[0].mxu0
      %v2196 = vadd.f32 0.0, %v2195
      %v2197 = vpop.f32.mrb[0].mxu0
      %2198 = vmatprep.mubr.bf16.mxu0 %v1147
      %2199 = vmatmul.mubr.bf16.gmra.mrb[0].mxu0 %v1146
      %v2200 = vpop.f32.mrb[0].mxu0
      %v2201 = vadd.f32 0.0, %v2200
      %v2202 = vpop.f32.mrb[0].mxu0
      %v2203 = vpop.f32.mrb[0].mxu0
      %v2204 = vadd.f32 0.0, %v2203
      %v2205 = vpop.f32.mrb[0].mxu0
      %2206 = vmatprep.mubr.bf16.mxu0 %v1151
      %2207 = vmatmul.mubr.bf16.gmra.mrb[0].mxu0 %v1150
      %v2208 = vpop.f32.mrb[0].mxu0
      %v2209 = vadd.f32 0.0, %v2208
      %v2210 = vpop.f32.mrb[0].mxu0
      %v2211 = vpop.f32.mrb[0].mxu0
      %v2212 = vadd.f32 0.0, %v2211
      %v2213 = vpop.f32.mrb[0].mxu0
      %2214 = vmatprep.mubr.bf16.mxu0 %v1155
      %2215 = vmatmul.mubr.bf16.gmra.mrb[0].mxu0 %v1154
      %v2216 = vpop.f32.mrb[0].mxu0
      %v2217 = vadd.f32 0.0, %v2216
      %v2218 = vpop.f32.mrb[0].mxu0
      %v2219 = vpop.f32.mrb[0].mxu0
      %v2220 = vadd.f32 0.0, %v2219
      %v2221 = vpop.f32.mrb[0].mxu0
      %2222 = vmatprep.mubr.bf16.mxu0 %v1159
      %2223 = vmatmul.mubr.bf16.gmra.mrb[0].mxu0 %v1158
      %v2224 = vpop.f32.mrb[0].mxu0
      %v2225 = vadd.f32 0.0, %v2224
      %v2226 = vpop.f32.mrb[0].mxu0
      %v2227 = vpop.f32.mrb[0].mxu0
      %v2228 = vadd.f32 0.0, %v2227
      %v2229 = vpop.f32.mrb[0].mxu0
      %2230 = vmatprep.mubr.bf16.mxu0 %v1163
      %2231 = vmatmul.mubr.bf16.gmra.mrb[0].mxu0 %v1162
      %v2232 = vpop.f32.mrb[0].mxu0
      %v2233 = vadd.f32 0.0, %v2232
      %v2234 = vpop.f32.mrb[0].mxu0
      %v2235 = vpop.f32.mrb[0].mxu0
      %v2236 = vadd.f32 0.0, %v2235
      %v2237 = vpop.f32.mrb[0].mxu0
      %2238 = vmatprep.mubr.bf16.mxu0 %v1167
      %2239 = vmatmul.mubr.bf16.gmra.mrb[0].mxu0 %v1166
      %v2240 = vpop.f32.mrb[0].mxu0
      %v2241 = vadd.f32 0.0, %v2240
      %v2242 = vpop.f32.mrb[0].mxu0
      %v2243 = vpop.f32.mrb[0].mxu0
      %v2244 = vadd.f32 0.0, %v2243
      %v2245 = vpop.f32.mrb[0].mxu0
      %2246 = vmatprep.mubr.bf16.mxu0 %v1171
      %2247 = vmatmul.mubr.bf16.gmra.mrb[0].mxu0 %v1170
      %v2248 = vpop.f32.mrb[0].mxu0
      %v2249 = vadd.f32 0.0, %v2248
      %v2250 = vpop.f32.mrb[0].mxu0
      %v2251 = vpop.f32.mrb[0].mxu0
      %v2252 = vadd.f32 0.0, %v2251
      %v2253 = vpop.f32.mrb[0].mxu0
      %2254 = vmatprep.mubr.bf16.mxu0 %v1175
      %2255 = vmatmul.mubr.bf16.gmra.mrb[0].mxu0 %v1174
      %v2256 = vpop.f32.mrb[0].mxu0
      %v2257 = vadd.f32 0.0, %v2256
      %v2258 = vpop.f32.mrb[0].mxu0
      %v2259 = vpop.f32.mrb[0].mxu0
      %v2260 = vadd.f32 0.0, %v2259
      %v2261 = vpop.f32.mrb[0].mxu0
      %2262 = vmatprep.mubr.bf16.mxu0 %v1179
      %2263 = vmatmul.mubr.bf16.gmra.mrb[0].mxu0 %v1178
      %v2264 = vpop.f32.mrb[0].mxu0
      %v2265 = vadd.f32 0.0, %v2264
      %v2266 = vpop.f32.mrb[0].mxu0
      %v2267 = vpop.f32.mrb[0].mxu0
      %v2268 = vadd.f32 0.0, %v2267
      %v2269 = vpop.f32.mrb[0].mxu0
      %2270 = vmatprep.mubr.bf16.mxu0 %v1663
      %2271 = vmatmul.mubr.bf16.gmra.mrb[0].mxu0 %v1662
      %v2272 = vpop.f32.mrb[0].mxu0
      %v2273 = vadd.f32 0.0, %v2272
      %v2274 = vpop.f32.mrb[0].mxu0
      %v2275 = vpop.f32.mrb[0].mxu0
      %v2276 = vadd.f32 0.0, %v2275
      %v2277 = vpop.f32.mrb[0].mxu0
      %2278 = vmatprep.mubr.bf16.mxu0 %v1667
      %2279 = vmatmul.mubr.bf16.gmra.mrb[0].mxu0 %v1666
      %v2280 = vpop.f32.mrb[0].mxu0
      %v2281 = vadd.f32 0.0, %v2280
      %v2282 = vpop.f32.mrb[0].mxu0
      %v2283 = vpop.f32.mrb[0].mxu0
      %v2284 = vadd.f32 0.0, %v2283
      %v2285 = vpop.f32.mrb[0].mxu0
      %2286 = vmatprep.mubr.bf16.mxu0 %v1671
      %2287 = vmatmul.mubr.bf16.gmra.mrb[0].mxu0 %v1670
      %v2288 = vpop.f32.mrb[0].mxu0
      %v2289 = vadd.f32 0.0, %v2288
      %v2290 = vpop.f32.mrb[0].mxu0
      %v2291 = vpop.f32.mrb[0].mxu0
      %v2292 = vadd.f32 0.0, %v2291
      %v2293 = vpop.f32.mrb[0].mxu0
      %2294 = vmatprep.mubr.bf16.mxu0 %v1675
      %2295 = vmatmul.mubr.bf16.gmra.mrb[0].mxu0 %v1674
      %v2296 = vpop.f32.mrb[0].mxu0
      %v2297 = vadd.f32 0.0, %v2296
      %v2298 = vpop.f32.mrb[0].mxu0
      %v2299 = vpop.f32.mrb[0].mxu0
      %v2300 = vadd.f32 0.0, %v2299
      %v2301 = vpop.f32.mrb[0].mxu0
      %2302 = vmatprep.mubr.bf16.mxu0 %v1679
      %2303 = vmatmul.mubr.bf16.gmra.mrb[0].mxu0 %v1678
      %v2304 = vpop.f32.mrb[0].mxu0
      %v2305 = vadd.f32 0.0, %v2304
      %v2306 = vpop.f32.mrb[0].mxu0
      %v2307 = vpop.f32.mrb[0].mxu0
      %v2308 = vadd.f32 0.0, %v2307
      %v2309 = vpop.f32.mrb[0].mxu0
      %2310 = vmatprep.mubr.bf16.mxu0 %v1683
      %2311 = vmatmul.mubr.bf16.gmra.mrb[0].mxu0 %v1682
      %v2312 = vpop.f32.mrb[0].mxu0
      %v2313 = vadd.f32 0.0, %v2312
      %v2314 = vpop.f32.mrb[0].mxu0
      %v2315 = vpop.f32.mrb[0].mxu0
      %v2316 = vadd.f32 0.0, %v2315
      %v2317 = vpop.f32.mrb[0].mxu0
      %2318 = vmatprep.mubr.bf16.mxu0 %v1687
      %2319 = vmatmul.mubr.bf16.gmra.mrb[0].mxu0 %v1686
      %v2320 = vpop.f32.mrb[0].mxu0
      %v2321 = vadd.f32 0.0, %v2320
      %v2322 = vpop.f32.mrb[0].mxu0
      %v2323 = vpop.f32.mrb[0].mxu0
      %v2324 = vadd.f32 0.0, %v2323
      %v2325 = vpop.f32.mrb[0].mxu0
      %2326 = vmatprep.mubr.bf16.mxu0 %v1691
      %2327 = vmatmul.mubr.bf16.gmra.mrb[0].mxu0 %v1690
      %v2328 = vpop.f32.mrb[0].mxu0
      %v2329 = vadd.f32 0.0, %v2328
      %v2330 = vpop.f32.mrb[0].mxu0
      %v2331 = vpop.f32.mrb[0].mxu0
      %v2332 = vadd.f32 0.0, %v2331
      %v2333 = vpop.f32.mrb[0].mxu0
      %2334 = vmatprep.mubr.bf16.mxu0 %v1695
      %2335 = vmatmul.mubr.bf16.gmra.mrb[0].mxu0 %v1694
      %v2336 = vpop.f32.mrb[0].mxu0
      %v2337 = vadd.f32 0.0, %v2336
      %v2338 = vpop.f32.mrb[0].mxu0
      %v2339 = vpop.f32.mrb[0].mxu0
      %v2340 = vadd.f32 0.0, %v2339
      %v2341 = vpop.f32.mrb[0].mxu0
      %2342 = vmatprep.mubr.bf16.mxu0 %v1699
      %2343 = vmatmul.mubr.bf16.gmra.mrb[0].mxu0 %v1698
      %v2344 = vpop.f32.mrb[0].mxu0
      %v2345 = vadd.f32 0.0, %v2344
      %v2346 = vpop.f32.mrb[0].mxu0
      %v2347 = vpop.f32.mrb[0].mxu0
      %v2348 = vadd.f32 0.0, %v2347
      %v2349 = vpop.f32.mrb[0].mxu0
      %2350 = vmatprep.mubr.bf16.mxu0 %v1703
      %2351 = vmatmul.mubr.bf16.gmra.mrb[0].mxu0 %v1702
      %v2352 = vpop.f32.mrb[0].mxu0
      %v2353 = vadd.f32 0.0, %v2352
      %v2354 = vpop.f32.mrb[0].mxu0
      %v2355 = vpop.f32.mrb[0].mxu0
      %v2356 = vadd.f32 0.0, %v2355
      %v2357 = vpop.f32.mrb[0].mxu0
      %2358 = vmatprep.mubr.bf16.mxu0 %v1707
      %2359 = vmatmul.mubr.bf16.gmra.mrb[0].mxu0 %v1706
      %v2360 = vpop.f32.mrb[0].mxu0
      %v2361 = vadd.f32 0.0, %v2360
      %v2362 = vpop.f32.mrb[0].mxu0
      %v2363 = vpop.f32.mrb[0].mxu0
      %v2364 = vadd.f32 0.0, %v2363
      %v2365 = vpop.f32.mrb[0].mxu0
      %2366 = vmatprep.mubr.bf16.mxu0 %v1711
      %2367 = vmatmul.mubr.bf16.gmra.mrb[0].mxu0 %v1710
      %v2368 = vpop.f32.mrb[0].mxu0
      %v2369 = vadd.f32 0.0, %v2368
      %v2370 = vpop.f32.mrb[0].mxu0
      %v2371 = vpop.f32.mrb[0].mxu0
      %v2372 = vadd.f32 0.0, %v2371
      %v2373 = vpop.f32.mrb[0].mxu0
      %2374 = vmatprep.mubr.bf16.mxu0 %v1715
      %2375 = vmatmul.mubr.bf16.gmra.mrb[0].mxu0 %v1714
      %v2376 = vpop.f32.mrb[0].mxu0
      %v2377 = vadd.f32 0.0, %v2376
      %v2378 = vpop.f32.mrb[0].mxu0
      %v2379 = vpop.f32.mrb[0].mxu0
      %v2380 = vadd.f32 0.0, %v2379
      %v2381 = vpop.f32.mrb[0].mxu0
      %2382 = vmatprep.mubr.bf16.mxu0 %v1719
      %2383 = vmatmul.mubr.bf16.gmra.mrb[0].mxu0 %v1718
      %v2384 = vpop.f32.mrb[0].mxu0
      %v2385 = vadd.f32 0.0, %v2384
      %v2386 = vpop.f32.mrb[0].mxu0
      %v2387 = vpop.f32.mrb[0].mxu0
      %v2388 = vadd.f32 0.0, %v2387
      %v2389 = vpop.f32.mrb[0].mxu0
      %2390 = vmatprep.mubr.bf16.mxu0 %v1723
      %2391 = vmatmul.mubr.bf16.gmra.mrb[0].mxu0 %v1722
      %v2392 = vpop.f32.mrb[0].mxu0
      %v2393 = vadd.f32 0.0, %v2392
      %v2394 = vpop.f32.mrb[0].mxu0
      %v2395 = vpop.f32.mrb[0].mxu0
      %v2396 = vadd.f32 0.0, %v2395
      %v2397 = vpop.f32.mrb[0].mxu0
      %2398 = vdwg.mxu0
      %2399 = vmatprep.subr.bf16.mxu0 0
      %2400 = vmatpush1.bf16.msra.mxu0 %v1934
      %2401 = vmatprep.subr.bf16.mxu0 0
      %2402 = vmatpush1.bf16.msra.mxu0 %v1935
      %2403 = vmatprep.subr.bf16.mxu0 0
      %2404 = vmatpush1.bf16.msra.mxu0 %v1936
      %2405 = vmatprep.subr.bf16.mxu0 0
      %2406 = vmatpush1.bf16.msra.mxu0 %v1937
      %2407 = vmatprep.subr.bf16.mxu0 0
      %2408 = vmatpush1.bf16.msra.mxu0 %v1938
      %2409 = vmatprep.subr.bf16.mxu0 0
      %2410 = vmatpush1.bf16.msra.mxu0 %v1939
      %2411 = vmatprep.subr.bf16.mxu0 0
      %2412 = vmatpush1.bf16.msra.mxu0 %v1940
      %2413 = vmatprep.subr.bf16.mxu0 0
      %2414 = vmatpush1.bf16.msra.mxu0 %v1941
      %2415 = vmatprep.subr.bf16.mxu0 0
      %2416 = vmatpush1.bf16.msra.mxu0 %v1942
      %2417 = vmatprep.subr.bf16.mxu0 0
      %2418 = vmatpush1.bf16.msra.mxu0 %v1943
      %2419 = vmatprep.subr.bf16.mxu0 0
      %2420 = vmatpush1.bf16.msra.mxu0 %v1944
      %2421 = vmatprep.subr.bf16.mxu0 0
      %2422 = vmatpush1.bf16.msra.mxu0 %v1945
      %2423 = vmatprep.subr.bf16.mxu0 0
      %2424 = vmatpush1.bf16.msra.mxu0 %v1946
      %2425 = vmatprep.subr.bf16.mxu0 0
      %2426 = vmatpush1.bf16.msra.mxu0 %v1947
      %2427 = vmatprep.subr.bf16.mxu0 0
      %2428 = vmatpush1.bf16.msra.mxu0 %v1948
      %2429 = vmatprep.subr.bf16.mxu0 0
      %2430 = vmatpush1.bf16.msra.mxu0 %v1949
      %2431 = vmatprep.mubr.bf16.mxu0 %v577
      %2432 = vmatmul.mubr.bf16.gmra.mrb[0].mxu0 %v576
      %v2433 = vpop.f32.mrb[0].mxu0
      %v2434 = vadd.f32 %v2017, %v2433
      %v2435 = vpop.f32.mrb[0].mxu0
      %v2436 = vpop.f32.mrb[0].mxu0
      %v2437 = vadd.f32 %v2020, %v2436
      %v2438 = vpop.f32.mrb[0].mxu0
      %2439 = vmatprep.mubr.bf16.mxu0 %v581
      %2440 = vmatmul.mubr.bf16.gmra.mrb[0].mxu0 %v580
      %v2441 = vpop.f32.mrb[0].mxu0
      %v2442 = vadd.f32 %v2025, %v2441
      %v2443 = vpop.f32.mrb[0].mxu0
      %v2444 = vpop.f32.mrb[0].mxu0
      %v2445 = vadd.f32 %v2028, %v2444
      %v2446 = vpop.f32.mrb[0].mxu0
      %2447 = vmatprep.mubr.bf16.mxu0 %v585
      %2448 = vmatmul.mubr.bf16.gmra.mrb[0].mxu0 %v584
      %v2449 = vpop.f32.mrb[0].mxu0
      %v2450 = vadd.f32 %v2033, %v2449
      %v2451 = vpop.f32.mrb[0].mxu0
      %v2452 = vpop.f32.mrb[0].mxu0
      %v2453 = vadd.f32 %v2036, %v2452
      %v2454 = vpop.f32.mrb[0].mxu0
      %2455 = vmatprep.mubr.bf16.mxu0 %v589
      %2456 = vmatmul.mubr.bf16.gmra.mrb[0].mxu0 %v588
      %v2457 = vpop.f32.mrb[0].mxu0
      %v2458 = vadd.f32 %v2041, %v2457
      %v2459 = vpop.f32.mrb[0].mxu0
      %v2460 = vpop.f32.mrb[0].mxu0
      %v2461 = vadd.f32 %v2044, %v2460
      %v2462 = vpop.f32.mrb[0].mxu0
      %2463 = vmatprep.mubr.bf16.mxu0 %v593
      %2464 = vmatmul.mubr.bf16.gmra.mrb[0].mxu0 %v592
      %v2465 = vpop.f32.mrb[0].mxu0
      %v2466 = vadd.f32 %v2049, %v2465
      %v2467 = vpop.f32.mrb[0].mxu0
      %v2468 = vpop.f32.mrb[0].mxu0
      %v2469 = vadd.f32 %v2052, %v2468
      %v2470 = vpop.f32.mrb[0].mxu0
      %2471 = vmatprep.mubr.bf16.mxu0 %v597
      %2472 = vmatmul.mubr.bf16.gmra.mrb[0].mxu0 %v596
      %v2473 = vpop.f32.mrb[0].mxu0
      %v2474 = vadd.f32 %v2057, %v2473
      %v2475 = vpop.f32.mrb[0].mxu0
      %v2476 = vpop.f32.mrb[0].mxu0
      %v2477 = vadd.f32 %v2060, %v2476
      %v2478 = vpop.f32.mrb[0].mxu0
      %2479 = vmatprep.mubr.bf16.mxu0 %v601
      %2480 = vmatmul.mubr.bf16.gmra.mrb[0].mxu0 %v600
      %v2481 = vpop.f32.mrb[0].mxu0
      %v2482 = vadd.f32 %v2065, %v2481
      %v2483 = vpop.f32.mrb[0].mxu0
      %v2484 = vpop.f32.mrb[0].mxu0
      %v2485 = vadd.f32 %v2068, %v2484
      %v2486 = vpop.f32.mrb[0].mxu0
      %2487 = vmatprep.mubr.bf16.mxu0 %v605
      %2488 = vmatmul.mubr.bf16.gmra.mrb[0].mxu0 %v604
      %v2489 = vpop.f32.mrb[0].mxu0
      %v2490 = vadd.f32 %v2073, %v2489
      %v2491 = vpop.f32.mrb[0].mxu0
      %v2492 = vpop.f32.mrb[0].mxu0
      %v2493 = vadd.f32 %v2076, %v2492
      %v2494 = vpop.f32.mrb[0].mxu0
      %2495 = vmatprep.mubr.bf16.mxu0 %v609
      %2496 = vmatmul.mubr.bf16.gmra.mrb[0].mxu0 %v608
      %v2497 = vpop.f32.mrb[0].mxu0
      %v2498 = vadd.f32 %v2081, %v2497
      %v2499 = vpop.f32.mrb[0].mxu0
      %v2500 = vpop.f32.mrb[0].mxu0
      %v2501 = vadd.f32 %v2084, %v2500
      %v2502 = vpop.f32.mrb[0].mxu0
      %2503 = vmatprep.mubr.bf16.mxu0 %v613
      %2504 = vmatmul.mubr.bf16.gmra.mrb[0].mxu0 %v612
      %v2505 = vpop.f32.mrb[0].mxu0
      %v2506 = vadd.f32 %v2089, %v2505
      %v2507 = vpop.f32.mrb[0].mxu0
      %v2508 = vpop.f32.mrb[0].mxu0
      %v2509 = vadd.f32 %v2092, %v2508
      %v2510 = vpop.f32.mrb[0].mxu0
      %2511 = vmatprep.mubr.bf16.mxu0 %v617
      %2512 = vmatmul.mubr.bf16.gmra.mrb[0].mxu0 %v616
      %v2513 = vpop.f32.mrb[0].mxu0
      %v2514 = vadd.f32 %v2097, %v2513
      %v2515 = vpop.f32.mrb[0].mxu0
      %v2516 = vpop.f32.mrb[0].mxu0
      %v2517 = vadd.f32 %v2100, %v2516
      %v2518 = vpop.f32.mrb[0].mxu0
      %2519 = vmatprep.mubr.bf16.mxu0 %v621
      %2520 = vmatmul.mubr.bf16.gmra.mrb[0].mxu0 %v620
      %v2521 = vpop.f32.mrb[0].mxu0
      %v2522 = vadd.f32 %v2105, %v2521
      %v2523 = vpop.f32.mrb[0].mxu0
      %v2524 = vpop.f32.mrb[0].mxu0
      %v2525 = vadd.f32 %v2108, %v2524
      %v2526 = vpop.f32.mrb[0].mxu0
      %2527 = vmatprep.mubr.bf16.mxu0 %v625
      %2528 = vmatmul.mubr.bf16.gmra.mrb[0].mxu0 %v624
      %v2529 = vpop.f32.mrb[0].mxu0
      %v2530 = vadd.f32 %v2113, %v2529
      %v2531 = vpop.f32.mrb[0].mxu0
      %v2532 = vpop.f32.mrb[0].mxu0
      %v2533 = vadd.f32 %v2116, %v2532
      %v2534 = vpop.f32.mrb[0].mxu0
      %2535 = vmatprep.mubr.bf16.mxu0 %v629
      %2536 = vmatmul.mubr.bf16.gmra.mrb[0].mxu0 %v628
      %v2537 = vpop.f32.mrb[0].mxu0
      %v2538 = vadd.f32 %v2121, %v2537
      %v2539 = vpop.f32.mrb[0].mxu0
      %v2540 = vpop.f32.mrb[0].mxu0
      %v2541 = vadd.f32 %v2124, %v2540
      %v2542 = vpop.f32.mrb[0].mxu0
      %2543 = vmatprep.mubr.bf16.mxu0 %v633
      %2544 = vmatmul.mubr.bf16.gmra.mrb[0].mxu0 %v632
      %v2545 = vpop.f32.mrb[0].mxu0
      %v2546 = vadd.f32 %v2129, %v2545
      %v2547 = vpop.f32.mrb[0].mxu0
      %v2548 = vpop.f32.mrb[0].mxu0
      %v2549 = vadd.f32 %v2132, %v2548
      %v2550 = vpop.f32.mrb[0].mxu0
      %2551 = vmatprep.mubr.bf16.mxu0 %v637
      %2552 = vmatmul.mubr.bf16.gmra.mrb[0].mxu0 %v636
      %v2553 = vpop.f32.mrb[0].mxu0
      %v2554 = vadd.f32 %v2137, %v2553
      %v2555 = vpop.f32.mrb[0].mxu0
      %v2556 = vpop.f32.mrb[0].mxu0
      %v2557 = vadd.f32 %v2140, %v2556
      %v2558 = vpop.f32.mrb[0].mxu0
      %2559 = vmatprep.mubr.bf16.mxu0 %v1121
      %2560 = vmatmul.mubr.bf16.gmra.mrb[0].mxu0 %v1120
      %v2561 = vpop.f32.mrb[0].mxu0
      %v2562 = vadd.f32 %v2145, %v2561
      %v2563 = vpop.f32.mrb[0].mxu0
      %v2564 = vpop.f32.mrb[0].mxu0
      %v2565 = vadd.f32 %v2148, %v2564
      %v2566 = vpop.f32.mrb[0].mxu0
      %2567 = vmatprep.mubr.bf16.mxu0 %v1125
      %2568 = vmatmul.mubr.bf16.gmra.mrb[0].mxu0 %v1124
      %v2569 = vpop.f32.mrb[0].mxu0
      %v2570 = vadd.f32 %v2153, %v2569
      %v2571 = vpop.f32.mrb[0].mxu0
      %v2572 = vpop.f32.mrb[0].mxu0
      %v2573 = vadd.f32 %v2156, %v2572
      %v2574 = vpop.f32.mrb[0].mxu0
      %2575 = vmatprep.mubr.bf16.mxu0 %v1129
      %2576 = vmatmul.mubr.bf16.gmra.mrb[0].mxu0 %v1128
      %v2577 = vpop.f32.mrb[0].mxu0
      %v2578 = vadd.f32 %v2161, %v2577
      %v2579 = vpop.f32.mrb[0].mxu0
      %v2580 = vpop.f32.mrb[0].mxu0
      %v2581 = vadd.f32 %v2164, %v2580
      %v2582 = vpop.f32.mrb[0].mxu0
      %2583 = vmatprep.mubr.bf16.mxu0 %v1133
      %2584 = vmatmul.mubr.bf16.gmra.mrb[0].mxu0 %v1132
      %v2585 = vpop.f32.mrb[0].mxu0
      %v2586 = vadd.f32 %v2169, %v2585
      %v2587 = vpop.f32.mrb[0].mxu0
      %v2588 = vpop.f32.mrb[0].mxu0
      %v2589 = vadd.f32 %v2172, %v2588
      %v2590 = vpop.f32.mrb[0].mxu0
      %2591 = vmatprep.mubr.bf16.mxu0 %v1137
      %2592 = vmatmul.mubr.bf16.gmra.mrb[0].mxu0 %v1136
      %v2593 = vpop.f32.mrb[0].mxu0
      %v2594 = vadd.f32 %v2177, %v2593
      %v2595 = vpop.f32.mrb[0].mxu0
      %v2596 = vpop.f32.mrb[0].mxu0
      %v2597 = vadd.f32 %v2180, %v2596
      %v2598 = vpop.f32.mrb[0].mxu0
      %2599 = vmatprep.mubr.bf16.mxu0 %v1141
      %2600 = vmatmul.mubr.bf16.gmra.mrb[0].mxu0 %v1140
      %v2601 = vpop.f32.mrb[0].mxu0
      %v2602 = vadd.f32 %v2185, %v2601
      %v2603 = vpop.f32.mrb[0].mxu0
      %v2604 = vpop.f32.mrb[0].mxu0
      %v2605 = vadd.f32 %v2188, %v2604
      %v2606 = vpop.f32.mrb[0].mxu0
      %2607 = vmatprep.mubr.bf16.mxu0 %v1145
      %2608 = vmatmul.mubr.bf16.gmra.mrb[0].mxu0 %v1144
      %v2609 = vpop.f32.mrb[0].mxu0
      %v2610 = vadd.f32 %v2193, %v2609
      %v2611 = vpop.f32.mrb[0].mxu0
      %v2612 = vpop.f32.mrb[0].mxu0
      %v2613 = vadd.f32 %v2196, %v2612
      %v2614 = vpop.f32.mrb[0].mxu0
      %2615 = vmatprep.mubr.bf16.mxu0 %v1149
      %2616 = vmatmul.mubr.bf16.gmra.mrb[0].mxu0 %v1148
      %v2617 = vpop.f32.mrb[0].mxu0
      %v2618 = vadd.f32 %v2201, %v2617
      %v2619 = vpop.f32.mrb[0].mxu0
      %v2620 = vpop.f32.mrb[0].mxu0
      %v2621 = vadd.f32 %v2204, %v2620
      %v2622 = vpop.f32.mrb[0].mxu0
      %2623 = vmatprep.mubr.bf16.mxu0 %v1153
      %2624 = vmatmul.mubr.bf16.gmra.mrb[0].mxu0 %v1152
      %v2625 = vpop.f32.mrb[0].mxu0
      %v2626 = vadd.f32 %v2209, %v2625
      %v2627 = vpop.f32.mrb[0].mxu0
      %v2628 = vpop.f32.mrb[0].mxu0
      %v2629 = vadd.f32 %v2212, %v2628
      %v2630 = vpop.f32.mrb[0].mxu0
      %2631 = vmatprep.mubr.bf16.mxu0 %v1157
      %2632 = vmatmul.mubr.bf16.gmra.mrb[0].mxu0 %v1156
      %v2633 = vpop.f32.mrb[0].mxu0
      %v2634 = vadd.f32 %v2217, %v2633
      %v2635 = vpop.f32.mrb[0].mxu0
      %v2636 = vpop.f32.mrb[0].mxu0
      %v2637 = vadd.f32 %v2220, %v2636
      %v2638 = vpop.f32.mrb[0].mxu0
      %2639 = vmatprep.mubr.bf16.mxu0 %v1161
      %2640 = vmatmul.mubr.bf16.gmra.mrb[0].mxu0 %v1160
      %v2641 = vpop.f32.mrb[0].mxu0
      %v2642 = vadd.f32 %v2225, %v2641
      %v2643 = vpop.f32.mrb[0].mxu0
      %v2644 = vpop.f32.mrb[0].mxu0
      %v2645 = vadd.f32 %v2228, %v2644
      %v2646 = vpop.f32.mrb[0].mxu0
      %2647 = vmatprep.mubr.bf16.mxu0 %v1165
      %2648 = vmatmul.mubr.bf16.gmra.mrb[0].mxu0 %v1164
      %v2649 = vpop.f32.mrb[0].mxu0
      %v2650 = vadd.f32 %v2233, %v2649
      %v2651 = vpop.f32.mrb[0].mxu0
      %v2652 = vpop.f32.mrb[0].mxu0
      %v2653 = vadd.f32 %v2236, %v2652
      %v2654 = vpop.f32.mrb[0].mxu0
      %2655 = vmatprep.mubr.bf16.mxu0 %v1169
      %2656 = vmatmul.mubr.bf16.gmra.mrb[0].mxu0 %v1168
      %v2657 = vpop.f32.mrb[0].mxu0
      %v2658 = vadd.f32 %v2241, %v2657
      %v2659 = vpop.f32.mrb[0].mxu0
      %v2660 = vpop.f32.mrb[0].mxu0
      %v2661 = vadd.f32 %v2244, %v2660
      %v2662 = vpop.f32.mrb[0].mxu0
      %2663 = vmatprep.mubr.bf16.mxu0 %v1173
      %2664 = vmatmul.mubr.bf16.gmra.mrb[0].mxu0 %v1172
      %v2665 = vpop.f32.mrb[0].mxu0
      %v2666 = vadd.f32 %v2249, %v2665
      %v2667 = vpop.f32.mrb[0].mxu0
      %v2668 = vpop.f32.mrb[0].mxu0
      %v2669 = vadd.f32 %v2252, %v2668
      %v2670 = vpop.f32.mrb[0].mxu0
      %2671 = vmatprep.mubr.bf16.mxu0 %v1177
      %2672 = vmatmul.mubr.bf16.gmra.mrb[0].mxu0 %v1176
      %v2673 = vpop.f32.mrb[0].mxu0
      %v2674 = vadd.f32 %v2257, %v2673
      %v2675 = vpop.f32.mrb[0].mxu0
      %v2676 = vpop.f32.mrb[0].mxu0
      %v2677 = vadd.f32 %v2260, %v2676
      %v2678 = vpop.f32.mrb[0].mxu0
      %2679 = vmatprep.mubr.bf16.mxu0 %v1181
      %2680 = vmatmul.mubr.bf16.gmra.mrb[0].mxu0 %v1180
      %v2681 = vpop.f32.mrb[0].mxu0
      %v2682 = vadd.f32 %v2265, %v2681
      %v2683 = vpop.f32.mrb[0].mxu0
      %v2684 = vpop.f32.mrb[0].mxu0
      %v2685 = vadd.f32 %v2268, %v2684
      %v2686 = vpop.f32.mrb[0].mxu0
      %2687 = vmatprep.mubr.bf16.mxu0 %v1665
      %2688 = vmatmul.mubr.bf16.gmra.mrb[0].mxu0 %v1664
      %v2689 = vpop.f32.mrb[0].mxu0
      %v2690 = vadd.f32 %v2273, %v2689
      %v2691 = vpop.f32.mrb[0].mxu0
      %v2692 = vpop.f32.mrb[0].mxu0
      %v2693 = vadd.f32 %v2276, %v2692
      %v2694 = vpop.f32.mrb[0].mxu0
      %2695 = vmatprep.mubr.bf16.mxu0 %v1669
      %2696 = vmatmul.mubr.bf16.gmra.mrb[0].mxu0 %v1668
      %v2697 = vpop.f32.mrb[0].mxu0
      %v2698 = vadd.f32 %v2281, %v2697
      %v2699 = vpop.f32.mrb[0].mxu0
      %v2700 = vpop.f32.mrb[0].mxu0
      %v2701 = vadd.f32 %v2284, %v2700
      %v2702 = vpop.f32.mrb[0].mxu0
      %2703 = vmatprep.mubr.bf16.mxu0 %v1673
      %2704 = vmatmul.mubr.bf16.gmra.mrb[0].mxu0 %v1672
      %v2705 = vpop.f32.mrb[0].mxu0
      %v2706 = vadd.f32 %v2289, %v2705
      %v2707 = vpop.f32.mrb[0].mxu0
      %v2708 = vpop.f32.mrb[0].mxu0
      %v2709 = vadd.f32 %v2292, %v2708
      %v2710 = vpop.f32.mrb[0].mxu0
      %2711 = vmatprep.mubr.bf16.mxu0 %v1677
      %2712 = vmatmul.mubr.bf16.gmra.mrb[0].mxu0 %v1676
      %v2713 = vpop.f32.mrb[0].mxu0
      %v2714 = vadd.f32 %v2297, %v2713
      %v2715 = vpop.f32.mrb[0].mxu0
      %v2716 = vpop.f32.mrb[0].mxu0
      %v2717 = vadd.f32 %v2300, %v2716
      %v2718 = vpop.f32.mrb[0].mxu0
      %2719 = vmatprep.mubr.bf16.mxu0 %v1681
      %2720 = vmatmul.mubr.bf16.gmra.mrb[0].mxu0 %v1680
      %v2721 = vpop.f32.mrb[0].mxu0
      %v2722 = vadd.f32 %v2305, %v2721
      %v2723 = vpop.f32.mrb[0].mxu0
      %v2724 = vpop.f32.mrb[0].mxu0
      %v2725 = vadd.f32 %v2308, %v2724
      %v2726 = vpop.f32.mrb[0].mxu0
      %2727 = vmatprep.mubr.bf16.mxu0 %v1685
      %2728 = vmatmul.mubr.bf16.gmra.mrb[0].mxu0 %v1684
      %v2729 = vpop.f32.mrb[0].mxu0
      %v2730 = vadd.f32 %v2313, %v2729
      %v2731 = vpop.f32.mrb[0].mxu0
      %v2732 = vpop.f32.mrb[0].mxu0
      %v2733 = vadd.f32 %v2316, %v2732
      %v2734 = vpop.f32.mrb[0].mxu0
      %2735 = vmatprep.mubr.bf16.mxu0 %v1689
      %2736 = vmatmul.mubr.bf16.gmra.mrb[0].mxu0 %v1688
      %v2737 = vpop.f32.mrb[0].mxu0
      %v2738 = vadd.f32 %v2321, %v2737
      %v2739 = vpop.f32.mrb[0].mxu0
      %v2740 = vpop.f32.mrb[0].mxu0
      %v2741 = vadd.f32 %v2324, %v2740
      %v2742 = vpop.f32.mrb[0].mxu0
      %2743 = vmatprep.mubr.bf16.mxu0 %v1693
      %2744 = vmatmul.mubr.bf16.gmra.mrb[0].mxu0 %v1692
      %v2745 = vpop.f32.mrb[0].mxu0
      %v2746 = vadd.f32 %v2329, %v2745
      %v2747 = vpop.f32.mrb[0].mxu0
      %v2748 = vpop.f32.mrb[0].mxu0
      %v2749 = vadd.f32 %v2332, %v2748
      %v2750 = vpop.f32.mrb[0].mxu0
      %2751 = vmatprep.mubr.bf16.mxu0 %v1697
      %2752 = vmatmul.mubr.bf16.gmra.mrb[0].mxu0 %v1696
      %v2753 = vpop.f32.mrb[0].mxu0
      %v2754 = vadd.f32 %v2337, %v2753
      %v2755 = vpop.f32.mrb[0].mxu0
      %v2756 = vpop.f32.mrb[0].mxu0
      %v2757 = vadd.f32 %v2340, %v2756
      %v2758 = vpop.f32.mrb[0].mxu0
      %2759 = vmatprep.mubr.bf16.mxu0 %v1701
      %2760 = vmatmul.mubr.bf16.gmra.mrb[0].mxu0 %v1700
      %v2761 = vpop.f32.mrb[0].mxu0
      %v2762 = vadd.f32 %v2345, %v2761
      %v2763 = vpop.f32.mrb[0].mxu0
      %v2764 = vpop.f32.mrb[0].mxu0
      %v2765 = vadd.f32 %v2348, %v2764
      %v2766 = vpop.f32.mrb[0].mxu0
      %2767 = vmatprep.mubr.bf16.mxu0 %v1705
      %2768 = vmatmul.mubr.bf16.gmra.mrb[0].mxu0 %v1704
      %v2769 = vpop.f32.mrb[0].mxu0
      %v2770 = vadd.f32 %v2353, %v2769
      %v2771 = vpop.f32.mrb[0].mxu0
      %v2772 = vpop.f32.mrb[0].mxu0
      %v2773 = vadd.f32 %v2356, %v2772
      %v2774 = vpop.f32.mrb[0].mxu0
      %2775 = vmatprep.mubr.bf16.mxu0 %v1709
      %2776 = vmatmul.mubr.bf16.gmra.mrb[0].mxu0 %v1708
      %v2777 = vpop.f32.mrb[0].mxu0
      %v2778 = vadd.f32 %v2361, %v2777
      %v2779 = vpop.f32.mrb[0].mxu0
      %v2780 = vpop.f32.mrb[0].mxu0
      %v2781 = vadd.f32 %v2364, %v2780
      %v2782 = vpop.f32.mrb[0].mxu0
      %2783 = vmatprep.mubr.bf16.mxu0 %v1713
      %2784 = vmatmul.mubr.bf16.gmra.mrb[0].mxu0 %v1712
      %v2785 = vpop.f32.mrb[0].mxu0
      %v2786 = vadd.f32 %v2369, %v2785
      %v2787 = vpop.f32.mrb[0].mxu0
      %v2788 = vpop.f32.mrb[0].mxu0
      %v2789 = vadd.f32 %v2372, %v2788
      %v2790 = vpop.f32.mrb[0].mxu0
      %2791 = vmatprep.mubr.bf16.mxu0 %v1717
      %2792 = vmatmul.mubr.bf16.gmra.mrb[0].mxu0 %v1716
      %v2793 = vpop.f32.mrb[0].mxu0
      %v2794 = vadd.f32 %v2377, %v2793
      %v2795 = vpop.f32.mrb[0].mxu0
      %v2796 = vpop.f32.mrb[0].mxu0
      %v2797 = vadd.f32 %v2380, %v2796
      %v2798 = vpop.f32.mrb[0].mxu0
      %2799 = vmatprep.mubr.bf16.mxu0 %v1721
      %2800 = vmatmul.mubr.bf16.gmra.mrb[0].mxu0 %v1720
      %v2801 = vpop.f32.mrb[0].mxu0
      %v2802 = vadd.f32 %v2385, %v2801
      %v2803 = vpop.f32.mrb[0].mxu0
      %v2804 = vpop.f32.mrb[0].mxu0
      %v2805 = vadd.f32 %v2388, %v2804
      %v2806 = vpop.f32.mrb[0].mxu0
      %2807 = vmatprep.mubr.bf16.mxu0 %v1725
      %2808 = vmatmul.mubr.bf16.gmra.mrb[0].mxu0 %v1724
      %v2809 = vpop.f32.mrb[0].mxu0
      %v2810 = vadd.f32 %v2393, %v2809
      %v2811 = vpop.f32.mrb[0].mxu0
      %v2812 = vpop.f32.mrb[0].mxu0
      %v2813 = vadd.f32 %v2396, %v2812
      %v2814 = vpop.f32.mrb[0].mxu0
      %2815 = vdwg.mxu0
      %2848 = vrot.lane.b32.xlu0 %v2562, 64
      %v2849 = vpop.permute.xlu0 %2848
      %2850 = vrot.lane.b32.xlu0 %v2565, 64
      %v2851 = vpop.permute.xlu0 %2850
      %2852 = vrot.lane.b32.xlu0 %v2570, 64
      %v2853 = vpop.permute.xlu0 %2852
      %2854 = vrot.lane.b32.xlu0 %v2573, 64
      %v2855 = vpop.permute.xlu0 %2854
      %2856 = vrot.lane.b32.xlu0 %v2578, 64
      %v2857 = vpop.permute.xlu0 %2856
      %2858 = vrot.lane.b32.xlu0 %v2581, 64
      %v2859 = vpop.permute.xlu0 %2858
      %2860 = vrot.lane.b32.xlu0 %v2586, 64
      %v2861 = vpop.permute.xlu0 %2860
      %2862 = vrot.lane.b32.xlu0 %v2589, 64
      %v2863 = vpop.permute.xlu0 %2862
      %2864 = vrot.lane.b32.xlu0 %v2594, 64
      %v2865 = vpop.permute.xlu0 %2864
      %2866 = vrot.lane.b32.xlu0 %v2597, 64
      %v2867 = vpop.permute.xlu0 %2866
      %2868 = vrot.lane.b32.xlu0 %v2602, 64
      %v2869 = vpop.permute.xlu0 %2868
      %2870 = vrot.lane.b32.xlu0 %v2605, 64
      %v2871 = vpop.permute.xlu0 %2870
      %2872 = vrot.lane.b32.xlu0 %v2610, 64
      %v2873 = vpop.permute.xlu0 %2872
      %2874 = vrot.lane.b32.xlu0 %v2613, 64
      %v2875 = vpop.permute.xlu0 %2874
      %2876 = vrot.lane.b32.xlu0 %v2618, 64
      %v2877 = vpop.permute.xlu0 %2876
      %2878 = vrot.lane.b32.xlu0 %v2621, 64
      %v2879 = vpop.permute.xlu0 %2878
      %2880 = vrot.lane.b32.xlu0 %v2626, 64
      %v2881 = vpop.permute.xlu0 %2880
      %2882 = vrot.lane.b32.xlu0 %v2629, 64
      %v2883 = vpop.permute.xlu0 %2882
      %2884 = vrot.lane.b32.xlu0 %v2634, 64
      %v2885 = vpop.permute.xlu0 %2884
      %2886 = vrot.lane.b32.xlu0 %v2637, 64
      %v2887 = vpop.permute.xlu0 %2886
      %2888 = vrot.lane.b32.xlu0 %v2642, 64
      %v2889 = vpop.permute.xlu0 %2888
      %2890 = vrot.lane.b32.xlu0 %v2645, 64
      %v2891 = vpop.permute.xlu0 %2890
      %2892 = vrot.lane.b32.xlu0 %v2650, 64
      %v2893 = vpop.permute.xlu0 %2892
      %2894 = vrot.lane.b32.xlu0 %v2653, 64
      %v2895 = vpop.permute.xlu0 %2894
      %2896 = vrot.lane.b32.xlu0 %v2658, 64
      %v2897 = vpop.permute.xlu0 %2896
      %2898 = vrot.lane.b32.xlu0 %v2661, 64
      %v2899 = vpop.permute.xlu0 %2898
      %2900 = vrot.lane.b32.xlu0 %v2666, 64
      %v2901 = vpop.permute.xlu0 %2900
      %2902 = vrot.lane.b32.xlu0 %v2669, 64
      %v2903 = vpop.permute.xlu0 %2902
      %2904 = vrot.lane.b32.xlu0 %v2674, 64
      %v2905 = vpop.permute.xlu0 %2904
      %2906 = vrot.lane.b32.xlu0 %v2677, 64
      %v2907 = vpop.permute.xlu0 %2906
      %2908 = vrot.lane.b32.xlu0 %v2682, 64
      %v2909 = vpop.permute.xlu0 %2908
      %2910 = vrot.lane.b32.xlu0 %v2685, 64
      %v2911 = vpop.permute.xlu0 %2910
      %vm2944 = vcmask 523264
      %v2945 = vsel %vm2944, %v2434, %v2849
      %v2946 = vsel %vm2944, %v2437, %v2851
      %v2947 = vsel %vm2944, %v2442, %v2853
      %v2948 = vsel %vm2944, %v2445, %v2855
      %v2949 = vsel %vm2944, %v2450, %v2857
      %v2950 = vsel %vm2944, %v2453, %v2859
      %v2951 = vsel %vm2944, %v2458, %v2861
      %v2952 = vsel %vm2944, %v2461, %v2863
      %v2953 = vsel %vm2944, %v2466, %v2865
      %v2954 = vsel %vm2944, %v2469, %v2867
      %v2955 = vsel %vm2944, %v2474, %v2869
      %v2956 = vsel %vm2944, %v2477, %v2871
      %v2957 = vsel %vm2944, %v2482, %v2873
      %v2958 = vsel %vm2944, %v2485, %v2875
      %v2959 = vsel %vm2944, %v2490, %v2877
      %v2960 = vsel %vm2944, %v2493, %v2879
      %v2961 = vsel %vm2944, %v2498, %v2881
      %v2962 = vsel %vm2944, %v2501, %v2883
      %v2963 = vsel %vm2944, %v2506, %v2885
      %v2964 = vsel %vm2944, %v2509, %v2887
      %v2965 = vsel %vm2944, %v2514, %v2889
      %v2966 = vsel %vm2944, %v2517, %v2891
      %v2967 = vsel %vm2944, %v2522, %v2893
      %v2968 = vsel %vm2944, %v2525, %v2895
      %v2969 = vsel %vm2944, %v2530, %v2897
      %v2970 = vsel %vm2944, %v2533, %v2899
      %v2971 = vsel %vm2944, %v2538, %v2901
      %v2972 = vsel %vm2944, %v2541, %v2903
      %v2973 = vsel %vm2944, %v2546, %v2905
      %v2974 = vsel %vm2944, %v2549, %v2907
      %v2975 = vsel %vm2944, %v2554, %v2909
      %v2976 = vsel %vm2944, %v2557, %v2911
      %v2977 = vpack.c.bf16 %v2946, %v2945
      %v2978 = vpack.c.bf16 %v2693, %v2690
      %v2979 = vpack.c.bf16 %v2948, %v2947
      %v2980 = vpack.c.bf16 %v2701, %v2698
      %v2981 = vpack.c.bf16 %v2950, %v2949
      %v2982 = vpack.c.bf16 %v2709, %v2706
      %v2983 = vpack.c.bf16 %v2952, %v2951
      %v2984 = vpack.c.bf16 %v2717, %v2714
      %v2985 = vpack.c.bf16 %v2954, %v2953
      %v2986 = vpack.c.bf16 %v2725, %v2722
      %v2987 = vpack.c.bf16 %v2956, %v2955
      %v2988 = vpack.c.bf16 %v2733, %v2730
      %v2989 = vpack.c.bf16 %v2958, %v2957
      %v2990 = vpack.c.bf16 %v2741, %v2738
      %v2991 = vpack.c.bf16 %v2960, %v2959
      %v2992 = vpack.c.bf16 %v2749, %v2746
      %v2993 = vpack.c.bf16 %v2962, %v2961
      %v2994 = vpack.c.bf16 %v2757, %v2754
      %v2995 = vpack.c.bf16 %v2964, %v2963
      %v2996 = vpack.c.bf16 %v2765, %v2762
      %v2997 = vpack.c.bf16 %v2966, %v2965
      %v2998 = vpack.c.bf16 %v2773, %v2770
      %v2999 = vpack.c.bf16 %v2968, %v2967
      %v3000 = vpack.c.bf16 %v2781, %v2778
      %v3001 = vpack.c.bf16 %v2970, %v2969
      %v3002 = vpack.c.bf16 %v2789, %v2786
      %v3003 = vpack.c.bf16 %v2972, %v2971
      %v3004 = vpack.c.bf16 %v2797, %v2794
      %v3005 = vpack.c.bf16 %v2974, %v2973
      %v3006 = vpack.c.bf16 %v2805, %v2802
      %v3007 = vpack.c.bf16 %v2976, %v2975
      %v3008 = vpack.c.bf16 %v2813, %v2810
      %v3009 = vld [vmem:[#allocation3] sm:$0xff]
      %v3010 = vld [vmem:[#allocation3 + $0x8] sm:$0xff]
      %v3011 = vld [vmem:[#allocation3 + $0x10] sm:$0xff]
      %v3012 = vld [vmem:[#allocation3 + $0x18] sm:$0xff]
      %v3013 = vld [vmem:[#allocation3 + $0x20] sm:$0xff]
      %v3014 = vld [vmem:[#allocation3 + $0x28] sm:$0xff]
      %v3015 = vld [vmem:[#allocation3 + $0x30] sm:$0xff]
      %v3016 = vld [vmem:[#allocation3 + $0x38] sm:$0xff]
      %v3017 = vld [vmem:[#allocation3 + $0x40] sm:$0xff]
      %v3018 = vld [vmem:[#allocation3 + $0x48] sm:$0xff]
      %v3019 = vld [vmem:[#allocation3 + $0x50] sm:$0xff]
      %v3020 = vld [vmem:[#allocation3 + $0x58] sm:$0xff]
      %v3021 = vld [vmem:[#allocation3 + $0x60] sm:$0xff]
      %v3022 = vld [vmem:[#allocation3 + $0x68] sm:$0xff]
      %v3023 = vld [vmem:[#allocation3 + $0x70] sm:$0xff]
      %v3024 = vld [vmem:[#allocation3 + $0x78] sm:$0xff]
      %v3025 = vld [vmem:[#allocation3 + $0x80] sm:$0xff]
      %v3026 = vld [vmem:[#allocation3 + $0x88] sm:$0xff]
      %v3027 = vld [vmem:[#allocation3 + $0x90] sm:$0xff]
      %v3028 = vld [vmem:[#allocation3 + $0x98] sm:$0xff]
      %v3029 = vld [vmem:[#allocation3 + $0xa0] sm:$0xff]
      %v3030 = vld [vmem:[#allocation3 + $0xa8] sm:$0xff]
      %v3031 = vld [vmem:[#allocation3 + $0xb0] sm:$0xff]
      %v3032 = vld [vmem:[#allocation3 + $0xb8] sm:$0xff]
      %v3033 = vld [vmem:[#allocation3 + $0xc0] sm:$0xff]
      %v3034 = vld [vmem:[#allocation3 + $0xc8] sm:$0xff]
      %v3035 = vld [vmem:[#allocation3 + $0xd0] sm:$0xff]
      %v3036 = vld [vmem:[#allocation3 + $0xd8] sm:$0xff]
      %v3037 = vld [vmem:[#allocation3 + $0xe0] sm:$0xff]
      %v3038 = vld [vmem:[#allocation3 + $0xe8] sm:$0xff]
      %v3039 = vld [vmem:[#allocation3 + $0xf0] sm:$0xff]
      %v3040 = vld [vmem:[#allocation3 + $0xf8] sm:$0xff]
      %v3041 = vld [vmem:[#allocation3 + $0x100] sm:$0xff]
      %v3042 = vld [vmem:[#allocation3 + $0x108] sm:$0xff]
      %v3043 = vld [vmem:[#allocation3 + $0x110] sm:$0xff]
      %v3044 = vld [vmem:[#allocation3 + $0x118] sm:$0xff]
      %v3045 = vld [vmem:[#allocation3 + $0x120] sm:$0xff]
      %v3046 = vld [vmem:[#allocation3 + $0x128] sm:$0xff]
      %v3047 = vld [vmem:[#allocation3 + $0x130] sm:$0xff]
      %v3048 = vld [vmem:[#allocation3 + $0x138] sm:$0xff]
      %v3049 = vld [vmem:[#allocation3 + $0x140] sm:$0xff]
      %v3050 = vld [vmem:[#allocation3 + $0x148] sm:$0xff]
      %v3051 = vld [vmem:[#allocation3 + $0x150] sm:$0xff]
      %v3052 = vld [vmem:[#allocation3 + $0x158] sm:$0xff]
      %v3053 = vld [vmem:[#allocation3 + $0x160] sm:$0xff]
      %v3054 = vld [vmem:[#allocation3 + $0x168] sm:$0xff]
      %v3055 = vld [vmem:[#allocation3 + $0x170] sm:$0xff]
      %v3056 = vld [vmem:[#allocation3 + $0x178] sm:$0xff]
      %v3057 = vld [vmem:[#allocation3 + $0x180] sm:$0xff]
      %v3058 = vld [vmem:[#allocation3 + $0x188] sm:$0xff]
      %v3059 = vld [vmem:[#allocation3 + $0x190] sm:$0xff]
      %v3060 = vld [vmem:[#allocation3 + $0x198] sm:$0xff]
      %v3061 = vld [vmem:[#allocation3 + $0x1a0] sm:$0xff]
      %v3062 = vld [vmem:[#allocation3 + $0x1a8] sm:$0xff]
      %v3063 = vld [vmem:[#allocation3 + $0x1b0] sm:$0xff]
      %v3064 = vld [vmem:[#allocation3 + $0x1b8] sm:$0xff]
      %v3065 = vld [vmem:[#allocation3 + $0x1c0] sm:$0xff]
      %v3066 = vld [vmem:[#allocation3 + $0x1c8] sm:$0xff]
      %v3067 = vld [vmem:[#allocation3 + $0x1d0] sm:$0xff]
      %v3068 = vld [vmem:[#allocation3 + $0x1d8] sm:$0xff]
      %v3069 = vld [vmem:[#allocation3 + $0x1e0] sm:$0xff]
      %v3070 = vld [vmem:[#allocation3 + $0x1e8] sm:$0xff]
      %v3071 = vld [vmem:[#allocation3 + $0x1f0] sm:$0xff]
      %v3072 = vld [vmem:[#allocation3 + $0x1f8] sm:$0xff]
      %v3073 = vld [vmem:[#allocation3 + $0x200] sm:$0xff]
      %v3074 = vld [vmem:[#allocation3 + $0x208] sm:$0xff]
      %v3075 = vld [vmem:[#allocation3 + $0x210] sm:$0xff]
      %v3076 = vld [vmem:[#allocation3 + $0x218] sm:$0xff]
      %v3077 = vld [vmem:[#allocation3 + $0x220] sm:$0xff]
      %v3078 = vld [vmem:[#allocation3 + $0x228] sm:$0xff]
      %v3079 = vld [vmem:[#allocation3 + $0x230] sm:$0xff]
      %v3080 = vld [vmem:[#allocation3 + $0x238] sm:$0xff]
      %v3081 = vld [vmem:[#allocation3 + $0x240] sm:$0xff]
      %v3082 = vld [vmem:[#allocation3 + $0x248] sm:$0xff]
      %v3083 = vld [vmem:[#allocation3 + $0x250] sm:$0xff]
      %v3084 = vld [vmem:[#allocation3 + $0x258] sm:$0xff]
      %v3085 = vld [vmem:[#allocation3 + $0x260] sm:$0xff]
      %v3086 = vld [vmem:[#allocation3 + $0x268] sm:$0xff]
      %v3087 = vld [vmem:[#allocation3 + $0x270] sm:$0xff]
      %v3088 = vld [vmem:[#allocation3 + $0x278] sm:$0xff]
      %v3089 = vld [vmem:[#allocation3 + $0x280] sm:$0xff]
      %v3090 = vld [vmem:[#allocation3 + $0x288] sm:$0xff]
      %v3091 = vld [vmem:[#allocation3 + $0x290] sm:$0xff]
      %v3092 = vld [vmem:[#allocation3 + $0x298] sm:$0xff]
      %v3093 = vld [vmem:[#allocation3 + $0x2a0] sm:$0xff]
      %v3094 = vld [vmem:[#allocation3 + $0x2a8] sm:$0xff]
      %v3095 = vld [vmem:[#allocation3 + $0x2b0] sm:$0xff]
      %v3096 = vld [vmem:[#allocation3 + $0x2b8] sm:$0xff]
      %v3097 = vld [vmem:[#allocation3 + $0x2c0] sm:$0xff]
      %v3098 = vld [vmem:[#allocation3 + $0x2c8] sm:$0xff]
      %v3099 = vld [vmem:[#allocation3 + $0x2d0] sm:$0xff]
      %v3100 = vld [vmem:[#allocation3 + $0x2d8] sm:$0xff]
      %v3101 = vld [vmem:[#allocation3 + $0x2e0] sm:$0xff]
      %v3102 = vld [vmem:[#allocation3 + $0x2e8] sm:$0xff]
      %v3103 = vld [vmem:[#allocation3 + $0x2f0] sm:$0xff]
      %v3104 = vld [vmem:[#allocation3 + $0x2f8] sm:$0xff]
      %v3105 = vld [vmem:[%s3] sm:$0xff]
      %v3107 = vlaneseq
      %v3108 = vshrl.u32 %v3107, 7
      %v3109 = vsub.s32 0, %v3108
      %v3110 = vrot.slane %v3105, %v3109
      %v3111 = vlaneseq
      %v3112 = vshrl.u32 %v3111, 7
      %v3113 = vsub.s32 1, %v3112
      %v3114 = vrot.slane %v3105, %v3113
      %v3115 = vlaneseq
      %v3116 = vshrl.u32 %v3115, 7
      %v3117 = vsub.s32 2, %v3116
      %v3118 = vrot.slane %v3105, %v3117
      %v3119 = vlaneseq
      %v3120 = vshrl.u32 %v3119, 7
      %v3121 = vsub.s32 3, %v3120
      %v3122 = vrot.slane %v3105, %v3121
      %v3123 = vlaneseq
      %v3124 = vshrl.u32 %v3123, 7
      %v3125 = vsub.s32 4, %v3124
      %v3126 = vrot.slane %v3105, %v3125
      %v3127 = vlaneseq
      %v3128 = vshrl.u32 %v3127, 7
      %v3129 = vsub.s32 5, %v3128
      %v3130 = vrot.slane %v3105, %v3129
      %v3131 = vlaneseq
      %v3132 = vshrl.u32 %v3131, 7
      %v3133 = vsub.s32 6, %v3132
      %v3134 = vrot.slane %v3105, %v3133
      %v3135 = vlaneseq
      %v3136 = vshrl.u32 %v3135, 7
      %v3137 = vsub.s32 7, %v3136
      %v3138 = vrot.slane %v3105, %v3137
      %v3243 = vunpack.c.l.b16 %v3009
      %v3244 = vunpack.c.h.b16 %v3009
      %v3245 = vunpack.c.l.b16 %v3010
      %v3246 = vunpack.c.h.b16 %v3010
      %v3247 = vunpack.c.l.b16 %v3011
      %v3248 = vunpack.c.h.b16 %v3011
      %v3249 = vunpack.c.l.b16 %v3012
      %v3250 = vunpack.c.h.b16 %v3012
      %v3251 = vunpack.c.l.b16 %v3013
      %v3252 = vunpack.c.h.b16 %v3013
      %v3253 = vunpack.c.l.b16 %v3014
      %v3254 = vunpack.c.h.b16 %v3014
      %v3255 = vunpack.c.l.b16 %v3015
      %v3256 = vunpack.c.h.b16 %v3015
      %v3257 = vunpack.c.l.b16 %v3016
      %v3258 = vunpack.c.h.b16 %v3016
      %v3259 = vunpack.c.l.b16 %v3017
      %v3260 = vunpack.c.h.b16 %v3017
      %v3261 = vunpack.c.l.b16 %v3018
      %v3262 = vunpack.c.h.b16 %v3018
      %v3263 = vunpack.c.l.b16 %v3019
      %v3264 = vunpack.c.h.b16 %v3019
      %v3265 = vunpack.c.l.b16 %v3020
      %v3266 = vunpack.c.h.b16 %v3020
      %v3267 = vunpack.c.l.b16 %v3021
      %v3268 = vunpack.c.h.b16 %v3021
      %v3269 = vunpack.c.l.b16 %v3022
      %v3270 = vunpack.c.h.b16 %v3022
      %v3271 = vunpack.c.l.b16 %v3023
      %v3272 = vunpack.c.h.b16 %v3023
      %v3273 = vunpack.c.l.b16 %v3024
      %v3274 = vunpack.c.h.b16 %v3024
      %v3275 = vunpack.c.l.b16 %v3025
      %v3276 = vunpack.c.h.b16 %v3025
      %v3277 = vunpack.c.l.b16 %v3026
      %v3278 = vunpack.c.h.b16 %v3026
      %v3279 = vunpack.c.l.b16 %v3027
      %v3280 = vunpack.c.h.b16 %v3027
      %v3281 = vunpack.c.l.b16 %v3028
      %v3282 = vunpack.c.h.b16 %v3028
      %v3283 = vunpack.c.l.b16 %v3029
      %v3284 = vunpack.c.h.b16 %v3029
      %v3285 = vunpack.c.l.b16 %v3030
      %v3286 = vunpack.c.h.b16 %v3030
      %v3287 = vunpack.c.l.b16 %v3031
      %v3288 = vunpack.c.h.b16 %v3031
      %v3289 = vunpack.c.l.b16 %v3032
      %v3290 = vunpack.c.h.b16 %v3032
      %v3291 = vunpack.c.l.b16 %v3033
      %v3292 = vunpack.c.h.b16 %v3033
      %v3293 = vunpack.c.l.b16 %v3034
      %v3294 = vunpack.c.h.b16 %v3034
      %v3295 = vunpack.c.l.b16 %v3035
      %v3296 = vunpack.c.h.b16 %v3035
      %v3297 = vunpack.c.l.b16 %v3036
      %v3298 = vunpack.c.h.b16 %v3036
      %v3299 = vunpack.c.l.b16 %v3037
      %v3300 = vunpack.c.h.b16 %v3037
      %v3301 = vunpack.c.l.b16 %v3038
      %v3302 = vunpack.c.h.b16 %v3038
      %v3303 = vunpack.c.l.b16 %v3039
      %v3304 = vunpack.c.h.b16 %v3039
      %v3305 = vunpack.c.l.b16 %v3040
      %v3306 = vunpack.c.h.b16 %v3040
      %v3307 = vunpack.c.l.b16 %v3041
      %v3308 = vunpack.c.h.b16 %v3041
      %v3309 = vunpack.c.l.b16 %v3042
      %v3310 = vunpack.c.h.b16 %v3042
      %v3311 = vunpack.c.l.b16 %v3043
      %v3312 = vunpack.c.h.b16 %v3043
      %v3313 = vunpack.c.l.b16 %v3044
      %v3314 = vunpack.c.h.b16 %v3044
      %v3315 = vunpack.c.l.b16 %v3045
      %v3316 = vunpack.c.h.b16 %v3045
      %v3317 = vunpack.c.l.b16 %v3046
      %v3318 = vunpack.c.h.b16 %v3046
      %v3319 = vunpack.c.l.b16 %v3047
      %v3320 = vunpack.c.h.b16 %v3047
      %v3321 = vunpack.c.l.b16 %v3048
      %v3322 = vunpack.c.h.b16 %v3048
      %v3323 = vunpack.c.l.b16 %v3049
      %v3324 = vunpack.c.h.b16 %v3049
      %v3325 = vunpack.c.l.b16 %v3050
      %v3326 = vunpack.c.h.b16 %v3050
      %v3327 = vunpack.c.l.b16 %v3051
      %v3328 = vunpack.c.h.b16 %v3051
      %v3329 = vunpack.c.l.b16 %v3052
      %v3330 = vunpack.c.h.b16 %v3052
      %v3331 = vunpack.c.l.b16 %v3053
      %v3332 = vunpack.c.h.b16 %v3053
      %v3333 = vunpack.c.l.b16 %v3054
      %v3334 = vunpack.c.h.b16 %v3054
      %v3335 = vunpack.c.l.b16 %v3055
      %v3336 = vunpack.c.h.b16 %v3055
      %v3337 = vunpack.c.l.b16 %v3056
      %v3338 = vunpack.c.h.b16 %v3056
      %v3339 = vunpack.c.l.b16 %v3057
      %v3340 = vunpack.c.h.b16 %v3057
      %v3341 = vunpack.c.l.b16 %v3058
      %v3342 = vunpack.c.h.b16 %v3058
      %v3343 = vunpack.c.l.b16 %v3059
      %v3344 = vunpack.c.h.b16 %v3059
      %v3345 = vunpack.c.l.b16 %v3060
      %v3346 = vunpack.c.h.b16 %v3060
      %v3347 = vunpack.c.l.b16 %v3061
      %v3348 = vunpack.c.h.b16 %v3061
      %v3349 = vunpack.c.l.b16 %v3062
      %v3350 = vunpack.c.h.b16 %v3062
      %v3351 = vunpack.c.l.b16 %v3063
      %v3352 = vunpack.c.h.b16 %v3063
      %v3353 = vunpack.c.l.b16 %v3064
      %v3354 = vunpack.c.h.b16 %v3064
      %v3355 = vunpack.c.l.b16 %v3065
      %v3356 = vunpack.c.h.b16 %v3065
      %v3357 = vunpack.c.l.b16 %v3066
      %v3358 = vunpack.c.h.b16 %v3066
      %v3359 = vunpack.c.l.b16 %v3067
      %v3360 = vunpack.c.h.b16 %v3067
      %v3361 = vunpack.c.l.b16 %v3068
      %v3362 = vunpack.c.h.b16 %v3068
      %v3363 = vunpack.c.l.b16 %v3069
      %v3364 = vunpack.c.h.b16 %v3069
      %v3365 = vunpack.c.l.b16 %v3070
      %v3366 = vunpack.c.h.b16 %v3070
      %v3367 = vunpack.c.l.b16 %v3071
      %v3368 = vunpack.c.h.b16 %v3071
      %v3369 = vunpack.c.l.b16 %v3072
      %v3370 = vunpack.c.h.b16 %v3072
      %v3371 = vunpack.c.l.b16 %v3073
      %v3372 = vunpack.c.h.b16 %v3073
      %v3373 = vunpack.c.l.b16 %v3074
      %v3374 = vunpack.c.h.b16 %v3074
      %v3375 = vunpack.c.l.b16 %v3075
      %v3376 = vunpack.c.h.b16 %v3075
      %v3377 = vunpack.c.l.b16 %v3076
      %v3378 = vunpack.c.h.b16 %v3076
      %v3379 = vunpack.c.l.b16 %v3077
      %v3380 = vunpack.c.h.b16 %v3077
      %v3381 = vunpack.c.l.b16 %v3078
      %v3382 = vunpack.c.h.b16 %v3078
      %v3383 = vunpack.c.l.b16 %v3079
      %v3384 = vunpack.c.h.b16 %v3079
      %v3385 = vunpack.c.l.b16 %v3080
      %v3386 = vunpack.c.h.b16 %v3080
      %v3387 = vunpack.c.l.b16 %v3081
      %v3388 = vunpack.c.h.b16 %v3081
      %v3389 = vunpack.c.l.b16 %v3082
      %v3390 = vunpack.c.h.b16 %v3082
      %v3391 = vunpack.c.l.b16 %v3083
      %v3392 = vunpack.c.h.b16 %v3083
      %v3393 = vunpack.c.l.b16 %v3084
      %v3394 = vunpack.c.h.b16 %v3084
      %v3395 = vunpack.c.l.b16 %v3085
      %v3396 = vunpack.c.h.b16 %v3085
      %v3397 = vunpack.c.l.b16 %v3086
      %v3398 = vunpack.c.h.b16 %v3086
      %v3399 = vunpack.c.l.b16 %v3087
      %v3400 = vunpack.c.h.b16 %v3087
      %v3401 = vunpack.c.l.b16 %v3088
      %v3402 = vunpack.c.h.b16 %v3088
      %v3403 = vunpack.c.l.b16 %v3089
      %v3404 = vunpack.c.h.b16 %v3089
      %v3405 = vunpack.c.l.b16 %v3090
      %v3406 = vunpack.c.h.b16 %v3090
      %v3407 = vunpack.c.l.b16 %v3091
      %v3408 = vunpack.c.h.b16 %v3091
      %v3409 = vunpack.c.l.b16 %v3092
      %v3410 = vunpack.c.h.b16 %v3092
      %v3411 = vunpack.c.l.b16 %v3093
      %v3412 = vunpack.c.h.b16 %v3093
      %v3413 = vunpack.c.l.b16 %v3094
      %v3414 = vunpack.c.h.b16 %v3094
      %v3415 = vunpack.c.l.b16 %v3095
      %v3416 = vunpack.c.h.b16 %v3095
      %v3417 = vunpack.c.l.b16 %v3096
      %v3418 = vunpack.c.h.b16 %v3096
      %v3419 = vunpack.c.l.b16 %v3097
      %v3420 = vunpack.c.h.b16 %v3097
      %v3421 = vunpack.c.l.b16 %v3098
      %v3422 = vunpack.c.h.b16 %v3098
      %v3423 = vunpack.c.l.b16 %v3099
      %v3424 = vunpack.c.h.b16 %v3099
      %v3425 = vunpack.c.l.b16 %v3100
      %v3426 = vunpack.c.h.b16 %v3100
      %v3427 = vunpack.c.l.b16 %v3101
      %v3428 = vunpack.c.h.b16 %v3101
      %v3429 = vunpack.c.l.b16 %v3102
      %v3430 = vunpack.c.h.b16 %v3102
      %v3431 = vunpack.c.l.b16 %v3103
      %v3432 = vunpack.c.h.b16 %v3103
      %v3433 = vunpack.c.l.b16 %v3104
      %v3434 = vunpack.c.h.b16 %v3104
      %v3435 = vpack.c.b16 %v3251, %v3243
      %v3436 = vpack.c.b16 %v3252, %v3244
      %v3437 = vpack.c.b16 %v3253, %v3245
      %v3438 = vpack.c.b16 %v3254, %v3246
      %v3439 = vpack.c.b16 %v3255, %v3247
      %v3440 = vpack.c.b16 %v3256, %v3248
      %v3441 = vpack.c.b16 %v3257, %v3249
      %v3442 = vpack.c.b16 %v3258, %v3250
      %v3443 = vpack.c.b16 %v3267, %v3259
      %v3444 = vpack.c.b16 %v3268, %v3260
      %v3445 = vpack.c.b16 %v3269, %v3261
      %v3446 = vpack.c.b16 %v3270, %v3262
      %v3447 = vpack.c.b16 %v3271, %v3263
      %v3448 = vpack.c.b16 %v3272, %v3264
      %v3449 = vpack.c.b16 %v3273, %v3265
      %v3450 = vpack.c.b16 %v3274, %v3266
      %v3451 = vpack.c.b16 %v3283, %v3275
      %v3452 = vpack.c.b16 %v3284, %v3276
      %v3453 = vpack.c.b16 %v3285, %v3277
      %v3454 = vpack.c.b16 %v3286, %v3278
      %v3455 = vpack.c.b16 %v3287, %v3279
      %v3456 = vpack.c.b16 %v3288, %v3280
      %v3457 = vpack.c.b16 %v3289, %v3281
      %v3458 = vpack.c.b16 %v3290, %v3282
      %v3459 = vpack.c.b16 %v3299, %v3291
      %v3460 = vpack.c.b16 %v3300, %v3292
      %v3461 = vpack.c.b16 %v3301, %v3293
      %v3462 = vpack.c.b16 %v3302, %v3294
      %v3463 = vpack.c.b16 %v3303, %v3295
      %v3464 = vpack.c.b16 %v3304, %v3296
      %v3465 = vpack.c.b16 %v3305, %v3297
      %v3466 = vpack.c.b16 %v3306, %v3298
      %v3467 = vpack.c.b16 %v3315, %v3307
      %v3468 = vpack.c.b16 %v3316, %v3308
      %v3469 = vpack.c.b16 %v3317, %v3309
      %v3470 = vpack.c.b16 %v3318, %v3310
      %v3471 = vpack.c.b16 %v3319, %v3311
      %v3472 = vpack.c.b16 %v3320, %v3312
      %v3473 = vpack.c.b16 %v3321, %v3313
      %v3474 = vpack.c.b16 %v3322, %v3314
      %v3475 = vpack.c.b16 %v3331, %v3323
      %v3476 = vpack.c.b16 %v3332, %v3324
      %v3477 = vpack.c.b16 %v3333, %v3325
      %v3478 = vpack.c.b16 %v3334, %v3326
      %v3479 = vpack.c.b16 %v3335, %v3327
      %v3480 = vpack.c.b16 %v3336, %v3328
      %v3481 = vpack.c.b16 %v3337, %v3329
      %v3482 = vpack.c.b16 %v3338, %v3330
      %v3483 = vpack.c.b16 %v3347, %v3339
      %v3484 = vpack.c.b16 %v3348, %v3340
      %v3485 = vpack.c.b16 %v3349, %v3341
      %v3486 = vpack.c.b16 %v3350, %v3342
      %v3487 = vpack.c.b16 %v3351, %v3343
      %v3488 = vpack.c.b16 %v3352, %v3344
      %v3489 = vpack.c.b16 %v3353, %v3345
      %v3490 = vpack.c.b16 %v3354, %v3346
      %v3491 = vpack.c.b16 %v3363, %v3355
      %v3492 = vpack.c.b16 %v3364, %v3356
      %v3493 = vpack.c.b16 %v3365, %v3357
      %v3494 = vpack.c.b16 %v3366, %v3358
      %v3495 = vpack.c.b16 %v3367, %v3359
      %v3496 = vpack.c.b16 %v3368, %v3360
      %v3497 = vpack.c.b16 %v3369, %v3361
      %v3498 = vpack.c.b16 %v3370, %v3362
      %v3499 = vpack.c.b16 %v3379, %v3371
      %v3500 = vpack.c.b16 %v3380, %v3372
      %v3501 = vpack.c.b16 %v3381, %v3373
      %v3502 = vpack.c.b16 %v3382, %v3374
      %v3503 = vpack.c.b16 %v3383, %v3375
      %v3504 = vpack.c.b16 %v3384, %v3376
      %v3505 = vpack.c.b16 %v3385, %v3377
      %v3506 = vpack.c.b16 %v3386, %v3378
      %v3507 = vpack.c.b16 %v3395, %v3387
      %v3508 = vpack.c.b16 %v3396, %v3388
      %v3509 = vpack.c.b16 %v3397, %v3389
      %v3510 = vpack.c.b16 %v3398, %v3390
      %v3511 = vpack.c.b16 %v3399, %v3391
      %v3512 = vpack.c.b16 %v3400, %v3392
      %v3513 = vpack.c.b16 %v3401, %v3393
      %v3514 = vpack.c.b16 %v3402, %v3394
      %v3515 = vpack.c.b16 %v3411, %v3403
      %v3516 = vpack.c.b16 %v3412, %v3404
      %v3517 = vpack.c.b16 %v3413, %v3405
      %v3518 = vpack.c.b16 %v3414, %v3406
      %v3519 = vpack.c.b16 %v3415, %v3407
      %v3520 = vpack.c.b16 %v3416, %v3408
      %v3521 = vpack.c.b16 %v3417, %v3409
      %v3522 = vpack.c.b16 %v3418, %v3410
      %v3523 = vpack.c.b16 %v3427, %v3419
      %v3524 = vpack.c.b16 %v3428, %v3420
      %v3525 = vpack.c.b16 %v3429, %v3421
      %v3526 = vpack.c.b16 %v3430, %v3422
      %v3527 = vpack.c.b16 %v3431, %v3423
      %v3528 = vpack.c.b16 %v3432, %v3424
      %v3529 = vpack.c.b16 %v3433, %v3425
      %v3530 = vpack.c.b16 %v3434, %v3426
      %v3628 = vsel %vm2944, %v2978, 0
      %v3631 = vsel %vm2944, %v2980, 0
      %v3634 = vsel %vm2944, %v2982, 0
      %v3637 = vsel %vm2944, %v2984, 0
      %v3640 = vsel %vm2944, %v2986, 0
      %v3643 = vsel %vm2944, %v2988, 0
      %v3646 = vsel %vm2944, %v2990, 0
      %v3649 = vsel %vm2944, %v2992, 0
      %v3652 = vsel %vm2944, %v2994, 0
      %v3655 = vsel %vm2944, %v2996, 0
      %v3658 = vsel %vm2944, %v2998, 0
      %v3661 = vsel %vm2944, %v3000, 0
      %v3664 = vsel %vm2944, %v3002, 0
      %v3667 = vsel %vm2944, %v3004, 0
      %v3670 = vsel %vm2944, %v3006, 0
      %v3673 = vsel %vm2944, %v3008, 0
      %3675 = vmatprep.subr.bf16.mxu0 %v3436
      %3676 = vmatpush1.bf16.msra.mxu0 %v3435
      %3677 = vmatprep.subr.bf16.mxu0 %v3444
      %3678 = vmatpush1.bf16.msra.mxu0 %v3443
      %3679 = vmatprep.subr.bf16.mxu0 %v3452
      %3680 = vmatpush1.bf16.msra.mxu0 %v3451
      %3681 = vmatprep.subr.bf16.mxu0 %v3460
      %3682 = vmatpush1.bf16.msra.mxu0 %v3459
      %3683 = vmatprep.subr.bf16.mxu0 %v3468
      %3684 = vmatpush1.bf16.msra.mxu0 %v3467
      %3685 = vmatprep.subr.bf16.mxu0 %v3476
      %3686 = vmatpush1.bf16.msra.mxu0 %v3475
      %3687 = vmatprep.subr.bf16.mxu0 %v3484
      %3688 = vmatpush1.bf16.msra.mxu0 %v3483
      %3689 = vmatprep.subr.bf16.mxu0 %v3492
      %3690 = vmatpush1.bf16.msra.mxu0 %v3491
      %3691 = vmatprep.subr.bf16.mxu0 %v3500
      %3692 = vmatpush1.bf16.msra.mxu0 %v3499
      %3693 = vmatprep.subr.bf16.mxu0 %v3508
      %3694 = vmatpush1.bf16.msra.mxu0 %v3507
      %3695 = vmatprep.subr.bf16.mxu0 %v3516
      %3696 = vmatpush1.bf16.msra.mxu0 %v3515
      %3697 = vmatprep.subr.bf16.mxu0 %v3524
      %3698 = vmatpush1.bf16.msra.mxu0 %v3523
      %3699 = vmatprep.subr.bf16.mxu0 0
      %3700 = vmatpush1.bf16.msra.mxu0 0
      %3701 = vmatprep.subr.bf16.mxu0 0
      %3702 = vmatpush1.bf16.msra.mxu0 0
      %3703 = vmatprep.subr.bf16.mxu0 0
      %3704 = vmatpush1.bf16.msra.mxu0 0
      %3705 = vmatprep.subr.bf16.mxu0 0
      %3706 = vmatpush1.bf16.msra.mxu0 0
      %3707 = vmatprep.mubr.bf16.mxu0 %v3628
      %3708 = vmatmul.mubr.bf16.gmra.mrb[0].mxu0 %v2977
      %v3709 = vpop.f32.mrb[0].mxu0
      %v3710 = vadd.f32 %v3110, %v3709
      %v3711 = vpop.f32.mrb[0].mxu0
      %v3712 = vadd.f32 %v3114, %v3711
      %v3713 = vpop.f32.mrb[0].mxu0
      %v3714 = vadd.f32 %v3110, %v3713
      %v3715 = vpop.f32.mrb[0].mxu0
      %v3716 = vadd.f32 %v3114, %v3715
      %3717 = vmatprep.mubr.bf16.mxu0 %v3631
      %3718 = vmatmul.mubr.bf16.gmra.mrb[0].mxu0 %v2979
      %v3719 = vpop.f32.mrb[0].mxu0
      %v3720 = vadd.f32 %v3110, %v3719
      %v3721 = vpop.f32.mrb[0].mxu0
      %v3722 = vadd.f32 %v3114, %v3721
      %v3723 = vpop.f32.mrb[0].mxu0
      %v3724 = vadd.f32 %v3110, %v3723
      %v3725 = vpop.f32.mrb[0].mxu0
      %v3726 = vadd.f32 %v3114, %v3725
      %3727 = vmatprep.mubr.bf16.mxu0 %v3634
      %3728 = vmatmul.mubr.bf16.gmra.mrb[0].mxu0 %v2981
      %v3729 = vpop.f32.mrb[0].mxu0
      %v3730 = vadd.f32 %v3110, %v3729
      %v3731 = vpop.f32.mrb[0].mxu0
      %v3732 = vadd.f32 %v3114, %v3731
      %v3733 = vpop.f32.mrb[0].mxu0
      %v3734 = vadd.f32 %v3110, %v3733
      %v3735 = vpop.f32.mrb[0].mxu0
      %v3736 = vadd.f32 %v3114, %v3735
      %3737 = vmatprep.mubr.bf16.mxu0 %v3637
      %3738 = vmatmul.mubr.bf16.gmra.mrb[0].mxu0 %v2983
      %v3739 = vpop.f32.mrb[0].mxu0
      %v3740 = vadd.f32 %v3110, %v3739
      %v3741 = vpop.f32.mrb[0].mxu0
      %v3742 = vadd.f32 %v3114, %v3741
      %v3743 = vpop.f32.mrb[0].mxu0
      %v3744 = vadd.f32 %v3110, %v3743
      %v3745 = vpop.f32.mrb[0].mxu0
      %v3746 = vadd.f32 %v3114, %v3745
      %3747 = vmatprep.mubr.bf16.mxu0 %v3640
      %3748 = vmatmul.mubr.bf16.gmra.mrb[0].mxu0 %v2985
      %v3749 = vpop.f32.mrb[0].mxu0
      %v3750 = vadd.f32 %v3110, %v3749
      %v3751 = vpop.f32.mrb[0].mxu0
      %v3752 = vadd.f32 %v3114, %v3751
      %v3753 = vpop.f32.mrb[0].mxu0
      %v3754 = vadd.f32 %v3110, %v3753
      %v3755 = vpop.f32.mrb[0].mxu0
      %v3756 = vadd.f32 %v3114, %v3755
      %3757 = vmatprep.mubr.bf16.mxu0 %v3643
      %3758 = vmatmul.mubr.bf16.gmra.mrb[0].mxu0 %v2987
      %v3759 = vpop.f32.mrb[0].mxu0
      %v3760 = vadd.f32 %v3110, %v3759
      %v3761 = vpop.f32.mrb[0].mxu0
      %v3762 = vadd.f32 %v3114, %v3761
      %v3763 = vpop.f32.mrb[0].mxu0
      %v3764 = vadd.f32 %v3110, %v3763
      %v3765 = vpop.f32.mrb[0].mxu0
      %v3766 = vadd.f32 %v3114, %v3765
      %3767 = vmatprep.mubr.bf16.mxu0 %v3646
      %3768 = vmatmul.mubr.bf16.gmra.mrb[0].mxu0 %v2989
      %v3769 = vpop.f32.mrb[0].mxu0
      %v3770 = vadd.f32 %v3110, %v3769
      %v3771 = vpop.f32.mrb[0].mxu0
      %v3772 = vadd.f32 %v3114, %v3771
      %v3773 = vpop.f32.mrb[0].mxu0
      %v3774 = vadd.f32 %v3110, %v3773
      %v3775 = vpop.f32.mrb[0].mxu0
      %v3776 = vadd.f32 %v3114, %v3775
      %3777 = vmatprep.mubr.bf16.mxu0 %v3649
      %3778 = vmatmul.mubr.bf16.gmra.mrb[0].mxu0 %v2991
      %v3779 = vpop.f32.mrb[0].mxu0
      %v3780 = vadd.f32 %v3110, %v3779
      %v3781 = vpop.f32.mrb[0].mxu0
      %v3782 = vadd.f32 %v3114, %v3781
      %v3783 = vpop.f32.mrb[0].mxu0
      %v3784 = vadd.f32 %v3110, %v3783
      %v3785 = vpop.f32.mrb[0].mxu0
      %v3786 = vadd.f32 %v3114, %v3785
      %3787 = vmatprep.mubr.bf16.mxu0 %v3652
      %3788 = vmatmul.mubr.bf16.gmra.mrb[0].mxu0 %v2993
      %v3789 = vpop.f32.mrb[0].mxu0
      %v3790 = vadd.f32 %v3110, %v3789
      %v3791 = vpop.f32.mrb[0].mxu0
      %v3792 = vadd.f32 %v3114, %v3791
      %v3793 = vpop.f32.mrb[0].mxu0
      %v3794 = vadd.f32 %v3110, %v3793
      %v3795 = vpop.f32.mrb[0].mxu0
      %v3796 = vadd.f32 %v3114, %v3795
      %3797 = vmatprep.mubr.bf16.mxu0 %v3655
      %3798 = vmatmul.mubr.bf16.gmra.mrb[0].mxu0 %v2995
      %v3799 = vpop.f32.mrb[0].mxu0
      %v3800 = vadd.f32 %v3110, %v3799
      %v3801 = vpop.f32.mrb[0].mxu0
      %v3802 = vadd.f32 %v3114, %v3801
      %v3803 = vpop.f32.mrb[0].mxu0
      %v3804 = vadd.f32 %v3110, %v3803
      %v3805 = vpop.f32.mrb[0].mxu0
      %v3806 = vadd.f32 %v3114, %v3805
      %3807 = vmatprep.mubr.bf16.mxu0 %v3658
      %3808 = vmatmul.mubr.bf16.gmra.mrb[0].mxu0 %v2997
      %v3809 = vpop.f32.mrb[0].mxu0
      %v3810 = vadd.f32 %v3110, %v3809
      %v3811 = vpop.f32.mrb[0].mxu0
      %v3812 = vadd.f32 %v3114, %v3811
      %v3813 = vpop.f32.mrb[0].mxu0
      %v3814 = vadd.f32 %v3110, %v3813
      %v3815 = vpop.f32.mrb[0].mxu0
      %v3816 = vadd.f32 %v3114, %v3815
      %3817 = vmatprep.mubr.bf16.mxu0 %v3661
      %3818 = vmatmul.mubr.bf16.gmra.mrb[0].mxu0 %v2999
      %v3819 = vpop.f32.mrb[0].mxu0
      %v3820 = vadd.f32 %v3110, %v3819
      %v3821 = vpop.f32.mrb[0].mxu0
      %v3822 = vadd.f32 %v3114, %v3821
      %v3823 = vpop.f32.mrb[0].mxu0
      %v3824 = vadd.f32 %v3110, %v3823
      %v3825 = vpop.f32.mrb[0].mxu0
      %v3826 = vadd.f32 %v3114, %v3825
      %3827 = vmatprep.mubr.bf16.mxu0 %v3664
      %3828 = vmatmul.mubr.bf16.gmra.mrb[0].mxu0 %v3001
      %v3829 = vpop.f32.mrb[0].mxu0
      %v3830 = vadd.f32 %v3110, %v3829
      %v3831 = vpop.f32.mrb[0].mxu0
      %v3832 = vadd.f32 %v3114, %v3831
      %v3833 = vpop.f32.mrb[0].mxu0
      %v3834 = vadd.f32 %v3110, %v3833
      %v3835 = vpop.f32.mrb[0].mxu0
      %v3836 = vadd.f32 %v3114, %v3835
      %3837 = vmatprep.mubr.bf16.mxu0 %v3667
      %3838 = vmatmul.mubr.bf16.gmra.mrb[0].mxu0 %v3003
      %v3839 = vpop.f32.mrb[0].mxu0
      %v3840 = vadd.f32 %v3110, %v3839
      %v3841 = vpop.f32.mrb[0].mxu0
      %v3842 = vadd.f32 %v3114, %v3841
      %v3843 = vpop.f32.mrb[0].mxu0
      %v3844 = vadd.f32 %v3110, %v3843
      %v3845 = vpop.f32.mrb[0].mxu0
      %v3846 = vadd.f32 %v3114, %v3845
      %3847 = vmatprep.mubr.bf16.mxu0 %v3670
      %3848 = vmatmul.mubr.bf16.gmra.mrb[0].mxu0 %v3005
      %v3849 = vpop.f32.mrb[0].mxu0
      %v3850 = vadd.f32 %v3110, %v3849
      %v3851 = vpop.f32.mrb[0].mxu0
      %v3852 = vadd.f32 %v3114, %v3851
      %v3853 = vpop.f32.mrb[0].mxu0
      %v3854 = vadd.f32 %v3110, %v3853
      %v3855 = vpop.f32.mrb[0].mxu0
      %v3856 = vadd.f32 %v3114, %v3855
      %3857 = vmatprep.mubr.bf16.mxu0 %v3673
      %3858 = vmatmul.mubr.bf16.gmra.mrb[0].mxu0 %v3007
      %v3859 = vpop.f32.mrb[0].mxu0
      %v3860 = vadd.f32 %v3110, %v3859
      %v3861 = vpop.f32.mrb[0].mxu0
      %v3862 = vadd.f32 %v3114, %v3861
      %v3863 = vpop.f32.mrb[0].mxu0
      %v3864 = vadd.f32 %v3110, %v3863
      %v3865 = vpop.f32.mrb[0].mxu0
      %v3866 = vadd.f32 %v3114, %v3865
      %3867 = vdwg.mxu0
      %3868 = vmatprep.subr.bf16.mxu0 %v3438
      %3869 = vmatpush1.bf16.msra.mxu0 %v3437
      %3870 = vmatprep.subr.bf16.mxu0 %v3446
      %3871 = vmatpush1.bf16.msra.mxu0 %v3445
      %3872 = vmatprep.subr.bf16.mxu0 %v3454
      %3873 = vmatpush1.bf16.msra.mxu0 %v3453
      %3874 = vmatprep.subr.bf16.mxu0 %v3462
      %3875 = vmatpush1.bf16.msra.mxu0 %v3461
      %3876 = vmatprep.subr.bf16.mxu0 %v3470
      %3877 = vmatpush1.bf16.msra.mxu0 %v3469
      %3878 = vmatprep.subr.bf16.mxu0 %v3478
      %3879 = vmatpush1.bf16.msra.mxu0 %v3477
      %3880 = vmatprep.subr.bf16.mxu0 %v3486
      %3881 = vmatpush1.bf16.msra.mxu0 %v3485
      %3882 = vmatprep.subr.bf16.mxu0 %v3494
      %3883 = vmatpush1.bf16.msra.mxu0 %v3493
      %3884 = vmatprep.subr.bf16.mxu0 %v3502
      %3885 = vmatpush1.bf16.msra.mxu0 %v3501
      %3886 = vmatprep.subr.bf16.mxu0 %v3510
      %3887 = vmatpush1.bf16.msra.mxu0 %v3509
      %3888 = vmatprep.subr.bf16.mxu0 %v3518
      %3889 = vmatpush1.bf16.msra.mxu0 %v3517
      %3890 = vmatprep.subr.bf16.mxu0 %v3526
      %3891 = vmatpush1.bf16.msra.mxu0 %v3525
      %3892 = vmatprep.subr.bf16.mxu0 0
      %3893 = vmatpush1.bf16.msra.mxu0 0
      %3894 = vmatprep.subr.bf16.mxu0 0
      %3895 = vmatpush1.bf16.msra.mxu0 0
      %3896 = vmatprep.subr.bf16.mxu0 0
      %3897 = vmatpush1.bf16.msra.mxu0 0
      %3898 = vmatprep.subr.bf16.mxu0 0
      %3899 = vmatpush1.bf16.msra.mxu0 0
      %3900 = vmatprep.mubr.bf16.mxu0 %v3628
      %3901 = vmatmul.mubr.bf16.gmra.mrb[0].mxu0 %v2977
      %v3902 = vpop.f32.mrb[0].mxu0
      %v3903 = vadd.f32 %v3118, %v3902
      %v3904 = vpop.f32.mrb[0].mxu0
      %v3905 = vadd.f32 %v3122, %v3904
      %v3906 = vpop.f32.mrb[0].mxu0
      %v3907 = vadd.f32 %v3118, %v3906
      %v3908 = vpop.f32.mrb[0].mxu0
      %v3909 = vadd.f32 %v3122, %v3908
      %3910 = vmatprep.mubr.bf16.mxu0 %v3631
      %3911 = vmatmul.mubr.bf16.gmra.mrb[0].mxu0 %v2979
      %v3912 = vpop.f32.mrb[0].mxu0
      %v3913 = vadd.f32 %v3118, %v3912
      %v3914 = vpop.f32.mrb[0].mxu0
      %v3915 = vadd.f32 %v3122, %v3914
      %v3916 = vpop.f32.mrb[0].mxu0
      %v3917 = vadd.f32 %v3118, %v3916
      %v3918 = vpop.f32.mrb[0].mxu0
      %v3919 = vadd.f32 %v3122, %v3918
      %3920 = vmatprep.mubr.bf16.mxu0 %v3634
      %3921 = vmatmul.mubr.bf16.gmra.mrb[0].mxu0 %v2981
      %v3922 = vpop.f32.mrb[0].mxu0
      %v3923 = vadd.f32 %v3118, %v3922
      %v3924 = vpop.f32.mrb[0].mxu0
      %v3925 = vadd.f32 %v3122, %v3924
      %v3926 = vpop.f32.mrb[0].mxu0
      %v3927 = vadd.f32 %v3118, %v3926
      %v3928 = vpop.f32.mrb[0].mxu0
      %v3929 = vadd.f32 %v3122, %v3928
      %3930 = vmatprep.mubr.bf16.mxu0 %v3637
      %3931 = vmatmul.mubr.bf16.gmra.mrb[0].mxu0 %v2983
      %v3932 = vpop.f32.mrb[0].mxu0
      %v3933 = vadd.f32 %v3118, %v3932
      %v3934 = vpop.f32.mrb[0].mxu0
      %v3935 = vadd.f32 %v3122, %v3934
      %v3936 = vpop.f32.mrb[0].mxu0
      %v3937 = vadd.f32 %v3118, %v3936
      %v3938 = vpop.f32.mrb[0].mxu0
      %v3939 = vadd.f32 %v3122, %v3938
      %3940 = vmatprep.mubr.bf16.mxu0 %v3640
      %3941 = vmatmul.mubr.bf16.gmra.mrb[0].mxu0 %v2985
      %v3942 = vpop.f32.mrb[0].mxu0
      %v3943 = vadd.f32 %v3118, %v3942
      %v3944 = vpop.f32.mrb[0].mxu0
      %v3945 = vadd.f32 %v3122, %v3944
      %v3946 = vpop.f32.mrb[0].mxu0
      %v3947 = vadd.f32 %v3118, %v3946
      %v3948 = vpop.f32.mrb[0].mxu0
      %v3949 = vadd.f32 %v3122, %v3948
      %3950 = vmatprep.mubr.bf16.mxu0 %v3643
      %3951 = vmatmul.mubr.bf16.gmra.mrb[0].mxu0 %v2987
      %v3952 = vpop.f32.mrb[0].mxu0
      %v3953 = vadd.f32 %v3118, %v3952
      %v3954 = vpop.f32.mrb[0].mxu0
      %v3955 = vadd.f32 %v3122, %v3954
      %v3956 = vpop.f32.mrb[0].mxu0
      %v3957 = vadd.f32 %v3118, %v3956
      %v3958 = vpop.f32.mrb[0].mxu0
      %v3959 = vadd.f32 %v3122, %v3958
      %3960 = vmatprep.mubr.bf16.mxu0 %v3646
      %3961 = vmatmul.mubr.bf16.gmra.mrb[0].mxu0 %v2989
      %v3962 = vpop.f32.mrb[0].mxu0
      %v3963 = vadd.f32 %v3118, %v3962
      %v3964 = vpop.f32.mrb[0].mxu0
      %v3965 = vadd.f32 %v3122, %v3964
      %v3966 = vpop.f32.mrb[0].mxu0
      %v3967 = vadd.f32 %v3118, %v3966
      %v3968 = vpop.f32.mrb[0].mxu0
      %v3969 = vadd.f32 %v3122, %v3968
      %3970 = vmatprep.mubr.bf16.mxu0 %v3649
      %3971 = vmatmul.mubr.bf16.gmra.mrb[0].mxu0 %v2991
      %v3972 = vpop.f32.mrb[0].mxu0
      %v3973 = vadd.f32 %v3118, %v3972
      %v3974 = vpop.f32.mrb[0].mxu0
      %v3975 = vadd.f32 %v3122, %v3974
      %v3976 = vpop.f32.mrb[0].mxu0
      %v3977 = vadd.f32 %v3118, %v3976
      %v3978 = vpop.f32.mrb[0].mxu0
      %v3979 = vadd.f32 %v3122, %v3978
      %3980 = vmatprep.mubr.bf16.mxu0 %v3652
      %3981 = vmatmul.mubr.bf16.gmra.mrb[0].mxu0 %v2993
      %v3982 = vpop.f32.mrb[0].mxu0
      %v3983 = vadd.f32 %v3118, %v3982
      %v3984 = vpop.f32.mrb[0].mxu0
      %v3985 = vadd.f32 %v3122, %v3984
      %v3986 = vpop.f32.mrb[0].mxu0
      %v3987 = vadd.f32 %v3118, %v3986
      %v3988 = vpop.f32.mrb[0].mxu0
      %v3989 = vadd.f32 %v3122, %v3988
      %3990 = vmatprep.mubr.bf16.mxu0 %v3655
      %3991 = vmatmul.mubr.bf16.gmra.mrb[0].mxu0 %v2995
      %v3992 = vpop.f32.mrb[0].mxu0
      %v3993 = vadd.f32 %v3118, %v3992
      %v3994 = vpop.f32.mrb[0].mxu0
      %v3995 = vadd.f32 %v3122, %v3994
      %v3996 = vpop.f32.mrb[0].mxu0
      %v3997 = vadd.f32 %v3118, %v3996
      %v3998 = vpop.f32.mrb[0].mxu0
      %v3999 = vadd.f32 %v3122, %v3998
      %4000 = vmatprep.mubr.bf16.mxu0 %v3658
      %4001 = vmatmul.mubr.bf16.gmra.mrb[0].mxu0 %v2997
      %v4002 = vpop.f32.mrb[0].mxu0
      %v4003 = vadd.f32 %v3118, %v4002
      %v4004 = vpop.f32.mrb[0].mxu0
      %v4005 = vadd.f32 %v3122, %v4004
      %v4006 = vpop.f32.mrb[0].mxu0
      %v4007 = vadd.f32 %v3118, %v4006
      %v4008 = vpop.f32.mrb[0].mxu0
      %v4009 = vadd.f32 %v3122, %v4008
      %4010 = vmatprep.mubr.bf16.mxu0 %v3661
      %4011 = vmatmul.mubr.bf16.gmra.mrb[0].mxu0 %v2999
      %v4012 = vpop.f32.mrb[0].mxu0
      %v4013 = vadd.f32 %v3118, %v4012
      %v4014 = vpop.f32.mrb[0].mxu0
      %v4015 = vadd.f32 %v3122, %v4014
      %v4016 = vpop.f32.mrb[0].mxu0
      %v4017 = vadd.f32 %v3118, %v4016
      %v4018 = vpop.f32.mrb[0].mxu0
      %v4019 = vadd.f32 %v3122, %v4018
      %4020 = vmatprep.mubr.bf16.mxu0 %v3664
      %4021 = vmatmul.mubr.bf16.gmra.mrb[0].mxu0 %v3001
      %v4022 = vpop.f32.mrb[0].mxu0
      %v4023 = vadd.f32 %v3118, %v4022
      %v4024 = vpop.f32.mrb[0].mxu0
      %v4025 = vadd.f32 %v3122, %v4024
      %v4026 = vpop.f32.mrb[0].mxu0
      %v4027 = vadd.f32 %v3118, %v4026
      %v4028 = vpop.f32.mrb[0].mxu0
      %v4029 = vadd.f32 %v3122, %v4028
      %4030 = vmatprep.mubr.bf16.mxu0 %v3667
      %4031 = vmatmul.mubr.bf16.gmra.mrb[0].mxu0 %v3003
      %v4032 = vpop.f32.mrb[0].mxu0
      %v4033 = vadd.f32 %v3118, %v4032
      %v4034 = vpop.f32.mrb[0].mxu0
      %v4035 = vadd.f32 %v3122, %v4034
      %v4036 = vpop.f32.mrb[0].mxu0
      %v4037 = vadd.f32 %v3118, %v4036
      %v4038 = vpop.f32.mrb[0].mxu0
      %v4039 = vadd.f32 %v3122, %v4038
      %4040 = vmatprep.mubr.bf16.mxu0 %v3670
      %4041 = vmatmul.mubr.bf16.gmra.mrb[0].mxu0 %v3005
      %v4042 = vpop.f32.mrb[0].mxu0
      %v4043 = vadd.f32 %v3118, %v4042
      %v4044 = vpop.f32.mrb[0].mxu0
      %v4045 = vadd.f32 %v3122, %v4044
      %v4046 = vpop.f32.mrb[0].mxu0
      %v4047 = vadd.f32 %v3118, %v4046
      %v4048 = vpop.f32.mrb[0].mxu0
      %v4049 = vadd.f32 %v3122, %v4048
      %4050 = vmatprep.mubr.bf16.mxu0 %v3673
      %4051 = vmatmul.mubr.bf16.gmra.mrb[0].mxu0 %v3007
      %v4052 = vpop.f32.mrb[0].mxu0
      %v4053 = vadd.f32 %v3118, %v4052
      %v4054 = vpop.f32.mrb[0].mxu0
      %v4055 = vadd.f32 %v3122, %v4054
      %v4056 = vpop.f32.mrb[0].mxu0
      %v4057 = vadd.f32 %v3118, %v4056
      %v4058 = vpop.f32.mrb[0].mxu0
      %v4059 = vadd.f32 %v3122, %v4058
      %4060 = vdwg.mxu0
      %4061 = vmatprep.subr.bf16.mxu0 %v3440
      %4062 = vmatpush1.bf16.msra.mxu0 %v3439
      %4063 = vmatprep.subr.bf16.mxu0 %v3448
      %4064 = vmatpush1.bf16.msra.mxu0 %v3447
      %4065 = vmatprep.subr.bf16.mxu0 %v3456
      %4066 = vmatpush1.bf16.msra.mxu0 %v3455
      %4067 = vmatprep.subr.bf16.mxu0 %v3464
      %4068 = vmatpush1.bf16.msra.mxu0 %v3463
      %4069 = vmatprep.subr.bf16.mxu0 %v3472
      %4070 = vmatpush1.bf16.msra.mxu0 %v3471
      %4071 = vmatprep.subr.bf16.mxu0 %v3480
      %4072 = vmatpush1.bf16.msra.mxu0 %v3479
      %4073 = vmatprep.subr.bf16.mxu0 %v3488
      %4074 = vmatpush1.bf16.msra.mxu0 %v3487
      %4075 = vmatprep.subr.bf16.mxu0 %v3496
      %4076 = vmatpush1.bf16.msra.mxu0 %v3495
      %4077 = vmatprep.subr.bf16.mxu0 %v3504
      %4078 = vmatpush1.bf16.msra.mxu0 %v3503
      %4079 = vmatprep.subr.bf16.mxu0 %v3512
      %4080 = vmatpush1.bf16.msra.mxu0 %v3511
      %4081 = vmatprep.subr.bf16.mxu0 %v3520
      %4082 = vmatpush1.bf16.msra.mxu0 %v3519
      %4083 = vmatprep.subr.bf16.mxu0 %v3528
      %4084 = vmatpush1.bf16.msra.mxu0 %v3527
      %4085 = vmatprep.subr.bf16.mxu0 0
      %4086 = vmatpush1.bf16.msra.mxu0 0
      %4087 = vmatprep.subr.bf16.mxu0 0
      %4088 = vmatpush1.bf16.msra.mxu0 0
      %4089 = vmatprep.subr.bf16.mxu0 0
      %4090 = vmatpush1.bf16.msra.mxu0 0
      %4091 = vmatprep.subr.bf16.mxu0 0
      %4092 = vmatpush1.bf16.msra.mxu0 0
      %4093 = vmatprep.mubr.bf16.mxu0 %v3628
      %4094 = vmatmul.mubr.bf16.gmra.mrb[0].mxu0 %v2977
      %v4095 = vpop.f32.mrb[0].mxu0
      %v4096 = vadd.f32 %v3126, %v4095
      %v4097 = vpop.f32.mrb[0].mxu0
      %v4098 = vadd.f32 %v3130, %v4097
      %v4099 = vpop.f32.mrb[0].mxu0
      %v4100 = vadd.f32 %v3126, %v4099
      %v4101 = vpop.f32.mrb[0].mxu0
      %v4102 = vadd.f32 %v3130, %v4101
      %4103 = vmatprep.mubr.bf16.mxu0 %v3631
      %4104 = vmatmul.mubr.bf16.gmra.mrb[0].mxu0 %v2979
      %v4105 = vpop.f32.mrb[0].mxu0
      %v4106 = vadd.f32 %v3126, %v4105
      %v4107 = vpop.f32.mrb[0].mxu0
      %v4108 = vadd.f32 %v3130, %v4107
      %v4109 = vpop.f32.mrb[0].mxu0
      %v4110 = vadd.f32 %v3126, %v4109
      %v4111 = vpop.f32.mrb[0].mxu0
      %v4112 = vadd.f32 %v3130, %v4111
      %4113 = vmatprep.mubr.bf16.mxu0 %v3634
      %4114 = vmatmul.mubr.bf16.gmra.mrb[0].mxu0 %v2981
      %v4115 = vpop.f32.mrb[0].mxu0
      %v4116 = vadd.f32 %v3126, %v4115
      %v4117 = vpop.f32.mrb[0].mxu0
      %v4118 = vadd.f32 %v3130, %v4117
      %v4119 = vpop.f32.mrb[0].mxu0
      %v4120 = vadd.f32 %v3126, %v4119
      %v4121 = vpop.f32.mrb[0].mxu0
      %v4122 = vadd.f32 %v3130, %v4121
      %4123 = vmatprep.mubr.bf16.mxu0 %v3637
      %4124 = vmatmul.mubr.bf16.gmra.mrb[0].mxu0 %v2983
      %v4125 = vpop.f32.mrb[0].mxu0
      %v4126 = vadd.f32 %v3126, %v4125
      %v4127 = vpop.f32.mrb[0].mxu0
      %v4128 = vadd.f32 %v3130, %v4127
      %v4129 = vpop.f32.mrb[0].mxu0
      %v4130 = vadd.f32 %v3126, %v4129
      %v4131 = vpop.f32.mrb[0].mxu0
      %v4132 = vadd.f32 %v3130, %v4131
      %4133 = vmatprep.mubr.bf16.mxu0 %v3640
      %4134 = vmatmul.mubr.bf16.gmra.mrb[0].mxu0 %v2985
      %v4135 = vpop.f32.mrb[0].mxu0
      %v4136 = vadd.f32 %v3126, %v4135
      %v4137 = vpop.f32.mrb[0].mxu0
      %v4138 = vadd.f32 %v3130, %v4137
      %v4139 = vpop.f32.mrb[0].mxu0
      %v4140 = vadd.f32 %v3126, %v4139
      %v4141 = vpop.f32.mrb[0].mxu0
      %v4142 = vadd.f32 %v3130, %v4141
      %4143 = vmatprep.mubr.bf16.mxu0 %v3643
      %4144 = vmatmul.mubr.bf16.gmra.mrb[0].mxu0 %v2987
      %v4145 = vpop.f32.mrb[0].mxu0
      %v4146 = vadd.f32 %v3126, %v4145
      %v4147 = vpop.f32.mrb[0].mxu0
      %v4148 = vadd.f32 %v3130, %v4147
      %v4149 = vpop.f32.mrb[0].mxu0
      %v4150 = vadd.f32 %v3126, %v4149
      %v4151 = vpop.f32.mrb[0].mxu0
      %v4152 = vadd.f32 %v3130, %v4151
      %4153 = vmatprep.mubr.bf16.mxu0 %v3646
      %4154 = vmatmul.mubr.bf16.gmra.mrb[0].mxu0 %v2989
      %v4155 = vpop.f32.mrb[0].mxu0
      %v4156 = vadd.f32 %v3126, %v4155
      %v4157 = vpop.f32.mrb[0].mxu0
      %v4158 = vadd.f32 %v3130, %v4157
      %v4159 = vpop.f32.mrb[0].mxu0
      %v4160 = vadd.f32 %v3126, %v4159
      %v4161 = vpop.f32.mrb[0].mxu0
      %v4162 = vadd.f32 %v3130, %v4161
      %4163 = vmatprep.mubr.bf16.mxu0 %v3649
      %4164 = vmatmul.mubr.bf16.gmra.mrb[0].mxu0 %v2991
      %v4165 = vpop.f32.mrb[0].mxu0
      %v4166 = vadd.f32 %v3126, %v4165
      %v4167 = vpop.f32.mrb[0].mxu0
      %v4168 = vadd.f32 %v3130, %v4167
      %v4169 = vpop.f32.mrb[0].mxu0
      %v4170 = vadd.f32 %v3126, %v4169
      %v4171 = vpop.f32.mrb[0].mxu0
      %v4172 = vadd.f32 %v3130, %v4171
      %4173 = vmatprep.mubr.bf16.mxu0 %v3652
      %4174 = vmatmul.mubr.bf16.gmra.mrb[0].mxu0 %v2993
      %v4175 = vpop.f32.mrb[0].mxu0
      %v4176 = vadd.f32 %v3126, %v4175
      %v4177 = vpop.f32.mrb[0].mxu0
      %v4178 = vadd.f32 %v3130, %v4177
      %v4179 = vpop.f32.mrb[0].mxu0
      %v4180 = vadd.f32 %v3126, %v4179
      %v4181 = vpop.f32.mrb[0].mxu0
      %v4182 = vadd.f32 %v3130, %v4181
      %4183 = vmatprep.mubr.bf16.mxu0 %v3655
      %4184 = vmatmul.mubr.bf16.gmra.mrb[0].mxu0 %v2995
      %v4185 = vpop.f32.mrb[0].mxu0
      %v4186 = vadd.f32 %v3126, %v4185
      %v4187 = vpop.f32.mrb[0].mxu0
      %v4188 = vadd.f32 %v3130, %v4187
      %v4189 = vpop.f32.mrb[0].mxu0
      %v4190 = vadd.f32 %v3126, %v4189
      %v4191 = vpop.f32.mrb[0].mxu0
      %v4192 = vadd.f32 %v3130, %v4191
      %4193 = vmatprep.mubr.bf16.mxu0 %v3658
      %4194 = vmatmul.mubr.bf16.gmra.mrb[0].mxu0 %v2997
      %v4195 = vpop.f32.mrb[0].mxu0
      %v4196 = vadd.f32 %v3126, %v4195
      %v4197 = vpop.f32.mrb[0].mxu0
      %v4198 = vadd.f32 %v3130, %v4197
      %v4199 = vpop.f32.mrb[0].mxu0
      %v4200 = vadd.f32 %v3126, %v4199
      %v4201 = vpop.f32.mrb[0].mxu0
      %v4202 = vadd.f32 %v3130, %v4201
      %4203 = vmatprep.mubr.bf16.mxu0 %v3661
      %4204 = vmatmul.mubr.bf16.gmra.mrb[0].mxu0 %v2999
      %v4205 = vpop.f32.mrb[0].mxu0
      %v4206 = vadd.f32 %v3126, %v4205
      %v4207 = vpop.f32.mrb[0].mxu0
      %v4208 = vadd.f32 %v3130, %v4207
      %v4209 = vpop.f32.mrb[0].mxu0
      %v4210 = vadd.f32 %v3126, %v4209
      %v4211 = vpop.f32.mrb[0].mxu0
      %v4212 = vadd.f32 %v3130, %v4211
      %4213 = vmatprep.mubr.bf16.mxu0 %v3664
      %4214 = vmatmul.mubr.bf16.gmra.mrb[0].mxu0 %v3001
      %v4215 = vpop.f32.mrb[0].mxu0
      %v4216 = vadd.f32 %v3126, %v4215
      %v4217 = vpop.f32.mrb[0].mxu0
      %v4218 = vadd.f32 %v3130, %v4217
      %v4219 = vpop.f32.mrb[0].mxu0
      %v4220 = vadd.f32 %v3126, %v4219
      %v4221 = vpop.f32.mrb[0].mxu0
      %v4222 = vadd.f32 %v3130, %v4221
      %4223 = vmatprep.mubr.bf16.mxu0 %v3667
      %4224 = vmatmul.mubr.bf16.gmra.mrb[0].mxu0 %v3003
      %v4225 = vpop.f32.mrb[0].mxu0
      %v4226 = vadd.f32 %v3126, %v4225
      %v4227 = vpop.f32.mrb[0].mxu0
      %v4228 = vadd.f32 %v3130, %v4227
      %v4229 = vpop.f32.mrb[0].mxu0
      %v4230 = vadd.f32 %v3126, %v4229
      %v4231 = vpop.f32.mrb[0].mxu0
      %v4232 = vadd.f32 %v3130, %v4231
      %4233 = vmatprep.mubr.bf16.mxu0 %v3670
      %4234 = vmatmul.mubr.bf16.gmra.mrb[0].mxu0 %v3005
      %v4235 = vpop.f32.mrb[0].mxu0
      %v4236 = vadd.f32 %v3126, %v4235
      %v4237 = vpop.f32.mrb[0].mxu0
      %v4238 = vadd.f32 %v3130, %v4237
      %v4239 = vpop.f32.mrb[0].mxu0
      %v4240 = vadd.f32 %v3126, %v4239
      %v4241 = vpop.f32.mrb[0].mxu0
      %v4242 = vadd.f32 %v3130, %v4241
      %4243 = vmatprep.mubr.bf16.mxu0 %v3673
      %4244 = vmatmul.mubr.bf16.gmra.mrb[0].mxu0 %v3007
      %v4245 = vpop.f32.mrb[0].mxu0
      %v4246 = vadd.f32 %v3126, %v4245
      %v4247 = vpop.f32.mrb[0].mxu0
      %v4248 = vadd.f32 %v3130, %v4247
      %v4249 = vpop.f32.mrb[0].mxu0
      %v4250 = vadd.f32 %v3126, %v4249
      %v4251 = vpop.f32.mrb[0].mxu0
      %v4252 = vadd.f32 %v3130, %v4251
      %4253 = vdwg.mxu0
      %4254 = vmatprep.subr.bf16.mxu0 %v3442
      %4255 = vmatpush1.bf16.msra.mxu0 %v3441
      %4256 = vmatprep.subr.bf16.mxu0 %v3450
      %4257 = vmatpush1.bf16.msra.mxu0 %v3449
      %4258 = vmatprep.subr.bf16.mxu0 %v3458
      %4259 = vmatpush1.bf16.msra.mxu0 %v3457
      %4260 = vmatprep.subr.bf16.mxu0 %v3466
      %4261 = vmatpush1.bf16.msra.mxu0 %v3465
      %4262 = vmatprep.subr.bf16.mxu0 %v3474
      %4263 = vmatpush1.bf16.msra.mxu0 %v3473
      %4264 = vmatprep.subr.bf16.mxu0 %v3482
      %4265 = vmatpush1.bf16.msra.mxu0 %v3481
      %4266 = vmatprep.subr.bf16.mxu0 %v3490
      %4267 = vmatpush1.bf16.msra.mxu0 %v3489
      %4268 = vmatprep.subr.bf16.mxu0 %v3498
      %4269 = vmatpush1.bf16.msra.mxu0 %v3497
      %4270 = vmatprep.subr.bf16.mxu0 %v3506
      %4271 = vmatpush1.bf16.msra.mxu0 %v3505
      %4272 = vmatprep.subr.bf16.mxu0 %v3514
      %4273 = vmatpush1.bf16.msra.mxu0 %v3513
      %4274 = vmatprep.subr.bf16.mxu0 %v3522
      %4275 = vmatpush1.bf16.msra.mxu0 %v3521
      %4276 = vmatprep.subr.bf16.mxu0 %v3530
      %4277 = vmatpush1.bf16.msra.mxu0 %v3529
      %4278 = vmatprep.subr.bf16.mxu0 0
      %4279 = vmatpush1.bf16.msra.mxu0 0
      %4280 = vmatprep.subr.bf16.mxu0 0
      %4281 = vmatpush1.bf16.msra.mxu0 0
      %4282 = vmatprep.subr.bf16.mxu0 0
      %4283 = vmatpush1.bf16.msra.mxu0 0
      %4284 = vmatprep.subr.bf16.mxu0 0
      %4285 = vmatpush1.bf16.msra.mxu0 0
      %4286 = vmatprep.mubr.bf16.mxu0 %v3628
      %4287 = vmatmul.mubr.bf16.gmra.mrb[0].mxu0 %v2977
      %v4288 = vpop.f32.mrb[0].mxu0
      %v4289 = vadd.f32 %v3134, %v4288
      %v4290 = vpop.f32.mrb[0].mxu0
      %v4291 = vadd.f32 %v3138, %v4290
      %v4292 = vpop.f32.mrb[0].mxu0
      %v4293 = vadd.f32 %v3134, %v4292
      %v4294 = vpop.f32.mrb[0].mxu0
      %v4295 = vadd.f32 %v3138, %v4294
      %4296 = vmatprep.mubr.bf16.mxu0 %v3631
      %4297 = vmatmul.mubr.bf16.gmra.mrb[0].mxu0 %v2979
      %v4298 = vpop.f32.mrb[0].mxu0
      %v4299 = vadd.f32 %v3134, %v4298
      %v4300 = vpop.f32.mrb[0].mxu0
      %v4301 = vadd.f32 %v3138, %v4300
      %v4302 = vpop.f32.mrb[0].mxu0
      %v4303 = vadd.f32 %v3134, %v4302
      %v4304 = vpop.f32.mrb[0].mxu0
      %v4305 = vadd.f32 %v3138, %v4304
      %4306 = vmatprep.mubr.bf16.mxu0 %v3634
      %4307 = vmatmul.mubr.bf16.gmra.mrb[0].mxu0 %v2981
      %v4308 = vpop.f32.mrb[0].mxu0
      %v4309 = vadd.f32 %v3134, %v4308
      %v4310 = vpop.f32.mrb[0].mxu0
      %v4311 = vadd.f32 %v3138, %v4310
      %v4312 = vpop.f32.mrb[0].mxu0
      %v4313 = vadd.f32 %v3134, %v4312
      %v4314 = vpop.f32.mrb[0].mxu0
      %v4315 = vadd.f32 %v3138, %v4314
      %4316 = vmatprep.mubr.bf16.mxu0 %v3637
      %4317 = vmatmul.mubr.bf16.gmra.mrb[0].mxu0 %v2983
      %v4318 = vpop.f32.mrb[0].mxu0
      %v4319 = vadd.f32 %v3134, %v4318
      %v4320 = vpop.f32.mrb[0].mxu0
      %v4321 = vadd.f32 %v3138, %v4320
      %v4322 = vpop.f32.mrb[0].mxu0
      %v4323 = vadd.f32 %v3134, %v4322
      %v4324 = vpop.f32.mrb[0].mxu0
      %v4325 = vadd.f32 %v3138, %v4324
      %4326 = vmatprep.mubr.bf16.mxu0 %v3640
      %4327 = vmatmul.mubr.bf16.gmra.mrb[0].mxu0 %v2985
      %v4328 = vpop.f32.mrb[0].mxu0
      %v4329 = vadd.f32 %v3134, %v4328
      %v4330 = vpop.f32.mrb[0].mxu0
      %v4331 = vadd.f32 %v3138, %v4330
      %v4332 = vpop.f32.mrb[0].mxu0
      %v4333 = vadd.f32 %v3134, %v4332
      %v4334 = vpop.f32.mrb[0].mxu0
      %v4335 = vadd.f32 %v3138, %v4334
      %4336 = vmatprep.mubr.bf16.mxu0 %v3643
      %4337 = vmatmul.mubr.bf16.gmra.mrb[0].mxu0 %v2987
      %v4338 = vpop.f32.mrb[0].mxu0
      %v4339 = vadd.f32 %v3134, %v4338
      %v4340 = vpop.f32.mrb[0].mxu0
      %v4341 = vadd.f32 %v3138, %v4340
      %v4342 = vpop.f32.mrb[0].mxu0
      %v4343 = vadd.f32 %v3134, %v4342
      %v4344 = vpop.f32.mrb[0].mxu0
      %v4345 = vadd.f32 %v3138, %v4344
      %4346 = vmatprep.mubr.bf16.mxu0 %v3646
      %4347 = vmatmul.mubr.bf16.gmra.mrb[0].mxu0 %v2989
      %v4348 = vpop.f32.mrb[0].mxu0
      %v4349 = vadd.f32 %v3134, %v4348
      %v4350 = vpop.f32.mrb[0].mxu0
      %v4351 = vadd.f32 %v3138, %v4350
      %v4352 = vpop.f32.mrb[0].mxu0
      %v4353 = vadd.f32 %v3134, %v4352
      %v4354 = vpop.f32.mrb[0].mxu0
      %v4355 = vadd.f32 %v3138, %v4354
      %4356 = vmatprep.mubr.bf16.mxu0 %v3649
      %4357 = vmatmul.mubr.bf16.gmra.mrb[0].mxu0 %v2991
      %v4358 = vpop.f32.mrb[0].mxu0
      %v4359 = vadd.f32 %v3134, %v4358
      %v4360 = vpop.f32.mrb[0].mxu0
      %v4361 = vadd.f32 %v3138, %v4360
      %v4362 = vpop.f32.mrb[0].mxu0
      %v4363 = vadd.f32 %v3134, %v4362
      %v4364 = vpop.f32.mrb[0].mxu0
      %v4365 = vadd.f32 %v3138, %v4364
      %4366 = vmatprep.mubr.bf16.mxu0 %v3652
      %4367 = vmatmul.mubr.bf16.gmra.mrb[0].mxu0 %v2993
      %v4368 = vpop.f32.mrb[0].mxu0
      %v4369 = vadd.f32 %v3134, %v4368
      %v4370 = vpop.f32.mrb[0].mxu0
      %v4371 = vadd.f32 %v3138, %v4370
      %v4372 = vpop.f32.mrb[0].mxu0
      %v4373 = vadd.f32 %v3134, %v4372
      %v4374 = vpop.f32.mrb[0].mxu0
      %v4375 = vadd.f32 %v3138, %v4374
      %4376 = vmatprep.mubr.bf16.mxu0 %v3655
      %4377 = vmatmul.mubr.bf16.gmra.mrb[0].mxu0 %v2995
      %v4378 = vpop.f32.mrb[0].mxu0
      %v4379 = vadd.f32 %v3134, %v4378
      %v4380 = vpop.f32.mrb[0].mxu0
      %v4381 = vadd.f32 %v3138, %v4380
      %v4382 = vpop.f32.mrb[0].mxu0
      %v4383 = vadd.f32 %v3134, %v4382
      %v4384 = vpop.f32.mrb[0].mxu0
      %v4385 = vadd.f32 %v3138, %v4384
      %4386 = vmatprep.mubr.bf16.mxu0 %v3658
      %4387 = vmatmul.mubr.bf16.gmra.mrb[0].mxu0 %v2997
      %v4388 = vpop.f32.mrb[0].mxu0
      %v4389 = vadd.f32 %v3134, %v4388
      %v4390 = vpop.f32.mrb[0].mxu0
      %v4391 = vadd.f32 %v3138, %v4390
      %v4392 = vpop.f32.mrb[0].mxu0
      %v4393 = vadd.f32 %v3134, %v4392
      %v4394 = vpop.f32.mrb[0].mxu0
      %v4395 = vadd.f32 %v3138, %v4394
      %4396 = vmatprep.mubr.bf16.mxu0 %v3661
      %4397 = vmatmul.mubr.bf16.gmra.mrb[0].mxu0 %v2999
      %v4398 = vpop.f32.mrb[0].mxu0
      %v4399 = vadd.f32 %v3134, %v4398
      %v4400 = vpop.f32.mrb[0].mxu0
      %v4401 = vadd.f32 %v3138, %v4400
      %v4402 = vpop.f32.mrb[0].mxu0
      %v4403 = vadd.f32 %v3134, %v4402
      %v4404 = vpop.f32.mrb[0].mxu0
      %v4405 = vadd.f32 %v3138, %v4404
      %4406 = vmatprep.mubr.bf16.mxu0 %v3664
      %4407 = vmatmul.mubr.bf16.gmra.mrb[0].mxu0 %v3001
      %v4408 = vpop.f32.mrb[0].mxu0
      %v4409 = vadd.f32 %v3134, %v4408
      %v4410 = vpop.f32.mrb[0].mxu0
      %v4411 = vadd.f32 %v3138, %v4410
      %v4412 = vpop.f32.mrb[0].mxu0
      %v4413 = vadd.f32 %v3134, %v4412
      %v4414 = vpop.f32.mrb[0].mxu0
      %v4415 = vadd.f32 %v3138, %v4414
      %4416 = vmatprep.mubr.bf16.mxu0 %v3667
      %4417 = vmatmul.mubr.bf16.gmra.mrb[0].mxu0 %v3003
      %v4418 = vpop.f32.mrb[0].mxu0
      %v4419 = vadd.f32 %v3134, %v4418
      %v4420 = vpop.f32.mrb[0].mxu0
      %v4421 = vadd.f32 %v3138, %v4420
      %v4422 = vpop.f32.mrb[0].mxu0
      %v4423 = vadd.f32 %v3134, %v4422
      %v4424 = vpop.f32.mrb[0].mxu0
      %v4425 = vadd.f32 %v3138, %v4424
      %4426 = vmatprep.mubr.bf16.mxu0 %v3670
      %4427 = vmatmul.mubr.bf16.gmra.mrb[0].mxu0 %v3005
      %v4428 = vpop.f32.mrb[0].mxu0
      %v4429 = vadd.f32 %v3134, %v4428
      %v4430 = vpop.f32.mrb[0].mxu0
      %v4431 = vadd.f32 %v3138, %v4430
      %v4432 = vpop.f32.mrb[0].mxu0
      %v4433 = vadd.f32 %v3134, %v4432
      %v4434 = vpop.f32.mrb[0].mxu0
      %v4435 = vadd.f32 %v3138, %v4434
      %4436 = vmatprep.mubr.bf16.mxu0 %v3673
      %4437 = vmatmul.mubr.bf16.gmra.mrb[0].mxu0 %v3007
      %v4438 = vpop.f32.mrb[0].mxu0
      %v4439 = vadd.f32 %v3134, %v4438
      %v4440 = vpop.f32.mrb[0].mxu0
      %v4441 = vadd.f32 %v3138, %v4440
      %v4442 = vpop.f32.mrb[0].mxu0
      %v4443 = vadd.f32 %v3134, %v4442
      %v4444 = vpop.f32.mrb[0].mxu0
      %v4445 = vadd.f32 %v3138, %v4444
      %4446 = vdwg.mxu0
      %v4447 = vmax.f32 %v3710, 0.0
      %v4448 = vmax.f32 %v3712, 0.0
      %v4449 = vmax.f32 %v3903, 0.0
      %v4450 = vmax.f32 %v3905, 0.0
      %v4451 = vmax.f32 %v4096, 0.0
      %v4452 = vmax.f32 %v4098, 0.0
      %v4453 = vmax.f32 %v4289, 0.0
      %v4454 = vmax.f32 %v4291, 0.0
      %v4455 = vmax.f32 %v3714, 0.0
      %v4456 = vmax.f32 %v3716, 0.0
      %v4457 = vmax.f32 %v3907, 0.0
      %v4458 = vmax.f32 %v3909, 0.0
      %v4459 = vmax.f32 %v4100, 0.0
      %v4460 = vmax.f32 %v4102, 0.0
      %v4461 = vmax.f32 %v4293, 0.0
      %v4462 = vmax.f32 %v4295, 0.0
      %v4463 = vmax.f32 %v3720, 0.0
      %v4464 = vmax.f32 %v3722, 0.0
      %v4465 = vmax.f32 %v3913, 0.0
      %v4466 = vmax.f32 %v3915, 0.0
      %v4467 = vmax.f32 %v4106, 0.0
      %v4468 = vmax.f32 %v4108, 0.0
      %v4469 = vmax.f32 %v4299, 0.0
      %v4470 = vmax.f32 %v4301, 0.0
      %v4471 = vmax.f32 %v3724, 0.0
      %v4472 = vmax.f32 %v3726, 0.0
      %v4473 = vmax.f32 %v3917, 0.0
      %v4474 = vmax.f32 %v3919, 0.0
      %v4475 = vmax.f32 %v4110, 0.0
      %v4476 = vmax.f32 %v4112, 0.0
      %v4477 = vmax.f32 %v4303, 0.0
      %v4478 = vmax.f32 %v4305, 0.0
      %v4479 = vmax.f32 %v3730, 0.0
      %v4480 = vmax.f32 %v3732, 0.0
      %v4481 = vmax.f32 %v3923, 0.0
      %v4482 = vmax.f32 %v3925, 0.0
      %v4483 = vmax.f32 %v4116, 0.0
      %v4484 = vmax.f32 %v4118, 0.0
      %v4485 = vmax.f32 %v4309, 0.0
      %v4486 = vmax.f32 %v4311, 0.0
      %v4487 = vmax.f32 %v3734, 0.0
      %v4488 = vmax.f32 %v3736, 0.0
      %v4489 = vmax.f32 %v3927, 0.0
      %v4490 = vmax.f32 %v3929, 0.0
      %v4491 = vmax.f32 %v4120, 0.0
      %v4492 = vmax.f32 %v4122, 0.0
      %v4493 = vmax.f32 %v4313, 0.0
      %v4494 = vmax.f32 %v4315, 0.0
      %v4495 = vmax.f32 %v3740, 0.0
      %v4496 = vmax.f32 %v3742, 0.0
      %v4497 = vmax.f32 %v3933, 0.0
      %v4498 = vmax.f32 %v3935, 0.0
      %v4499 = vmax.f32 %v4126, 0.0
      %v4500 = vmax.f32 %v4128, 0.0
      %v4501 = vmax.f32 %v4319, 0.0
      %v4502 = vmax.f32 %v4321, 0.0
      %v4503 = vmax.f32 %v3744, 0.0
      %v4504 = vmax.f32 %v3746, 0.0
      %v4505 = vmax.f32 %v3937, 0.0
      %v4506 = vmax.f32 %v3939, 0.0
      %v4507 = vmax.f32 %v4130, 0.0
      %v4508 = vmax.f32 %v4132, 0.0
      %v4509 = vmax.f32 %v4323, 0.0
      %v4510 = vmax.f32 %v4325, 0.0
      %v4511 = vmax.f32 %v3750, 0.0
      %v4512 = vmax.f32 %v3752, 0.0
      %v4513 = vmax.f32 %v3943, 0.0
      %v4514 = vmax.f32 %v3945, 0.0
      %v4515 = vmax.f32 %v4136, 0.0
      %v4516 = vmax.f32 %v4138, 0.0
      %v4517 = vmax.f32 %v4329, 0.0
      %v4518 = vmax.f32 %v4331, 0.0
      %v4519 = vmax.f32 %v3754, 0.0
      %v4520 = vmax.f32 %v3756, 0.0
      %v4521 = vmax.f32 %v3947, 0.0
      %v4522 = vmax.f32 %v3949, 0.0
      %v4523 = vmax.f32 %v4140, 0.0
      %v4524 = vmax.f32 %v4142, 0.0
      %v4525 = vmax.f32 %v4333, 0.0
      %v4526 = vmax.f32 %v4335, 0.0
      %v4527 = vmax.f32 %v3760, 0.0
      %v4528 = vmax.f32 %v3762, 0.0
      %v4529 = vmax.f32 %v3953, 0.0
      %v4530 = vmax.f32 %v3955, 0.0
      %v4531 = vmax.f32 %v4146, 0.0
      %v4532 = vmax.f32 %v4148, 0.0
      %v4533 = vmax.f32 %v4339, 0.0
      %v4534 = vmax.f32 %v4341, 0.0
      %v4535 = vmax.f32 %v3764, 0.0
      %v4536 = vmax.f32 %v3766, 0.0
      %v4537 = vmax.f32 %v3957, 0.0
      %v4538 = vmax.f32 %v3959, 0.0
      %v4539 = vmax.f32 %v4150, 0.0
      %v4540 = vmax.f32 %v4152, 0.0
      %v4541 = vmax.f32 %v4343, 0.0
      %v4542 = vmax.f32 %v4345, 0.0
      %v4543 = vmax.f32 %v3770, 0.0
      %v4544 = vmax.f32 %v3772, 0.0
      %v4545 = vmax.f32 %v3963, 0.0
      %v4546 = vmax.f32 %v3965, 0.0
      %v4547 = vmax.f32 %v4156, 0.0
      %v4548 = vmax.f32 %v4158, 0.0
      %v4549 = vmax.f32 %v4349, 0.0
      %v4550 = vmax.f32 %v4351, 0.0
      %v4551 = vmax.f32 %v3774, 0.0
      %v4552 = vmax.f32 %v3776, 0.0
      %v4553 = vmax.f32 %v3967, 0.0
      %v4554 = vmax.f32 %v3969, 0.0
      %v4555 = vmax.f32 %v4160, 0.0
      %v4556 = vmax.f32 %v4162, 0.0
      %v4557 = vmax.f32 %v4353, 0.0
      %v4558 = vmax.f32 %v4355, 0.0
      %v4559 = vmax.f32 %v3780, 0.0
      %v4560 = vmax.f32 %v3782, 0.0
      %v4561 = vmax.f32 %v3973, 0.0
      %v4562 = vmax.f32 %v3975, 0.0
      %v4563 = vmax.f32 %v4166, 0.0
      %v4564 = vmax.f32 %v4168, 0.0
      %v4565 = vmax.f32 %v4359, 0.0
      %v4566 = vmax.f32 %v4361, 0.0
      %v4567 = vmax.f32 %v3784, 0.0
      %v4568 = vmax.f32 %v3786, 0.0
      %v4569 = vmax.f32 %v3977, 0.0
      %v4570 = vmax.f32 %v3979, 0.0
      %v4571 = vmax.f32 %v4170, 0.0
      %v4572 = vmax.f32 %v4172, 0.0
      %v4573 = vmax.f32 %v4363, 0.0
      %v4574 = vmax.f32 %v4365, 0.0
      %v4575 = vmax.f32 %v3790, 0.0
      %v4576 = vmax.f32 %v3792, 0.0
      %v4577 = vmax.f32 %v3983, 0.0
      %v4578 = vmax.f32 %v3985, 0.0
      %v4579 = vmax.f32 %v4176, 0.0
      %v4580 = vmax.f32 %v4178, 0.0
      %v4581 = vmax.f32 %v4369, 0.0
      %v4582 = vmax.f32 %v4371, 0.0
      %v4583 = vmax.f32 %v3794, 0.0
      %v4584 = vmax.f32 %v3796, 0.0
      %v4585 = vmax.f32 %v3987, 0.0
      %v4586 = vmax.f32 %v3989, 0.0
      %v4587 = vmax.f32 %v4180, 0.0
      %v4588 = vmax.f32 %v4182, 0.0
      %v4589 = vmax.f32 %v4373, 0.0
      %v4590 = vmax.f32 %v4375, 0.0
      %v4591 = vmax.f32 %v3800, 0.0
      %v4592 = vmax.f32 %v3802, 0.0
      %v4593 = vmax.f32 %v3993, 0.0
      %v4594 = vmax.f32 %v3995, 0.0
      %v4595 = vmax.f32 %v4186, 0.0
      %v4596 = vmax.f32 %v4188, 0.0
      %v4597 = vmax.f32 %v4379, 0.0
      %v4598 = vmax.f32 %v4381, 0.0
      %v4599 = vmax.f32 %v3804, 0.0
      %v4600 = vmax.f32 %v3806, 0.0
      %v4601 = vmax.f32 %v3997, 0.0
      %v4602 = vmax.f32 %v3999, 0.0
      %v4603 = vmax.f32 %v4190, 0.0
      %v4604 = vmax.f32 %v4192, 0.0
      %v4605 = vmax.f32 %v4383, 0.0
      %v4606 = vmax.f32 %v4385, 0.0
      %v4607 = vmax.f32 %v3810, 0.0
      %v4608 = vmax.f32 %v3812, 0.0
      %v4609 = vmax.f32 %v4003, 0.0
      %v4610 = vmax.f32 %v4005, 0.0
      %v4611 = vmax.f32 %v4196, 0.0
      %v4612 = vmax.f32 %v4198, 0.0
      %v4613 = vmax.f32 %v4389, 0.0
      %v4614 = vmax.f32 %v4391, 0.0
      %v4615 = vmax.f32 %v3814, 0.0
      %v4616 = vmax.f32 %v3816, 0.0
      %v4617 = vmax.f32 %v4007, 0.0
      %v4618 = vmax.f32 %v4009, 0.0
      %v4619 = vmax.f32 %v4200, 0.0
      %v4620 = vmax.f32 %v4202, 0.0
      %v4621 = vmax.f32 %v4393, 0.0
      %v4622 = vmax.f32 %v4395, 0.0
      %v4623 = vmax.f32 %v3820, 0.0
      %v4624 = vmax.f32 %v3822, 0.0
      %v4625 = vmax.f32 %v4013, 0.0
      %v4626 = vmax.f32 %v4015, 0.0
      %v4627 = vmax.f32 %v4206, 0.0
      %v4628 = vmax.f32 %v4208, 0.0
      %v4629 = vmax.f32 %v4399, 0.0
      %v4630 = vmax.f32 %v4401, 0.0
      %v4631 = vmax.f32 %v3824, 0.0
      %v4632 = vmax.f32 %v3826, 0.0
      %v4633 = vmax.f32 %v4017, 0.0
      %v4634 = vmax.f32 %v4019, 0.0
      %v4635 = vmax.f32 %v4210, 0.0
      %v4636 = vmax.f32 %v4212, 0.0
      %v4637 = vmax.f32 %v4403, 0.0
      %v4638 = vmax.f32 %v4405, 0.0
      %v4639 = vmax.f32 %v3830, 0.0
      %v4640 = vmax.f32 %v3832, 0.0
      %v4641 = vmax.f32 %v4023, 0.0
      %v4642 = vmax.f32 %v4025, 0.0
      %v4643 = vmax.f32 %v4216, 0.0
      %v4644 = vmax.f32 %v4218, 0.0
      %v4645 = vmax.f32 %v4409, 0.0
      %v4646 = vmax.f32 %v4411, 0.0
      %v4647 = vmax.f32 %v3834, 0.0
      %v4648 = vmax.f32 %v3836, 0.0
      %v4649 = vmax.f32 %v4027, 0.0
      %v4650 = vmax.f32 %v4029, 0.0
      %v4651 = vmax.f32 %v4220, 0.0
      %v4652 = vmax.f32 %v4222, 0.0
      %v4653 = vmax.f32 %v4413, 0.0
      %v4654 = vmax.f32 %v4415, 0.0
      %v4655 = vmax.f32 %v3840, 0.0
      %v4656 = vmax.f32 %v3842, 0.0
      %v4657 = vmax.f32 %v4033, 0.0
      %v4658 = vmax.f32 %v4035, 0.0
      %v4659 = vmax.f32 %v4226, 0.0
      %v4660 = vmax.f32 %v4228, 0.0
      %v4661 = vmax.f32 %v4419, 0.0
      %v4662 = vmax.f32 %v4421, 0.0
      %v4663 = vmax.f32 %v3844, 0.0
      %v4664 = vmax.f32 %v3846, 0.0
      %v4665 = vmax.f32 %v4037, 0.0
      %v4666 = vmax.f32 %v4039, 0.0
      %v4667 = vmax.f32 %v4230, 0.0
      %v4668 = vmax.f32 %v4232, 0.0
      %v4669 = vmax.f32 %v4423, 0.0
      %v4670 = vmax.f32 %v4425, 0.0
      %v4671 = vmax.f32 %v3850, 0.0
      %v4672 = vmax.f32 %v3852, 0.0
      %v4673 = vmax.f32 %v4043, 0.0
      %v4674 = vmax.f32 %v4045, 0.0
      %v4675 = vmax.f32 %v4236, 0.0
      %v4676 = vmax.f32 %v4238, 0.0
      %v4677 = vmax.f32 %v4429, 0.0
      %v4678 = vmax.f32 %v4431, 0.0
      %v4679 = vmax.f32 %v3854, 0.0
      %v4680 = vmax.f32 %v3856, 0.0
      %v4681 = vmax.f32 %v4047, 0.0
      %v4682 = vmax.f32 %v4049, 0.0
      %v4683 = vmax.f32 %v4240, 0.0
      %v4684 = vmax.f32 %v4242, 0.0
      %v4685 = vmax.f32 %v4433, 0.0
      %v4686 = vmax.f32 %v4435, 0.0
      %v4687 = vmax.f32 %v3860, 0.0
      %v4688 = vmax.f32 %v3862, 0.0
      %v4689 = vmax.f32 %v4053, 0.0
      %v4690 = vmax.f32 %v4055, 0.0
      %v4691 = vmax.f32 %v4246, 0.0
      %v4692 = vmax.f32 %v4248, 0.0
      %v4693 = vmax.f32 %v4439, 0.0
      %v4694 = vmax.f32 %v4441, 0.0
      %v4695 = vmax.f32 %v3864, 0.0
      %v4696 = vmax.f32 %v3866, 0.0
      %v4697 = vmax.f32 %v4057, 0.0
      %v4698 = vmax.f32 %v4059, 0.0
      %v4699 = vmax.f32 %v4250, 0.0
      %v4700 = vmax.f32 %v4252, 0.0
      %v4701 = vmax.f32 %v4443, 0.0
      %v4702 = vmax.f32 %v4445, 0.0
      %v4703 = vpack.c.bf16 %v4455, %v4447
      %v4704 = vpack.c.bf16 %v4456, %v4448
      %v4705 = vpack.c.bf16 %v4457, %v4449
      %v4706 = vpack.c.bf16 %v4458, %v4450
      %v4707 = vpack.c.bf16 %v4459, %v4451
      %v4708 = vpack.c.bf16 %v4460, %v4452
      %v4709 = vpack.c.bf16 %v4461, %v4453
      %v4710 = vpack.c.bf16 %v4462, %v4454
      %v4711 = vpack.c.bf16 %v4471, %v4463
      %v4712 = vpack.c.bf16 %v4472, %v4464
      %v4713 = vpack.c.bf16 %v4473, %v4465
      %v4714 = vpack.c.bf16 %v4474, %v4466
      %v4715 = vpack.c.bf16 %v4475, %v4467
      %v4716 = vpack.c.bf16 %v4476, %v4468
      %v4717 = vpack.c.bf16 %v4477, %v4469
      %v4718 = vpack.c.bf16 %v4478, %v4470
      %v4719 = vpack.c.bf16 %v4487, %v4479
      %v4720 = vpack.c.bf16 %v4488, %v4480
      %v4721 = vpack.c.bf16 %v4489, %v4481
      %v4722 = vpack.c.bf16 %v4490, %v4482
      %v4723 = vpack.c.bf16 %v4491, %v4483
      %v4724 = vpack.c.bf16 %v4492, %v4484
      %v4725 = vpack.c.bf16 %v4493, %v4485
      %v4726 = vpack.c.bf16 %v4494, %v4486
      %v4727 = vpack.c.bf16 %v4503, %v4495
      %v4728 = vpack.c.bf16 %v4504, %v4496
      %v4729 = vpack.c.bf16 %v4505, %v4497
      %v4730 = vpack.c.bf16 %v4506, %v4498
      %v4731 = vpack.c.bf16 %v4507, %v4499
      %v4732 = vpack.c.bf16 %v4508, %v4500
      %v4733 = vpack.c.bf16 %v4509, %v4501
      %v4734 = vpack.c.bf16 %v4510, %v4502
      %v4735 = vpack.c.bf16 %v4519, %v4511
      %v4736 = vpack.c.bf16 %v4520, %v4512
      %v4737 = vpack.c.bf16 %v4521, %v4513
      %v4738 = vpack.c.bf16 %v4522, %v4514
      %v4739 = vpack.c.bf16 %v4523, %v4515
      %v4740 = vpack.c.bf16 %v4524, %v4516
      %v4741 = vpack.c.bf16 %v4525, %v4517
      %v4742 = vpack.c.bf16 %v4526, %v4518
      %v4743 = vpack.c.bf16 %v4535, %v4527
      %v4744 = vpack.c.bf16 %v4536, %v4528
      %v4745 = vpack.c.bf16 %v4537, %v4529
      %v4746 = vpack.c.bf16 %v4538, %v4530
      %v4747 = vpack.c.bf16 %v4539, %v4531
      %v4748 = vpack.c.bf16 %v4540, %v4532
      %v4749 = vpack.c.bf16 %v4541, %v4533
      %v4750 = vpack.c.bf16 %v4542, %v4534
      %v4751 = vpack.c.bf16 %v4551, %v4543
      %v4752 = vpack.c.bf16 %v4552, %v4544
      %v4753 = vpack.c.bf16 %v4553, %v4545
      %v4754 = vpack.c.bf16 %v4554, %v4546
      %v4755 = vpack.c.bf16 %v4555, %v4547
      %v4756 = vpack.c.bf16 %v4556, %v4548
      %v4757 = vpack.c.bf16 %v4557, %v4549
      %v4758 = vpack.c.bf16 %v4558, %v4550
      %v4759 = vpack.c.bf16 %v4567, %v4559
      %v4760 = vpack.c.bf16 %v4568, %v4560
      %v4761 = vpack.c.bf16 %v4569, %v4561
      %v4762 = vpack.c.bf16 %v4570, %v4562
      %v4763 = vpack.c.bf16 %v4571, %v4563
      %v4764 = vpack.c.bf16 %v4572, %v4564
      %v4765 = vpack.c.bf16 %v4573, %v4565
      %v4766 = vpack.c.bf16 %v4574, %v4566
      %v4767 = vpack.c.bf16 %v4583, %v4575
      %v4768 = vpack.c.bf16 %v4584, %v4576
      %v4769 = vpack.c.bf16 %v4585, %v4577
      %v4770 = vpack.c.bf16 %v4586, %v4578
      %v4771 = vpack.c.bf16 %v4587, %v4579
      %v4772 = vpack.c.bf16 %v4588, %v4580
      %v4773 = vpack.c.bf16 %v4589, %v4581
      %v4774 = vpack.c.bf16 %v4590, %v4582
      %v4775 = vpack.c.bf16 %v4599, %v4591
      %v4776 = vpack.c.bf16 %v4600, %v4592
      %v4777 = vpack.c.bf16 %v4601, %v4593
      %v4778 = vpack.c.bf16 %v4602, %v4594
      %v4779 = vpack.c.bf16 %v4603, %v4595
      %v4780 = vpack.c.bf16 %v4604, %v4596
      %v4781 = vpack.c.bf16 %v4605, %v4597
      %v4782 = vpack.c.bf16 %v4606, %v4598
      %v4783 = vpack.c.bf16 %v4615, %v4607
      %v4784 = vpack.c.bf16 %v4616, %v4608
      %v4785 = vpack.c.bf16 %v4617, %v4609
      %v4786 = vpack.c.bf16 %v4618, %v4610
      %v4787 = vpack.c.bf16 %v4619, %v4611
      %v4788 = vpack.c.bf16 %v4620, %v4612
      %v4789 = vpack.c.bf16 %v4621, %v4613
      %v4790 = vpack.c.bf16 %v4622, %v4614
      %v4791 = vpack.c.bf16 %v4631, %v4623
      %v4792 = vpack.c.bf16 %v4632, %v4624
      %v4793 = vpack.c.bf16 %v4633, %v4625
      %v4794 = vpack.c.bf16 %v4634, %v4626
      %v4795 = vpack.c.bf16 %v4635, %v4627
      %v4796 = vpack.c.bf16 %v4636, %v4628
      %v4797 = vpack.c.bf16 %v4637, %v4629
      %v4798 = vpack.c.bf16 %v4638, %v4630
      %v4799 = vpack.c.bf16 %v4647, %v4639
      %v4800 = vpack.c.bf16 %v4648, %v4640
      %v4801 = vpack.c.bf16 %v4649, %v4641
      %v4802 = vpack.c.bf16 %v4650, %v4642
      %v4803 = vpack.c.bf16 %v4651, %v4643
      %v4804 = vpack.c.bf16 %v4652, %v4644
      %v4805 = vpack.c.bf16 %v4653, %v4645
      %v4806 = vpack.c.bf16 %v4654, %v4646
      %v4807 = vpack.c.bf16 %v4663, %v4655
      %v4808 = vpack.c.bf16 %v4664, %v4656
      %v4809 = vpack.c.bf16 %v4665, %v4657
      %v4810 = vpack.c.bf16 %v4666, %v4658
      %v4811 = vpack.c.bf16 %v4667, %v4659
      %v4812 = vpack.c.bf16 %v4668, %v4660
      %v4813 = vpack.c.bf16 %v4669, %v4661
      %v4814 = vpack.c.bf16 %v4670, %v4662
      %v4815 = vpack.c.bf16 %v4679, %v4671
      %v4816 = vpack.c.bf16 %v4680, %v4672
      %v4817 = vpack.c.bf16 %v4681, %v4673
      %v4818 = vpack.c.bf16 %v4682, %v4674
      %v4819 = vpack.c.bf16 %v4683, %v4675
      %v4820 = vpack.c.bf16 %v4684, %v4676
      %v4821 = vpack.c.bf16 %v4685, %v4677
      %v4822 = vpack.c.bf16 %v4686, %v4678
      %v4823 = vpack.c.bf16 %v4695, %v4687
      %v4824 = vpack.c.bf16 %v4696, %v4688
      %v4825 = vpack.c.bf16 %v4697, %v4689
      %v4826 = vpack.c.bf16 %v4698, %v4690
      %v4827 = vpack.c.bf16 %v4699, %v4691
      %v4828 = vpack.c.bf16 %v4700, %v4692
      %v4829 = vpack.c.bf16 %v4701, %v4693
      %v4830 = vpack.c.bf16 %v4702, %v4694
      %4831 = vst [vmem:[#allocation2] sm:$0xff] %v4703
      %4832 = vst [vmem:[#allocation2 + $0x8] sm:$0xff] %v4704
      %4833 = vst [vmem:[#allocation2 + $0x10] sm:$0xff] %v4705
      %4834 = vst [vmem:[#allocation2 + $0x18] sm:$0xff] %v4706
      %4835 = vst [vmem:[#allocation2 + $0x20] sm:$0xff] %v4707
      %4836 = vst [vmem:[#allocation2 + $0x28] sm:$0xff] %v4708
      %4837 = vst [vmem:[#allocation2 + $0x30] sm:$0xff] %v4709
      %4838 = vst [vmem:[#allocation2 + $0x38] sm:$0xff] %v4710
      %4839 = vst [vmem:[#allocation2 + $0x40] sm:$0xff] %v4711
      %4840 = vst [vmem:[#allocation2 + $0x48] sm:$0xff] %v4712
      %4841 = vst [vmem:[#allocation2 + $0x50] sm:$0xff] %v4713
      %4842 = vst [vmem:[#allocation2 + $0x58] sm:$0xff] %v4714
      %4843 = vst [vmem:[#allocation2 + $0x60] sm:$0xff] %v4715
      %4844 = vst [vmem:[#allocation2 + $0x68] sm:$0xff] %v4716
      %4845 = vst [vmem:[#allocation2 + $0x70] sm:$0xff] %v4717
      %4846 = vst [vmem:[#allocation2 + $0x78] sm:$0xff] %v4718
      %4847 = vst [vmem:[#allocation2 + $0x80] sm:$0xff] %v4719
      %4848 = vst [vmem:[#allocation2 + $0x88] sm:$0xff] %v4720
      %4849 = vst [vmem:[#allocation2 + $0x90] sm:$0xff] %v4721
      %4850 = vst [vmem:[#allocation2 + $0x98] sm:$0xff] %v4722
      %4851 = vst [vmem:[#allocation2 + $0xa0] sm:$0xff] %v4723
      %4852 = vst [vmem:[#allocation2 + $0xa8] sm:$0xff] %v4724
      %4853 = vst [vmem:[#allocation2 + $0xb0] sm:$0xff] %v4725
      %4854 = vst [vmem:[#allocation2 + $0xb8] sm:$0xff] %v4726
      %4855 = vst [vmem:[#allocation2 + $0xc0] sm:$0xff] %v4727
      %4856 = vst [vmem:[#allocation2 + $0xc8] sm:$0xff] %v4728
      %4857 = vst [vmem:[#allocation2 + $0xd0] sm:$0xff] %v4729
      %4858 = vst [vmem:[#allocation2 + $0xd8] sm:$0xff] %v4730
      %4859 = vst [vmem:[#allocation2 + $0xe0] sm:$0xff] %v4731
      %4860 = vst [vmem:[#allocation2 + $0xe8] sm:$0xff] %v4732
      %4861 = vst [vmem:[#allocation2 + $0xf0] sm:$0xff] %v4733
      %4862 = vst [vmem:[#allocation2 + $0xf8] sm:$0xff] %v4734
      %4863 = vst [vmem:[#allocation2 + $0x100] sm:$0xff] %v4735
      %4864 = vst [vmem:[#allocation2 + $0x108] sm:$0xff] %v4736
      %4865 = vst [vmem:[#allocation2 + $0x110] sm:$0xff] %v4737
      %4866 = vst [vmem:[#allocation2 + $0x118] sm:$0xff] %v4738
      %4867 = vst [vmem:[#allocation2 + $0x120] sm:$0xff] %v4739
      %4868 = vst [vmem:[#allocation2 + $0x128] sm:$0xff] %v4740
      %4869 = vst [vmem:[#allocation2 + $0x130] sm:$0xff] %v4741
      %4870 = vst [vmem:[#allocation2 + $0x138] sm:$0xff] %v4742
      %4871 = vst [vmem:[#allocation2 + $0x140] sm:$0xff] %v4743
      %4872 = vst [vmem:[#allocation2 + $0x148] sm:$0xff] %v4744
      %4873 = vst [vmem:[#allocation2 + $0x150] sm:$0xff] %v4745
      %4874 = vst [vmem:[#allocation2 + $0x158] sm:$0xff] %v4746
      %4875 = vst [vmem:[#allocation2 + $0x160] sm:$0xff] %v4747
      %4876 = vst [vmem:[#allocation2 + $0x168] sm:$0xff] %v4748
      %4877 = vst [vmem:[#allocation2 + $0x170] sm:$0xff] %v4749
      %4878 = vst [vmem:[#allocation2 + $0x178] sm:$0xff] %v4750
      %4879 = vst [vmem:[#allocation2 + $0x180] sm:$0xff] %v4751
      %4880 = vst [vmem:[#allocation2 + $0x188] sm:$0xff] %v4752
      %4881 = vst [vmem:[#allocation2 + $0x190] sm:$0xff] %v4753
      %4882 = vst [vmem:[#allocation2 + $0x198] sm:$0xff] %v4754
      %4883 = vst [vmem:[#allocation2 + $0x1a0] sm:$0xff] %v4755
      %4884 = vst [vmem:[#allocation2 + $0x1a8] sm:$0xff] %v4756
      %4885 = vst [vmem:[#allocation2 + $0x1b0] sm:$0xff] %v4757
      %4886 = vst [vmem:[#allocation2 + $0x1b8] sm:$0xff] %v4758
      %4887 = vst [vmem:[#allocation2 + $0x1c0] sm:$0xff] %v4759
      %4888 = vst [vmem:[#allocation2 + $0x1c8] sm:$0xff] %v4760
      %4889 = vst [vmem:[#allocation2 + $0x1d0] sm:$0xff] %v4761
      %4890 = vst [vmem:[#allocation2 + $0x1d8] sm:$0xff] %v4762
      %4891 = vst [vmem:[#allocation2 + $0x1e0] sm:$0xff] %v4763
      %4892 = vst [vmem:[#allocation2 + $0x1e8] sm:$0xff] %v4764
      %4893 = vst [vmem:[#allocation2 + $0x1f0] sm:$0xff] %v4765
      %4894 = vst [vmem:[#allocation2 + $0x1f8] sm:$0xff] %v4766
      %4895 = vst [vmem:[#allocation2 + $0x200] sm:$0xff] %v4767
      %4896 = vst [vmem:[#allocation2 + $0x208] sm:$0xff] %v4768
      %4897 = vst [vmem:[#allocation2 + $0x210] sm:$0xff] %v4769
      %4898 = vst [vmem:[#allocation2 + $0x218] sm:$0xff] %v4770
      %4899 = vst [vmem:[#allocation2 + $0x220] sm:$0xff] %v4771
      %4900 = vst [vmem:[#allocation2 + $0x228] sm:$0xff] %v4772
      %4901 = vst [vmem:[#allocation2 + $0x230] sm:$0xff] %v4773
      %4902 = vst [vmem:[#allocation2 + $0x238] sm:$0xff] %v4774
      %4903 = vst [vmem:[#allocation2 + $0x240] sm:$0xff] %v4775
      %4904 = vst [vmem:[#allocation2 + $0x248] sm:$0xff] %v4776
      %4905 = vst [vmem:[#allocation2 + $0x250] sm:$0xff] %v4777
      %4906 = vst [vmem:[#allocation2 + $0x258] sm:$0xff] %v4778
      %4907 = vst [vmem:[#allocation2 + $0x260] sm:$0xff] %v4779
      %4908 = vst [vmem:[#allocation2 + $0x268] sm:$0xff] %v4780
      %4909 = vst [vmem:[#allocation2 + $0x270] sm:$0xff] %v4781
      %4910 = vst [vmem:[#allocation2 + $0x278] sm:$0xff] %v4782
      %4911 = vst [vmem:[#allocation2 + $0x280] sm:$0xff] %v4783
      %4912 = vst [vmem:[#allocation2 + $0x288] sm:$0xff] %v4784
      %4913 = vst [vmem:[#allocation2 + $0x290] sm:$0xff] %v4785
      %4914 = vst [vmem:[#allocation2 + $0x298] sm:$0xff] %v4786
      %4915 = vst [vmem:[#allocation2 + $0x2a0] sm:$0xff] %v4787
      %4916 = vst [vmem:[#allocation2 + $0x2a8] sm:$0xff] %v4788
      %4917 = vst [vmem:[#allocation2 + $0x2b0] sm:$0xff] %v4789
      %4918 = vst [vmem:[#allocation2 + $0x2b8] sm:$0xff] %v4790
      %4919 = vst [vmem:[#allocation2 + $0x2c0] sm:$0xff] %v4791
      %4920 = vst [vmem:[#allocation2 + $0x2c8] sm:$0xff] %v4792
      %4921 = vst [vmem:[#allocation2 + $0x2d0] sm:$0xff] %v4793
      %4922 = vst [vmem:[#allocation2 + $0x2d8] sm:$0xff] %v4794
      %4923 = vst [vmem:[#allocation2 + $0x2e0] sm:$0xff] %v4795
      %4924 = vst [vmem:[#allocation2 + $0x2e8] sm:$0xff] %v4796
      %4925 = vst [vmem:[#allocation2 + $0x2f0] sm:$0xff] %v4797
      %4926 = vst [vmem:[#allocation2 + $0x2f8] sm:$0xff] %v4798
      %4927 = vst [vmem:[#allocation2 + $0x300] sm:$0xff] %v4799
      %4928 = vst [vmem:[#allocation2 + $0x308] sm:$0xff] %v4800
      %4929 = vst [vmem:[#allocation2 + $0x310] sm:$0xff] %v4801
      %4930 = vst [vmem:[#allocation2 + $0x318] sm:$0xff] %v4802
      %4931 = vst [vmem:[#allocation2 + $0x320] sm:$0xff] %v4803
      %4932 = vst [vmem:[#allocation2 + $0x328] sm:$0xff] %v4804
      %4933 = vst [vmem:[#allocation2 + $0x330] sm:$0xff] %v4805
      %4934 = vst [vmem:[#allocation2 + $0x338] sm:$0xff] %v4806
      %4935 = vst [vmem:[#allocation2 + $0x340] sm:$0xff] %v4807
      %4936 = vst [vmem:[#allocation2 + $0x348] sm:$0xff] %v4808
      %4937 = vst [vmem:[#allocation2 + $0x350] sm:$0xff] %v4809
      %4938 = vst [vmem:[#allocation2 + $0x358] sm:$0xff] %v4810
      %4939 = vst [vmem:[#allocation2 + $0x360] sm:$0xff] %v4811
      %4940 = vst [vmem:[#allocation2 + $0x368] sm:$0xff] %v4812
      %4941 = vst [vmem:[#allocation2 + $0x370] sm:$0xff] %v4813
      %4942 = vst [vmem:[#allocation2 + $0x378] sm:$0xff] %v4814
      %4943 = vst [vmem:[#allocation2 + $0x380] sm:$0xff] %v4815
      %4944 = vst [vmem:[#allocation2 + $0x388] sm:$0xff] %v4816
      %4945 = vst [vmem:[#allocation2 + $0x390] sm:$0xff] %v4817
      %4946 = vst [vmem:[#allocation2 + $0x398] sm:$0xff] %v4818
      %4947 = vst [vmem:[#allocation2 + $0x3a0] sm:$0xff] %v4819
      %4948 = vst [vmem:[#allocation2 + $0x3a8] sm:$0xff] %v4820
      %4949 = vst [vmem:[#allocation2 + $0x3b0] sm:$0xff] %v4821
      %4950 = vst [vmem:[#allocation2 + $0x3b8] sm:$0xff] %v4822
      %4951 = vst [vmem:[#allocation2 + $0x3c0] sm:$0xff] %v4823
      %4952 = vst [vmem:[#allocation2 + $0x3c8] sm:$0xff] %v4824
      %4953 = vst [vmem:[#allocation2 + $0x3d0] sm:$0xff] %v4825
      %4954 = vst [vmem:[#allocation2 + $0x3d8] sm:$0xff] %v4826
      %4955 = vst [vmem:[#allocation2 + $0x3e0] sm:$0xff] %v4827
      %4956 = vst [vmem:[#allocation2 + $0x3e8] sm:$0xff] %v4828
      %4957 = vst [vmem:[#allocation2 + $0x3f0] sm:$0xff] %v4829
      %4958 = vst [vmem:[#allocation2 + $0x3f8] sm:$0xff] %v4830
    $region37: #{tpu_custom_call.1} parent=1 // pred_fallthru
      _
    %v4959 = vld [vmem:[#allocation2] sm:$0xff]
    %v4960 = vld [vmem:[#allocation2 + $0x8] sm:$0xff]
    %v4961 = vld [vmem:[#allocation2 + $0x10] sm:$0xff]
    %v4962 = vld [vmem:[#allocation2 + $0x18] sm:$0xff]
    %v4963 = vld [vmem:[#allocation2 + $0x20] sm:$0xff]
    %v4964 = vld [vmem:[#allocation2 + $0x28] sm:$0xff]
    %v4965 = vld [vmem:[#allocation2 + $0x30] sm:$0xff]
    %v4966 = vld [vmem:[#allocation2 + $0x38] sm:$0xff]
    %v4967 = vld [vmem:[#allocation2 + $0x40] sm:$0xff]
    %v4968 = vld [vmem:[#allocation2 + $0x48] sm:$0xff]
    %v4969 = vld [vmem:[#allocation2 + $0x50] sm:$0xff]
    %v4970 = vld [vmem:[#allocation2 + $0x58] sm:$0xff]
    %v4971 = vld [vmem:[#allocation2 + $0x60] sm:$0xff]
    %v4972 = vld [vmem:[#allocation2 + $0x68] sm:$0xff]
    %v4973 = vld [vmem:[#allocation2 + $0x70] sm:$0xff]
    %v4974 = vld [vmem:[#allocation2 + $0x78] sm:$0xff]
    %v4975 = vld [vmem:[#allocation2 + $0x80] sm:$0xff]
    %v4976 = vld [vmem:[#allocation2 + $0x88] sm:$0xff]
    %v4977 = vld [vmem:[#allocation2 + $0x90] sm:$0xff]
    %v4978 = vld [vmem:[#allocation2 + $0x98] sm:$0xff]
    %v4979 = vld [vmem:[#allocation2 + $0xa0] sm:$0xff]
    %v4980 = vld [vmem:[#allocation2 + $0xa8] sm:$0xff]
    %v4981 = vld [vmem:[#allocation2 + $0xb0] sm:$0xff]
    %v4982 = vld [vmem:[#allocation2 + $0xb8] sm:$0xff]
    %v4983 = vld [vmem:[#allocation2 + $0xc0] sm:$0xff]
    %v4984 = vld [vmem:[#allocation2 + $0xc8] sm:$0xff]
    %v4985 = vld [vmem:[#allocation2 + $0xd0] sm:$0xff]
    %v4986 = vld [vmem:[#allocation2 + $0xd8] sm:$0xff]
    %v4987 = vld [vmem:[#allocation2 + $0xe0] sm:$0xff]
    %v4988 = vld [vmem:[#allocation2 + $0xe8] sm:$0xff]
    %v4989 = vld [vmem:[#allocation2 + $0xf0] sm:$0xff]
    %v4990 = vld [vmem:[#allocation2 + $0xf8] sm:$0xff]
    %v4991 = vld [vmem:[#allocation2 + $0x100] sm:$0xff]
    %v4992 = vld [vmem:[#allocation2 + $0x108] sm:$0xff]
    %v4993 = vld [vmem:[#allocation2 + $0x110] sm:$0xff]
    %v4994 = vld [vmem:[#allocation2 + $0x118] sm:$0xff]
    %v4995 = vld [vmem:[#allocation2 + $0x120] sm:$0xff]
    %v4996 = vld [vmem:[#allocation2 + $0x128] sm:$0xff]
    %v4997 = vld [vmem:[#allocation2 + $0x130] sm:$0xff]
    %v4998 = vld [vmem:[#allocation2 + $0x138] sm:$0xff]
    %v4999 = vld [vmem:[#allocation2 + $0x140] sm:$0xff]
    %v5000 = vld [vmem:[#allocation2 + $0x148] sm:$0xff]
    %v5001 = vld [vmem:[#allocation2 + $0x150] sm:$0xff]
    %v5002 = vld [vmem:[#allocation2 + $0x158] sm:$0xff]
    %v5003 = vld [vmem:[#allocation2 + $0x160] sm:$0xff]
    %v5004 = vld [vmem:[#allocation2 + $0x168] sm:$0xff]
    %v5005 = vld [vmem:[#allocation2 + $0x170] sm:$0xff]
    %v5006 = vld [vmem:[#allocation2 + $0x178] sm:$0xff]
    %v5007 = vld [vmem:[#allocation2 + $0x180] sm:$0xff]
    %v5008 = vld [vmem:[#allocation2 + $0x188] sm:$0xff]
    %v5009 = vld [vmem:[#allocation2 + $0x190] sm:$0xff]
    %v5010 = vld [vmem:[#allocation2 + $0x198] sm:$0xff]
    %v5011 = vld [vmem:[#allocation2 + $0x1a0] sm:$0xff]
    %v5012 = vld [vmem:[#allocation2 + $0x1a8] sm:$0xff]
    %v5013 = vld [vmem:[#allocation2 + $0x1b0] sm:$0xff]
    %v5014 = vld [vmem:[#allocation2 + $0x1b8] sm:$0xff]
    %v5015 = vld [vmem:[#allocation2 + $0x1c0] sm:$0xff]
    %v5016 = vld [vmem:[#allocation2 + $0x1c8] sm:$0xff]
    %v5017 = vld [vmem:[#allocation2 + $0x1d0] sm:$0xff]
    %v5018 = vld [vmem:[#allocation2 + $0x1d8] sm:$0xff]
    %v5019 = vld [vmem:[#allocation2 + $0x1e0] sm:$0xff]
    %v5020 = vld [vmem:[#allocation2 + $0x1e8] sm:$0xff]
    %v5021 = vld [vmem:[#allocation2 + $0x1f0] sm:$0xff]
    %v5022 = vld [vmem:[#allocation2 + $0x1f8] sm:$0xff]
    %v5023 = vld [vmem:[#allocation2 + $0x200] sm:$0xff]
    %v5024 = vld [vmem:[#allocation2 + $0x208] sm:$0xff]
    %v5025 = vld [vmem:[#allocation2 + $0x210] sm:$0xff]
    %v5026 = vld [vmem:[#allocation2 + $0x218] sm:$0xff]
    %v5027 = vld [vmem:[#allocation2 + $0x220] sm:$0xff]
    %v5028 = vld [vmem:[#allocation2 + $0x228] sm:$0xff]
    %v5029 = vld [vmem:[#allocation2 + $0x230] sm:$0xff]
    %v5030 = vld [vmem:[#allocation2 + $0x238] sm:$0xff]
    %v5031 = vld [vmem:[#allocation2 + $0x240] sm:$0xff]
    %v5032 = vld [vmem:[#allocation2 + $0x248] sm:$0xff]
    %v5033 = vld [vmem:[#allocation2 + $0x250] sm:$0xff]
    %v5034 = vld [vmem:[#allocation2 + $0x258] sm:$0xff]
    %v5035 = vld [vmem:[#allocation2 + $0x260] sm:$0xff]
    %v5036 = vld [vmem:[#allocation2 + $0x268] sm:$0xff]
    %v5037 = vld [vmem:[#allocation2 + $0x270] sm:$0xff]
    %v5038 = vld [vmem:[#allocation2 + $0x278] sm:$0xff]
    %v5039 = vld [vmem:[#allocation2 + $0x280] sm:$0xff]
    %v5040 = vld [vmem:[#allocation2 + $0x288] sm:$0xff]
    %v5041 = vld [vmem:[#allocation2 + $0x290] sm:$0xff]
    %v5042 = vld [vmem:[#allocation2 + $0x298] sm:$0xff]
    %v5043 = vld [vmem:[#allocation2 + $0x2a0] sm:$0xff]
    %v5044 = vld [vmem:[#allocation2 + $0x2a8] sm:$0xff]
    %v5045 = vld [vmem:[#allocation2 + $0x2b0] sm:$0xff]
    %v5046 = vld [vmem:[#allocation2 + $0x2b8] sm:$0xff]
    %v5047 = vld [vmem:[#allocation2 + $0x2c0] sm:$0xff]
    %v5048 = vld [vmem:[#allocation2 + $0x2c8] sm:$0xff]
    %v5049 = vld [vmem:[#allocation2 + $0x2d0] sm:$0xff]
    %v5050 = vld [vmem:[#allocation2 + $0x2d8] sm:$0xff]
    %v5051 = vld [vmem:[#allocation2 + $0x2e0] sm:$0xff]
    %v5052 = vld [vmem:[#allocation2 + $0x2e8] sm:$0xff]
    %v5053 = vld [vmem:[#allocation2 + $0x2f0] sm:$0xff]
    %v5054 = vld [vmem:[#allocation2 + $0x2f8] sm:$0xff]
    %v5055 = vld [vmem:[#allocation2 + $0x300] sm:$0xff]
    %v5056 = vld [vmem:[#allocation2 + $0x308] sm:$0xff]
    %v5057 = vld [vmem:[#allocation2 + $0x310] sm:$0xff]
    %v5058 = vld [vmem:[#allocation2 + $0x318] sm:$0xff]
    %v5059 = vld [vmem:[#allocation2 + $0x320] sm:$0xff]
    %v5060 = vld [vmem:[#allocation2 + $0x328] sm:$0xff]
    %v5061 = vld [vmem:[#allocation2 + $0x330] sm:$0xff]
    %v5062 = vld [vmem:[#allocation2 + $0x338] sm:$0xff]
    %v5063 = vld [vmem:[#allocation2 + $0x340] sm:$0xff]
    %v5064 = vld [vmem:[#allocation2 + $0x348] sm:$0xff]
    %v5065 = vld [vmem:[#allocation2 + $0x350] sm:$0xff]
    %v5066 = vld [vmem:[#allocation2 + $0x358] sm:$0xff]
    %v5067 = vld [vmem:[#allocation2 + $0x360] sm:$0xff]
    %v5068 = vld [vmem:[#allocation2 + $0x368] sm:$0xff]
    %v5069 = vld [vmem:[#allocation2 + $0x370] sm:$0xff]
    %v5070 = vld [vmem:[#allocation2 + $0x378] sm:$0xff]
    %v5071 = vld [vmem:[#allocation2 + $0x380] sm:$0xff]
    %v5072 = vld [vmem:[#allocation2 + $0x388] sm:$0xff]
    %v5073 = vld [vmem:[#allocation2 + $0x390] sm:$0xff]
    %v5074 = vld [vmem:[#allocation2 + $0x398] sm:$0xff]
    %v5075 = vld [vmem:[#allocation2 + $0x3a0] sm:$0xff]
    %v5076 = vld [vmem:[#allocation2 + $0x3a8] sm:$0xff]
    %v5077 = vld [vmem:[#allocation2 + $0x3b0] sm:$0xff]
    %v5078 = vld [vmem:[#allocation2 + $0x3b8] sm:$0xff]
    %v5079 = vld [vmem:[#allocation2 + $0x3c0] sm:$0xff]
    %v5080 = vld [vmem:[#allocation2 + $0x3c8] sm:$0xff]
    %v5081 = vld [vmem:[#allocation2 + $0x3d0] sm:$0xff]
    %v5082 = vld [vmem:[#allocation2 + $0x3d8] sm:$0xff]
    %v5083 = vld [vmem:[#allocation2 + $0x3e0] sm:$0xff]
    %v5084 = vld [vmem:[#allocation2 + $0x3e8] sm:$0xff]
    %v5085 = vld [vmem:[#allocation2 + $0x3f0] sm:$0xff]
    %v5086 = vld [vmem:[#allocation2 + $0x3f8] sm:$0xff]
    %v5087 = vld [vmem:[#allocation6] sm:$0xff]
    %v5088 = vld [vmem:[#allocation6 + $0x8] sm:$0xff]
    %v5089 = vld [vmem:[#allocation6 + $0x10] sm:$0xff]
    %v5090 = vld [vmem:[#allocation6 + $0x18] sm:$0xff]
    %v5091 = vld [vmem:[#allocation6 + $0x20] sm:$0xff]
    %v5092 = vld [vmem:[#allocation6 + $0x28] sm:$0xff]
    %v5093 = vld [vmem:[#allocation6 + $0x30] sm:$0xff]
    %v5094 = vld [vmem:[#allocation6 + $0x38] sm:$0xff]
    %v5095 = vld [vmem:[#allocation6 + $0x40] sm:$0xff]
    %v5096 = vld [vmem:[#allocation6 + $0x48] sm:$0xff]
    %v5097 = vld [vmem:[#allocation6 + $0x50] sm:$0xff]
    %v5098 = vld [vmem:[#allocation6 + $0x58] sm:$0xff]
    %v5099 = vld [vmem:[#allocation6 + $0x60] sm:$0xff]
    %v5100 = vld [vmem:[#allocation6 + $0x68] sm:$0xff]
    %v5101 = vld [vmem:[#allocation6 + $0x70] sm:$0xff]
    %v5102 = vld [vmem:[#allocation6 + $0x78] sm:$0xff]
    %v5103 = vld [vmem:[#allocation6 + $0x80] sm:$0xff]
    %v5104 = vld [vmem:[#allocation6 + $0x88] sm:$0xff]
    %v5105 = vld [vmem:[#allocation6 + $0x90] sm:$0xff]
    %v5106 = vld [vmem:[#allocation6 + $0x98] sm:$0xff]
    %v5107 = vld [vmem:[#allocation6 + $0xa0] sm:$0xff]
    %v5108 = vld [vmem:[#allocation6 + $0xa8] sm:$0xff]
    %v5109 = vld [vmem:[#allocation6 + $0xb0] sm:$0xff]
    %v5110 = vld [vmem:[#allocation6 + $0xb8] sm:$0xff]
    %v5111 = vld [vmem:[#allocation6 + $0xc0] sm:$0xff]
    %v5112 = vld [vmem:[#allocation6 + $0xc8] sm:$0xff]
    %v5113 = vld [vmem:[#allocation6 + $0xd0] sm:$0xff]
    %v5114 = vld [vmem:[#allocation6 + $0xd8] sm:$0xff]
    %v5115 = vld [vmem:[#allocation6 + $0xe0] sm:$0xff]
    %v5116 = vld [vmem:[#allocation6 + $0xe8] sm:$0xff]
    %v5117 = vld [vmem:[#allocation6 + $0xf0] sm:$0xff]
    %v5118 = vld [vmem:[#allocation6 + $0xf8] sm:$0xff]
    %v5119 = vld [vmem:[#allocation6 + $0x100] sm:$0xff]
    %v5120 = vld [vmem:[#allocation6 + $0x108] sm:$0xff]
    %v5121 = vld [vmem:[#allocation6 + $0x110] sm:$0xff]
    %v5122 = vld [vmem:[#allocation6 + $0x118] sm:$0xff]
    %v5123 = vld [vmem:[#allocation6 + $0x120] sm:$0xff]
    %v5124 = vld [vmem:[#allocation6 + $0x128] sm:$0xff]
    %v5125 = vld [vmem:[#allocation6 + $0x130] sm:$0xff]
    %v5126 = vld [vmem:[#allocation6 + $0x138] sm:$0xff]
    %v5127 = vld [vmem:[#allocation6 + $0x140] sm:$0xff]
    %v5128 = vld [vmem:[#allocation6 + $0x148] sm:$0xff]
    %v5129 = vld [vmem:[#allocation6 + $0x150] sm:$0xff]
    %v5130 = vld [vmem:[#allocation6 + $0x158] sm:$0xff]
    %v5131 = vld [vmem:[#allocation6 + $0x160] sm:$0xff]
    %v5132 = vld [vmem:[#allocation6 + $0x168] sm:$0xff]
    %v5133 = vld [vmem:[#allocation6 + $0x170] sm:$0xff]
    %v5134 = vld [vmem:[#allocation6 + $0x178] sm:$0xff]
    %v5135 = vld [vmem:[#allocation6 + $0x180] sm:$0xff]
    %v5136 = vld [vmem:[#allocation6 + $0x188] sm:$0xff]
    %v5137 = vld [vmem:[#allocation6 + $0x190] sm:$0xff]
    %v5138 = vld [vmem:[#allocation6 + $0x198] sm:$0xff]
    %v5139 = vld [vmem:[#allocation6 + $0x1a0] sm:$0xff]
    %v5140 = vld [vmem:[#allocation6 + $0x1a8] sm:$0xff]
    %v5141 = vld [vmem:[#allocation6 + $0x1b0] sm:$0xff]
    %v5142 = vld [vmem:[#allocation6 + $0x1b8] sm:$0xff]
    %v5143 = vld [vmem:[#allocation6 + $0x1c0] sm:$0xff]
    %v5144 = vld [vmem:[#allocation6 + $0x1c8] sm:$0xff]
    %v5145 = vld [vmem:[#allocation6 + $0x1d0] sm:$0xff]
    %v5146 = vld [vmem:[#allocation6 + $0x1d8] sm:$0xff]
    %v5147 = vld [vmem:[#allocation6 + $0x1e0] sm:$0xff]
    %v5148 = vld [vmem:[#allocation6 + $0x1e8] sm:$0xff]
    %v5149 = vld [vmem:[#allocation6 + $0x1f0] sm:$0xff]
    %v5150 = vld [vmem:[#allocation6 + $0x1f8] sm:$0xff]
    %v5151 = vld [vmem:[#allocation6 + $0x200] sm:$0xff]
    %v5152 = vld [vmem:[#allocation6 + $0x208] sm:$0xff]
    %v5153 = vld [vmem:[#allocation6 + $0x210] sm:$0xff]
    %v5154 = vld [vmem:[#allocation6 + $0x218] sm:$0xff]
    %v5155 = vld [vmem:[#allocation6 + $0x220] sm:$0xff]
    %v5156 = vld [vmem:[#allocation6 + $0x228] sm:$0xff]
    %v5157 = vld [vmem:[#allocation6 + $0x230] sm:$0xff]
    %v5158 = vld [vmem:[#allocation6 + $0x238] sm:$0xff]
    %v5159 = vld [vmem:[#allocation6 + $0x240] sm:$0xff]
    %v5160 = vld [vmem:[#allocation6 + $0x248] sm:$0xff]
    %v5161 = vld [vmem:[#allocation6 + $0x250] sm:$0xff]
    %v5162 = vld [vmem:[#allocation6 + $0x258] sm:$0xff]
    %v5163 = vld [vmem:[#allocation6 + $0x260] sm:$0xff]
    %v5164 = vld [vmem:[#allocation6 + $0x268] sm:$0xff]
    %v5165 = vld [vmem:[#allocation6 + $0x270] sm:$0xff]
    %v5166 = vld [vmem:[#allocation6 + $0x278] sm:$0xff]
    %v5167 = vld [vmem:[#allocation6 + $0x280] sm:$0xff]
    %v5168 = vld [vmem:[#allocation6 + $0x288] sm:$0xff]
    %v5169 = vld [vmem:[#allocation6 + $0x290] sm:$0xff]
    %v5170 = vld [vmem:[#allocation6 + $0x298] sm:$0xff]
    %v5171 = vld [vmem:[#allocation6 + $0x2a0] sm:$0xff]
    %v5172 = vld [vmem:[#allocation6 + $0x2a8] sm:$0xff]
    %v5173 = vld [vmem:[#allocation6 + $0x2b0] sm:$0xff]
    %v5174 = vld [vmem:[#allocation6 + $0x2b8] sm:$0xff]
    %v5175 = vld [vmem:[#allocation6 + $0x2c0] sm:$0xff]
    %v5176 = vld [vmem:[#allocation6 + $0x2c8] sm:$0xff]
    %v5177 = vld [vmem:[#allocation6 + $0x2d0] sm:$0xff]
    %v5178 = vld [vmem:[#allocation6 + $0x2d8] sm:$0xff]
    %v5179 = vld [vmem:[#allocation6 + $0x2e0] sm:$0xff]
    %v5180 = vld [vmem:[#allocation6 + $0x2e8] sm:$0xff]
    %v5181 = vld [vmem:[#allocation6 + $0x2f0] sm:$0xff]
    %v5182 = vld [vmem:[#allocation6 + $0x2f8] sm:$0xff]
    %v5183 = vld [vmem:[#allocation6 + $0x300] sm:$0xff]
    %v5184 = vld [vmem:[#allocation6 + $0x308] sm:$0xff]
    %v5185 = vld [vmem:[#allocation6 + $0x310] sm:$0xff]
    %v5186 = vld [vmem:[#allocation6 + $0x318] sm:$0xff]
    %v5187 = vld [vmem:[#allocation6 + $0x320] sm:$0xff]
    %v5188 = vld [vmem:[#allocation6 + $0x328] sm:$0xff]
    %v5189 = vld [vmem:[#allocation6 + $0x330] sm:$0xff]
    %v5190 = vld [vmem:[#allocation6 + $0x338] sm:$0xff]
    %v5191 = vld [vmem:[#allocation6 + $0x340] sm:$0xff]
    %v5192 = vld [vmem:[#allocation6 + $0x348] sm:$0xff]
    %v5193 = vld [vmem:[#allocation6 + $0x350] sm:$0xff]
    %v5194 = vld [vmem:[#allocation6 + $0x358] sm:$0xff]
    %v5195 = vld [vmem:[#allocation6 + $0x360] sm:$0xff]
    %v5196 = vld [vmem:[#allocation6 + $0x368] sm:$0xff]
    %v5197 = vld [vmem:[#allocation6 + $0x370] sm:$0xff]
    %v5198 = vld [vmem:[#allocation6 + $0x378] sm:$0xff]
    %v5199 = vld [vmem:[#allocation6 + $0x380] sm:$0xff]
    %v5200 = vld [vmem:[#allocation6 + $0x388] sm:$0xff]
    %v5201 = vld [vmem:[#allocation6 + $0x390] sm:$0xff]
    %v5202 = vld [vmem:[#allocation6 + $0x398] sm:$0xff]
    %v5203 = vld [vmem:[#allocation6 + $0x3a0] sm:$0xff]
    %v5204 = vld [vmem:[#allocation6 + $0x3a8] sm:$0xff]
    %v5205 = vld [vmem:[#allocation6 + $0x3b0] sm:$0xff]
    %v5206 = vld [vmem:[#allocation6 + $0x3b8] sm:$0xff]
    %v5207 = vld [vmem:[#allocation6 + $0x3c0] sm:$0xff]
    %v5208 = vld [vmem:[#allocation6 + $0x3c8] sm:$0xff]
    %v5209 = vld [vmem:[#allocation6 + $0x3d0] sm:$0xff]
    %v5210 = vld [vmem:[#allocation6 + $0x3d8] sm:$0xff]
    %v5211 = vld [vmem:[#allocation6 + $0x3e0] sm:$0xff]
    %v5212 = vld [vmem:[#allocation6 + $0x3e8] sm:$0xff]
    %v5213 = vld [vmem:[#allocation6 + $0x3f0] sm:$0xff]
    %v5214 = vld [vmem:[#allocation6 + $0x3f8] sm:$0xff]
    %v5215 = vld [vmem:[#allocation6 + $0x400] sm:$0xff]
    %v5216 = vld [vmem:[#allocation6 + $0x408] sm:$0xff]
    %v5217 = vld [vmem:[#allocation6 + $0x410] sm:$0xff]
    %v5218 = vld [vmem:[#allocation6 + $0x418] sm:$0xff]
    %v5219 = vld [vmem:[#allocation6 + $0x420] sm:$0xff]
    %v5220 = vld [vmem:[#allocation6 + $0x428] sm:$0xff]
    %v5221 = vld [vmem:[#allocation6 + $0x430] sm:$0xff]
    %v5222 = vld [vmem:[#allocation6 + $0x438] sm:$0xff]
    %v5223 = vld [vmem:[#allocation6 + $0x440] sm:$0xff]
    %v5224 = vld [vmem:[#allocation6 + $0x448] sm:$0xff]
    %v5225 = vld [vmem:[#allocation6 + $0x450] sm:$0xff]
    %v5226 = vld [vmem:[#allocation6 + $0x458] sm:$0xff]
    %v5227 = vld [vmem:[#allocation6 + $0x460] sm:$0xff]
    %v5228 = vld [vmem:[#allocation6 + $0x468] sm:$0xff]
    %v5229 = vld [vmem:[#allocation6 + $0x470] sm:$0xff]
    %v5230 = vld [vmem:[#allocation6 + $0x478] sm:$0xff]
    %v5231 = vld [vmem:[#allocation6 + $0x480] sm:$0xff]
    %v5232 = vld [vmem:[#allocation6 + $0x488] sm:$0xff]
    %v5233 = vld [vmem:[#allocation6 + $0x490] sm:$0xff]
    %v5234 = vld [vmem:[#allocation6 + $0x498] sm:$0xff]
    %v5235 = vld [vmem:[#allocation6 + $0x4a0] sm:$0xff]
    %v5236 = vld [vmem:[#allocation6 + $0x4a8] sm:$0xff]
    %v5237 = vld [vmem:[#allocation6 + $0x4b0] sm:$0xff]
    %v5238 = vld [vmem:[#allocation6 + $0x4b8] sm:$0xff]
    %v5239 = vld [vmem:[#allocation6 + $0x4c0] sm:$0xff]
    %v5240 = vld [vmem:[#allocation6 + $0x4c8] sm:$0xff]
    %v5241 = vld [vmem:[#allocation6 + $0x4d0] sm:$0xff]
    %v5242 = vld [vmem:[#allocation6 + $0x4d8] sm:$0xff]
    %v5243 = vld [vmem:[#allocation6 + $0x4e0] sm:$0xff]
    %v5244 = vld [vmem:[#allocation6 + $0x4e8] sm:$0xff]
    %v5245 = vld [vmem:[#allocation6 + $0x4f0] sm:$0xff]
    %v5246 = vld [vmem:[#allocation6 + $0x4f8] sm:$0xff]
    %v5247 = vld [vmem:[#allocation6 + $0x500] sm:$0xff]
    %v5248 = vld [vmem:[#allocation6 + $0x508] sm:$0xff]
    %v5249 = vld [vmem:[#allocation6 + $0x510] sm:$0xff]
    %v5250 = vld [vmem:[#allocation6 + $0x518] sm:$0xff]
    %v5251 = vld [vmem:[#allocation6 + $0x520] sm:$0xff]
    %v5252 = vld [vmem:[#allocation6 + $0x528] sm:$0xff]
    %v5253 = vld [vmem:[#allocation6 + $0x530] sm:$0xff]
    %v5254 = vld [vmem:[#allocation6 + $0x538] sm:$0xff]
    %v5255 = vld [vmem:[#allocation6 + $0x540] sm:$0xff]
    %v5256 = vld [vmem:[#allocation6 + $0x548] sm:$0xff]
    %v5257 = vld [vmem:[#allocation6 + $0x550] sm:$0xff]
    %v5258 = vld [vmem:[#allocation6 + $0x558] sm:$0xff]
    %v5259 = vld [vmem:[#allocation6 + $0x560] sm:$0xff]
    %v5260 = vld [vmem:[#allocation6 + $0x568] sm:$0xff]
    %v5261 = vld [vmem:[#allocation6 + $0x570] sm:$0xff]
    %v5262 = vld [vmem:[#allocation6 + $0x578] sm:$0xff]
    %v5263 = vld [vmem:[#allocation6 + $0x580] sm:$0xff]
    %v5264 = vld [vmem:[#allocation6 + $0x588] sm:$0xff]
    %v5265 = vld [vmem:[#allocation6 + $0x590] sm:$0xff]
    %v5266 = vld [vmem:[#allocation6 + $0x598] sm:$0xff]
    %v5267 = vld [vmem:[#allocation6 + $0x5a0] sm:$0xff]
    %v5268 = vld [vmem:[#allocation6 + $0x5a8] sm:$0xff]
    %v5269 = vld [vmem:[#allocation6 + $0x5b0] sm:$0xff]
    %v5270 = vld [vmem:[#allocation6 + $0x5b8] sm:$0xff]
    %v5271 = vld [vmem:[#allocation6 + $0x5c0] sm:$0xff]
    %v5272 = vld [vmem:[#allocation6 + $0x5c8] sm:$0xff]
    %v5273 = vld [vmem:[#allocation6 + $0x5d0] sm:$0xff]
    %v5274 = vld [vmem:[#allocation6 + $0x5d8] sm:$0xff]
    %v5275 = vld [vmem:[#allocation6 + $0x5e0] sm:$0xff]
    %v5276 = vld [vmem:[#allocation6 + $0x5e8] sm:$0xff]
    %v5277 = vld [vmem:[#allocation6 + $0x5f0] sm:$0xff]
    %v5278 = vld [vmem:[#allocation6 + $0x5f8] sm:$0xff]
    %v5279 = vld [vmem:[#allocation6 + $0x600] sm:$0xff]
    %v5280 = vld [vmem:[#allocation6 + $0x608] sm:$0xff]
    %v5281 = vld [vmem:[#allocation6 + $0x610] sm:$0xff]
    %v5282 = vld [vmem:[#allocation6 + $0x618] sm:$0xff]
    %v5283 = vld [vmem:[#allocation6 + $0x620] sm:$0xff]
    %v5284 = vld [vmem:[#allocation6 + $0x628] sm:$0xff]
    %v5285 = vld [vmem:[#allocation6 + $0x630] sm:$0xff]
    %v5286 = vld [vmem:[#allocation6 + $0x638] sm:$0xff]
    %v5287 = vld [vmem:[#allocation6 + $0x640] sm:$0xff]
    %v5288 = vld [vmem:[#allocation6 + $0x648] sm:$0xff]
    %v5289 = vld [vmem:[#allocation6 + $0x650] sm:$0xff]
    %v5290 = vld [vmem:[#allocation6 + $0x658] sm:$0xff]
    %v5291 = vld [vmem:[#allocation6 + $0x660] sm:$0xff]
    %v5292 = vld [vmem:[#allocation6 + $0x668] sm:$0xff]
    %v5293 = vld [vmem:[#allocation6 + $0x670] sm:$0xff]
    %v5294 = vld [vmem:[#allocation6 + $0x678] sm:$0xff]
    %v5295 = vld [vmem:[#allocation6 + $0x680] sm:$0xff]
    %v5296 = vld [vmem:[#allocation6 + $0x688] sm:$0xff]
    %v5297 = vld [vmem:[#allocation6 + $0x690] sm:$0xff]
    %v5298 = vld [vmem:[#allocation6 + $0x698] sm:$0xff]
    %v5299 = vld [vmem:[#allocation6 + $0x6a0] sm:$0xff]
    %v5300 = vld [vmem:[#allocation6 + $0x6a8] sm:$0xff]
    %v5301 = vld [vmem:[#allocation6 + $0x6b0] sm:$0xff]
    %v5302 = vld [vmem:[#allocation6 + $0x6b8] sm:$0xff]
    %v5303 = vld [vmem:[#allocation6 + $0x6c0] sm:$0xff]
    %v5304 = vld [vmem:[#allocation6 + $0x6c8] sm:$0xff]
    %v5305 = vld [vmem:[#allocation6 + $0x6d0] sm:$0xff]
    %v5306 = vld [vmem:[#allocation6 + $0x6d8] sm:$0xff]
    %v5307 = vld [vmem:[#allocation6 + $0x6e0] sm:$0xff]
    %v5308 = vld [vmem:[#allocation6 + $0x6e8] sm:$0xff]
    %v5309 = vld [vmem:[#allocation6 + $0x6f0] sm:$0xff]
    %v5310 = vld [vmem:[#allocation6 + $0x6f8] sm:$0xff]
    %v5311 = vld [vmem:[#allocation6 + $0x700] sm:$0xff]
    %v5312 = vld [vmem:[#allocation6 + $0x708] sm:$0xff]
    %v5313 = vld [vmem:[#allocation6 + $0x710] sm:$0xff]
    %v5314 = vld [vmem:[#allocation6 + $0x718] sm:$0xff]
    %v5315 = vld [vmem:[#allocation6 + $0x720] sm:$0xff]
    %v5316 = vld [vmem:[#allocation6 + $0x728] sm:$0xff]
    %v5317 = vld [vmem:[#allocation6 + $0x730] sm:$0xff]
    %v5318 = vld [vmem:[#allocation6 + $0x738] sm:$0xff]
    %v5319 = vld [vmem:[#allocation6 + $0x740] sm:$0xff]
    %v5320 = vld [vmem:[#allocation6 + $0x748] sm:$0xff]
    %v5321 = vld [vmem:[#allocation6 + $0x750] sm:$0xff]
    %v5322 = vld [vmem:[#allocation6 + $0x758] sm:$0xff]
    %v5323 = vld [vmem:[#allocation6 + $0x760] sm:$0xff]
    %v5324 = vld [vmem:[#allocation6 + $0x768] sm:$0xff]
    %v5325 = vld [vmem:[#allocation6 + $0x770] sm:$0xff]
    %v5326 = vld [vmem:[#allocation6 + $0x778] sm:$0xff]
    %v5327 = vld [vmem:[#allocation6 + $0x780] sm:$0xff]
    %v5328 = vld [vmem:[#allocation6 + $0x788] sm:$0xff]
    %v5329 = vld [vmem:[#allocation6 + $0x790] sm:$0xff]
    %v5330 = vld [vmem:[#allocation6 + $0x798] sm:$0xff]
    %v5331 = vld [vmem:[#allocation6 + $0x7a0] sm:$0xff]
    %v5332 = vld [vmem:[#allocation6 + $0x7a8] sm:$0xff]
    %v5333 = vld [vmem:[#allocation6 + $0x7b0] sm:$0xff]
    %v5334 = vld [vmem:[#allocation6 + $0x7b8] sm:$0xff]
    %v5335 = vld [vmem:[#allocation6 + $0x7c0] sm:$0xff]
    %v5336 = vld [vmem:[#allocation6 + $0x7c8] sm:$0xff]
    %v5337 = vld [vmem:[#allocation6 + $0x7d0] sm:$0xff]
    %v5338 = vld [vmem:[#allocation6 + $0x7d8] sm:$0xff]
    %v5339 = vld [vmem:[#allocation6 + $0x7e0] sm:$0xff]
    %v5340 = vld [vmem:[#allocation6 + $0x7e8] sm:$0xff]
    %v5341 = vld [vmem:[#allocation6 + $0x7f0] sm:$0xff]
    %v5342 = vld [vmem:[#allocation6 + $0x7f8] sm:$0xff]
    %v5343 = vld [vmem:[%s5] sm:$0xf]
    %v5345 = vlaneseq
    %v5346 = vshrl.u32 %v5345, 7
    %v5347 = vsub.s32 0, %v5346
    %v5348 = vrot.slane %v5343, %v5347
    %v5349 = vlaneseq
    %v5350 = vshrl.u32 %v5349, 7
    %v5351 = vsub.s32 1, %v5350
    %v5352 = vrot.slane %v5343, %v5351
    %v5353 = vlaneseq
    %v5354 = vshrl.u32 %v5353, 7
    %v5355 = vsub.s32 2, %v5354
    %v5356 = vrot.slane %v5343, %v5355
    %v5357 = vlaneseq
    %v5358 = vshrl.u32 %v5357, 7
    %v5359 = vsub.s32 3, %v5358
    %v5360 = vrot.slane %v5343, %v5359
    %v5621 = vunpack.c.l.b16 %v5087
    %v5622 = vunpack.c.h.b16 %v5087
    %v5623 = vunpack.c.l.b16 %v5088
    %v5624 = vunpack.c.h.b16 %v5088
    %v5625 = vunpack.c.l.b16 %v5089
    %v5626 = vunpack.c.h.b16 %v5089
    %v5627 = vunpack.c.l.b16 %v5090
    %v5628 = vunpack.c.h.b16 %v5090
    %v5629 = vunpack.c.l.b16 %v5091
    %v5630 = vunpack.c.h.b16 %v5091
    %v5631 = vunpack.c.l.b16 %v5092
    %v5632 = vunpack.c.h.b16 %v5092
    %v5633 = vunpack.c.l.b16 %v5093
    %v5634 = vunpack.c.h.b16 %v5093
    %v5635 = vunpack.c.l.b16 %v5094
    %v5636 = vunpack.c.h.b16 %v5094
    %v5637 = vunpack.c.l.b16 %v5095
    %v5638 = vunpack.c.h.b16 %v5095
    %v5639 = vunpack.c.l.b16 %v5096
    %v5640 = vunpack.c.h.b16 %v5096
    %v5641 = vunpack.c.l.b16 %v5097
    %v5642 = vunpack.c.h.b16 %v5097
    %v5643 = vunpack.c.l.b16 %v5098
    %v5644 = vunpack.c.h.b16 %v5098
    %v5645 = vunpack.c.l.b16 %v5099
    %v5646 = vunpack.c.h.b16 %v5099
    %v5647 = vunpack.c.l.b16 %v5100
    %v5648 = vunpack.c.h.b16 %v5100
    %v5649 = vunpack.c.l.b16 %v5101
    %v5650 = vunpack.c.h.b16 %v5101
    %v5651 = vunpack.c.l.b16 %v5102
    %v5652 = vunpack.c.h.b16 %v5102
    %v5653 = vunpack.c.l.b16 %v5103
    %v5654 = vunpack.c.h.b16 %v5103
    %v5655 = vunpack.c.l.b16 %v5104
    %v5656 = vunpack.c.h.b16 %v5104
    %v5657 = vunpack.c.l.b16 %v5105
    %v5658 = vunpack.c.h.b16 %v5105
    %v5659 = vunpack.c.l.b16 %v5106
    %v5660 = vunpack.c.h.b16 %v5106
    %v5661 = vunpack.c.l.b16 %v5107
    %v5662 = vunpack.c.h.b16 %v5107
    %v5663 = vunpack.c.l.b16 %v5108
    %v5664 = vunpack.c.h.b16 %v5108
    %v5665 = vunpack.c.l.b16 %v5109
    %v5666 = vunpack.c.h.b16 %v5109
    %v5667 = vunpack.c.l.b16 %v5110
    %v5668 = vunpack.c.h.b16 %v5110
    %v5669 = vunpack.c.l.b16 %v5111
    %v5670 = vunpack.c.h.b16 %v5111
    %v5671 = vunpack.c.l.b16 %v5112
    %v5672 = vunpack.c.h.b16 %v5112
    %v5673 = vunpack.c.l.b16 %v5113
    %v5674 = vunpack.c.h.b16 %v5113
    %v5675 = vunpack.c.l.b16 %v5114
    %v5676 = vunpack.c.h.b16 %v5114
    %v5677 = vunpack.c.l.b16 %v5115
    %v5678 = vunpack.c.h.b16 %v5115
    %v5679 = vunpack.c.l.b16 %v5116
    %v5680 = vunpack.c.h.b16 %v5116
    %v5681 = vunpack.c.l.b16 %v5117
    %v5682 = vunpack.c.h.b16 %v5117
    %v5683 = vunpack.c.l.b16 %v5118
    %v5684 = vunpack.c.h.b16 %v5118
    %v5685 = vunpack.c.l.b16 %v5119
    %v5686 = vunpack.c.h.b16 %v5119
    %v5687 = vunpack.c.l.b16 %v5120
    %v5688 = vunpack.c.h.b16 %v5120
    %v5689 = vunpack.c.l.b16 %v5121
    %v5690 = vunpack.c.h.b16 %v5121
    %v5691 = vunpack.c.l.b16 %v5122
    %v5692 = vunpack.c.h.b16 %v5122
    %v5693 = vunpack.c.l.b16 %v5123
    %v5694 = vunpack.c.h.b16 %v5123
    %v5695 = vunpack.c.l.b16 %v5124
    %v5696 = vunpack.c.h.b16 %v5124
    %v5697 = vunpack.c.l.b16 %v5125
    %v5698 = vunpack.c.h.b16 %v5125
    %v5699 = vunpack.c.l.b16 %v5126
    %v5700 = vunpack.c.h.b16 %v5126
    %v5701 = vunpack.c.l.b16 %v5127
    %v5702 = vunpack.c.h.b16 %v5127
    %v5703 = vunpack.c.l.b16 %v5128
    %v5704 = vunpack.c.h.b16 %v5128
    %v5705 = vunpack.c.l.b16 %v5129
    %v5706 = vunpack.c.h.b16 %v5129
    %v5707 = vunpack.c.l.b16 %v5130
    %v5708 = vunpack.c.h.b16 %v5130
    %v5709 = vunpack.c.l.b16 %v5131
    %v5710 = vunpack.c.h.b16 %v5131
    %v5711 = vunpack.c.l.b16 %v5132
    %v5712 = vunpack.c.h.b16 %v5132
    %v5713 = vunpack.c.l.b16 %v5133
    %v5714 = vunpack.c.h.b16 %v5133
    %v5715 = vunpack.c.l.b16 %v5134
    %v5716 = vunpack.c.h.b16 %v5134
    %v5717 = vunpack.c.l.b16 %v5135
    %v5718 = vunpack.c.h.b16 %v5135
    %v5719 = vunpack.c.l.b16 %v5136
    %v5720 = vunpack.c.h.b16 %v5136
    %v5721 = vunpack.c.l.b16 %v5137
    %v5722 = vunpack.c.h.b16 %v5137
    %v5723 = vunpack.c.l.b16 %v5138
    %v5724 = vunpack.c.h.b16 %v5138
    %v5725 = vunpack.c.l.b16 %v5139
    %v5726 = vunpack.c.h.b16 %v5139
    %v5727 = vunpack.c.l.b16 %v5140
    %v5728 = vunpack.c.h.b16 %v5140
    %v5729 = vunpack.c.l.b16 %v5141
    %v5730 = vunpack.c.h.b16 %v5141
    %v5731 = vunpack.c.l.b16 %v5142
    %v5732 = vunpack.c.h.b16 %v5142
    %v5733 = vunpack.c.l.b16 %v5143
    %v5734 = vunpack.c.h.b16 %v5143
    %v5735 = vunpack.c.l.b16 %v5144
    %v5736 = vunpack.c.h.b16 %v5144
    %v5737 = vunpack.c.l.b16 %v5145
    %v5738 = vunpack.c.h.b16 %v5145
    %v5739 = vunpack.c.l.b16 %v5146
    %v5740 = vunpack.c.h.b16 %v5146
    %v5741 = vunpack.c.l.b16 %v5147
    %v5742 = vunpack.c.h.b16 %v5147
    %v5743 = vunpack.c.l.b16 %v5148
    %v5744 = vunpack.c.h.b16 %v5148
    %v5745 = vunpack.c.l.b16 %v5149
    %v5746 = vunpack.c.h.b16 %v5149
    %v5747 = vunpack.c.l.b16 %v5150
    %v5748 = vunpack.c.h.b16 %v5150
    %v5749 = vunpack.c.l.b16 %v5151
    %v5750 = vunpack.c.h.b16 %v5151
    %v5751 = vunpack.c.l.b16 %v5152
    %v5752 = vunpack.c.h.b16 %v5152
    %v5753 = vunpack.c.l.b16 %v5153
    %v5754 = vunpack.c.h.b16 %v5153
    %v5755 = vunpack.c.l.b16 %v5154
    %v5756 = vunpack.c.h.b16 %v5154
    %v5757 = vunpack.c.l.b16 %v5155
    %v5758 = vunpack.c.h.b16 %v5155
    %v5759 = vunpack.c.l.b16 %v5156
    %v5760 = vunpack.c.h.b16 %v5156
    %v5761 = vunpack.c.l.b16 %v5157
    %v5762 = vunpack.c.h.b16 %v5157
    %v5763 = vunpack.c.l.b16 %v5158
    %v5764 = vunpack.c.h.b16 %v5158
    %v5765 = vunpack.c.l.b16 %v5159
    %v5766 = vunpack.c.h.b16 %v5159
    %v5767 = vunpack.c.l.b16 %v5160
    %v5768 = vunpack.c.h.b16 %v5160
    %v5769 = vunpack.c.l.b16 %v5161
    %v5770 = vunpack.c.h.b16 %v5161
    %v5771 = vunpack.c.l.b16 %v5162
    %v5772 = vunpack.c.h.b16 %v5162
    %v5773 = vunpack.c.l.b16 %v5163
    %v5774 = vunpack.c.h.b16 %v5163
    %v5775 = vunpack.c.l.b16 %v5164
    %v5776 = vunpack.c.h.b16 %v5164
    %v5777 = vunpack.c.l.b16 %v5165
    %v5778 = vunpack.c.h.b16 %v5165
    %v5779 = vunpack.c.l.b16 %v5166
    %v5780 = vunpack.c.h.b16 %v5166
    %v5781 = vunpack.c.l.b16 %v5167
    %v5782 = vunpack.c.h.b16 %v5167
    %v5783 = vunpack.c.l.b16 %v5168
    %v5784 = vunpack.c.h.b16 %v5168
    %v5785 = vunpack.c.l.b16 %v5169
    %v5786 = vunpack.c.h.b16 %v5169
    %v5787 = vunpack.c.l.b16 %v5170
    %v5788 = vunpack.c.h.b16 %v5170
    %v5789 = vunpack.c.l.b16 %v5171
    %v5790 = vunpack.c.h.b16 %v5171
    %v5791 = vunpack.c.l.b16 %v5172
    %v5792 = vunpack.c.h.b16 %v5172
    %v5793 = vunpack.c.l.b16 %v5173
    %v5794 = vunpack.c.h.b16 %v5173
    %v5795 = vunpack.c.l.b16 %v5174
    %v5796 = vunpack.c.h.b16 %v5174
    %v5797 = vunpack.c.l.b16 %v5175
    %v5798 = vunpack.c.h.b16 %v5175
    %v5799 = vunpack.c.l.b16 %v5176
    %v5800 = vunpack.c.h.b16 %v5176
    %v5801 = vunpack.c.l.b16 %v5177
    %v5802 = vunpack.c.h.b16 %v5177
    %v5803 = vunpack.c.l.b16 %v5178
    %v5804 = vunpack.c.h.b16 %v5178
    %v5805 = vunpack.c.l.b16 %v5179
    %v5806 = vunpack.c.h.b16 %v5179
    %v5807 = vunpack.c.l.b16 %v5180
    %v5808 = vunpack.c.h.b16 %v5180
    %v5809 = vunpack.c.l.b16 %v5181
    %v5810 = vunpack.c.h.b16 %v5181
    %v5811 = vunpack.c.l.b16 %v5182
    %v5812 = vunpack.c.h.b16 %v5182
    %v5813 = vunpack.c.l.b16 %v5183
    %v5814 = vunpack.c.h.b16 %v5183
    %v5815 = vunpack.c.l.b16 %v5184
    %v5816 = vunpack.c.h.b16 %v5184
    %v5817 = vunpack.c.l.b16 %v5185
    %v5818 = vunpack.c.h.b16 %v5185
    %v5819 = vunpack.c.l.b16 %v5186
    %v5820 = vunpack.c.h.b16 %v5186
    %v5821 = vunpack.c.l.b16 %v5187
    %v5822 = vunpack.c.h.b16 %v5187
    %v5823 = vunpack.c.l.b16 %v5188
    %v5824 = vunpack.c.h.b16 %v5188
    %v5825 = vunpack.c.l.b16 %v5189
    %v5826 = vunpack.c.h.b16 %v5189
    %v5827 = vunpack.c.l.b16 %v5190
    %v5828 = vunpack.c.h.b16 %v5190
    %v5829 = vunpack.c.l.b16 %v5191
    %v5830 = vunpack.c.h.b16 %v5191
    %v5831 = vunpack.c.l.b16 %v5192
    %v5832 = vunpack.c.h.b16 %v5192
    %v5833 = vunpack.c.l.b16 %v5193
    %v5834 = vunpack.c.h.b16 %v5193
    %v5835 = vunpack.c.l.b16 %v5194
    %v5836 = vunpack.c.h.b16 %v5194
    %v5837 = vunpack.c.l.b16 %v5195
    %v5838 = vunpack.c.h.b16 %v5195
    %v5839 = vunpack.c.l.b16 %v5196
    %v5840 = vunpack.c.h.b16 %v5196
    %v5841 = vunpack.c.l.b16 %v5197
    %v5842 = vunpack.c.h.b16 %v5197
    %v5843 = vunpack.c.l.b16 %v5198
    %v5844 = vunpack.c.h.b16 %v5198
    %v5845 = vunpack.c.l.b16 %v5199
    %v5846 = vunpack.c.h.b16 %v5199
    %v5847 = vunpack.c.l.b16 %v5200
    %v5848 = vunpack.c.h.b16 %v5200
    %v5849 = vunpack.c.l.b16 %v5201
    %v5850 = vunpack.c.h.b16 %v5201
    %v5851 = vunpack.c.l.b16 %v5202
    %v5852 = vunpack.c.h.b16 %v5202
    %v5853 = vunpack.c.l.b16 %v5203
    %v5854 = vunpack.c.h.b16 %v5203
    %v5855 = vunpack.c.l.b16 %v5204
    %v5856 = vunpack.c.h.b16 %v5204
    %v5857 = vunpack.c.l.b16 %v5205
    %v5858 = vunpack.c.h.b16 %v5205
    %v5859 = vunpack.c.l.b16 %v5206
    %v5860 = vunpack.c.h.b16 %v5206
    %v5861 = vunpack.c.l.b16 %v5207
    %v5862 = vunpack.c.h.b16 %v5207
    %v5863 = vunpack.c.l.b16 %v5208
    %v5864 = vunpack.c.h.b16 %v5208
    %v5865 = vunpack.c.l.b16 %v5209
    %v5866 = vunpack.c.h.b16 %v5209
    %v5867 = vunpack.c.l.b16 %v5210
    %v5868 = vunpack.c.h.b16 %v5210
    %v5869 = vunpack.c.l.b16 %v5211
    %v5870 = vunpack.c.h.b16 %v5211
    %v5871 = vunpack.c.l.b16 %v5212
    %v5872 = vunpack.c.h.b16 %v5212
    %v5873 = vunpack.c.l.b16 %v5213
    %v5874 = vunpack.c.h.b16 %v5213
    %v5875 = vunpack.c.l.b16 %v5214
    %v5876 = vunpack.c.h.b16 %v5214
    %v5877 = vunpack.c.l.b16 %v5215
    %v5878 = vunpack.c.h.b16 %v5215
    %v5879 = vunpack.c.l.b16 %v5216
    %v5880 = vunpack.c.h.b16 %v5216
    %v5881 = vunpack.c.l.b16 %v5217
    %v5882 = vunpack.c.h.b16 %v5217
    %v5883 = vunpack.c.l.b16 %v5218
    %v5884 = vunpack.c.h.b16 %v5218
    %v5885 = vunpack.c.l.b16 %v5219
    %v5886 = vunpack.c.h.b16 %v5219
    %v5887 = vunpack.c.l.b16 %v5220
    %v5888 = vunpack.c.h.b16 %v5220
    %v5889 = vunpack.c.l.b16 %v5221
    %v5890 = vunpack.c.h.b16 %v5221
    %v5891 = vunpack.c.l.b16 %v5222
    %v5892 = vunpack.c.h.b16 %v5222
    %v5893 = vunpack.c.l.b16 %v5223
    %v5894 = vunpack.c.h.b16 %v5223
    %v5895 = vunpack.c.l.b16 %v5224
    %v5896 = vunpack.c.h.b16 %v5224
    %v5897 = vunpack.c.l.b16 %v5225
    %v5898 = vunpack.c.h.b16 %v5225
    %v5899 = vunpack.c.l.b16 %v5226
    %v5900 = vunpack.c.h.b16 %v5226
    %v5901 = vunpack.c.l.b16 %v5227
    %v5902 = vunpack.c.h.b16 %v5227
    %v5903 = vunpack.c.l.b16 %v5228
    %v5904 = vunpack.c.h.b16 %v5228
    %v5905 = vunpack.c.l.b16 %v5229
    %v5906 = vunpack.c.h.b16 %v5229
    %v5907 = vunpack.c.l.b16 %v5230
    %v5908 = vunpack.c.h.b16 %v5230
    %v5909 = vunpack.c.l.b16 %v5231
    %v5910 = vunpack.c.h.b16 %v5231
    %v5911 = vunpack.c.l.b16 %v5232
    %v5912 = vunpack.c.h.b16 %v5232
    %v5913 = vunpack.c.l.b16 %v5233
    %v5914 = vunpack.c.h.b16 %v5233
    %v5915 = vunpack.c.l.b16 %v5234
    %v5916 = vunpack.c.h.b16 %v5234
    %v5917 = vunpack.c.l.b16 %v5235
    %v5918 = vunpack.c.h.b16 %v5235
    %v5919 = vunpack.c.l.b16 %v5236
    %v5920 = vunpack.c.h.b16 %v5236
    %v5921 = vunpack.c.l.b16 %v5237
    %v5922 = vunpack.c.h.b16 %v5237
    %v5923 = vunpack.c.l.b16 %v5238
    %v5924 = vunpack.c.h.b16 %v5238
    %v5925 = vunpack.c.l.b16 %v5239
    %v5926 = vunpack.c.h.b16 %v5239
    %v5927 = vunpack.c.l.b16 %v5240
    %v5928 = vunpack.c.h.b16 %v5240
    %v5929 = vunpack.c.l.b16 %v5241
    %v5930 = vunpack.c.h.b16 %v5241
    %v5931 = vunpack.c.l.b16 %v5242
    %v5932 = vunpack.c.h.b16 %v5242
    %v5933 = vunpack.c.l.b16 %v5243
    %v5934 = vunpack.c.h.b16 %v5243
    %v5935 = vunpack.c.l.b16 %v5244
    %v5936 = vunpack.c.h.b16 %v5244
    %v5937 = vunpack.c.l.b16 %v5245
    %v5938 = vunpack.c.h.b16 %v5245
    %v5939 = vunpack.c.l.b16 %v5246
    %v5940 = vunpack.c.h.b16 %v5246
    %v5941 = vunpack.c.l.b16 %v5247
    %v5942 = vunpack.c.h.b16 %v5247
    %v5943 = vunpack.c.l.b16 %v5248
    %v5944 = vunpack.c.h.b16 %v5248
    %v5945 = vunpack.c.l.b16 %v5249
    %v5946 = vunpack.c.h.b16 %v5249
    %v5947 = vunpack.c.l.b16 %v5250
    %v5948 = vunpack.c.h.b16 %v5250
    %v5949 = vunpack.c.l.b16 %v5251
    %v5950 = vunpack.c.h.b16 %v5251
    %v5951 = vunpack.c.l.b16 %v5252
    %v5952 = vunpack.c.h.b16 %v5252
    %v5953 = vunpack.c.l.b16 %v5253
    %v5954 = vunpack.c.h.b16 %v5253
    %v5955 = vunpack.c.l.b16 %v5254
    %v5956 = vunpack.c.h.b16 %v5254
    %v5957 = vunpack.c.l.b16 %v5255
    %v5958 = vunpack.c.h.b16 %v5255
    %v5959 = vunpack.c.l.b16 %v5256
    %v5960 = vunpack.c.h.b16 %v5256
    %v5961 = vunpack.c.l.b16 %v5257
    %v5962 = vunpack.c.h.b16 %v5257
    %v5963 = vunpack.c.l.b16 %v5258
    %v5964 = vunpack.c.h.b16 %v5258
    %v5965 = vunpack.c.l.b16 %v5259
    %v5966 = vunpack.c.h.b16 %v5259
    %v5967 = vunpack.c.l.b16 %v5260
    %v5968 = vunpack.c.h.b16 %v5260
    %v5969 = vunpack.c.l.b16 %v5261
    %v5970 = vunpack.c.h.b16 %v5261
    %v5971 = vunpack.c.l.b16 %v5262
    %v5972 = vunpack.c.h.b16 %v5262
    %v5973 = vunpack.c.l.b16 %v5263
    %v5974 = vunpack.c.h.b16 %v5263
    %v5975 = vunpack.c.l.b16 %v5264
    %v5976 = vunpack.c.h.b16 %v5264
    %v5977 = vunpack.c.l.b16 %v5265
    %v5978 = vunpack.c.h.b16 %v5265
    %v5979 = vunpack.c.l.b16 %v5266
    %v5980 = vunpack.c.h.b16 %v5266
    %v5981 = vunpack.c.l.b16 %v5267
    %v5982 = vunpack.c.h.b16 %v5267
    %v5983 = vunpack.c.l.b16 %v5268
    %v5984 = vunpack.c.h.b16 %v5268
    %v5985 = vunpack.c.l.b16 %v5269
    %v5986 = vunpack.c.h.b16 %v5269
    %v5987 = vunpack.c.l.b16 %v5270
    %v5988 = vunpack.c.h.b16 %v5270
    %v5989 = vunpack.c.l.b16 %v5271
    %v5990 = vunpack.c.h.b16 %v5271
    %v5991 = vunpack.c.l.b16 %v5272
    %v5992 = vunpack.c.h.b16 %v5272
    %v5993 = vunpack.c.l.b16 %v5273
    %v5994 = vunpack.c.h.b16 %v5273
    %v5995 = vunpack.c.l.b16 %v5274
    %v5996 = vunpack.c.h.b16 %v5274
    %v5997 = vunpack.c.l.b16 %v5275
    %v5998 = vunpack.c.h.b16 %v5275
    %v5999 = vunpack.c.l.b16 %v5276
    %v6000 = vunpack.c.h.b16 %v5276
    %v6001 = vunpack.c.l.b16 %v5277
    %v6002 = vunpack.c.h.b16 %v5277
    %v6003 = vunpack.c.l.b16 %v5278
    %v6004 = vunpack.c.h.b16 %v5278
    %v6005 = vunpack.c.l.b16 %v5279
    %v6006 = vunpack.c.h.b16 %v5279
    %v6007 = vunpack.c.l.b16 %v5280
    %v6008 = vunpack.c.h.b16 %v5280
    %v6009 = vunpack.c.l.b16 %v5281
    %v6010 = vunpack.c.h.b16 %v5281
    %v6011 = vunpack.c.l.b16 %v5282
    %v6012 = vunpack.c.h.b16 %v5282
    %v6013 = vunpack.c.l.b16 %v5283
    %v6014 = vunpack.c.h.b16 %v5283
    %v6015 = vunpack.c.l.b16 %v5284
    %v6016 = vunpack.c.h.b16 %v5284
    %v6017 = vunpack.c.l.b16 %v5285
    %v6018 = vunpack.c.h.b16 %v5285
    %v6019 = vunpack.c.l.b16 %v5286
    %v6020 = vunpack.c.h.b16 %v5286
    %v6021 = vunpack.c.l.b16 %v5287
    %v6022 = vunpack.c.h.b16 %v5287
    %v6023 = vunpack.c.l.b16 %v5288
    %v6024 = vunpack.c.h.b16 %v5288
    %v6025 = vunpack.c.l.b16 %v5289
    %v6026 = vunpack.c.h.b16 %v5289
    %v6027 = vunpack.c.l.b16 %v5290
    %v6028 = vunpack.c.h.b16 %v5290
    %v6029 = vunpack.c.l.b16 %v5291
    %v6030 = vunpack.c.h.b16 %v5291
    %v6031 = vunpack.c.l.b16 %v5292
    %v6032 = vunpack.c.h.b16 %v5292
    %v6033 = vunpack.c.l.b16 %v5293
    %v6034 = vunpack.c.h.b16 %v5293
    %v6035 = vunpack.c.l.b16 %v5294
    %v6036 = vunpack.c.h.b16 %v5294
    %v6037 = vunpack.c.l.b16 %v5295
    %v6038 = vunpack.c.h.b16 %v5295
    %v6039 = vunpack.c.l.b16 %v5296
    %v6040 = vunpack.c.h.b16 %v5296
    %v6041 = vunpack.c.l.b16 %v5297
    %v6042 = vunpack.c.h.b16 %v5297
    %v6043 = vunpack.c.l.b16 %v5298
    %v6044 = vunpack.c.h.b16 %v5298
    %v6045 = vunpack.c.l.b16 %v5299
    %v6046 = vunpack.c.h.b16 %v5299
    %v6047 = vunpack.c.l.b16 %v5300
    %v6048 = vunpack.c.h.b16 %v5300
    %v6049 = vunpack.c.l.b16 %v5301
    %v6050 = vunpack.c.h.b16 %v5301
    %v6051 = vunpack.c.l.b16 %v5302
    %v6052 = vunpack.c.h.b16 %v5302
    %v6053 = vunpack.c.l.b16 %v5303
    %v6054 = vunpack.c.h.b16 %v5303
    %v6055 = vunpack.c.l.b16 %v5304
    %v6056 = vunpack.c.h.b16 %v5304
    %v6057 = vunpack.c.l.b16 %v5305
    %v6058 = vunpack.c.h.b16 %v5305
    %v6059 = vunpack.c.l.b16 %v5306
    %v6060 = vunpack.c.h.b16 %v5306
    %v6061 = vunpack.c.l.b16 %v5307
    %v6062 = vunpack.c.h.b16 %v5307
    %v6063 = vunpack.c.l.b16 %v5308
    %v6064 = vunpack.c.h.b16 %v5308
    %v6065 = vunpack.c.l.b16 %v5309
    %v6066 = vunpack.c.h.b16 %v5309
    %v6067 = vunpack.c.l.b16 %v5310
    %v6068 = vunpack.c.h.b16 %v5310
    %v6069 = vunpack.c.l.b16 %v5311
    %v6070 = vunpack.c.h.b16 %v5311
    %v6071 = vunpack.c.l.b16 %v5312
    %v6072 = vunpack.c.h.b16 %v5312
    %v6073 = vunpack.c.l.b16 %v5313
    %v6074 = vunpack.c.h.b16 %v5313
    %v6075 = vunpack.c.l.b16 %v5314
    %v6076 = vunpack.c.h.b16 %v5314
    %v6077 = vunpack.c.l.b16 %v5315
    %v6078 = vunpack.c.h.b16 %v5315
    %v6079 = vunpack.c.l.b16 %v5316
    %v6080 = vunpack.c.h.b16 %v5316
    %v6081 = vunpack.c.l.b16 %v5317
    %v6082 = vunpack.c.h.b16 %v5317
    %v6083 = vunpack.c.l.b16 %v5318
    %v6084 = vunpack.c.h.b16 %v5318
    %v6085 = vunpack.c.l.b16 %v5319
    %v6086 = vunpack.c.h.b16 %v5319
    %v6087 = vunpack.c.l.b16 %v5320
    %v6088 = vunpack.c.h.b16 %v5320
    %v6089 = vunpack.c.l.b16 %v5321
    %v6090 = vunpack.c.h.b16 %v5321
    %v6091 = vunpack.c.l.b16 %v5322
    %v6092 = vunpack.c.h.b16 %v5322
    %v6093 = vunpack.c.l.b16 %v5323
    %v6094 = vunpack.c.h.b16 %v5323
    %v6095 = vunpack.c.l.b16 %v5324
    %v6096 = vunpack.c.h.b16 %v5324
    %v6097 = vunpack.c.l.b16 %v5325
    %v6098 = vunpack.c.h.b16 %v5325
    %v6099 = vunpack.c.l.b16 %v5326
    %v6100 = vunpack.c.h.b16 %v5326
    %v6101 = vunpack.c.l.b16 %v5327
    %v6102 = vunpack.c.h.b16 %v5327
    %v6103 = vunpack.c.l.b16 %v5328
    %v6104 = vunpack.c.h.b16 %v5328
    %v6105 = vunpack.c.l.b16 %v5329
    %v6106 = vunpack.c.h.b16 %v5329
    %v6107 = vunpack.c.l.b16 %v5330
    %v6108 = vunpack.c.h.b16 %v5330
    %v6109 = vunpack.c.l.b16 %v5331
    %v6110 = vunpack.c.h.b16 %v5331
    %v6111 = vunpack.c.l.b16 %v5332
    %v6112 = vunpack.c.h.b16 %v5332
    %v6113 = vunpack.c.l.b16 %v5333
    %v6114 = vunpack.c.h.b16 %v5333
    %v6115 = vunpack.c.l.b16 %v5334
    %v6116 = vunpack.c.h.b16 %v5334
    %v6117 = vunpack.c.l.b16 %v5335
    %v6118 = vunpack.c.h.b16 %v5335
    %v6119 = vunpack.c.l.b16 %v5336
    %v6120 = vunpack.c.h.b16 %v5336
    %v6121 = vunpack.c.l.b16 %v5337
    %v6122 = vunpack.c.h.b16 %v5337
    %v6123 = vunpack.c.l.b16 %v5338
    %v6124 = vunpack.c.h.b16 %v5338
    %v6125 = vunpack.c.l.b16 %v5339
    %v6126 = vunpack.c.h.b16 %v5339
    %v6127 = vunpack.c.l.b16 %v5340
    %v6128 = vunpack.c.h.b16 %v5340
    %v6129 = vunpack.c.l.b16 %v5341
    %v6130 = vunpack.c.h.b16 %v5341
    %v6131 = vunpack.c.l.b16 %v5342
    %v6132 = vunpack.c.h.b16 %v5342
    %v6133 = vpack.c.b16 %v5625, %v5621
    %v6134 = vpack.c.b16 %v5626, %v5622
    %v6135 = vpack.c.b16 %v5627, %v5623
    %v6136 = vpack.c.b16 %v5628, %v5624
    %v6137 = vpack.c.b16 %v5633, %v5629
    %v6138 = vpack.c.b16 %v5634, %v5630
    %v6139 = vpack.c.b16 %v5635, %v5631
    %v6140 = vpack.c.b16 %v5636, %v5632
    %v6141 = vpack.c.b16 %v5641, %v5637
    %v6142 = vpack.c.b16 %v5642, %v5638
    %v6143 = vpack.c.b16 %v5643, %v5639
    %v6144 = vpack.c.b16 %v5644, %v5640
    %v6145 = vpack.c.b16 %v5649, %v5645
    %v6146 = vpack.c.b16 %v5650, %v5646
    %v6147 = vpack.c.b16 %v5651, %v5647
    %v6148 = vpack.c.b16 %v5652, %v5648
    %v6149 = vpack.c.b16 %v5657, %v5653
    %v6150 = vpack.c.b16 %v5658, %v5654
    %v6151 = vpack.c.b16 %v5659, %v5655
    %v6152 = vpack.c.b16 %v5660, %v5656
    %v6153 = vpack.c.b16 %v5665, %v5661
    %v6154 = vpack.c.b16 %v5666, %v5662
    %v6155 = vpack.c.b16 %v5667, %v5663
    %v6156 = vpack.c.b16 %v5668, %v5664
    %v6157 = vpack.c.b16 %v5673, %v5669
    %v6158 = vpack.c.b16 %v5674, %v5670
    %v6159 = vpack.c.b16 %v5675, %v5671
    %v6160 = vpack.c.b16 %v5676, %v5672
    %v6161 = vpack.c.b16 %v5681, %v5677
    %v6162 = vpack.c.b16 %v5682, %v5678
    %v6163 = vpack.c.b16 %v5683, %v5679
    %v6164 = vpack.c.b16 %v5684, %v5680
    %v6165 = vpack.c.b16 %v5689, %v5685
    %v6166 = vpack.c.b16 %v5690, %v5686
    %v6167 = vpack.c.b16 %v5691, %v5687
    %v6168 = vpack.c.b16 %v5692, %v5688
    %v6169 = vpack.c.b16 %v5697, %v5693
    %v6170 = vpack.c.b16 %v5698, %v5694
    %v6171 = vpack.c.b16 %v5699, %v5695
    %v6172 = vpack.c.b16 %v5700, %v5696
    %v6173 = vpack.c.b16 %v5705, %v5701
    %v6174 = vpack.c.b16 %v5706, %v5702
    %v6175 = vpack.c.b16 %v5707, %v5703
    %v6176 = vpack.c.b16 %v5708, %v5704
    %v6177 = vpack.c.b16 %v5713, %v5709
    %v6178 = vpack.c.b16 %v5714, %v5710
    %v6179 = vpack.c.b16 %v5715, %v5711
    %v6180 = vpack.c.b16 %v5716, %v5712
    %v6181 = vpack.c.b16 %v5721, %v5717
    %v6182 = vpack.c.b16 %v5722, %v5718
    %v6183 = vpack.c.b16 %v5723, %v5719
    %v6184 = vpack.c.b16 %v5724, %v5720
    %v6185 = vpack.c.b16 %v5729, %v5725
    %v6186 = vpack.c.b16 %v5730, %v5726
    %v6187 = vpack.c.b16 %v5731, %v5727
    %v6188 = vpack.c.b16 %v5732, %v5728
    %v6189 = vpack.c.b16 %v5737, %v5733
    %v6190 = vpack.c.b16 %v5738, %v5734
    %v6191 = vpack.c.b16 %v5739, %v5735
    %v6192 = vpack.c.b16 %v5740, %v5736
    %v6193 = vpack.c.b16 %v5745, %v5741
    %v6194 = vpack.c.b16 %v5746, %v5742
    %v6195 = vpack.c.b16 %v5747, %v5743
    %v6196 = vpack.c.b16 %v5748, %v5744
    %v6197 = vpack.c.b16 %v5753, %v5749
    %v6198 = vpack.c.b16 %v5754, %v5750
    %v6199 = vpack.c.b16 %v5755, %v5751
    %v6200 = vpack.c.b16 %v5756, %v5752
    %v6201 = vpack.c.b16 %v5761, %v5757
    %v6202 = vpack.c.b16 %v5762, %v5758
    %v6203 = vpack.c.b16 %v5763, %v5759
    %v6204 = vpack.c.b16 %v5764, %v5760
    %v6205 = vpack.c.b16 %v5769, %v5765
    %v6206 = vpack.c.b16 %v5770, %v5766
    %v6207 = vpack.c.b16 %v5771, %v5767
    %v6208 = vpack.c.b16 %v5772, %v5768
    %v6209 = vpack.c.b16 %v5777, %v5773
    %v6210 = vpack.c.b16 %v5778, %v5774
    %v6211 = vpack.c.b16 %v5779, %v5775
    %v6212 = vpack.c.b16 %v5780, %v5776
    %v6213 = vpack.c.b16 %v5785, %v5781
    %v6214 = vpack.c.b16 %v5786, %v5782
    %v6215 = vpack.c.b16 %v5787, %v5783
    %v6216 = vpack.c.b16 %v5788, %v5784
    %v6217 = vpack.c.b16 %v5793, %v5789
    %v6218 = vpack.c.b16 %v5794, %v5790
    %v6219 = vpack.c.b16 %v5795, %v5791
    %v6220 = vpack.c.b16 %v5796, %v5792
    %v6221 = vpack.c.b16 %v5801, %v5797
    %v6222 = vpack.c.b16 %v5802, %v5798
    %v6223 = vpack.c.b16 %v5803, %v5799
    %v6224 = vpack.c.b16 %v5804, %v5800
    %v6225 = vpack.c.b16 %v5809, %v5805
    %v6226 = vpack.c.b16 %v5810, %v5806
    %v6227 = vpack.c.b16 %v5811, %v5807
    %v6228 = vpack.c.b16 %v5812, %v5808
    %v6229 = vpack.c.b16 %v5817, %v5813
    %v6230 = vpack.c.b16 %v5818, %v5814
    %v6231 = vpack.c.b16 %v5819, %v5815
    %v6232 = vpack.c.b16 %v5820, %v5816
    %v6233 = vpack.c.b16 %v5825, %v5821
    %v6234 = vpack.c.b16 %v5826, %v5822
    %v6235 = vpack.c.b16 %v5827, %v5823
    %v6236 = vpack.c.b16 %v5828, %v5824
    %v6237 = vpack.c.b16 %v5833, %v5829
    %v6238 = vpack.c.b16 %v5834, %v5830
    %v6239 = vpack.c.b16 %v5835, %v5831
    %v6240 = vpack.c.b16 %v5836, %v5832
    %v6241 = vpack.c.b16 %v5841, %v5837
    %v6242 = vpack.c.b16 %v5842, %v5838
    %v6243 = vpack.c.b16 %v5843, %v5839
    %v6244 = vpack.c.b16 %v5844, %v5840
    %v6245 = vpack.c.b16 %v5849, %v5845
    %v6246 = vpack.c.b16 %v5850, %v5846
    %v6247 = vpack.c.b16 %v5851, %v5847
    %v6248 = vpack.c.b16 %v5852, %v5848
    %v6249 = vpack.c.b16 %v5857, %v5853
    %v6250 = vpack.c.b16 %v5858, %v5854
    %v6251 = vpack.c.b16 %v5859, %v5855
    %v6252 = vpack.c.b16 %v5860, %v5856
    %v6253 = vpack.c.b16 %v5865, %v5861
    %v6254 = vpack.c.b16 %v5866, %v5862
    %v6255 = vpack.c.b16 %v5867, %v5863
    %v6256 = vpack.c.b16 %v5868, %v5864
    %v6257 = vpack.c.b16 %v5873, %v5869
    %v6258 = vpack.c.b16 %v5874, %v5870
    %v6259 = vpack.c.b16 %v5875, %v5871
    %v6260 = vpack.c.b16 %v5876, %v5872
    %v6261 = vpack.c.b16 %v5881, %v5877
    %v6262 = vpack.c.b16 %v5882, %v5878
    %v6263 = vpack.c.b16 %v5883, %v5879
    %v6264 = vpack.c.b16 %v5884, %v5880
    %v6265 = vpack.c.b16 %v5889, %v5885
    %v6266 = vpack.c.b16 %v5890, %v5886
    %v6267 = vpack.c.b16 %v5891, %v5887
    %v6268 = vpack.c.b16 %v5892, %v5888
    %v6269 = vpack.c.b16 %v5897, %v5893
    %v6270 = vpack.c.b16 %v5898, %v5894
    %v6271 = vpack.c.b16 %v5899, %v5895
    %v6272 = vpack.c.b16 %v5900, %v5896
    %v6273 = vpack.c.b16 %v5905, %v5901
    %v6274 = vpack.c.b16 %v5906, %v5902
    %v6275 = vpack.c.b16 %v5907, %v5903
    %v6276 = vpack.c.b16 %v5908, %v5904
    %v6277 = vpack.c.b16 %v5913, %v5909
    %v6278 = vpack.c.b16 %v5914, %v5910
    %v6279 = vpack.c.b16 %v5915, %v5911
    %v6280 = vpack.c.b16 %v5916, %v5912
    %v6281 = vpack.c.b16 %v5921, %v5917
    %v6282 = vpack.c.b16 %v5922, %v5918
    %v6283 = vpack.c.b16 %v5923, %v5919
    %v6284 = vpack.c.b16 %v5924, %v5920
    %v6285 = vpack.c.b16 %v5929, %v5925
    %v6286 = vpack.c.b16 %v5930, %v5926
    %v6287 = vpack.c.b16 %v5931, %v5927
    %v6288 = vpack.c.b16 %v5932, %v5928
    %v6289 = vpack.c.b16 %v5937, %v5933
    %v6290 = vpack.c.b16 %v5938, %v5934
    %v6291 = vpack.c.b16 %v5939, %v5935
    %v6292 = vpack.c.b16 %v5940, %v5936
    %v6293 = vpack.c.b16 %v5945, %v5941
    %v6294 = vpack.c.b16 %v5946, %v5942
    %v6295 = vpack.c.b16 %v5947, %v5943
    %v6296 = vpack.c.b16 %v5948, %v5944
    %v6297 = vpack.c.b16 %v5953, %v5949
    %v6298 = vpack.c.b16 %v5954, %v5950
    %v6299 = vpack.c.b16 %v5955, %v5951
    %v6300 = vpack.c.b16 %v5956, %v5952
    %v6301 = vpack.c.b16 %v5961, %v5957
    %v6302 = vpack.c.b16 %v5962, %v5958
    %v6303 = vpack.c.b16 %v5963, %v5959
    %v6304 = vpack.c.b16 %v5964, %v5960
    %v6305 = vpack.c.b16 %v5969, %v5965
    %v6306 = vpack.c.b16 %v5970, %v5966
    %v6307 = vpack.c.b16 %v5971, %v5967
    %v6308 = vpack.c.b16 %v5972, %v5968
    %v6309 = vpack.c.b16 %v5977, %v5973
    %v6310 = vpack.c.b16 %v5978, %v5974
    %v6311 = vpack.c.b16 %v5979, %v5975
    %v6312 = vpack.c.b16 %v5980, %v5976
    %v6313 = vpack.c.b16 %v5985, %v5981
    %v6314 = vpack.c.b16 %v5986, %v5982
    %v6315 = vpack.c.b16 %v5987, %v5983
    %v6316 = vpack.c.b16 %v5988, %v5984
    %v6317 = vpack.c.b16 %v5993, %v5989
    %v6318 = vpack.c.b16 %v5994, %v5990
    %v6319 = vpack.c.b16 %v5995, %v5991
    %v6320 = vpack.c.b16 %v5996, %v5992
    %v6321 = vpack.c.b16 %v6001, %v5997
    %v6322 = vpack.c.b16 %v6002, %v5998
    %v6323 = vpack.c.b16 %v6003, %v5999
    %v6324 = vpack.c.b16 %v6004, %v6000
    %v6325 = vpack.c.b16 %v6009, %v6005
    %v6326 = vpack.c.b16 %v6010, %v6006
    %v6327 = vpack.c.b16 %v6011, %v6007
    %v6328 = vpack.c.b16 %v6012, %v6008
    %v6329 = vpack.c.b16 %v6017, %v6013
    %v6330 = vpack.c.b16 %v6018, %v6014
    %v6331 = vpack.c.b16 %v6019, %v6015
    %v6332 = vpack.c.b16 %v6020, %v6016
    %v6333 = vpack.c.b16 %v6025, %v6021
    %v6334 = vpack.c.b16 %v6026, %v6022
    %v6335 = vpack.c.b16 %v6027, %v6023
    %v6336 = vpack.c.b16 %v6028, %v6024
    %v6337 = vpack.c.b16 %v6033, %v6029
    %v6338 = vpack.c.b16 %v6034, %v6030
    %v6339 = vpack.c.b16 %v6035, %v6031
    %v6340 = vpack.c.b16 %v6036, %v6032
    %v6341 = vpack.c.b16 %v6041, %v6037
    %v6342 = vpack.c.b16 %v6042, %v6038
    %v6343 = vpack.c.b16 %v6043, %v6039
    %v6344 = vpack.c.b16 %v6044, %v6040
    %v6345 = vpack.c.b16 %v6049, %v6045
    %v6346 = vpack.c.b16 %v6050, %v6046
    %v6347 = vpack.c.b16 %v6051, %v6047
    %v6348 = vpack.c.b16 %v6052, %v6048
    %v6349 = vpack.c.b16 %v6057, %v6053
    %v6350 = vpack.c.b16 %v6058, %v6054
    %v6351 = vpack.c.b16 %v6059, %v6055
    %v6352 = vpack.c.b16 %v6060, %v6056
    %v6353 = vpack.c.b16 %v6065, %v6061
    %v6354 = vpack.c.b16 %v6066, %v6062
    %v6355 = vpack.c.b16 %v6067, %v6063
    %v6356 = vpack.c.b16 %v6068, %v6064
    %v6357 = vpack.c.b16 %v6073, %v6069
    %v6358 = vpack.c.b16 %v6074, %v6070
    %v6359 = vpack.c.b16 %v6075, %v6071
    %v6360 = vpack.c.b16 %v6076, %v6072
    %v6361 = vpack.c.b16 %v6081, %v6077
    %v6362 = vpack.c.b16 %v6082, %v6078
    %v6363 = vpack.c.b16 %v6083, %v6079
    %v6364 = vpack.c.b16 %v6084, %v6080
    %v6365 = vpack.c.b16 %v6089, %v6085
    %v6366 = vpack.c.b16 %v6090, %v6086
    %v6367 = vpack.c.b16 %v6091, %v6087
    %v6368 = vpack.c.b16 %v6092, %v6088
    %v6369 = vpack.c.b16 %v6097, %v6093
    %v6370 = vpack.c.b16 %v6098, %v6094
    %v6371 = vpack.c.b16 %v6099, %v6095
    %v6372 = vpack.c.b16 %v6100, %v6096
    %v6373 = vpack.c.b16 %v6105, %v6101
    %v6374 = vpack.c.b16 %v6106, %v6102
    %v6375 = vpack.c.b16 %v6107, %v6103
    %v6376 = vpack.c.b16 %v6108, %v6104
    %v6377 = vpack.c.b16 %v6113, %v6109
    %v6378 = vpack.c.b16 %v6114, %v6110
    %v6379 = vpack.c.b16 %v6115, %v6111
    %v6380 = vpack.c.b16 %v6116, %v6112
    %v6381 = vpack.c.b16 %v6121, %v6117
    %v6382 = vpack.c.b16 %v6122, %v6118
    %v6383 = vpack.c.b16 %v6123, %v6119
    %v6384 = vpack.c.b16 %v6124, %v6120
    %v6385 = vpack.c.b16 %v6129, %v6125
    %v6386 = vpack.c.b16 %v6130, %v6126
    %v6387 = vpack.c.b16 %v6131, %v6127
    %v6388 = vpack.c.b16 %v6132, %v6128
    %6645 = vmatprep.subr.bf16.mxu0 %v6134
    %6646 = vmatpush1.bf16.msra.mxu0 %v6133
    %6647 = vmatprep.subr.bf16.mxu0 %v6138
    %6648 = vmatpush1.bf16.msra.mxu0 %v6137
    %6649 = vmatprep.subr.bf16.mxu0 %v6142
    %6650 = vmatpush1.bf16.msra.mxu0 %v6141
    %6651 = vmatprep.subr.bf16.mxu0 %v6146
    %6652 = vmatpush1.bf16.msra.mxu0 %v6145
    %6653 = vmatprep.subr.bf16.mxu0 %v6150
    %6654 = vmatpush1.bf16.msra.mxu0 %v6149
    %6655 = vmatprep.subr.bf16.mxu0 %v6154
    %6656 = vmatpush1.bf16.msra.mxu0 %v6153
    %6657 = vmatprep.subr.bf16.mxu0 %v6158
    %6658 = vmatpush1.bf16.msra.mxu0 %v6157
    %6659 = vmatprep.subr.bf16.mxu0 %v6162
    %6660 = vmatpush1.bf16.msra.mxu0 %v6161
    %6661 = vmatprep.subr.bf16.mxu0 %v6166
    %6662 = vmatpush1.bf16.msra.mxu0 %v6165
    %6663 = vmatprep.subr.bf16.mxu0 %v6170
    %6664 = vmatpush1.bf16.msra.mxu0 %v6169
    %6665 = vmatprep.subr.bf16.mxu0 %v6174
    %6666 = vmatpush1.bf16.msra.mxu0 %v6173
    %6667 = vmatprep.subr.bf16.mxu0 %v6178
    %6668 = vmatpush1.bf16.msra.mxu0 %v6177
    %6669 = vmatprep.subr.bf16.mxu0 %v6182
    %6670 = vmatpush1.bf16.msra.mxu0 %v6181
    %6671 = vmatprep.subr.bf16.mxu0 %v6186
    %6672 = vmatpush1.bf16.msra.mxu0 %v6185
    %6673 = vmatprep.subr.bf16.mxu0 %v6190
    %6674 = vmatpush1.bf16.msra.mxu0 %v6189
    %6675 = vmatprep.subr.bf16.mxu0 %v6194
    %6676 = vmatpush1.bf16.msra.mxu0 %v6193
    %6677 = vmatprep.mubr.bf16.mxu0 %v4960
    %6678 = vmatmul.mubr.bf16.gmra.mrb[0].mxu0 %v4959
    %v6679 = vpop.f32.mrb[0].mxu0
    %v6680 = vadd.f32 %v5348, %v6679
    %v6681 = vpop.f32.mrb[0].mxu0
    %v6682 = vadd.f32 %v5352, %v6681
    %v6683 = vpop.f32.mrb[0].mxu0
    %v6684 = vadd.f32 %v5348, %v6683
    %v6685 = vpop.f32.mrb[0].mxu0
    %v6686 = vadd.f32 %v5352, %v6685
    %6687 = vmatprep.mubr.bf16.mxu0 %v4968
    %6688 = vmatmul.mubr.bf16.gmra.mrb[0].mxu0 %v4967
    %v6689 = vpop.f32.mrb[0].mxu0
    %v6690 = vadd.f32 %v5348, %v6689
    %v6691 = vpop.f32.mrb[0].mxu0
    %v6692 = vadd.f32 %v5352, %v6691
    %v6693 = vpop.f32.mrb[0].mxu0
    %v6694 = vadd.f32 %v5348, %v6693
    %v6695 = vpop.f32.mrb[0].mxu0
    %v6696 = vadd.f32 %v5352, %v6695
    %6697 = vmatprep.mubr.bf16.mxu0 %v4976
    %6698 = vmatmul.mubr.bf16.gmra.mrb[0].mxu0 %v4975
    %v6699 = vpop.f32.mrb[0].mxu0
    %v6700 = vadd.f32 %v5348, %v6699
    %v6701 = vpop.f32.mrb[0].mxu0
    %v6702 = vadd.f32 %v5352, %v6701
    %v6703 = vpop.f32.mrb[0].mxu0
    %v6704 = vadd.f32 %v5348, %v6703
    %v6705 = vpop.f32.mrb[0].mxu0
    %v6706 = vadd.f32 %v5352, %v6705
    %6707 = vmatprep.mubr.bf16.mxu0 %v4984
    %6708 = vmatmul.mubr.bf16.gmra.mrb[0].mxu0 %v4983
    %v6709 = vpop.f32.mrb[0].mxu0
    %v6710 = vadd.f32 %v5348, %v6709
    %v6711 = vpop.f32.mrb[0].mxu0
    %v6712 = vadd.f32 %v5352, %v6711
    %v6713 = vpop.f32.mrb[0].mxu0
    %v6714 = vadd.f32 %v5348, %v6713
    %v6715 = vpop.f32.mrb[0].mxu0
    %v6716 = vadd.f32 %v5352, %v6715
    %6717 = vmatprep.mubr.bf16.mxu0 %v4992
    %6718 = vmatmul.mubr.bf16.gmra.mrb[0].mxu0 %v4991
    %v6719 = vpop.f32.mrb[0].mxu0
    %v6720 = vadd.f32 %v5348, %v6719
    %v6721 = vpop.f32.mrb[0].mxu0
    %v6722 = vadd.f32 %v5352, %v6721
    %v6723 = vpop.f32.mrb[0].mxu0
    %v6724 = vadd.f32 %v5348, %v6723
    %v6725 = vpop.f32.mrb[0].mxu0
    %v6726 = vadd.f32 %v5352, %v6725
    %6727 = vmatprep.mubr.bf16.mxu0 %v5000
    %6728 = vmatmul.mubr.bf16.gmra.mrb[0].mxu0 %v4999
    %v6729 = vpop.f32.mrb[0].mxu0
    %v6730 = vadd.f32 %v5348, %v6729
    %v6731 = vpop.f32.mrb[0].mxu0
    %v6732 = vadd.f32 %v5352, %v6731
    %v6733 = vpop.f32.mrb[0].mxu0
    %v6734 = vadd.f32 %v5348, %v6733
    %v6735 = vpop.f32.mrb[0].mxu0
    %v6736 = vadd.f32 %v5352, %v6735
    %6737 = vmatprep.mubr.bf16.mxu0 %v5008
    %6738 = vmatmul.mubr.bf16.gmra.mrb[0].mxu0 %v5007
    %v6739 = vpop.f32.mrb[0].mxu0
    %v6740 = vadd.f32 %v5348, %v6739
    %v6741 = vpop.f32.mrb[0].mxu0
    %v6742 = vadd.f32 %v5352, %v6741
    %v6743 = vpop.f32.mrb[0].mxu0
    %v6744 = vadd.f32 %v5348, %v6743
    %v6745 = vpop.f32.mrb[0].mxu0
    %v6746 = vadd.f32 %v5352, %v6745
    %6747 = vmatprep.mubr.bf16.mxu0 %v5016
    %6748 = vmatmul.mubr.bf16.gmra.mrb[0].mxu0 %v5015
    %v6749 = vpop.f32.mrb[0].mxu0
    %v6750 = vadd.f32 %v5348, %v6749
    %v6751 = vpop.f32.mrb[0].mxu0
    %v6752 = vadd.f32 %v5352, %v6751
    %v6753 = vpop.f32.mrb[0].mxu0
    %v6754 = vadd.f32 %v5348, %v6753
    %v6755 = vpop.f32.mrb[0].mxu0
    %v6756 = vadd.f32 %v5352, %v6755
    %6757 = vmatprep.mubr.bf16.mxu0 %v5024
    %6758 = vmatmul.mubr.bf16.gmra.mrb[0].mxu0 %v5023
    %v6759 = vpop.f32.mrb[0].mxu0
    %v6760 = vadd.f32 %v5348, %v6759
    %v6761 = vpop.f32.mrb[0].mxu0
    %v6762 = vadd.f32 %v5352, %v6761
    %v6763 = vpop.f32.mrb[0].mxu0
    %v6764 = vadd.f32 %v5348, %v6763
    %v6765 = vpop.f32.mrb[0].mxu0
    %v6766 = vadd.f32 %v5352, %v6765
    %6767 = vmatprep.mubr.bf16.mxu0 %v5032
    %6768 = vmatmul.mubr.bf16.gmra.mrb[0].mxu0 %v5031
    %v6769 = vpop.f32.mrb[0].mxu0
    %v6770 = vadd.f32 %v5348, %v6769
    %v6771 = vpop.f32.mrb[0].mxu0
    %v6772 = vadd.f32 %v5352, %v6771
    %v6773 = vpop.f32.mrb[0].mxu0
    %v6774 = vadd.f32 %v5348, %v6773
    %v6775 = vpop.f32.mrb[0].mxu0
    %v6776 = vadd.f32 %v5352, %v6775
    %6777 = vmatprep.mubr.bf16.mxu0 %v5040
    %6778 = vmatmul.mubr.bf16.gmra.mrb[0].mxu0 %v5039
    %v6779 = vpop.f32.mrb[0].mxu0
    %v6780 = vadd.f32 %v5348, %v6779
    %v6781 = vpop.f32.mrb[0].mxu0
    %v6782 = vadd.f32 %v5352, %v6781
    %v6783 = vpop.f32.mrb[0].mxu0
    %v6784 = vadd.f32 %v5348, %v6783
    %v6785 = vpop.f32.mrb[0].mxu0
    %v6786 = vadd.f32 %v5352, %v6785
    %6787 = vmatprep.mubr.bf16.mxu0 %v5048
    %6788 = vmatmul.mubr.bf16.gmra.mrb[0].mxu0 %v5047
    %v6789 = vpop.f32.mrb[0].mxu0
    %v6790 = vadd.f32 %v5348, %v6789
    %v6791 = vpop.f32.mrb[0].mxu0
    %v6792 = vadd.f32 %v5352, %v6791
    %v6793 = vpop.f32.mrb[0].mxu0
    %v6794 = vadd.f32 %v5348, %v6793
    %v6795 = vpop.f32.mrb[0].mxu0
    %v6796 = vadd.f32 %v5352, %v6795
    %6797 = vmatprep.mubr.bf16.mxu0 %v5056
    %6798 = vmatmul.mubr.bf16.gmra.mrb[0].mxu0 %v5055
    %v6799 = vpop.f32.mrb[0].mxu0
    %v6800 = vadd.f32 %v5348, %v6799
    %v6801 = vpop.f32.mrb[0].mxu0
    %v6802 = vadd.f32 %v5352, %v6801
    %v6803 = vpop.f32.mrb[0].mxu0
    %v6804 = vadd.f32 %v5348, %v6803
    %v6805 = vpop.f32.mrb[0].mxu0
    %v6806 = vadd.f32 %v5352, %v6805
    %6807 = vmatprep.mubr.bf16.mxu0 %v5064
    %6808 = vmatmul.mubr.bf16.gmra.mrb[0].mxu0 %v5063
    %v6809 = vpop.f32.mrb[0].mxu0
    %v6810 = vadd.f32 %v5348, %v6809
    %v6811 = vpop.f32.mrb[0].mxu0
    %v6812 = vadd.f32 %v5352, %v6811
    %v6813 = vpop.f32.mrb[0].mxu0
    %v6814 = vadd.f32 %v5348, %v6813
    %v6815 = vpop.f32.mrb[0].mxu0
    %v6816 = vadd.f32 %v5352, %v6815
    %6817 = vmatprep.mubr.bf16.mxu0 %v5072
    %6818 = vmatmul.mubr.bf16.gmra.mrb[0].mxu0 %v5071
    %v6819 = vpop.f32.mrb[0].mxu0
    %v6820 = vadd.f32 %v5348, %v6819
    %v6821 = vpop.f32.mrb[0].mxu0
    %v6822 = vadd.f32 %v5352, %v6821
    %v6823 = vpop.f32.mrb[0].mxu0
    %v6824 = vadd.f32 %v5348, %v6823
    %v6825 = vpop.f32.mrb[0].mxu0
    %v6826 = vadd.f32 %v5352, %v6825
    %6827 = vmatprep.mubr.bf16.mxu0 %v5080
    %6828 = vmatmul.mubr.bf16.gmra.mrb[0].mxu0 %v5079
    %v6829 = vpop.f32.mrb[0].mxu0
    %v6830 = vadd.f32 %v5348, %v6829
    %v6831 = vpop.f32.mrb[0].mxu0
    %v6832 = vadd.f32 %v5352, %v6831
    %v6833 = vpop.f32.mrb[0].mxu0
    %v6834 = vadd.f32 %v5348, %v6833
    %v6835 = vpop.f32.mrb[0].mxu0
    %v6836 = vadd.f32 %v5352, %v6835
    %6837 = vdwg.mxu0
    %6838 = vmatprep.subr.bf16.mxu0 %v6198
    %6839 = vmatpush1.bf16.msra.mxu0 %v6197
    %6840 = vmatprep.subr.bf16.mxu0 %v6202
    %6841 = vmatpush1.bf16.msra.mxu0 %v6201
    %6842 = vmatprep.subr.bf16.mxu0 %v6206
    %6843 = vmatpush1.bf16.msra.mxu0 %v6205
    %6844 = vmatprep.subr.bf16.mxu0 %v6210
    %6845 = vmatpush1.bf16.msra.mxu0 %v6209
    %6846 = vmatprep.subr.bf16.mxu0 %v6214
    %6847 = vmatpush1.bf16.msra.mxu0 %v6213
    %6848 = vmatprep.subr.bf16.mxu0 %v6218
    %6849 = vmatpush1.bf16.msra.mxu0 %v6217
    %6850 = vmatprep.subr.bf16.mxu0 %v6222
    %6851 = vmatpush1.bf16.msra.mxu0 %v6221
    %6852 = vmatprep.subr.bf16.mxu0 %v6226
    %6853 = vmatpush1.bf16.msra.mxu0 %v6225
    %6854 = vmatprep.subr.bf16.mxu0 %v6230
    %6855 = vmatpush1.bf16.msra.mxu0 %v6229
    %6856 = vmatprep.subr.bf16.mxu0 %v6234
    %6857 = vmatpush1.bf16.msra.mxu0 %v6233
    %6858 = vmatprep.subr.bf16.mxu0 %v6238
    %6859 = vmatpush1.bf16.msra.mxu0 %v6237
    %6860 = vmatprep.subr.bf16.mxu0 %v6242
    %6861 = vmatpush1.bf16.msra.mxu0 %v6241
    %6862 = vmatprep.subr.bf16.mxu0 %v6246
    %6863 = vmatpush1.bf16.msra.mxu0 %v6245
    %6864 = vmatprep.subr.bf16.mxu0 %v6250
    %6865 = vmatpush1.bf16.msra.mxu0 %v6249
    %6866 = vmatprep.subr.bf16.mxu0 %v6254
    %6867 = vmatpush1.bf16.msra.mxu0 %v6253
    %6868 = vmatprep.subr.bf16.mxu0 %v6258
    %6869 = vmatpush1.bf16.msra.mxu0 %v6257
    %6870 = vmatprep.mubr.bf16.mxu0 %v4962
    %6871 = vmatmul.mubr.bf16.gmra.mrb[0].mxu0 %v4961
    %v6872 = vpop.f32.mrb[0].mxu0
    %v6873 = vadd.f32 %v6680, %v6872
    %v6874 = vpop.f32.mrb[0].mxu0
    %v6875 = vadd.f32 %v6682, %v6874
    %v6876 = vpop.f32.mrb[0].mxu0
    %v6877 = vadd.f32 %v6684, %v6876
    %v6878 = vpop.f32.mrb[0].mxu0
    %v6879 = vadd.f32 %v6686, %v6878
    %6880 = vmatprep.mubr.bf16.mxu0 %v4970
    %6881 = vmatmul.mubr.bf16.gmra.mrb[0].mxu0 %v4969
    %v6882 = vpop.f32.mrb[0].mxu0
    %v6883 = vadd.f32 %v6690, %v6882
    %v6884 = vpop.f32.mrb[0].mxu0
    %v6885 = vadd.f32 %v6692, %v6884
    %v6886 = vpop.f32.mrb[0].mxu0
    %v6887 = vadd.f32 %v6694, %v6886
    %v6888 = vpop.f32.mrb[0].mxu0
    %v6889 = vadd.f32 %v6696, %v6888
    %6890 = vmatprep.mubr.bf16.mxu0 %v4978
    %6891 = vmatmul.mubr.bf16.gmra.mrb[0].mxu0 %v4977
    %v6892 = vpop.f32.mrb[0].mxu0
    %v6893 = vadd.f32 %v6700, %v6892
    %v6894 = vpop.f32.mrb[0].mxu0
    %v6895 = vadd.f32 %v6702, %v6894
    %v6896 = vpop.f32.mrb[0].mxu0
    %v6897 = vadd.f32 %v6704, %v6896
    %v6898 = vpop.f32.mrb[0].mxu0
    %v6899 = vadd.f32 %v6706, %v6898
    %6900 = vmatprep.mubr.bf16.mxu0 %v4986
    %6901 = vmatmul.mubr.bf16.gmra.mrb[0].mxu0 %v4985
    %v6902 = vpop.f32.mrb[0].mxu0
    %v6903 = vadd.f32 %v6710, %v6902
    %v6904 = vpop.f32.mrb[0].mxu0
    %v6905 = vadd.f32 %v6712, %v6904
    %v6906 = vpop.f32.mrb[0].mxu0
    %v6907 = vadd.f32 %v6714, %v6906
    %v6908 = vpop.f32.mrb[0].mxu0
    %v6909 = vadd.f32 %v6716, %v6908
    %6910 = vmatprep.mubr.bf16.mxu0 %v4994
    %6911 = vmatmul.mubr.bf16.gmra.mrb[0].mxu0 %v4993
    %v6912 = vpop.f32.mrb[0].mxu0
    %v6913 = vadd.f32 %v6720, %v6912
    %v6914 = vpop.f32.mrb[0].mxu0
    %v6915 = vadd.f32 %v6722, %v6914
    %v6916 = vpop.f32.mrb[0].mxu0
    %v6917 = vadd.f32 %v6724, %v6916
    %v6918 = vpop.f32.mrb[0].mxu0
    %v6919 = vadd.f32 %v6726, %v6918
    %6920 = vmatprep.mubr.bf16.mxu0 %v5002
    %6921 = vmatmul.mubr.bf16.gmra.mrb[0].mxu0 %v5001
    %v6922 = vpop.f32.mrb[0].mxu0
    %v6923 = vadd.f32 %v6730, %v6922
    %v6924 = vpop.f32.mrb[0].mxu0
    %v6925 = vadd.f32 %v6732, %v6924
    %v6926 = vpop.f32.mrb[0].mxu0
    %v6927 = vadd.f32 %v6734, %v6926
    %v6928 = vpop.f32.mrb[0].mxu0
    %v6929 = vadd.f32 %v6736, %v6928
    %6930 = vmatprep.mubr.bf16.mxu0 %v5010
    %6931 = vmatmul.mubr.bf16.gmra.mrb[0].mxu0 %v5009
    %v6932 = vpop.f32.mrb[0].mxu0
    %v6933 = vadd.f32 %v6740, %v6932
    %v6934 = vpop.f32.mrb[0].mxu0
    %v6935 = vadd.f32 %v6742, %v6934
    %v6936 = vpop.f32.mrb[0].mxu0
    %v6937 = vadd.f32 %v6744, %v6936
    %v6938 = vpop.f32.mrb[0].mxu0
    %v6939 = vadd.f32 %v6746, %v6938
    %6940 = vmatprep.mubr.bf16.mxu0 %v5018
    %6941 = vmatmul.mubr.bf16.gmra.mrb[0].mxu0 %v5017
    %v6942 = vpop.f32.mrb[0].mxu0
    %v6943 = vadd.f32 %v6750, %v6942
    %v6944 = vpop.f32.mrb[0].mxu0
    %v6945 = vadd.f32 %v6752, %v6944
    %v6946 = vpop.f32.mrb[0].mxu0
    %v6947 = vadd.f32 %v6754, %v6946
    %v6948 = vpop.f32.mrb[0].mxu0
    %v6949 = vadd.f32 %v6756, %v6948
    %6950 = vmatprep.mubr.bf16.mxu0 %v5026
    %6951 = vmatmul.mubr.bf16.gmra.mrb[0].mxu0 %v5025
    %v6952 = vpop.f32.mrb[0].mxu0
    %v6953 = vadd.f32 %v6760, %v6952
    %v6954 = vpop.f32.mrb[0].mxu0
    %v6955 = vadd.f32 %v6762, %v6954
    %v6956 = vpop.f32.mrb[0].mxu0
    %v6957 = vadd.f32 %v6764, %v6956
    %v6958 = vpop.f32.mrb[0].mxu0
    %v6959 = vadd.f32 %v6766, %v6958
    %6960 = vmatprep.mubr.bf16.mxu0 %v5034
    %6961 = vmatmul.mubr.bf16.gmra.mrb[0].mxu0 %v5033
    %v6962 = vpop.f32.mrb[0].mxu0
    %v6963 = vadd.f32 %v6770, %v6962
    %v6964 = vpop.f32.mrb[0].mxu0
    %v6965 = vadd.f32 %v6772, %v6964
    %v6966 = vpop.f32.mrb[0].mxu0
    %v6967 = vadd.f32 %v6774, %v6966
    %v6968 = vpop.f32.mrb[0].mxu0
    %v6969 = vadd.f32 %v6776, %v6968
    %6970 = vmatprep.mubr.bf16.mxu0 %v5042
    %6971 = vmatmul.mubr.bf16.gmra.mrb[0].mxu0 %v5041
    %v6972 = vpop.f32.mrb[0].mxu0
    %v6973 = vadd.f32 %v6780, %v6972
    %v6974 = vpop.f32.mrb[0].mxu0
    %v6975 = vadd.f32 %v6782, %v6974
    %v6976 = vpop.f32.mrb[0].mxu0
    %v6977 = vadd.f32 %v6784, %v6976
    %v6978 = vpop.f32.mrb[0].mxu0
    %v6979 = vadd.f32 %v6786, %v6978
    %6980 = vmatprep.mubr.bf16.mxu0 %v5050
    %6981 = vmatmul.mubr.bf16.gmra.mrb[0].mxu0 %v5049
    %v6982 = vpop.f32.mrb[0].mxu0
    %v6983 = vadd.f32 %v6790, %v6982
    %v6984 = vpop.f32.mrb[0].mxu0
    %v6985 = vadd.f32 %v6792, %v6984
    %v6986 = vpop.f32.mrb[0].mxu0
    %v6987 = vadd.f32 %v6794, %v6986
    %v6988 = vpop.f32.mrb[0].mxu0
    %v6989 = vadd.f32 %v6796, %v6988
    %6990 = vmatprep.mubr.bf16.mxu0 %v5058
    %6991 = vmatmul.mubr.bf16.gmra.mrb[0].mxu0 %v5057
    %v6992 = vpop.f32.mrb[0].mxu0
    %v6993 = vadd.f32 %v6800, %v6992
    %v6994 = vpop.f32.mrb[0].mxu0
    %v6995 = vadd.f32 %v6802, %v6994
    %v6996 = vpop.f32.mrb[0].mxu0
    %v6997 = vadd.f32 %v6804, %v6996
    %v6998 = vpop.f32.mrb[0].mxu0
    %v6999 = vadd.f32 %v6806, %v6998
    %7000 = vmatprep.mubr.bf16.mxu0 %v5066
    %7001 = vmatmul.mubr.bf16.gmra.mrb[0].mxu0 %v5065
    %v7002 = vpop.f32.mrb[0].mxu0
    %v7003 = vadd.f32 %v6810, %v7002
    %v7004 = vpop.f32.mrb[0].mxu0
    %v7005 = vadd.f32 %v6812, %v7004
    %v7006 = vpop.f32.mrb[0].mxu0
    %v7007 = vadd.f32 %v6814, %v7006
    %v7008 = vpop.f32.mrb[0].mxu0
    %v7009 = vadd.f32 %v6816, %v7008
    %7010 = vmatprep.mubr.bf16.mxu0 %v5074
    %7011 = vmatmul.mubr.bf16.gmra.mrb[0].mxu0 %v5073
    %v7012 = vpop.f32.mrb[0].mxu0
    %v7013 = vadd.f32 %v6820, %v7012
    %v7014 = vpop.f32.mrb[0].mxu0
    %v7015 = vadd.f32 %v6822, %v7014
    %v7016 = vpop.f32.mrb[0].mxu0
    %v7017 = vadd.f32 %v6824, %v7016
    %v7018 = vpop.f32.mrb[0].mxu0
    %v7019 = vadd.f32 %v6826, %v7018
    %7020 = vmatprep.mubr.bf16.mxu0 %v5082
    %7021 = vmatmul.mubr.bf16.gmra.mrb[0].mxu0 %v5081
    %v7022 = vpop.f32.mrb[0].mxu0
    %v7023 = vadd.f32 %v6830, %v7022
    %v7024 = vpop.f32.mrb[0].mxu0
    %v7025 = vadd.f32 %v6832, %v7024
    %v7026 = vpop.f32.mrb[0].mxu0
    %v7027 = vadd.f32 %v6834, %v7026
    %v7028 = vpop.f32.mrb[0].mxu0
    %v7029 = vadd.f32 %v6836, %v7028
    %7030 = vdwg.mxu0
    %7031 = vmatprep.subr.bf16.mxu0 %v6262
    %7032 = vmatpush1.bf16.msra.mxu0 %v6261
    %7033 = vmatprep.subr.bf16.mxu0 %v6266
    %7034 = vmatpush1.bf16.msra.mxu0 %v6265
    %7035 = vmatprep.subr.bf16.mxu0 %v6270
    %7036 = vmatpush1.bf16.msra.mxu0 %v6269
    %7037 = vmatprep.subr.bf16.mxu0 %v6274
    %7038 = vmatpush1.bf16.msra.mxu0 %v6273
    %7039 = vmatprep.subr.bf16.mxu0 %v6278
    %7040 = vmatpush1.bf16.msra.mxu0 %v6277
    %7041 = vmatprep.subr.bf16.mxu0 %v6282
    %7042 = vmatpush1.bf16.msra.mxu0 %v6281
    %7043 = vmatprep.subr.bf16.mxu0 %v6286
    %7044 = vmatpush1.bf16.msra.mxu0 %v6285
    %7045 = vmatprep.subr.bf16.mxu0 %v6290
    %7046 = vmatpush1.bf16.msra.mxu0 %v6289
    %7047 = vmatprep.subr.bf16.mxu0 %v6294
    %7048 = vmatpush1.bf16.msra.mxu0 %v6293
    %7049 = vmatprep.subr.bf16.mxu0 %v6298
    %7050 = vmatpush1.bf16.msra.mxu0 %v6297
    %7051 = vmatprep.subr.bf16.mxu0 %v6302
    %7052 = vmatpush1.bf16.msra.mxu0 %v6301
    %7053 = vmatprep.subr.bf16.mxu0 %v6306
    %7054 = vmatpush1.bf16.msra.mxu0 %v6305
    %7055 = vmatprep.subr.bf16.mxu0 %v6310
    %7056 = vmatpush1.bf16.msra.mxu0 %v6309
    %7057 = vmatprep.subr.bf16.mxu0 %v6314
    %7058 = vmatpush1.bf16.msra.mxu0 %v6313
    %7059 = vmatprep.subr.bf16.mxu0 %v6318
    %7060 = vmatpush1.bf16.msra.mxu0 %v6317
    %7061 = vmatprep.subr.bf16.mxu0 %v6322
    %7062 = vmatpush1.bf16.msra.mxu0 %v6321
    %7063 = vmatprep.mubr.bf16.mxu0 %v4964
    %7064 = vmatmul.mubr.bf16.gmra.mrb[0].mxu0 %v4963
    %v7065 = vpop.f32.mrb[0].mxu0
    %v7066 = vadd.f32 %v6873, %v7065
    %v7067 = vpop.f32.mrb[0].mxu0
    %v7068 = vadd.f32 %v6875, %v7067
    %v7069 = vpop.f32.mrb[0].mxu0
    %v7070 = vadd.f32 %v6877, %v7069
    %v7071 = vpop.f32.mrb[0].mxu0
    %v7072 = vadd.f32 %v6879, %v7071
    %7073 = vmatprep.mubr.bf16.mxu0 %v4972
    %7074 = vmatmul.mubr.bf16.gmra.mrb[0].mxu0 %v4971
    %v7075 = vpop.f32.mrb[0].mxu0
    %v7076 = vadd.f32 %v6883, %v7075
    %v7077 = vpop.f32.mrb[0].mxu0
    %v7078 = vadd.f32 %v6885, %v7077
    %v7079 = vpop.f32.mrb[0].mxu0
    %v7080 = vadd.f32 %v6887, %v7079
    %v7081 = vpop.f32.mrb[0].mxu0
    %v7082 = vadd.f32 %v6889, %v7081
    %7083 = vmatprep.mubr.bf16.mxu0 %v4980
    %7084 = vmatmul.mubr.bf16.gmra.mrb[0].mxu0 %v4979
    %v7085 = vpop.f32.mrb[0].mxu0
    %v7086 = vadd.f32 %v6893, %v7085
    %v7087 = vpop.f32.mrb[0].mxu0
    %v7088 = vadd.f32 %v6895, %v7087
    %v7089 = vpop.f32.mrb[0].mxu0
    %v7090 = vadd.f32 %v6897, %v7089
    %v7091 = vpop.f32.mrb[0].mxu0
    %v7092 = vadd.f32 %v6899, %v7091
    %7093 = vmatprep.mubr.bf16.mxu0 %v4988
    %7094 = vmatmul.mubr.bf16.gmra.mrb[0].mxu0 %v4987
    %v7095 = vpop.f32.mrb[0].mxu0
    %v7096 = vadd.f32 %v6903, %v7095
    %v7097 = vpop.f32.mrb[0].mxu0
    %v7098 = vadd.f32 %v6905, %v7097
    %v7099 = vpop.f32.mrb[0].mxu0
    %v7100 = vadd.f32 %v6907, %v7099
    %v7101 = vpop.f32.mrb[0].mxu0
    %v7102 = vadd.f32 %v6909, %v7101
    %7103 = vmatprep.mubr.bf16.mxu0 %v4996
    %7104 = vmatmul.mubr.bf16.gmra.mrb[0].mxu0 %v4995
    %v7105 = vpop.f32.mrb[0].mxu0
    %v7106 = vadd.f32 %v6913, %v7105
    %v7107 = vpop.f32.mrb[0].mxu0
    %v7108 = vadd.f32 %v6915, %v7107
    %v7109 = vpop.f32.mrb[0].mxu0
    %v7110 = vadd.f32 %v6917, %v7109
    %v7111 = vpop.f32.mrb[0].mxu0
    %v7112 = vadd.f32 %v6919, %v7111
    %7113 = vmatprep.mubr.bf16.mxu0 %v5004
    %7114 = vmatmul.mubr.bf16.gmra.mrb[0].mxu0 %v5003
    %v7115 = vpop.f32.mrb[0].mxu0
    %v7116 = vadd.f32 %v6923, %v7115
    %v7117 = vpop.f32.mrb[0].mxu0
    %v7118 = vadd.f32 %v6925, %v7117
    %v7119 = vpop.f32.mrb[0].mxu0
    %v7120 = vadd.f32 %v6927, %v7119
    %v7121 = vpop.f32.mrb[0].mxu0
    %v7122 = vadd.f32 %v6929, %v7121
    %7123 = vmatprep.mubr.bf16.mxu0 %v5012
    %7124 = vmatmul.mubr.bf16.gmra.mrb[0].mxu0 %v5011
    %v7125 = vpop.f32.mrb[0].mxu0
    %v7126 = vadd.f32 %v6933, %v7125
    %v7127 = vpop.f32.mrb[0].mxu0
    %v7128 = vadd.f32 %v6935, %v7127
    %v7129 = vpop.f32.mrb[0].mxu0
    %v7130 = vadd.f32 %v6937, %v7129
    %v7131 = vpop.f32.mrb[0].mxu0
    %v7132 = vadd.f32 %v6939, %v7131
    %7133 = vmatprep.mubr.bf16.mxu0 %v5020
    %7134 = vmatmul.mubr.bf16.gmra.mrb[0].mxu0 %v5019
    %v7135 = vpop.f32.mrb[0].mxu0
    %v7136 = vadd.f32 %v6943, %v7135
    %v7137 = vpop.f32.mrb[0].mxu0
    %v7138 = vadd.f32 %v6945, %v7137
    %v7139 = vpop.f32.mrb[0].mxu0
    %v7140 = vadd.f32 %v6947, %v7139
    %v7141 = vpop.f32.mrb[0].mxu0
    %v7142 = vadd.f32 %v6949, %v7141
    %7143 = vmatprep.mubr.bf16.mxu0 %v5028
    %7144 = vmatmul.mubr.bf16.gmra.mrb[0].mxu0 %v5027
    %v7145 = vpop.f32.mrb[0].mxu0
    %v7146 = vadd.f32 %v6953, %v7145
    %v7147 = vpop.f32.mrb[0].mxu0
    %v7148 = vadd.f32 %v6955, %v7147
    %v7149 = vpop.f32.mrb[0].mxu0
    %v7150 = vadd.f32 %v6957, %v7149
    %v7151 = vpop.f32.mrb[0].mxu0
    %v7152 = vadd.f32 %v6959, %v7151
    %7153 = vmatprep.mubr.bf16.mxu0 %v5036
    %7154 = vmatmul.mubr.bf16.gmra.mrb[0].mxu0 %v5035
    %v7155 = vpop.f32.mrb[0].mxu0
    %v7156 = vadd.f32 %v6963, %v7155
    %v7157 = vpop.f32.mrb[0].mxu0
    %v7158 = vadd.f32 %v6965, %v7157
    %v7159 = vpop.f32.mrb[0].mxu0
    %v7160 = vadd.f32 %v6967, %v7159
    %v7161 = vpop.f32.mrb[0].mxu0
    %v7162 = vadd.f32 %v6969, %v7161
    %7163 = vmatprep.mubr.bf16.mxu0 %v5044
    %7164 = vmatmul.mubr.bf16.gmra.mrb[0].mxu0 %v5043
    %v7165 = vpop.f32.mrb[0].mxu0
    %v7166 = vadd.f32 %v6973, %v7165
    %v7167 = vpop.f32.mrb[0].mxu0
    %v7168 = vadd.f32 %v6975, %v7167
    %v7169 = vpop.f32.mrb[0].mxu0
    %v7170 = vadd.f32 %v6977, %v7169
    %v7171 = vpop.f32.mrb[0].mxu0
    %v7172 = vadd.f32 %v6979, %v7171
    %7173 = vmatprep.mubr.bf16.mxu0 %v5052
    %7174 = vmatmul.mubr.bf16.gmra.mrb[0].mxu0 %v5051
    %v7175 = vpop.f32.mrb[0].mxu0
    %v7176 = vadd.f32 %v6983, %v7175
    %v7177 = vpop.f32.mrb[0].mxu0
    %v7178 = vadd.f32 %v6985, %v7177
    %v7179 = vpop.f32.mrb[0].mxu0
    %v7180 = vadd.f32 %v6987, %v7179
    %v7181 = vpop.f32.mrb[0].mxu0
    %v7182 = vadd.f32 %v6989, %v7181
    %7183 = vmatprep.mubr.bf16.mxu0 %v5060
    %7184 = vmatmul.mubr.bf16.gmra.mrb[0].mxu0 %v5059
    %v7185 = vpop.f32.mrb[0].mxu0
    %v7186 = vadd.f32 %v6993, %v7185
    %v7187 = vpop.f32.mrb[0].mxu0
    %v7188 = vadd.f32 %v6995, %v7187
    %v7189 = vpop.f32.mrb[0].mxu0
    %v7190 = vadd.f32 %v6997, %v7189
    %v7191 = vpop.f32.mrb[0].mxu0
    %v7192 = vadd.f32 %v6999, %v7191
    %7193 = vmatprep.mubr.bf16.mxu0 %v5068
    %7194 = vmatmul.mubr.bf16.gmra.mrb[0].mxu0 %v5067
    %v7195 = vpop.f32.mrb[0].mxu0
    %v7196 = vadd.f32 %v7003, %v7195
    %v7197 = vpop.f32.mrb[0].mxu0
    %v7198 = vadd.f32 %v7005, %v7197
    %v7199 = vpop.f32.mrb[0].mxu0
    %v7200 = vadd.f32 %v7007, %v7199
    %v7201 = vpop.f32.mrb[0].mxu0
    %v7202 = vadd.f32 %v7009, %v7201
    %7203 = vmatprep.mubr.bf16.mxu0 %v5076
    %7204 = vmatmul.mubr.bf16.gmra.mrb[0].mxu0 %v5075
    %v7205 = vpop.f32.mrb[0].mxu0
    %v7206 = vadd.f32 %v7013, %v7205
    %v7207 = vpop.f32.mrb[0].mxu0
    %v7208 = vadd.f32 %v7015, %v7207
    %v7209 = vpop.f32.mrb[0].mxu0
    %v7210 = vadd.f32 %v7017, %v7209
    %v7211 = vpop.f32.mrb[0].mxu0
    %v7212 = vadd.f32 %v7019, %v7211
    %7213 = vmatprep.mubr.bf16.mxu0 %v5084
    %7214 = vmatmul.mubr.bf16.gmra.mrb[0].mxu0 %v5083
    %v7215 = vpop.f32.mrb[0].mxu0
    %v7216 = vadd.f32 %v7023, %v7215
    %v7217 = vpop.f32.mrb[0].mxu0
    %v7218 = vadd.f32 %v7025, %v7217
    %v7219 = vpop.f32.mrb[0].mxu0
    %v7220 = vadd.f32 %v7027, %v7219
    %v7221 = vpop.f32.mrb[0].mxu0
    %v7222 = vadd.f32 %v7029, %v7221
    %7223 = vdwg.mxu0
    %7224 = vmatprep.subr.bf16.mxu0 %v6326
    %7225 = vmatpush1.bf16.msra.mxu0 %v6325
    %7226 = vmatprep.subr.bf16.mxu0 %v6330
    %7227 = vmatpush1.bf16.msra.mxu0 %v6329
    %7228 = vmatprep.subr.bf16.mxu0 %v6334
    %7229 = vmatpush1.bf16.msra.mxu0 %v6333
    %7230 = vmatprep.subr.bf16.mxu0 %v6338
    %7231 = vmatpush1.bf16.msra.mxu0 %v6337
    %7232 = vmatprep.subr.bf16.mxu0 %v6342
    %7233 = vmatpush1.bf16.msra.mxu0 %v6341
    %7234 = vmatprep.subr.bf16.mxu0 %v6346
    %7235 = vmatpush1.bf16.msra.mxu0 %v6345
    %7236 = vmatprep.subr.bf16.mxu0 %v6350
    %7237 = vmatpush1.bf16.msra.mxu0 %v6349
    %7238 = vmatprep.subr.bf16.mxu0 %v6354
    %7239 = vmatpush1.bf16.msra.mxu0 %v6353
    %7240 = vmatprep.subr.bf16.mxu0 %v6358
    %7241 = vmatpush1.bf16.msra.mxu0 %v6357
    %7242 = vmatprep.subr.bf16.mxu0 %v6362
    %7243 = vmatpush1.bf16.msra.mxu0 %v6361
    %7244 = vmatprep.subr.bf16.mxu0 %v6366
    %7245 = vmatpush1.bf16.msra.mxu0 %v6365
    %7246 = vmatprep.subr.bf16.mxu0 %v6370
    %7247 = vmatpush1.bf16.msra.mxu0 %v6369
    %7248 = vmatprep.subr.bf16.mxu0 %v6374
    %7249 = vmatpush1.bf16.msra.mxu0 %v6373
    %7250 = vmatprep.subr.bf16.mxu0 %v6378
    %7251 = vmatpush1.bf16.msra.mxu0 %v6377
    %7252 = vmatprep.subr.bf16.mxu0 %v6382
    %7253 = vmatpush1.bf16.msra.mxu0 %v6381
    %7254 = vmatprep.subr.bf16.mxu0 %v6386
    %7255 = vmatpush1.bf16.msra.mxu0 %v6385
    %7256 = vmatprep.mubr.bf16.mxu0 %v4966
    %7257 = vmatmul.mubr.bf16.gmra.mrb[0].mxu0 %v4965
    %v7258 = vpop.f32.mrb[0].mxu0
    %v7259 = vadd.f32 %v7066, %v7258
    %v7260 = vpop.f32.mrb[0].mxu0
    %v7261 = vadd.f32 %v7068, %v7260
    %v7262 = vpop.f32.mrb[0].mxu0
    %v7263 = vadd.f32 %v7070, %v7262
    %v7264 = vpop.f32.mrb[0].mxu0
    %v7265 = vadd.f32 %v7072, %v7264
    %7266 = vmatprep.mubr.bf16.mxu0 %v4974
    %7267 = vmatmul.mubr.bf16.gmra.mrb[0].mxu0 %v4973
    %v7268 = vpop.f32.mrb[0].mxu0
    %v7269 = vadd.f32 %v7076, %v7268
    %v7270 = vpop.f32.mrb[0].mxu0
    %v7271 = vadd.f32 %v7078, %v7270
    %v7272 = vpop.f32.mrb[0].mxu0
    %v7273 = vadd.f32 %v7080, %v7272
    %v7274 = vpop.f32.mrb[0].mxu0
    %v7275 = vadd.f32 %v7082, %v7274
    %7276 = vmatprep.mubr.bf16.mxu0 %v4982
    %7277 = vmatmul.mubr.bf16.gmra.mrb[0].mxu0 %v4981
    %v7278 = vpop.f32.mrb[0].mxu0
    %v7279 = vadd.f32 %v7086, %v7278
    %v7280 = vpop.f32.mrb[0].mxu0
    %v7281 = vadd.f32 %v7088, %v7280
    %v7282 = vpop.f32.mrb[0].mxu0
    %v7283 = vadd.f32 %v7090, %v7282
    %v7284 = vpop.f32.mrb[0].mxu0
    %v7285 = vadd.f32 %v7092, %v7284
    %7286 = vmatprep.mubr.bf16.mxu0 %v4990
    %7287 = vmatmul.mubr.bf16.gmra.mrb[0].mxu0 %v4989
    %v7288 = vpop.f32.mrb[0].mxu0
    %v7289 = vadd.f32 %v7096, %v7288
    %v7290 = vpop.f32.mrb[0].mxu0
    %v7291 = vadd.f32 %v7098, %v7290
    %v7292 = vpop.f32.mrb[0].mxu0
    %v7293 = vadd.f32 %v7100, %v7292
    %v7294 = vpop.f32.mrb[0].mxu0
    %v7295 = vadd.f32 %v7102, %v7294
    %7296 = vmatprep.mubr.bf16.mxu0 %v4998
    %7297 = vmatmul.mubr.bf16.gmra.mrb[0].mxu0 %v4997
    %v7298 = vpop.f32.mrb[0].mxu0
    %v7299 = vadd.f32 %v7106, %v7298
    %v7300 = vpop.f32.mrb[0].mxu0
    %v7301 = vadd.f32 %v7108, %v7300
    %v7302 = vpop.f32.mrb[0].mxu0
    %v7303 = vadd.f32 %v7110, %v7302
    %v7304 = vpop.f32.mrb[0].mxu0
    %v7305 = vadd.f32 %v7112, %v7304
    %7306 = vmatprep.mubr.bf16.mxu0 %v5006
    %7307 = vmatmul.mubr.bf16.gmra.mrb[0].mxu0 %v5005
    %v7308 = vpop.f32.mrb[0].mxu0
    %v7309 = vadd.f32 %v7116, %v7308
    %v7310 = vpop.f32.mrb[0].mxu0
    %v7311 = vadd.f32 %v7118, %v7310
    %v7312 = vpop.f32.mrb[0].mxu0
    %v7313 = vadd.f32 %v7120, %v7312
    %v7314 = vpop.f32.mrb[0].mxu0
    %v7315 = vadd.f32 %v7122, %v7314
    %7316 = vmatprep.mubr.bf16.mxu0 %v5014
    %7317 = vmatmul.mubr.bf16.gmra.mrb[0].mxu0 %v5013
    %v7318 = vpop.f32.mrb[0].mxu0
    %v7319 = vadd.f32 %v7126, %v7318
    %v7320 = vpop.f32.mrb[0].mxu0
    %v7321 = vadd.f32 %v7128, %v7320
    %v7322 = vpop.f32.mrb[0].mxu0
    %v7323 = vadd.f32 %v7130, %v7322
    %v7324 = vpop.f32.mrb[0].mxu0
    %v7325 = vadd.f32 %v7132, %v7324
    %7326 = vmatprep.mubr.bf16.mxu0 %v5022
    %7327 = vmatmul.mubr.bf16.gmra.mrb[0].mxu0 %v5021
    %v7328 = vpop.f32.mrb[0].mxu0
    %v7329 = vadd.f32 %v7136, %v7328
    %v7330 = vpop.f32.mrb[0].mxu0
    %v7331 = vadd.f32 %v7138, %v7330
    %v7332 = vpop.f32.mrb[0].mxu0
    %v7333 = vadd.f32 %v7140, %v7332
    %v7334 = vpop.f32.mrb[0].mxu0
    %v7335 = vadd.f32 %v7142, %v7334
    %7336 = vmatprep.mubr.bf16.mxu0 %v5030
    %7337 = vmatmul.mubr.bf16.gmra.mrb[0].mxu0 %v5029
    %v7338 = vpop.f32.mrb[0].mxu0
    %v7339 = vadd.f32 %v7146, %v7338
    %v7340 = vpop.f32.mrb[0].mxu0
    %v7341 = vadd.f32 %v7148, %v7340
    %v7342 = vpop.f32.mrb[0].mxu0
    %v7343 = vadd.f32 %v7150, %v7342
    %v7344 = vpop.f32.mrb[0].mxu0
    %v7345 = vadd.f32 %v7152, %v7344
    %7346 = vmatprep.mubr.bf16.mxu0 %v5038
    %7347 = vmatmul.mubr.bf16.gmra.mrb[0].mxu0 %v5037
    %v7348 = vpop.f32.mrb[0].mxu0
    %v7349 = vadd.f32 %v7156, %v7348
    %v7350 = vpop.f32.mrb[0].mxu0
    %v7351 = vadd.f32 %v7158, %v7350
    %v7352 = vpop.f32.mrb[0].mxu0
    %v7353 = vadd.f32 %v7160, %v7352
    %v7354 = vpop.f32.mrb[0].mxu0
    %v7355 = vadd.f32 %v7162, %v7354
    %7356 = vmatprep.mubr.bf16.mxu0 %v5046
    %7357 = vmatmul.mubr.bf16.gmra.mrb[0].mxu0 %v5045
    %v7358 = vpop.f32.mrb[0].mxu0
    %v7359 = vadd.f32 %v7166, %v7358
    %v7360 = vpop.f32.mrb[0].mxu0
    %v7361 = vadd.f32 %v7168, %v7360
    %v7362 = vpop.f32.mrb[0].mxu0
    %v7363 = vadd.f32 %v7170, %v7362
    %v7364 = vpop.f32.mrb[0].mxu0
    %v7365 = vadd.f32 %v7172, %v7364
    %7366 = vmatprep.mubr.bf16.mxu0 %v5054
    %7367 = vmatmul.mubr.bf16.gmra.mrb[0].mxu0 %v5053
    %v7368 = vpop.f32.mrb[0].mxu0
    %v7369 = vadd.f32 %v7176, %v7368
    %v7370 = vpop.f32.mrb[0].mxu0
    %v7371 = vadd.f32 %v7178, %v7370
    %v7372 = vpop.f32.mrb[0].mxu0
    %v7373 = vadd.f32 %v7180, %v7372
    %v7374 = vpop.f32.mrb[0].mxu0
    %v7375 = vadd.f32 %v7182, %v7374
    %7376 = vmatprep.mubr.bf16.mxu0 %v5062
    %7377 = vmatmul.mubr.bf16.gmra.mrb[0].mxu0 %v5061
    %v7378 = vpop.f32.mrb[0].mxu0
    %v7379 = vadd.f32 %v7186, %v7378
    %v7380 = vpop.f32.mrb[0].mxu0
    %v7381 = vadd.f32 %v7188, %v7380
    %v7382 = vpop.f32.mrb[0].mxu0
    %v7383 = vadd.f32 %v7190, %v7382
    %v7384 = vpop.f32.mrb[0].mxu0
    %v7385 = vadd.f32 %v7192, %v7384
    %7386 = vmatprep.mubr.bf16.mxu0 %v5070
    %7387 = vmatmul.mubr.bf16.gmra.mrb[0].mxu0 %v5069
    %v7388 = vpop.f32.mrb[0].mxu0
    %v7389 = vadd.f32 %v7196, %v7388
    %v7390 = vpop.f32.mrb[0].mxu0
    %v7391 = vadd.f32 %v7198, %v7390
    %v7392 = vpop.f32.mrb[0].mxu0
    %v7393 = vadd.f32 %v7200, %v7392
    %v7394 = vpop.f32.mrb[0].mxu0
    %v7395 = vadd.f32 %v7202, %v7394
    %7396 = vmatprep.mubr.bf16.mxu0 %v5078
    %7397 = vmatmul.mubr.bf16.gmra.mrb[0].mxu0 %v5077
    %v7398 = vpop.f32.mrb[0].mxu0
    %v7399 = vadd.f32 %v7206, %v7398
    %v7400 = vpop.f32.mrb[0].mxu0
    %v7401 = vadd.f32 %v7208, %v7400
    %v7402 = vpop.f32.mrb[0].mxu0
    %v7403 = vadd.f32 %v7210, %v7402
    %v7404 = vpop.f32.mrb[0].mxu0
    %v7405 = vadd.f32 %v7212, %v7404
    %7406 = vmatprep.mubr.bf16.mxu0 %v5086
    %7407 = vmatmul.mubr.bf16.gmra.mrb[0].mxu0 %v5085
    %v7408 = vpop.f32.mrb[0].mxu0
    %v7409 = vadd.f32 %v7216, %v7408
    %v7410 = vpop.f32.mrb[0].mxu0
    %v7411 = vadd.f32 %v7218, %v7410
    %v7412 = vpop.f32.mrb[0].mxu0
    %v7413 = vadd.f32 %v7220, %v7412
    %v7414 = vpop.f32.mrb[0].mxu0
    %v7415 = vadd.f32 %v7222, %v7414
    %7416 = vdwg.mxu0
    %7417 = vmatprep.subr.bf16.mxu0 %v6136
    %7418 = vmatpush1.bf16.msra.mxu0 %v6135
    %7419 = vmatprep.subr.bf16.mxu0 %v6140
    %7420 = vmatpush1.bf16.msra.mxu0 %v6139
    %7421 = vmatprep.subr.bf16.mxu0 %v6144
    %7422 = vmatpush1.bf16.msra.mxu0 %v6143
    %7423 = vmatprep.subr.bf16.mxu0 %v6148
    %7424 = vmatpush1.bf16.msra.mxu0 %v6147
    %7425 = vmatprep.subr.bf16.mxu0 %v6152
    %7426 = vmatpush1.bf16.msra.mxu0 %v6151
    %7427 = vmatprep.subr.bf16.mxu0 %v6156
    %7428 = vmatpush1.bf16.msra.mxu0 %v6155
    %7429 = vmatprep.subr.bf16.mxu0 %v6160
    %7430 = vmatpush1.bf16.msra.mxu0 %v6159
    %7431 = vmatprep.subr.bf16.mxu0 %v6164
    %7432 = vmatpush1.bf16.msra.mxu0 %v6163
    %7433 = vmatprep.subr.bf16.mxu0 %v6168
    %7434 = vmatpush1.bf16.msra.mxu0 %v6167
    %7435 = vmatprep.subr.bf16.mxu0 %v6172
    %7436 = vmatpush1.bf16.msra.mxu0 %v6171
    %7437 = vmatprep.subr.bf16.mxu0 %v6176
    %7438 = vmatpush1.bf16.msra.mxu0 %v6175
    %7439 = vmatprep.subr.bf16.mxu0 %v6180
    %7440 = vmatpush1.bf16.msra.mxu0 %v6179
    %7441 = vmatprep.subr.bf16.mxu0 %v6184
    %7442 = vmatpush1.bf16.msra.mxu0 %v6183
    %7443 = vmatprep.subr.bf16.mxu0 %v6188
    %7444 = vmatpush1.bf16.msra.mxu0 %v6187
    %7445 = vmatprep.subr.bf16.mxu0 %v6192
    %7446 = vmatpush1.bf16.msra.mxu0 %v6191
    %7447 = vmatprep.subr.bf16.mxu0 %v6196
    %7448 = vmatpush1.bf16.msra.mxu0 %v6195
    %7449 = vmatprep.mubr.bf16.mxu0 %v4960
    %7450 = vmatmul.mubr.bf16.gmra.mrb[0].mxu0 %v4959
    %v7451 = vpop.f32.mrb[0].mxu0
    %v7452 = vadd.f32 %v5356, %v7451
    %v7453 = vpop.f32.mrb[0].mxu0
    %v7454 = vadd.f32 %v5360, %v7453
    %v7455 = vpop.f32.mrb[0].mxu0
    %v7456 = vadd.f32 %v5356, %v7455
    %v7457 = vpop.f32.mrb[0].mxu0
    %v7458 = vadd.f32 %v5360, %v7457
    %7459 = vmatprep.mubr.bf16.mxu0 %v4968
    %7460 = vmatmul.mubr.bf16.gmra.mrb[0].mxu0 %v4967
    %v7461 = vpop.f32.mrb[0].mxu0
    %v7462 = vadd.f32 %v5356, %v7461
    %v7463 = vpop.f32.mrb[0].mxu0
    %v7464 = vadd.f32 %v5360, %v7463
    %v7465 = vpop.f32.mrb[0].mxu0
    %v7466 = vadd.f32 %v5356, %v7465
    %v7467 = vpop.f32.mrb[0].mxu0
    %v7468 = vadd.f32 %v5360, %v7467
    %7469 = vmatprep.mubr.bf16.mxu0 %v4976
    %7470 = vmatmul.mubr.bf16.gmra.mrb[0].mxu0 %v4975
    %v7471 = vpop.f32.mrb[0].mxu0
    %v7472 = vadd.f32 %v5356, %v7471
    %v7473 = vpop.f32.mrb[0].mxu0
    %v7474 = vadd.f32 %v5360, %v7473
    %v7475 = vpop.f32.mrb[0].mxu0
    %v7476 = vadd.f32 %v5356, %v7475
    %v7477 = vpop.f32.mrb[0].mxu0
    %v7478 = vadd.f32 %v5360, %v7477
    %7479 = vmatprep.mubr.bf16.mxu0 %v4984
    %7480 = vmatmul.mubr.bf16.gmra.mrb[0].mxu0 %v4983
    %v7481 = vpop.f32.mrb[0].mxu0
    %v7482 = vadd.f32 %v5356, %v7481
    %v7483 = vpop.f32.mrb[0].mxu0
    %v7484 = vadd.f32 %v5360, %v7483
    %v7485 = vpop.f32.mrb[0].mxu0
    %v7486 = vadd.f32 %v5356, %v7485
    %v7487 = vpop.f32.mrb[0].mxu0
    %v7488 = vadd.f32 %v5360, %v7487
    %7489 = vmatprep.mubr.bf16.mxu0 %v4992
    %7490 = vmatmul.mubr.bf16.gmra.mrb[0].mxu0 %v4991
    %v7491 = vpop.f32.mrb[0].mxu0
    %v7492 = vadd.f32 %v5356, %v7491
    %v7493 = vpop.f32.mrb[0].mxu0
    %v7494 = vadd.f32 %v5360, %v7493
    %v7495 = vpop.f32.mrb[0].mxu0
    %v7496 = vadd.f32 %v5356, %v7495
    %v7497 = vpop.f32.mrb[0].mxu0
    %v7498 = vadd.f32 %v5360, %v7497
    %7499 = vmatprep.mubr.bf16.mxu0 %v5000
    %7500 = vmatmul.mubr.bf16.gmra.mrb[0].mxu0 %v4999
    %v7501 = vpop.f32.mrb[0].mxu0
    %v7502 = vadd.f32 %v5356, %v7501
    %v7503 = vpop.f32.mrb[0].mxu0
    %v7504 = vadd.f32 %v5360, %v7503
    %v7505 = vpop.f32.mrb[0].mxu0
    %v7506 = vadd.f32 %v5356, %v7505
    %v7507 = vpop.f32.mrb[0].mxu0
    %v7508 = vadd.f32 %v5360, %v7507
    %7509 = vmatprep.mubr.bf16.mxu0 %v5008
    %7510 = vmatmul.mubr.bf16.gmra.mrb[0].mxu0 %v5007
    %v7511 = vpop.f32.mrb[0].mxu0
    %v7512 = vadd.f32 %v5356, %v7511
    %v7513 = vpop.f32.mrb[0].mxu0
    %v7514 = vadd.f32 %v5360, %v7513
    %v7515 = vpop.f32.mrb[0].mxu0
    %v7516 = vadd.f32 %v5356, %v7515
    %v7517 = vpop.f32.mrb[0].mxu0
    %v7518 = vadd.f32 %v5360, %v7517
    %7519 = vmatprep.mubr.bf16.mxu0 %v5016
    %7520 = vmatmul.mubr.bf16.gmra.mrb[0].mxu0 %v5015
    %v7521 = vpop.f32.mrb[0].mxu0
    %v7522 = vadd.f32 %v5356, %v7521
    %v7523 = vpop.f32.mrb[0].mxu0
    %v7524 = vadd.f32 %v5360, %v7523
    %v7525 = vpop.f32.mrb[0].mxu0
    %v7526 = vadd.f32 %v5356, %v7525
    %v7527 = vpop.f32.mrb[0].mxu0
    %v7528 = vadd.f32 %v5360, %v7527
    %7529 = vmatprep.mubr.bf16.mxu0 %v5024
    %7530 = vmatmul.mubr.bf16.gmra.mrb[0].mxu0 %v5023
    %v7531 = vpop.f32.mrb[0].mxu0
    %v7532 = vadd.f32 %v5356, %v7531
    %v7533 = vpop.f32.mrb[0].mxu0
    %v7534 = vadd.f32 %v5360, %v7533
    %v7535 = vpop.f32.mrb[0].mxu0
    %v7536 = vadd.f32 %v5356, %v7535
    %v7537 = vpop.f32.mrb[0].mxu0
    %v7538 = vadd.f32 %v5360, %v7537
    %7539 = vmatprep.mubr.bf16.mxu0 %v5032
    %7540 = vmatmul.mubr.bf16.gmra.mrb[0].mxu0 %v5031
    %v7541 = vpop.f32.mrb[0].mxu0
    %v7542 = vadd.f32 %v5356, %v7541
    %v7543 = vpop.f32.mrb[0].mxu0
    %v7544 = vadd.f32 %v5360, %v7543
    %v7545 = vpop.f32.mrb[0].mxu0
    %v7546 = vadd.f32 %v5356, %v7545
    %v7547 = vpop.f32.mrb[0].mxu0
    %v7548 = vadd.f32 %v5360, %v7547
    %7549 = vmatprep.mubr.bf16.mxu0 %v5040
    %7550 = vmatmul.mubr.bf16.gmra.mrb[0].mxu0 %v5039
    %v7551 = vpop.f32.mrb[0].mxu0
    %v7552 = vadd.f32 %v5356, %v7551
    %v7553 = vpop.f32.mrb[0].mxu0
    %v7554 = vadd.f32 %v5360, %v7553
    %v7555 = vpop.f32.mrb[0].mxu0
    %v7556 = vadd.f32 %v5356, %v7555
    %v7557 = vpop.f32.mrb[0].mxu0
    %v7558 = vadd.f32 %v5360, %v7557
    %7559 = vmatprep.mubr.bf16.mxu0 %v5048
    %7560 = vmatmul.mubr.bf16.gmra.mrb[0].mxu0 %v5047
    %v7561 = vpop.f32.mrb[0].mxu0
    %v7562 = vadd.f32 %v5356, %v7561
    %v7563 = vpop.f32.mrb[0].mxu0
    %v7564 = vadd.f32 %v5360, %v7563
    %v7565 = vpop.f32.mrb[0].mxu0
    %v7566 = vadd.f32 %v5356, %v7565
    %v7567 = vpop.f32.mrb[0].mxu0
    %v7568 = vadd.f32 %v5360, %v7567
    %7569 = vmatprep.mubr.bf16.mxu0 %v5056
    %7570 = vmatmul.mubr.bf16.gmra.mrb[0].mxu0 %v5055
    %v7571 = vpop.f32.mrb[0].mxu0
    %v7572 = vadd.f32 %v5356, %v7571
    %v7573 = vpop.f32.mrb[0].mxu0
    %v7574 = vadd.f32 %v5360, %v7573
    %v7575 = vpop.f32.mrb[0].mxu0
    %v7576 = vadd.f32 %v5356, %v7575
    %v7577 = vpop.f32.mrb[0].mxu0
    %v7578 = vadd.f32 %v5360, %v7577
    %7579 = vmatprep.mubr.bf16.mxu0 %v5064
    %7580 = vmatmul.mubr.bf16.gmra.mrb[0].mxu0 %v5063
    %v7581 = vpop.f32.mrb[0].mxu0
    %v7582 = vadd.f32 %v5356, %v7581
    %v7583 = vpop.f32.mrb[0].mxu0
    %v7584 = vadd.f32 %v5360, %v7583
    %v7585 = vpop.f32.mrb[0].mxu0
    %v7586 = vadd.f32 %v5356, %v7585
    %v7587 = vpop.f32.mrb[0].mxu0
    %v7588 = vadd.f32 %v5360, %v7587
    %7589 = vmatprep.mubr.bf16.mxu0 %v5072
    %7590 = vmatmul.mubr.bf16.gmra.mrb[0].mxu0 %v5071
    %v7591 = vpop.f32.mrb[0].mxu0
    %v7592 = vadd.f32 %v5356, %v7591
    %v7593 = vpop.f32.mrb[0].mxu0
    %v7594 = vadd.f32 %v5360, %v7593
    %v7595 = vpop.f32.mrb[0].mxu0
    %v7596 = vadd.f32 %v5356, %v7595
    %v7597 = vpop.f32.mrb[0].mxu0
    %v7598 = vadd.f32 %v5360, %v7597
    %7599 = vmatprep.mubr.bf16.mxu0 %v5080
    %7600 = vmatmul.mubr.bf16.gmra.mrb[0].mxu0 %v5079
    %v7601 = vpop.f32.mrb[0].mxu0
    %v7602 = vadd.f32 %v5356, %v7601
    %v7603 = vpop.f32.mrb[0].mxu0
    %v7604 = vadd.f32 %v5360, %v7603
    %v7605 = vpop.f32.mrb[0].mxu0
    %v7606 = vadd.f32 %v5356, %v7605
    %v7607 = vpop.f32.mrb[0].mxu0
    %v7608 = vadd.f32 %v5360, %v7607
    %7609 = vdwg.mxu0
    %7610 = vmatprep.subr.bf16.mxu0 %v6200
    %7611 = vmatpush1.bf16.msra.mxu0 %v6199
    %7612 = vmatprep.subr.bf16.mxu0 %v6204
    %7613 = vmatpush1.bf16.msra.mxu0 %v6203
    %7614 = vmatprep.subr.bf16.mxu0 %v6208
    %7615 = vmatpush1.bf16.msra.mxu0 %v6207
    %7616 = vmatprep.subr.bf16.mxu0 %v6212
    %7617 = vmatpush1.bf16.msra.mxu0 %v6211
    %7618 = vmatprep.subr.bf16.mxu0 %v6216
    %7619 = vmatpush1.bf16.msra.mxu0 %v6215
    %7620 = vmatprep.subr.bf16.mxu0 %v6220
    %7621 = vmatpush1.bf16.msra.mxu0 %v6219
    %7622 = vmatprep.subr.bf16.mxu0 %v6224
    %7623 = vmatpush1.bf16.msra.mxu0 %v6223
    %7624 = vmatprep.subr.bf16.mxu0 %v6228
    %7625 = vmatpush1.bf16.msra.mxu0 %v6227
    %7626 = vmatprep.subr.bf16.mxu0 %v6232
    %7627 = vmatpush1.bf16.msra.mxu0 %v6231
    %7628 = vmatprep.subr.bf16.mxu0 %v6236
    %7629 = vmatpush1.bf16.msra.mxu0 %v6235
    %7630 = vmatprep.subr.bf16.mxu0 %v6240
    %7631 = vmatpush1.bf16.msra.mxu0 %v6239
    %7632 = vmatprep.subr.bf16.mxu0 %v6244
    %7633 = vmatpush1.bf16.msra.mxu0 %v6243
    %7634 = vmatprep.subr.bf16.mxu0 %v6248
    %7635 = vmatpush1.bf16.msra.mxu0 %v6247
    %7636 = vmatprep.subr.bf16.mxu0 %v6252
    %7637 = vmatpush1.bf16.msra.mxu0 %v6251
    %7638 = vmatprep.subr.bf16.mxu0 %v6256
    %7639 = vmatpush1.bf16.msra.mxu0 %v6255
    %7640 = vmatprep.subr.bf16.mxu0 %v6260
    %7641 = vmatpush1.bf16.msra.mxu0 %v6259
    %7642 = vmatprep.mubr.bf16.mxu0 %v4962
    %7643 = vmatmul.mubr.bf16.gmra.mrb[0].mxu0 %v4961
    %v7644 = vpop.f32.mrb[0].mxu0
    %v7645 = vadd.f32 %v7452, %v7644
    %v7646 = vpop.f32.mrb[0].mxu0
    %v7647 = vadd.f32 %v7454, %v7646
    %v7648 = vpop.f32.mrb[0].mxu0
    %v7649 = vadd.f32 %v7456, %v7648
    %v7650 = vpop.f32.mrb[0].mxu0
    %v7651 = vadd.f32 %v7458, %v7650
    %7652 = vmatprep.mubr.bf16.mxu0 %v4970
    %7653 = vmatmul.mubr.bf16.gmra.mrb[0].mxu0 %v4969
    %v7654 = vpop.f32.mrb[0].mxu0
    %v7655 = vadd.f32 %v7462, %v7654
    %v7656 = vpop.f32.mrb[0].mxu0
    %v7657 = vadd.f32 %v7464, %v7656
    %v7658 = vpop.f32.mrb[0].mxu0
    %v7659 = vadd.f32 %v7466, %v7658
    %v7660 = vpop.f32.mrb[0].mxu0
    %v7661 = vadd.f32 %v7468, %v7660
    %7662 = vmatprep.mubr.bf16.mxu0 %v4978
    %7663 = vmatmul.mubr.bf16.gmra.mrb[0].mxu0 %v4977
    %v7664 = vpop.f32.mrb[0].mxu0
    %v7665 = vadd.f32 %v7472, %v7664
    %v7666 = vpop.f32.mrb[0].mxu0
    %v7667 = vadd.f32 %v7474, %v7666
    %v7668 = vpop.f32.mrb[0].mxu0
    %v7669 = vadd.f32 %v7476, %v7668
    %v7670 = vpop.f32.mrb[0].mxu0
    %v7671 = vadd.f32 %v7478, %v7670
    %7672 = vmatprep.mubr.bf16.mxu0 %v4986
    %7673 = vmatmul.mubr.bf16.gmra.mrb[0].mxu0 %v4985
    %v7674 = vpop.f32.mrb[0].mxu0
    %v7675 = vadd.f32 %v7482, %v7674
    %v7676 = vpop.f32.mrb[0].mxu0
    %v7677 = vadd.f32 %v7484, %v7676
    %v7678 = vpop.f32.mrb[0].mxu0
    %v7679 = vadd.f32 %v7486, %v7678
    %v7680 = vpop.f32.mrb[0].mxu0
    %v7681 = vadd.f32 %v7488, %v7680
    %7682 = vmatprep.mubr.bf16.mxu0 %v4994
    %7683 = vmatmul.mubr.bf16.gmra.mrb[0].mxu0 %v4993
    %v7684 = vpop.f32.mrb[0].mxu0
    %v7685 = vadd.f32 %v7492, %v7684
    %v7686 = vpop.f32.mrb[0].mxu0
    %v7687 = vadd.f32 %v7494, %v7686
    %v7688 = vpop.f32.mrb[0].mxu0
    %v7689 = vadd.f32 %v7496, %v7688
    %v7690 = vpop.f32.mrb[0].mxu0
    %v7691 = vadd.f32 %v7498, %v7690
    %7692 = vmatprep.mubr.bf16.mxu0 %v5002
    %7693 = vmatmul.mubr.bf16.gmra.mrb[0].mxu0 %v5001
    %v7694 = vpop.f32.mrb[0].mxu0
    %v7695 = vadd.f32 %v7502, %v7694
    %v7696 = vpop.f32.mrb[0].mxu0
    %v7697 = vadd.f32 %v7504, %v7696
    %v7698 = vpop.f32.mrb[0].mxu0
    %v7699 = vadd.f32 %v7506, %v7698
    %v7700 = vpop.f32.mrb[0].mxu0
    %v7701 = vadd.f32 %v7508, %v7700
    %7702 = vmatprep.mubr.bf16.mxu0 %v5010
    %7703 = vmatmul.mubr.bf16.gmra.mrb[0].mxu0 %v5009
    %v7704 = vpop.f32.mrb[0].mxu0
    %v7705 = vadd.f32 %v7512, %v7704
    %v7706 = vpop.f32.mrb[0].mxu0
    %v7707 = vadd.f32 %v7514, %v7706
    %v7708 = vpop.f32.mrb[0].mxu0
    %v7709 = vadd.f32 %v7516, %v7708
    %v7710 = vpop.f32.mrb[0].mxu0
    %v7711 = vadd.f32 %v7518, %v7710
    %7712 = vmatprep.mubr.bf16.mxu0 %v5018
    %7713 = vmatmul.mubr.bf16.gmra.mrb[0].mxu0 %v5017
    %v7714 = vpop.f32.mrb[0].mxu0
    %v7715 = vadd.f32 %v7522, %v7714
    %v7716 = vpop.f32.mrb[0].mxu0
    %v7717 = vadd.f32 %v7524, %v7716
    %v7718 = vpop.f32.mrb[0].mxu0
    %v7719 = vadd.f32 %v7526, %v7718
    %v7720 = vpop.f32.mrb[0].mxu0
    %v7721 = vadd.f32 %v7528, %v7720
    %7722 = vmatprep.mubr.bf16.mxu0 %v5026
    %7723 = vmatmul.mubr.bf16.gmra.mrb[0].mxu0 %v5025
    %v7724 = vpop.f32.mrb[0].mxu0
    %v7725 = vadd.f32 %v7532, %v7724
    %v7726 = vpop.f32.mrb[0].mxu0
    %v7727 = vadd.f32 %v7534, %v7726
    %v7728 = vpop.f32.mrb[0].mxu0
    %v7729 = vadd.f32 %v7536, %v7728
    %v7730 = vpop.f32.mrb[0].mxu0
    %v7731 = vadd.f32 %v7538, %v7730
    %7732 = vmatprep.mubr.bf16.mxu0 %v5034
    %7733 = vmatmul.mubr.bf16.gmra.mrb[0].mxu0 %v5033
    %v7734 = vpop.f32.mrb[0].mxu0
    %v7735 = vadd.f32 %v7542, %v7734
    %v7736 = vpop.f32.mrb[0].mxu0
    %v7737 = vadd.f32 %v7544, %v7736
    %v7738 = vpop.f32.mrb[0].mxu0
    %v7739 = vadd.f32 %v7546, %v7738
    %v7740 = vpop.f32.mrb[0].mxu0
    %v7741 = vadd.f32 %v7548, %v7740
    %7742 = vmatprep.mubr.bf16.mxu0 %v5042
    %7743 = vmatmul.mubr.bf16.gmra.mrb[0].mxu0 %v5041
    %v7744 = vpop.f32.mrb[0].mxu0
    %v7745 = vadd.f32 %v7552, %v7744
    %v7746 = vpop.f32.mrb[0].mxu0
    %v7747 = vadd.f32 %v7554, %v7746
    %v7748 = vpop.f32.mrb[0].mxu0
    %v7749 = vadd.f32 %v7556, %v7748
    %v7750 = vpop.f32.mrb[0].mxu0
    %v7751 = vadd.f32 %v7558, %v7750
    %7752 = vmatprep.mubr.bf16.mxu0 %v5050
    %7753 = vmatmul.mubr.bf16.gmra.mrb[0].mxu0 %v5049
    %v7754 = vpop.f32.mrb[0].mxu0
    %v7755 = vadd.f32 %v7562, %v7754
    %v7756 = vpop.f32.mrb[0].mxu0
    %v7757 = vadd.f32 %v7564, %v7756
    %v7758 = vpop.f32.mrb[0].mxu0
    %v7759 = vadd.f32 %v7566, %v7758
    %v7760 = vpop.f32.mrb[0].mxu0
    %v7761 = vadd.f32 %v7568, %v7760
    %7762 = vmatprep.mubr.bf16.mxu0 %v5058
    %7763 = vmatmul.mubr.bf16.gmra.mrb[0].mxu0 %v5057
    %v7764 = vpop.f32.mrb[0].mxu0
    %v7765 = vadd.f32 %v7572, %v7764
    %v7766 = vpop.f32.mrb[0].mxu0
    %v7767 = vadd.f32 %v7574, %v7766
    %v7768 = vpop.f32.mrb[0].mxu0
    %v7769 = vadd.f32 %v7576, %v7768
    %v7770 = vpop.f32.mrb[0].mxu0
    %v7771 = vadd.f32 %v7578, %v7770
    %7772 = vmatprep.mubr.bf16.mxu0 %v5066
    %7773 = vmatmul.mubr.bf16.gmra.mrb[0].mxu0 %v5065
    %v7774 = vpop.f32.mrb[0].mxu0
    %v7775 = vadd.f32 %v7582, %v7774
    %v7776 = vpop.f32.mrb[0].mxu0
    %v7777 = vadd.f32 %v7584, %v7776
    %v7778 = vpop.f32.mrb[0].mxu0
    %v7779 = vadd.f32 %v7586, %v7778
    %v7780 = vpop.f32.mrb[0].mxu0
    %v7781 = vadd.f32 %v7588, %v7780
    %7782 = vmatprep.mubr.bf16.mxu0 %v5074
    %7783 = vmatmul.mubr.bf16.gmra.mrb[0].mxu0 %v5073
    %v7784 = vpop.f32.mrb[0].mxu0
    %v7785 = vadd.f32 %v7592, %v7784
    %v7786 = vpop.f32.mrb[0].mxu0
    %v7787 = vadd.f32 %v7594, %v7786
    %v7788 = vpop.f32.mrb[0].mxu0
    %v7789 = vadd.f32 %v7596, %v7788
    %v7790 = vpop.f32.mrb[0].mxu0
    %v7791 = vadd.f32 %v7598, %v7790
    %7792 = vmatprep.mubr.bf16.mxu0 %v5082
    %7793 = vmatmul.mubr.bf16.gmra.mrb[0].mxu0 %v5081
    %v7794 = vpop.f32.mrb[0].mxu0
    %v7795 = vadd.f32 %v7602, %v7794
    %v7796 = vpop.f32.mrb[0].mxu0
    %v7797 = vadd.f32 %v7604, %v7796
    %v7798 = vpop.f32.mrb[0].mxu0
    %v7799 = vadd.f32 %v7606, %v7798
    %v7800 = vpop.f32.mrb[0].mxu0
    %v7801 = vadd.f32 %v7608, %v7800
    %7802 = vdwg.mxu0
    %7803 = vmatprep.subr.bf16.mxu0 %v6264
    %7804 = vmatpush1.bf16.msra.mxu0 %v6263
    %7805 = vmatprep.subr.bf16.mxu0 %v6268
    %7806 = vmatpush1.bf16.msra.mxu0 %v6267
    %7807 = vmatprep.subr.bf16.mxu0 %v6272
    %7808 = vmatpush1.bf16.msra.mxu0 %v6271
    %7809 = vmatprep.subr.bf16.mxu0 %v6276
    %7810 = vmatpush1.bf16.msra.mxu0 %v6275
    %7811 = vmatprep.subr.bf16.mxu0 %v6280
    %7812 = vmatpush1.bf16.msra.mxu0 %v6279
    %7813 = vmatprep.subr.bf16.mxu0 %v6284
    %7814 = vmatpush1.bf16.msra.mxu0 %v6283
    %7815 = vmatprep.subr.bf16.mxu0 %v6288
    %7816 = vmatpush1.bf16.msra.mxu0 %v6287
    %7817 = vmatprep.subr.bf16.mxu0 %v6292
    %7818 = vmatpush1.bf16.msra.mxu0 %v6291
    %7819 = vmatprep.subr.bf16.mxu0 %v6296
    %7820 = vmatpush1.bf16.msra.mxu0 %v6295
    %7821 = vmatprep.subr.bf16.mxu0 %v6300
    %7822 = vmatpush1.bf16.msra.mxu0 %v6299
    %7823 = vmatprep.subr.bf16.mxu0 %v6304
    %7824 = vmatpush1.bf16.msra.mxu0 %v6303
    %7825 = vmatprep.subr.bf16.mxu0 %v6308
    %7826 = vmatpush1.bf16.msra.mxu0 %v6307
    %7827 = vmatprep.subr.bf16.mxu0 %v6312
    %7828 = vmatpush1.bf16.msra.mxu0 %v6311
    %7829 = vmatprep.subr.bf16.mxu0 %v6316
    %7830 = vmatpush1.bf16.msra.mxu0 %v6315
    %7831 = vmatprep.subr.bf16.mxu0 %v6320
    %7832 = vmatpush1.bf16.msra.mxu0 %v6319
    %7833 = vmatprep.subr.bf16.mxu0 %v6324
    %7834 = vmatpush1.bf16.msra.mxu0 %v6323
    %7835 = vmatprep.mubr.bf16.mxu0 %v4964
    %7836 = vmatmul.mubr.bf16.gmra.mrb[0].mxu0 %v4963
    %v7837 = vpop.f32.mrb[0].mxu0
    %v7838 = vadd.f32 %v7645, %v7837
    %v7839 = vpop.f32.mrb[0].mxu0
    %v7840 = vadd.f32 %v7647, %v7839
    %v7841 = vpop.f32.mrb[0].mxu0
    %v7842 = vadd.f32 %v7649, %v7841
    %v7843 = vpop.f32.mrb[0].mxu0
    %v7844 = vadd.f32 %v7651, %v7843
    %7845 = vmatprep.mubr.bf16.mxu0 %v4972
    %7846 = vmatmul.mubr.bf16.gmra.mrb[0].mxu0 %v4971
    %v7847 = vpop.f32.mrb[0].mxu0
    %v7848 = vadd.f32 %v7655, %v7847
    %v7849 = vpop.f32.mrb[0].mxu0
    %v7850 = vadd.f32 %v7657, %v7849
    %v7851 = vpop.f32.mrb[0].mxu0
    %v7852 = vadd.f32 %v7659, %v7851
    %v7853 = vpop.f32.mrb[0].mxu0
    %v7854 = vadd.f32 %v7661, %v7853
    %7855 = vmatprep.mubr.bf16.mxu0 %v4980
    %7856 = vmatmul.mubr.bf16.gmra.mrb[0].mxu0 %v4979
    %v7857 = vpop.f32.mrb[0].mxu0
    %v7858 = vadd.f32 %v7665, %v7857
    %v7859 = vpop.f32.mrb[0].mxu0
    %v7860 = vadd.f32 %v7667, %v7859
    %v7861 = vpop.f32.mrb[0].mxu0
    %v7862 = vadd.f32 %v7669, %v7861
    %v7863 = vpop.f32.mrb[0].mxu0
    %v7864 = vadd.f32 %v7671, %v7863
    %7865 = vmatprep.mubr.bf16.mxu0 %v4988
    %7866 = vmatmul.mubr.bf16.gmra.mrb[0].mxu0 %v4987
    %v7867 = vpop.f32.mrb[0].mxu0
    %v7868 = vadd.f32 %v7675, %v7867
    %v7869 = vpop.f32.mrb[0].mxu0
    %v7870 = vadd.f32 %v7677, %v7869
    %v7871 = vpop.f32.mrb[0].mxu0
    %v7872 = vadd.f32 %v7679, %v7871
    %v7873 = vpop.f32.mrb[0].mxu0
    %v7874 = vadd.f32 %v7681, %v7873
    %7875 = vmatprep.mubr.bf16.mxu0 %v4996
    %7876 = vmatmul.mubr.bf16.gmra.mrb[0].mxu0 %v4995
    %v7877 = vpop.f32.mrb[0].mxu0
    %v7878 = vadd.f32 %v7685, %v7877
    %v7879 = vpop.f32.mrb[0].mxu0
    %v7880 = vadd.f32 %v7687, %v7879
    %v7881 = vpop.f32.mrb[0].mxu0
    %v7882 = vadd.f32 %v7689, %v7881
    %v7883 = vpop.f32.mrb[0].mxu0
    %v7884 = vadd.f32 %v7691, %v7883
    %7885 = vmatprep.mubr.bf16.mxu0 %v5004
    %7886 = vmatmul.mubr.bf16.gmra.mrb[0].mxu0 %v5003
    %v7887 = vpop.f32.mrb[0].mxu0
    %v7888 = vadd.f32 %v7695, %v7887
    %v7889 = vpop.f32.mrb[0].mxu0
    %v7890 = vadd.f32 %v7697, %v7889
    %v7891 = vpop.f32.mrb[0].mxu0
    %v7892 = vadd.f32 %v7699, %v7891
    %v7893 = vpop.f32.mrb[0].mxu0
    %v7894 = vadd.f32 %v7701, %v7893
    %7895 = vmatprep.mubr.bf16.mxu0 %v5012
    %7896 = vmatmul.mubr.bf16.gmra.mrb[0].mxu0 %v5011
    %v7897 = vpop.f32.mrb[0].mxu0
    %v7898 = vadd.f32 %v7705, %v7897
    %v7899 = vpop.f32.mrb[0].mxu0
    %v7900 = vadd.f32 %v7707, %v7899
    %v7901 = vpop.f32.mrb[0].mxu0
    %v7902 = vadd.f32 %v7709, %v7901
    %v7903 = vpop.f32.mrb[0].mxu0
    %v7904 = vadd.f32 %v7711, %v7903
    %7905 = vmatprep.mubr.bf16.mxu0 %v5020
    %7906 = vmatmul.mubr.bf16.gmra.mrb[0].mxu0 %v5019
    %v7907 = vpop.f32.mrb[0].mxu0
    %v7908 = vadd.f32 %v7715, %v7907
    %v7909 = vpop.f32.mrb[0].mxu0
    %v7910 = vadd.f32 %v7717, %v7909
    %v7911 = vpop.f32.mrb[0].mxu0
    %v7912 = vadd.f32 %v7719, %v7911
    %v7913 = vpop.f32.mrb[0].mxu0
    %v7914 = vadd.f32 %v7721, %v7913
    %7915 = vmatprep.mubr.bf16.mxu0 %v5028
    %7916 = vmatmul.mubr.bf16.gmra.mrb[0].mxu0 %v5027
    %v7917 = vpop.f32.mrb[0].mxu0
    %v7918 = vadd.f32 %v7725, %v7917
    %v7919 = vpop.f32.mrb[0].mxu0
    %v7920 = vadd.f32 %v7727, %v7919
    %v7921 = vpop.f32.mrb[0].mxu0
    %v7922 = vadd.f32 %v7729, %v7921
    %v7923 = vpop.f32.mrb[0].mxu0
    %v7924 = vadd.f32 %v7731, %v7923
    %7925 = vmatprep.mubr.bf16.mxu0 %v5036
    %7926 = vmatmul.mubr.bf16.gmra.mrb[0].mxu0 %v5035
    %v7927 = vpop.f32.mrb[0].mxu0
    %v7928 = vadd.f32 %v7735, %v7927
    %v7929 = vpop.f32.mrb[0].mxu0
    %v7930 = vadd.f32 %v7737, %v7929
    %v7931 = vpop.f32.mrb[0].mxu0
    %v7932 = vadd.f32 %v7739, %v7931
    %v7933 = vpop.f32.mrb[0].mxu0
    %v7934 = vadd.f32 %v7741, %v7933
    %7935 = vmatprep.mubr.bf16.mxu0 %v5044
    %7936 = vmatmul.mubr.bf16.gmra.mrb[0].mxu0 %v5043
    %v7937 = vpop.f32.mrb[0].mxu0
    %v7938 = vadd.f32 %v7745, %v7937
    %v7939 = vpop.f32.mrb[0].mxu0
    %v7940 = vadd.f32 %v7747, %v7939
    %v7941 = vpop.f32.mrb[0].mxu0
    %v7942 = vadd.f32 %v7749, %v7941
    %v7943 = vpop.f32.mrb[0].mxu0
    %v7944 = vadd.f32 %v7751, %v7943
    %7945 = vmatprep.mubr.bf16.mxu0 %v5052
    %7946 = vmatmul.mubr.bf16.gmra.mrb[0].mxu0 %v5051
    %v7947 = vpop.f32.mrb[0].mxu0
    %v7948 = vadd.f32 %v7755, %v7947
    %v7949 = vpop.f32.mrb[0].mxu0
    %v7950 = vadd.f32 %v7757, %v7949
    %v7951 = vpop.f32.mrb[0].mxu0
    %v7952 = vadd.f32 %v7759, %v7951
    %v7953 = vpop.f32.mrb[0].mxu0
    %v7954 = vadd.f32 %v7761, %v7953
    %7955 = vmatprep.mubr.bf16.mxu0 %v5060
    %7956 = vmatmul.mubr.bf16.gmra.mrb[0].mxu0 %v5059
    %v7957 = vpop.f32.mrb[0].mxu0
    %v7958 = vadd.f32 %v7765, %v7957
    %v7959 = vpop.f32.mrb[0].mxu0
    %v7960 = vadd.f32 %v7767, %v7959
    %v7961 = vpop.f32.mrb[0].mxu0
    %v7962 = vadd.f32 %v7769, %v7961
    %v7963 = vpop.f32.mrb[0].mxu0
    %v7964 = vadd.f32 %v7771, %v7963
    %7965 = vmatprep.mubr.bf16.mxu0 %v5068
    %7966 = vmatmul.mubr.bf16.gmra.mrb[0].mxu0 %v5067
    %v7967 = vpop.f32.mrb[0].mxu0
    %v7968 = vadd.f32 %v7775, %v7967
    %v7969 = vpop.f32.mrb[0].mxu0
    %v7970 = vadd.f32 %v7777, %v7969
    %v7971 = vpop.f32.mrb[0].mxu0
    %v7972 = vadd.f32 %v7779, %v7971
    %v7973 = vpop.f32.mrb[0].mxu0
    %v7974 = vadd.f32 %v7781, %v7973
    %7975 = vmatprep.mubr.bf16.mxu0 %v5076
    %7976 = vmatmul.mubr.bf16.gmra.mrb[0].mxu0 %v5075
    %v7977 = vpop.f32.mrb[0].mxu0
    %v7978 = vadd.f32 %v7785, %v7977
    %v7979 = vpop.f32.mrb[0].mxu0
    %v7980 = vadd.f32 %v7787, %v7979
    %v7981 = vpop.f32.mrb[0].mxu0
    %v7982 = vadd.f32 %v7789, %v7981
    %v7983 = vpop.f32.mrb[0].mxu0
    %v7984 = vadd.f32 %v7791, %v7983
    %7985 = vmatprep.mubr.bf16.mxu0 %v5084
    %7986 = vmatmul.mubr.bf16.gmra.mrb[0].mxu0 %v5083
    %v7987 = vpop.f32.mrb[0].mxu0
    %v7988 = vadd.f32 %v7795, %v7987
    %v7989 = vpop.f32.mrb[0].mxu0
    %v7990 = vadd.f32 %v7797, %v7989
    %v7991 = vpop.f32.mrb[0].mxu0
    %v7992 = vadd.f32 %v7799, %v7991
    %v7993 = vpop.f32.mrb[0].mxu0
    %v7994 = vadd.f32 %v7801, %v7993
    %7995 = vdwg.mxu0
    %7996 = vmatprep.subr.bf16.mxu0 %v6328
    %7997 = vmatpush1.bf16.msra.mxu0 %v6327
    %7998 = vmatprep.subr.bf16.mxu0 %v6332
    %7999 = vmatpush1.bf16.msra.mxu0 %v6331
    %8000 = vmatprep.subr.bf16.mxu0 %v6336
    %8001 = vmatpush1.bf16.msra.mxu0 %v6335
    %8002 = vmatprep.subr.bf16.mxu0 %v6340
    %8003 = vmatpush1.bf16.msra.mxu0 %v6339
    %8004 = vmatprep.subr.bf16.mxu0 %v6344
    %8005 = vmatpush1.bf16.msra.mxu0 %v6343
    %8006 = vmatprep.subr.bf16.mxu0 %v6348
    %8007 = vmatpush1.bf16.msra.mxu0 %v6347
    %8008 = vmatprep.subr.bf16.mxu0 %v6352
    %8009 = vmatpush1.bf16.msra.mxu0 %v6351
    %8010 = vmatprep.subr.bf16.mxu0 %v6356
    %8011 = vmatpush1.bf16.msra.mxu0 %v6355
    %8012 = vmatprep.subr.bf16.mxu0 %v6360
    %8013 = vmatpush1.bf16.msra.mxu0 %v6359
    %8014 = vmatprep.subr.bf16.mxu0 %v6364
    %8015 = vmatpush1.bf16.msra.mxu0 %v6363
    %8016 = vmatprep.subr.bf16.mxu0 %v6368
    %8017 = vmatpush1.bf16.msra.mxu0 %v6367
    %8018 = vmatprep.subr.bf16.mxu0 %v6372
    %8019 = vmatpush1.bf16.msra.mxu0 %v6371
    %8020 = vmatprep.subr.bf16.mxu0 %v6376
    %8021 = vmatpush1.bf16.msra.mxu0 %v6375
    %8022 = vmatprep.subr.bf16.mxu0 %v6380
    %8023 = vmatpush1.bf16.msra.mxu0 %v6379
    %8024 = vmatprep.subr.bf16.mxu0 %v6384
    %8025 = vmatpush1.bf16.msra.mxu0 %v6383
    %8026 = vmatprep.subr.bf16.mxu0 %v6388
    %8027 = vmatpush1.bf16.msra.mxu0 %v6387
    %8028 = vmatprep.mubr.bf16.mxu0 %v4966
    %8029 = vmatmul.mubr.bf16.gmra.mrb[0].mxu0 %v4965
    %v8030 = vpop.f32.mrb[0].mxu0
    %v8031 = vadd.f32 %v7838, %v8030
    %v8032 = vpop.f32.mrb[0].mxu0
    %v8033 = vadd.f32 %v7840, %v8032
    %v8034 = vpop.f32.mrb[0].mxu0
    %v8035 = vadd.f32 %v7842, %v8034
    %v8036 = vpop.f32.mrb[0].mxu0
    %v8037 = vadd.f32 %v7844, %v8036
    %8038 = vmatprep.mubr.bf16.mxu0 %v4974
    %8039 = vmatmul.mubr.bf16.gmra.mrb[0].mxu0 %v4973
    %v8040 = vpop.f32.mrb[0].mxu0
    %v8041 = vadd.f32 %v7848, %v8040
    %v8042 = vpop.f32.mrb[0].mxu0
    %v8043 = vadd.f32 %v7850, %v8042
    %v8044 = vpop.f32.mrb[0].mxu0
    %v8045 = vadd.f32 %v7852, %v8044
    %v8046 = vpop.f32.mrb[0].mxu0
    %v8047 = vadd.f32 %v7854, %v8046
    %8048 = vmatprep.mubr.bf16.mxu0 %v4982
    %8049 = vmatmul.mubr.bf16.gmra.mrb[0].mxu0 %v4981
    %v8050 = vpop.f32.mrb[0].mxu0
    %v8051 = vadd.f32 %v7858, %v8050
    %v8052 = vpop.f32.mrb[0].mxu0
    %v8053 = vadd.f32 %v7860, %v8052
    %v8054 = vpop.f32.mrb[0].mxu0
    %v8055 = vadd.f32 %v7862, %v8054
    %v8056 = vpop.f32.mrb[0].mxu0
    %v8057 = vadd.f32 %v7864, %v8056
    %8058 = vmatprep.mubr.bf16.mxu0 %v4990
    %8059 = vmatmul.mubr.bf16.gmra.mrb[0].mxu0 %v4989
    %v8060 = vpop.f32.mrb[0].mxu0
    %v8061 = vadd.f32 %v7868, %v8060
    %v8062 = vpop.f32.mrb[0].mxu0
    %v8063 = vadd.f32 %v7870, %v8062
    %v8064 = vpop.f32.mrb[0].mxu0
    %v8065 = vadd.f32 %v7872, %v8064
    %v8066 = vpop.f32.mrb[0].mxu0
    %v8067 = vadd.f32 %v7874, %v8066
    %8068 = vmatprep.mubr.bf16.mxu0 %v4998
    %8069 = vmatmul.mubr.bf16.gmra.mrb[0].mxu0 %v4997
    %v8070 = vpop.f32.mrb[0].mxu0
    %v8071 = vadd.f32 %v7878, %v8070
    %v8072 = vpop.f32.mrb[0].mxu0
    %v8073 = vadd.f32 %v7880, %v8072
    %v8074 = vpop.f32.mrb[0].mxu0
    %v8075 = vadd.f32 %v7882, %v8074
    %v8076 = vpop.f32.mrb[0].mxu0
    %v8077 = vadd.f32 %v7884, %v8076
    %8078 = vmatprep.mubr.bf16.mxu0 %v5006
    %8079 = vmatmul.mubr.bf16.gmra.mrb[0].mxu0 %v5005
    %v8080 = vpop.f32.mrb[0].mxu0
    %v8081 = vadd.f32 %v7888, %v8080
    %v8082 = vpop.f32.mrb[0].mxu0
    %v8083 = vadd.f32 %v7890, %v8082
    %v8084 = vpop.f32.mrb[0].mxu0
    %v8085 = vadd.f32 %v7892, %v8084
    %v8086 = vpop.f32.mrb[0].mxu0
    %v8087 = vadd.f32 %v7894, %v8086
    %8088 = vmatprep.mubr.bf16.mxu0 %v5014
    %8089 = vmatmul.mubr.bf16.gmra.mrb[0].mxu0 %v5013
    %v8090 = vpop.f32.mrb[0].mxu0
    %v8091 = vadd.f32 %v7898, %v8090
    %v8092 = vpop.f32.mrb[0].mxu0
    %v8093 = vadd.f32 %v7900, %v8092
    %v8094 = vpop.f32.mrb[0].mxu0
    %v8095 = vadd.f32 %v7902, %v8094
    %v8096 = vpop.f32.mrb[0].mxu0
    %v8097 = vadd.f32 %v7904, %v8096
    %8098 = vmatprep.mubr.bf16.mxu0 %v5022
    %8099 = vmatmul.mubr.bf16.gmra.mrb[0].mxu0 %v5021
    %v8100 = vpop.f32.mrb[0].mxu0
    %v8101 = vadd.f32 %v7908, %v8100
    %v8102 = vpop.f32.mrb[0].mxu0
    %v8103 = vadd.f32 %v7910, %v8102
    %v8104 = vpop.f32.mrb[0].mxu0
    %v8105 = vadd.f32 %v7912, %v8104
    %v8106 = vpop.f32.mrb[0].mxu0
    %v8107 = vadd.f32 %v7914, %v8106
    %8108 = vmatprep.mubr.bf16.mxu0 %v5030
    %8109 = vmatmul.mubr.bf16.gmra.mrb[0].mxu0 %v5029
    %v8110 = vpop.f32.mrb[0].mxu0
    %v8111 = vadd.f32 %v7918, %v8110
    %v8112 = vpop.f32.mrb[0].mxu0
    %v8113 = vadd.f32 %v7920, %v8112
    %v8114 = vpop.f32.mrb[0].mxu0
    %v8115 = vadd.f32 %v7922, %v8114
    %v8116 = vpop.f32.mrb[0].mxu0
    %v8117 = vadd.f32 %v7924, %v8116
    %8118 = vmatprep.mubr.bf16.mxu0 %v5038
    %8119 = vmatmul.mubr.bf16.gmra.mrb[0].mxu0 %v5037
    %v8120 = vpop.f32.mrb[0].mxu0
    %v8121 = vadd.f32 %v7928, %v8120
    %v8122 = vpop.f32.mrb[0].mxu0
    %v8123 = vadd.f32 %v7930, %v8122
    %v8124 = vpop.f32.mrb[0].mxu0
    %v8125 = vadd.f32 %v7932, %v8124
    %v8126 = vpop.f32.mrb[0].mxu0
    %v8127 = vadd.f32 %v7934, %v8126
    %8128 = vmatprep.mubr.bf16.mxu0 %v5046
    %8129 = vmatmul.mubr.bf16.gmra.mrb[0].mxu0 %v5045
    %v8130 = vpop.f32.mrb[0].mxu0
    %v8131 = vadd.f32 %v7938, %v8130
    %v8132 = vpop.f32.mrb[0].mxu0
    %v8133 = vadd.f32 %v7940, %v8132
    %v8134 = vpop.f32.mrb[0].mxu0
    %v8135 = vadd.f32 %v7942, %v8134
    %v8136 = vpop.f32.mrb[0].mxu0
    %v8137 = vadd.f32 %v7944, %v8136
    %8138 = vmatprep.mubr.bf16.mxu0 %v5054
    %8139 = vmatmul.mubr.bf16.gmra.mrb[0].mxu0 %v5053
    %v8140 = vpop.f32.mrb[0].mxu0
    %v8141 = vadd.f32 %v7948, %v8140
    %v8142 = vpop.f32.mrb[0].mxu0
    %v8143 = vadd.f32 %v7950, %v8142
    %v8144 = vpop.f32.mrb[0].mxu0
    %v8145 = vadd.f32 %v7952, %v8144
    %v8146 = vpop.f32.mrb[0].mxu0
    %v8147 = vadd.f32 %v7954, %v8146
    %8148 = vmatprep.mubr.bf16.mxu0 %v5062
    %8149 = vmatmul.mubr.bf16.gmra.mrb[0].mxu0 %v5061
    %v8150 = vpop.f32.mrb[0].mxu0
    %v8151 = vadd.f32 %v7958, %v8150
    %v8152 = vpop.f32.mrb[0].mxu0
    %v8153 = vadd.f32 %v7960, %v8152
    %v8154 = vpop.f32.mrb[0].mxu0
    %v8155 = vadd.f32 %v7962, %v8154
    %v8156 = vpop.f32.mrb[0].mxu0
    %v8157 = vadd.f32 %v7964, %v8156
    %8158 = vmatprep.mubr.bf16.mxu0 %v5070
    %8159 = vmatmul.mubr.bf16.gmra.mrb[0].mxu0 %v5069
    %v8160 = vpop.f32.mrb[0].mxu0
    %v8161 = vadd.f32 %v7968, %v8160
    %v8162 = vpop.f32.mrb[0].mxu0
    %v8163 = vadd.f32 %v7970, %v8162
    %v8164 = vpop.f32.mrb[0].mxu0
    %v8165 = vadd.f32 %v7972, %v8164
    %v8166 = vpop.f32.mrb[0].mxu0
    %v8167 = vadd.f32 %v7974, %v8166
    %8168 = vmatprep.mubr.bf16.mxu0 %v5078
    %8169 = vmatmul.mubr.bf16.gmra.mrb[0].mxu0 %v5077
    %v8170 = vpop.f32.mrb[0].mxu0
    %v8171 = vadd.f32 %v7978, %v8170
    %v8172 = vpop.f32.mrb[0].mxu0
    %v8173 = vadd.f32 %v7980, %v8172
    %v8174 = vpop.f32.mrb[0].mxu0
    %v8175 = vadd.f32 %v7982, %v8174
    %v8176 = vpop.f32.mrb[0].mxu0
    %v8177 = vadd.f32 %v7984, %v8176
    %8178 = vmatprep.mubr.bf16.mxu0 %v5086
    %8179 = vmatmul.mubr.bf16.gmra.mrb[0].mxu0 %v5085
    %v8180 = vpop.f32.mrb[0].mxu0
    %v8181 = vadd.f32 %v7988, %v8180
    %v8182 = vpop.f32.mrb[0].mxu0
    %v8183 = vadd.f32 %v7990, %v8182
    %v8184 = vpop.f32.mrb[0].mxu0
    %v8185 = vadd.f32 %v7992, %v8184
    %v8186 = vpop.f32.mrb[0].mxu0
    %v8187 = vadd.f32 %v7994, %v8186
    %8188 = vdwg.mxu0
    %8189 = vst [vmem:[#allocation8] sm:$0xff] %v7259
    %8190 = vst [vmem:[#allocation8 + $0x8] sm:$0xff] %v7261
    %8191 = vst [vmem:[#allocation8 + $0x10] sm:$0xff] %v8031
    %8192 = vst [vmem:[#allocation8 + $0x18] sm:$0xff] %v8033
    %8193 = vst [vmem:[#allocation8 + $0x20] sm:$0xff] %v7263
    %8194 = vst [vmem:[#allocation8 + $0x28] sm:$0xff] %v7265
    %8195 = vst [vmem:[#allocation8 + $0x30] sm:$0xff] %v8035
    %8196 = vst [vmem:[#allocation8 + $0x38] sm:$0xff] %v8037
    %8197 = vst [vmem:[#allocation8 + $0x40] sm:$0xff] %v7269
    %8198 = vst [vmem:[#allocation8 + $0x48] sm:$0xff] %v7271
    %8199 = vst [vmem:[#allocation8 + $0x50] sm:$0xff] %v8041
    %8200 = vst [vmem:[#allocation8 + $0x58] sm:$0xff] %v8043
    %8201 = vst [vmem:[#allocation8 + $0x60] sm:$0xff] %v7273
    %8202 = vst [vmem:[#allocation8 + $0x68] sm:$0xff] %v7275
    %8203 = vst [vmem:[#allocation8 + $0x70] sm:$0xff] %v8045
    %8204 = vst [vmem:[#allocation8 + $0x78] sm:$0xff] %v8047
    %8205 = vst [vmem:[#allocation8 + $0x80] sm:$0xff] %v7279
    %8206 = vst [vmem:[#allocation8 + $0x88] sm:$0xff] %v7281
    %8207 = vst [vmem:[#allocation8 + $0x90] sm:$0xff] %v8051
    %8208 = vst [vmem:[#allocation8 + $0x98] sm:$0xff] %v8053
    %8209 = vst [vmem:[#allocation8 + $0xa0] sm:$0xff] %v7283
    %8210 = vst [vmem:[#allocation8 + $0xa8] sm:$0xff] %v7285
    %8211 = vst [vmem:[#allocation8 + $0xb0] sm:$0xff] %v8055
    %8212 = vst [vmem:[#allocation8 + $0xb8] sm:$0xff] %v8057
    %8213 = vst [vmem:[#allocation8 + $0xc0] sm:$0xff] %v7289
    %8214 = vst [vmem:[#allocation8 + $0xc8] sm:$0xff] %v7291
    %8215 = vst [vmem:[#allocation8 + $0xd0] sm:$0xff] %v8061
    %8216 = vst [vmem:[#allocation8 + $0xd8] sm:$0xff] %v8063
    %8217 = vst [vmem:[#allocation8 + $0xe0] sm:$0xff] %v7293
    %8218 = vst [vmem:[#allocation8 + $0xe8] sm:$0xff] %v7295
    %8219 = vst [vmem:[#allocation8 + $0xf0] sm:$0xff] %v8065
    %8220 = vst [vmem:[#allocation8 + $0xf8] sm:$0xff] %v8067
    %8221 = vst [vmem:[#allocation8 + $0x100] sm:$0xff] %v7299
    %8222 = vst [vmem:[#allocation8 + $0x108] sm:$0xff] %v7301
    %8223 = vst [vmem:[#allocation8 + $0x110] sm:$0xff] %v8071
    %8224 = vst [vmem:[#allocation8 + $0x118] sm:$0xff] %v8073
    %8225 = vst [vmem:[#allocation8 + $0x120] sm:$0xff] %v7303
    %8226 = vst [vmem:[#allocation8 + $0x128] sm:$0xff] %v7305
    %8227 = vst [vmem:[#allocation8 + $0x130] sm:$0xff] %v8075
    %8228 = vst [vmem:[#allocation8 + $0x138] sm:$0xff] %v8077
    %8229 = vst [vmem:[#allocation8 + $0x140] sm:$0xff] %v7309
    %8230 = vst [vmem:[#allocation8 + $0x148] sm:$0xff] %v7311
    %8231 = vst [vmem:[#allocation8 + $0x150] sm:$0xff] %v8081
    %8232 = vst [vmem:[#allocation8 + $0x158] sm:$0xff] %v8083
    %8233 = vst [vmem:[#allocation8 + $0x160] sm:$0xff] %v7313
    %8234 = vst [vmem:[#allocation8 + $0x168] sm:$0xff] %v7315
    %8235 = vst [vmem:[#allocation8 + $0x170] sm:$0xff] %v8085
    %8236 = vst [vmem:[#allocation8 + $0x178] sm:$0xff] %v8087
    %8237 = vst [vmem:[#allocation8 + $0x180] sm:$0xff] %v7319
    %8238 = vst [vmem:[#allocation8 + $0x188] sm:$0xff] %v7321
    %8239 = vst [vmem:[#allocation8 + $0x190] sm:$0xff] %v8091
    %8240 = vst [vmem:[#allocation8 + $0x198] sm:$0xff] %v8093
    %8241 = vst [vmem:[#allocation8 + $0x1a0] sm:$0xff] %v7323
    %8242 = vst [vmem:[#allocation8 + $0x1a8] sm:$0xff] %v7325
    %8243 = vst [vmem:[#allocation8 + $0x1b0] sm:$0xff] %v8095
    %8244 = vst [vmem:[#allocation8 + $0x1b8] sm:$0xff] %v8097
    %8245 = vst [vmem:[#allocation8 + $0x1c0] sm:$0xff] %v7329
    %8246 = vst [vmem:[#allocation8 + $0x1c8] sm:$0xff] %v7331
    %8247 = vst [vmem:[#allocation8 + $0x1d0] sm:$0xff] %v8101
    %8248 = vst [vmem:[#allocation8 + $0x1d8] sm:$0xff] %v8103
    %8249 = vst [vmem:[#allocation8 + $0x1e0] sm:$0xff] %v7333
    %8250 = vst [vmem:[#allocation8 + $0x1e8] sm:$0xff] %v7335
    %8251 = vst [vmem:[#allocation8 + $0x1f0] sm:$0xff] %v8105
    %8252 = vst [vmem:[#allocation8 + $0x1f8] sm:$0xff] %v8107
    %8253 = vst [vmem:[#allocation8 + $0x200] sm:$0xff] %v7339
    %8254 = vst [vmem:[#allocation8 + $0x208] sm:$0xff] %v7341
    %8255 = vst [vmem:[#allocation8 + $0x210] sm:$0xff] %v8111
    %8256 = vst [vmem:[#allocation8 + $0x218] sm:$0xff] %v8113
    %8257 = vst [vmem:[#allocation8 + $0x220] sm:$0xff] %v7343
    %8258 = vst [vmem:[#allocation8 + $0x228] sm:$0xff] %v7345
    %8259 = vst [vmem:[#allocation8 + $0x230] sm:$0xff] %v8115
    %8260 = vst [vmem:[#allocation8 + $0x238] sm:$0xff] %v8117
    %8261 = vst [vmem:[#allocation8 + $0x240] sm:$0xff] %v7349
    %8262 = vst [vmem:[#allocation8 + $0x248] sm:$0xff] %v7351
    %8263 = vst [vmem:[#allocation8 + $0x250] sm:$0xff] %v8121
    %8264 = vst [vmem:[#allocation8 + $0x258] sm:$0xff] %v8123
    %8265 = vst [vmem:[#allocation8 + $0x260] sm:$0xff] %v7353
    %8266 = vst [vmem:[#allocation8 + $0x268] sm:$0xff] %v7355
    %8267 = vst [vmem:[#allocation8 + $0x270] sm:$0xff] %v8125
    %8268 = vst [vmem:[#allocation8 + $0x278] sm:$0xff] %v8127
    %8269 = vst [vmem:[#allocation8 + $0x280] sm:$0xff] %v7359
    %8270 = vst [vmem:[#allocation8 + $0x288] sm:$0xff] %v7361
    %8271 = vst [vmem:[#allocation8 + $0x290] sm:$0xff] %v8131
    %8272 = vst [vmem:[#allocation8 + $0x298] sm:$0xff] %v8133
    %8273 = vst [vmem:[#allocation8 + $0x2a0] sm:$0xff] %v7363
    %8274 = vst [vmem:[#allocation8 + $0x2a8] sm:$0xff] %v7365
    %8275 = vst [vmem:[#allocation8 + $0x2b0] sm:$0xff] %v8135
    %8276 = vst [vmem:[#allocation8 + $0x2b8] sm:$0xff] %v8137
    %8277 = vst [vmem:[#allocation8 + $0x2c0] sm:$0xff] %v7369
    %8278 = vst [vmem:[#allocation8 + $0x2c8] sm:$0xff] %v7371
    %8279 = vst [vmem:[#allocation8 + $0x2d0] sm:$0xff] %v8141
    %8280 = vst [vmem:[#allocation8 + $0x2d8] sm:$0xff] %v8143
    %8281 = vst [vmem:[#allocation8 + $0x2e0] sm:$0xff] %v7373
    %8282 = vst [vmem:[#allocation8 + $0x2e8] sm:$0xff] %v7375
    %8283 = vst [vmem:[#allocation8 + $0x2f0] sm:$0xff] %v8145
    %8284 = vst [vmem:[#allocation8 + $0x2f8] sm:$0xff] %v8147
    %8285 = vst [vmem:[#allocation8 + $0x300] sm:$0xff] %v7379
    %8286 = vst [vmem:[#allocation8 + $0x308] sm:$0xff] %v7381
    %8287 = vst [vmem:[#allocation8 + $0x310] sm:$0xff] %v8151
    %8288 = vst [vmem:[#allocation8 + $0x318] sm:$0xff] %v8153
    %8289 = vst [vmem:[#allocation8 + $0x320] sm:$0xff] %v7383
    %8290 = vst [vmem:[#allocation8 + $0x328] sm:$0xff] %v7385
    %8291 = vst [vmem:[#allocation8 + $0x330] sm:$0xff] %v8155
    %8292 = vst [vmem:[#allocation8 + $0x338] sm:$0xff] %v8157
    %8293 = vst [vmem:[#allocation8 + $0x340] sm:$0xff] %v7389
    %8294 = vst [vmem:[#allocation8 + $0x348] sm:$0xff] %v7391
    %8295 = vst [vmem:[#allocation8 + $0x350] sm:$0xff] %v8161
    %8296 = vst [vmem:[#allocation8 + $0x358] sm:$0xff] %v8163
    %8297 = vst [vmem:[#allocation8 + $0x360] sm:$0xff] %v7393
    %8298 = vst [vmem:[#allocation8 + $0x368] sm:$0xff] %v7395
    %8299 = vst [vmem:[#allocation8 + $0x370] sm:$0xff] %v8165
    %8300 = vst [vmem:[#allocation8 + $0x378] sm:$0xff] %v8167
    %8301 = vst [vmem:[#allocation8 + $0x380] sm:$0xff] %v7399
    %8302 = vst [vmem:[#allocation8 + $0x388] sm:$0xff] %v7401
    %8303 = vst [vmem:[#allocation8 + $0x390] sm:$0xff] %v8171
    %8304 = vst [vmem:[#allocation8 + $0x398] sm:$0xff] %v8173
    %8305 = vst [vmem:[#allocation8 + $0x3a0] sm:$0xff] %v7403
    %8306 = vst [vmem:[#allocation8 + $0x3a8] sm:$0xff] %v7405
    %8307 = vst [vmem:[#allocation8 + $0x3b0] sm:$0xff] %v8175
    %8308 = vst [vmem:[#allocation8 + $0x3b8] sm:$0xff] %v8177
    %8309 = vst [vmem:[#allocation8 + $0x3c0] sm:$0xff] %v7409
    %8310 = vst [vmem:[#allocation8 + $0x3c8] sm:$0xff] %v7411
    %8311 = vst [vmem:[#allocation8 + $0x3d0] sm:$0xff] %v8181
    %8312 = vst [vmem:[#allocation8 + $0x3d8] sm:$0xff] %v8183
    %8313 = vst [vmem:[#allocation8 + $0x3e0] sm:$0xff] %v7413
    %8314 = vst [vmem:[#allocation8 + $0x3e8] sm:$0xff] %v7415
    %8315 = vst [vmem:[#allocation8 + $0x3f0] sm:$0xff] %v8185
    %8316 = vst [vmem:[#allocation8 + $0x3f8] sm:$0xff] %v8187
    // Predicated region
    $region38: #{tpu_custom_call.1} parent=1 // pred_check
      _
    $region39: #{tpu_custom_call.1} parent=1 // pred_check_branch
      %8318 = sbr.rel (0) target = $region41
    $region40: #{tpu_custom_call.1} parent=1 // pred_region
      %s8320 = ssub.s32 16384, 16384
      %8321 = vsyncadd [#allocation5], %s8320
      %s8322 = sshll.u32 [#allocation8], 4
      %s8323 = int_to_ptr.vmem [resolvable:$true] %s8322
      %8328 = dma.vmem_to_hbm [thread:$0]  %s8323, 16384, %s6, [#allocation5], 512, 512, 32
    $region41: #{tpu_custom_call.1} parent=1 // pred_fallthru
      _
    // Predicated region
    $region42: #{tpu_custom_call.1} parent=1 // pred_check
      _
    $region43: #{tpu_custom_call.1} parent=1 // pred_check_branch
      %8330 = sbr.rel (0) target = $region45
    $region44: #{tpu_custom_call.1} parent=1 // pred_region
      %8331 = dma.done [#allocation5], 16384
    $region45: #{tpu_custom_call.1} parent=1 // pred_fallthru
      _
    %8332 = vsyncpa [#allocation4], 1
    %8333 = vsyncpa [#allocation7], 1
    %8334 = vsyncpa [#allocation5], 1

</llo_original>
